<compile_context>
chip_gen: v7x
topology: tpu7x:2x2x1
jax: 0.10.0
libtpu: 0.0.40
codegen_flags: <defaults>
</compile_context>

<pallas_src>
import functools

import jax
import jax.numpy as jnp
import numpy as np
from jax import lax
from jax.experimental import pallas as pl
from jax.experimental.pallas import tpu as pltpu

EPS = 1e-5


def resnet_block_kernel(x_ref, w1_ref, w2_ref, o_ref, xpad_ref, hpad_ref,
                        *, H, W, C):
    """One batch element per grid step.

    x_ref   : (1, H, W, C)   f32   input (also the residual)
    w*_ref  : (9, C, C)      bf16  conv weights split into 3x3 taps
    o_ref   : (1, H, W, C)   f32   output
    xpad_ref: (H+2, W+2, C)  bf16  VMEM scratch: reflect-padded x
    hpad_ref: (H+2, W+2, C)  bf16  VMEM scratch: reflect-padded intermediate h
    """
    HW = H * W
    inv_hw = 1.0 / float(HW)

    def reflect_pad_store(dst_ref, src):
        # src: (H, W, C) value -> dst_ref: (H+2, W+2, C), ReflectionPad2d(1).
        # Written entirely from live values: interior, 4 edges, 4 corners.
        dst_ref[1:H + 1, 1:W + 1, :] = src                          # interior
        dst_ref[0:1, 1:W + 1, :] = src[1:2]                         # top edge
        dst_ref[H + 1:H + 2, 1:W + 1, :] = src[H - 2:H - 1]         # bottom edge
        dst_ref[1:H + 1, 0:1, :] = src[:, 1:2, :]                   # left edge
        dst_ref[1:H + 1, W + 1:W + 2, :] = src[:, W - 2:W - 1, :]   # right edge
        dst_ref[0:1, 0:1, :] = src[1:2, 1:2, :]                     # corners
        dst_ref[0:1, W + 1:W + 2, :] = src[1:2, W - 2:W - 1, :]
        dst_ref[H + 1:H + 2, 0:1, :] = src[H - 2:H - 1, 1:2, :]
        dst_ref[H + 1:H + 2, W + 1:W + 2, :] = src[H - 2:H - 1, W - 2:W - 1, :]

    def conv3x3(pad_ref, w_ref):
        # 9 per-tap (HW, C) x (C, C) bf16 MXU matmuls, f32 accumulation.
        acc = None
        for kh in range(3):
            for kw in range(3):
                tap = pad_ref[kh:kh + H, kw:kw + W, :].reshape(HW, C)
                part = jnp.dot(tap, w_ref[kh * 3 + kw],
                               preferred_element_type=jnp.float32)
                acc = part if acc is None else acc + part
        return acc                                                   # (HW, C) f32

    def inst_norm(a):
        # InstanceNorm2d(affine=False): per-channel stats over H*W, biased
        # variance, single sweep (sum & sum-of-squares together).
        s = jnp.sum(a, axis=0, keepdims=True)
        ss = jnp.sum(a * a, axis=0, keepdims=True)
        mean = s * inv_hw
        var = ss * inv_hw - mean * mean
        return (a - mean) * lax.rsqrt(var + EPS)                     # rsqrt -> EUP

    # ---- reflect-pad x (bf16) into scratch; the f32 block is the residual --
    xb = x_ref[0].astype(jnp.bfloat16)                               # (H, W, C)
    reflect_pad_store(xpad_ref, xb)

    # ---- conv1 -> IN -> ReLU (bias dropped: cancelled by non-affine IN) ----
    h = jnp.maximum(inst_norm(conv3x3(xpad_ref, w1_ref)), 0.0)       # (HW, C) f32

    # ---- reflect-pad h (bf16) into scratch ---------------------------------
    reflect_pad_store(hpad_ref, h.astype(jnp.bfloat16).reshape(H, W, C))

    # ---- conv2 -> IN -> residual add ---------------------------------------
    h2 = inst_norm(conv3x3(hpad_ref, w2_ref)).reshape(H, W, C)       # f32
    o_ref[0] = (x_ref[0] + h2).astype(o_ref.dtype)


def resnet_block_pallas(x_nchw, w1, b1, w2, b2):
    """x_nchw: (N, C, H, W) f32.  w*: (3,3,C,C) HWIO.  b*: (C,).

    The conv biases are accepted for API parity with the PyTorch module but
    are NOT used: InstanceNorm2d(affine=False) subtracts the per-channel mean
    over H*W, so a per-channel bias is exactly cancelled.
    """
    del b1, b2                                                       # dead work
    N, C, H, W = x_nchw.shape
    x = jnp.transpose(x_nchw, (0, 2, 3, 1)).astype(jnp.float32)      # NHWC

    # Weights split into 3x3 taps, bf16 for the MXU.
    w1t = w1.reshape(9, C, C).astype(jnp.bfloat16)
    w2t = w2.reshape(9, C, C).astype(jnp.bfloat16)

    # Per-grid-step VMEM estimate (double-buffered x/out blocks, weights,
    # bf16 padded scratches, live f32 temps) + headroom, clamped to [16, 64] MiB.
    blk = H * W * C
    pad = (H + 2) * (W + 2) * C
    est = (2 * 2 * blk * 4            # x in + out blocks, double-buffered, f32
           + 2 * 2 * 9 * C * C * 2    # w1 + w2, double-buffered, bf16
           + 2 * pad * 2              # xpad + hpad scratch, bf16
           + 4 * blk * 4)             # live f32 temps (conv accs, IN temps)
    vmem_limit = int(min(max(2 * est, 16 * 1024 * 1024), 64 * 1024 * 1024))

    kernel = functools.partial(resnet_block_kernel, H=H, W=W, C=C)

    out = pl.pallas_call(
        kernel,
        out_shape=jax.ShapeDtypeStruct((N, H, W, C), x.dtype),
        grid=(N,),
        in_specs=[
            pl.BlockSpec((1, H, W, C), lambda n: (n, 0, 0, 0)),      # x
            pl.BlockSpec((9, C, C), lambda n: (0, 0, 0)),            # w1 (const idx)
            pl.BlockSpec((9, C, C), lambda n: (0, 0, 0)),            # w2 (const idx)
        ],
        out_specs=pl.BlockSpec((1, H, W, C), lambda n: (n, 0, 0, 0)),
        scratch_shapes=[
            pltpu.VMEM((H + 2, W + 2, C), jnp.bfloat16),             # xpad
            pltpu.VMEM((H + 2, W + 2, C), jnp.bfloat16),             # hpad
        ],
        compiler_params=pltpu.CompilerParams(
            dimension_semantics=("parallel",),
            vmem_limit_bytes=vmem_limit,
        ),
    )(x, w1t, w2t)

    return jnp.transpose(out, (0, 3, 1, 2))                          # -> NCHW


# ---------------------------------------------------------------------------
# Pure-JAX reference (correctness check).  conv_dtype=bf16 mirrors the
# kernel's MXU precision; conv_dtype=f32 is the exact PyTorch-f32 forward.
# ---------------------------------------------------------------------------
def resnet_block_ref(x_nchw, w1, b1, w2, b2, conv_dtype=jnp.float32):
    x = jnp.transpose(x_nchw, (0, 2, 3, 1)).astype(jnp.float32)      # NHWC

    def conv(a, w, b):
        p = jnp.pad(a, ((0, 0), (1, 1), (1, 1), (0, 0)), mode="reflect")
        y = lax.conv_general_dilated(
            p.astype(conv_dtype), w.astype(conv_dtype),
            window_strides=(1, 1), padding="VALID",
            dimension_numbers=("NHWC", "HWIO", "NHWC"),
            preferred_element_type=jnp.float32)
        return y + b.astype(jnp.float32)

    def inorm(a):
        mean = jnp.mean(a, axis=(1, 2), keepdims=True)
        var = jnp.mean((a - mean) ** 2, axis=(1, 2), keepdims=True)
        return (a - mean) * lax.rsqrt(var + EPS)

    h = jnp.maximum(inorm(conv(x, w1, b1)), 0.0)
    h = inorm(conv(h, w2, b2))
    return jnp.transpose(x + h, (0, 3, 1, 2))


if __name__ == "__main__":
    N, C, H, W = 2, 8, 16, 16    # dim = 8
    key = jax.random.PRNGKey(0)
    kx, k1, k2, k3, k4 = jax.random.split(key, 5)

    x = jax.random.normal(kx, (N, C, H, W), dtype=jnp.float32)
    # Conv2d(dim, dim, 3) params; stored HWIO for NHWC conv.
    fan_in = C * 3 * 3
    bound = 1.0 / np.sqrt(fan_in)
    w1 = jax.random.uniform(k1, (3, 3, C, C), jnp.float32, -bound, bound)
    b1 = jax.random.uniform(k2, (C,), jnp.float32, -bound, bound)
    w2 = jax.random.uniform(k3, (3, 3, C, C), jnp.float32, -bound, bound)
    b2 = jax.random.uniform(k4, (C,), jnp.float32, -bound, bound)

    out = jax.block_until_ready(resnet_block_pallas(x, w1, b1, w2, b2))
    assert out.shape == (N, C, H, W)

    # Check against a reference that uses the same bf16 conv precision
    # (verifies kernel structure: reflect pad, per-tap conv, IN, ReLU, residual).
    ref_bf16 = jax.block_until_ready(
        resnet_block_ref(x, w1, b1, w2, b2, conv_dtype=jnp.bfloat16))
    np.testing.assert_allclose(np.asarray(out), np.asarray(ref_bf16),
                               rtol=5e-3, atol=1e-2)

    # Loose sanity check against the exact f32 module semantics (difference
    # is bounded by bf16 quantization of the conv operands).
    ref_f32 = jax.block_until_ready(
        resnet_block_ref(x, w1, b1, w2, b2, conv_dtype=jnp.float32))
    np.testing.assert_allclose(np.asarray(out), np.asarray(ref_f32),
                               rtol=1e-1, atol=1e-1)

    print("KERNEL_OK")
</pallas_src>

<mosaic_0001>
module attributes {stable_mosaic.version = 11 : i64} {
  func.func @resnet_block_kernel(%arg0: i32, %arg1: memref<1x16x16x8xf32, #tpu.memory_space<vmem>>, %arg2: memref<9x8x8xbf16, #tpu.memory_space<vmem>>, %arg3: memref<9x8x8xbf16, #tpu.memory_space<vmem>>, %arg4: memref<1x16x16x8xf32, #tpu.memory_space<vmem>>, %arg5: memref<18x18x8xbf16, #tpu.memory_space<vmem>>, %arg6: memref<18x18x8xbf16, #tpu.memory_space<vmem>>) attributes {dimension_semantics = [#tpu.dimension_semantics<parallel>], iteration_bounds = array<i64: 2>, scalar_prefetch = 0 : i64, scratch_operands = 2 : i64, tpu.core_type = #tpu.core_type<tc>, window_params = [{transform_indices = @transform_0, window_bounds = array<i64: 1, 16, 16, 8>}, {pipeline_mode = #tpu.pipeline_mode<synchronous>, transform_indices = @transform_1, window_bounds = array<i64: 9, 8, 8>}, {pipeline_mode = #tpu.pipeline_mode<synchronous>, transform_indices = @transform_2, window_bounds = array<i64: 9, 8, 8>}, {transform_indices = @transform_3, window_bounds = array<i64: 1, 16, 16, 8>}]} {
    %c0 = arith.constant 0 : index
    %c0_0 = arith.constant 0 : index
    %c0_1 = arith.constant 0 : index
    %c0_2 = arith.constant 0 : index
    %0 = vector.load %arg1[%c0, %c0_0, %c0_1, %c0_2] : memref<1x16x16x8xf32, #tpu.memory_space<vmem>>, vector<1x16x16x8xf32>
    %1 = vector.shape_cast %0 : vector<1x16x16x8xf32> to vector<16x16x8xf32>
    %2 = arith.truncf %1 : vector<16x16x8xf32> to vector<16x16x8xbf16>
    %c1 = arith.constant 1 : index
    %c1_3 = arith.constant 1 : index
    %c0_4 = arith.constant 0 : index
    %3 = vector.load %arg5[%c1, %c1_3, %c0_4] : memref<18x18x8xbf16, #tpu.memory_space<vmem>>, vector<16x16x8xbf16>
    tpu.vector_store %arg5[%c1, %c1_3, %c0_4], %2 {strides = array<i32>} : memref<18x18x8xbf16, #tpu.memory_space<vmem>>, vector<16x16x8xbf16>,
    %4 = vector.extract_strided_slice %2 {offsets = [1, 0, 0], sizes = [1, 16, 8], strides = [1, 1, 1]} : vector<16x16x8xbf16> to vector<1x16x8xbf16>
    %c0_5 = arith.constant 0 : index
    %c1_6 = arith.constant 1 : index
    %c0_7 = arith.constant 0 : index
    %5 = vector.load %arg5[%c0_5, %c1_6, %c0_7] : memref<18x18x8xbf16, #tpu.memory_space<vmem>>, vector<1x16x8xbf16>
    tpu.vector_store %arg5[%c0_5, %c1_6, %c0_7], %4 {strides = array<i32>} : memref<18x18x8xbf16, #tpu.memory_space<vmem>>, vector<1x16x8xbf16>,
    %6 = vector.extract_strided_slice %2 {offsets = [14, 0, 0], sizes = [1, 16, 8], strides = [1, 1, 1]} : vector<16x16x8xbf16> to vector<1x16x8xbf16>
    %c17 = arith.constant 17 : index
    %c1_8 = arith.constant 1 : index
    %c0_9 = arith.constant 0 : index
    %7 = vector.load %arg5[%c17, %c1_8, %c0_9] : memref<18x18x8xbf16, #tpu.memory_space<vmem>>, vector<1x16x8xbf16>
    tpu.vector_store %arg5[%c17, %c1_8, %c0_9], %6 {strides = array<i32>} : memref<18x18x8xbf16, #tpu.memory_space<vmem>>, vector<1x16x8xbf16>,
    %8 = vector.extract_strided_slice %2 {offsets = [0, 1, 0], sizes = [16, 1, 8], strides = [1, 1, 1]} : vector<16x16x8xbf16> to vector<16x1x8xbf16>
    %c1_10 = arith.constant 1 : index
    %c0_11 = arith.constant 0 : index
    %c0_12 = arith.constant 0 : index
    %9 = vector.load %arg5[%c1_10, %c0_11, %c0_12] : memref<18x18x8xbf16, #tpu.memory_space<vmem>>, vector<16x1x8xbf16>
    tpu.vector_store %arg5[%c1_10, %c0_11, %c0_12], %8 {strides = array<i32>} : memref<18x18x8xbf16, #tpu.memory_space<vmem>>, vector<16x1x8xbf16>,
    %10 = vector.extract_strided_slice %2 {offsets = [0, 14, 0], sizes = [16, 1, 8], strides = [1, 1, 1]} : vector<16x16x8xbf16> to vector<16x1x8xbf16>
    %c1_13 = arith.constant 1 : index
    %c17_14 = arith.constant 17 : index
    %c0_15 = arith.constant 0 : index
    %11 = vector.load %arg5[%c1_13, %c17_14, %c0_15] : memref<18x18x8xbf16, #tpu.memory_space<vmem>>, vector<16x1x8xbf16>
    tpu.vector_store %arg5[%c1_13, %c17_14, %c0_15], %10 {strides = array<i32>} : memref<18x18x8xbf16, #tpu.memory_space<vmem>>, vector<16x1x8xbf16>,
    %12 = vector.extract_strided_slice %2 {offsets = [1, 1, 0], sizes = [1, 1, 8], strides = [1, 1, 1]} : vector<16x16x8xbf16> to vector<1x1x8xbf16>
    %c0_16 = arith.constant 0 : index
    %c0_17 = arith.constant 0 : index
    %c0_18 = arith.constant 0 : index
    %13 = vector.load %arg5[%c0_16, %c0_17, %c0_18] : memref<18x18x8xbf16, #tpu.memory_space<vmem>>, vector<1x1x8xbf16>
    tpu.vector_store %arg5[%c0_16, %c0_17, %c0_18], %12 {strides = array<i32>} : memref<18x18x8xbf16, #tpu.memory_space<vmem>>, vector<1x1x8xbf16>,
    %14 = vector.extract_strided_slice %2 {offsets = [1, 14, 0], sizes = [1, 1, 8], strides = [1, 1, 1]} : vector<16x16x8xbf16> to vector<1x1x8xbf16>
    %c0_19 = arith.constant 0 : index
    %c17_20 = arith.constant 17 : index
    %c0_21 = arith.constant 0 : index
    %15 = vector.load %arg5[%c0_19, %c17_20, %c0_21] : memref<18x18x8xbf16, #tpu.memory_space<vmem>>, vector<1x1x8xbf16>
    tpu.vector_store %arg5[%c0_19, %c17_20, %c0_21], %14 {strides = array<i32>} : memref<18x18x8xbf16, #tpu.memory_space<vmem>>, vector<1x1x8xbf16>,
    %16 = vector.extract_strided_slice %2 {offsets = [14, 1, 0], sizes = [1, 1, 8], strides = [1, 1, 1]} : vector<16x16x8xbf16> to vector<1x1x8xbf16>
    %c17_22 = arith.constant 17 : index
    %c0_23 = arith.constant 0 : index
    %c0_24 = arith.constant 0 : index
    %17 = vector.load %arg5[%c17_22, %c0_23, %c0_24] : memref<18x18x8xbf16, #tpu.memory_space<vmem>>, vector<1x1x8xbf16>
    tpu.vector_store %arg5[%c17_22, %c0_23, %c0_24], %16 {strides = array<i32>} : memref<18x18x8xbf16, #tpu.memory_space<vmem>>, vector<1x1x8xbf16>,
    %18 = vector.extract_strided_slice %2 {offsets = [14, 14, 0], sizes = [1, 1, 8], strides = [1, 1, 1]} : vector<16x16x8xbf16> to vector<1x1x8xbf16>
    %c17_25 = arith.constant 17 : index
    %c17_26 = arith.constant 17 : index
    %c0_27 = arith.constant 0 : index
    %19 = vector.load %arg5[%c17_25, %c17_26, %c0_27] : memref<18x18x8xbf16, #tpu.memory_space<vmem>>, vector<1x1x8xbf16>
    tpu.vector_store %arg5[%c17_25, %c17_26, %c0_27], %18 {strides = array<i32>} : memref<18x18x8xbf16, #tpu.memory_space<vmem>>, vector<1x1x8xbf16>,
    %c0_28 = arith.constant 0 : index
    %c0_29 = arith.constant 0 : index
    %c0_30 = arith.constant 0 : index
    %20 = vector.load %arg5[%c0_28, %c0_29, %c0_30] : memref<18x18x8xbf16, #tpu.memory_space<vmem>>, vector<16x16x8xbf16>
    %21 = vector.shape_cast %20 : vector<16x16x8xbf16> to vector<256x8xbf16>
    %c0_31 = arith.constant 0 : index
    %c0_32 = arith.constant 0 : index
    %c0_33 = arith.constant 0 : index
    %22 = vector.load %arg2[%c0_31, %c0_32, %c0_33] : memref<9x8x8xbf16, #tpu.memory_space<vmem>>, vector<1x8x8xbf16>
    %23 = vector.shape_cast %22 : vector<1x8x8xbf16> to vector<8x8xbf16>
    %cst = arith.constant dense<0.000000e+00> : vector<256x8xf32>
    %24 = tpu.matmul %21, %23, %cst {dimension_numbers = #tpu.dot_dimension_numbers<[1], [0], [0], [1], [0, 0, 1, 1], [], []>} : vector<256x8xbf16>, vector<8x8xbf16>, vector<256x8xf32> -> vector<256x8xf32>
    %c0_34 = arith.constant 0 : index
    %c1_35 = arith.constant 1 : index
    %c0_36 = arith.constant 0 : index
    %25 = vector.load %arg5[%c0_34, %c1_35, %c0_36] : memref<18x18x8xbf16, #tpu.memory_space<vmem>>, vector<16x16x8xbf16>
    %26 = vector.shape_cast %25 : vector<16x16x8xbf16> to vector<256x8xbf16>
    %c1_37 = arith.constant 1 : index
    %c0_38 = arith.constant 0 : index
    %c0_39 = arith.constant 0 : index
    %27 = vector.load %arg2[%c1_37, %c0_38, %c0_39] : memref<9x8x8xbf16, #tpu.memory_space<vmem>>, vector<1x8x8xbf16>
    %28 = vector.shape_cast %27 : vector<1x8x8xbf16> to vector<8x8xbf16>
    %cst_40 = arith.constant dense<0.000000e+00> : vector<256x8xf32>
    %29 = tpu.matmul %26, %28, %cst_40 {dimension_numbers = #tpu.dot_dimension_numbers<[1], [0], [0], [1], [0, 0, 1, 1], [], []>} : vector<256x8xbf16>, vector<8x8xbf16>, vector<256x8xf32> -> vector<256x8xf32>
    %30 = arith.addf %24, %29 : vector<256x8xf32>
    %c0_41 = arith.constant 0 : index
    %c2 = arith.constant 2 : index
    %c0_42 = arith.constant 0 : index
    %31 = vector.load %arg5[%c0_41, %c2, %c0_42] : memref<18x18x8xbf16, #tpu.memory_space<vmem>>, vector<16x16x8xbf16>
    %32 = vector.shape_cast %31 : vector<16x16x8xbf16> to vector<256x8xbf16>
    %c2_43 = arith.constant 2 : index
    %c0_44 = arith.constant 0 : index
    %c0_45 = arith.constant 0 : index
    %33 = vector.load %arg2[%c2_43, %c0_44, %c0_45] : memref<9x8x8xbf16, #tpu.memory_space<vmem>>, vector<1x8x8xbf16>
    %34 = vector.shape_cast %33 : vector<1x8x8xbf16> to vector<8x8xbf16>
    %cst_46 = arith.constant dense<0.000000e+00> : vector<256x8xf32>
    %35 = tpu.matmul %32, %34, %cst_46 {dimension_numbers = #tpu.dot_dimension_numbers<[1], [0], [0], [1], [0, 0, 1, 1], [], []>} : vector<256x8xbf16>, vector<8x8xbf16>, vector<256x8xf32> -> vector<256x8xf32>
    %36 = arith.addf %30, %35 : vector<256x8xf32>
    %c1_47 = arith.constant 1 : index
    %c0_48 = arith.constant 0 : index
    %c0_49 = arith.constant 0 : index
    %37 = vector.load %arg5[%c1_47, %c0_48, %c0_49] : memref<18x18x8xbf16, #tpu.memory_space<vmem>>, vector<16x16x8xbf16>
    %38 = vector.shape_cast %37 : vector<16x16x8xbf16> to vector<256x8xbf16>
    %c3 = arith.constant 3 : index
    %c0_50 = arith.constant 0 : index
    %c0_51 = arith.constant 0 : index
    %39 = vector.load %arg2[%c3, %c0_50, %c0_51] : memref<9x8x8xbf16, #tpu.memory_space<vmem>>, vector<1x8x8xbf16>
    %40 = vector.shape_cast %39 : vector<1x8x8xbf16> to vector<8x8xbf16>
    %cst_52 = arith.constant dense<0.000000e+00> : vector<256x8xf32>
    %41 = tpu.matmul %38, %40, %cst_52 {dimension_numbers = #tpu.dot_dimension_numbers<[1], [0], [0], [1], [0, 0, 1, 1], [], []>} : vector<256x8xbf16>, vector<8x8xbf16>, vector<256x8xf32> -> vector<256x8xf32>
    %42 = arith.addf %36, %41 : vector<256x8xf32>
    %c1_53 = arith.constant 1 : index
    %c1_54 = arith.constant 1 : index
    %c0_55 = arith.constant 0 : index
    %43 = vector.load %arg5[%c1_53, %c1_54, %c0_55] : memref<18x18x8xbf16, #tpu.memory_space<vmem>>, vector<16x16x8xbf16>
    %44 = vector.shape_cast %43 : vector<16x16x8xbf16> to vector<256x8xbf16>
    %c4 = arith.constant 4 : index
    %c0_56 = arith.constant 0 : index
    %c0_57 = arith.constant 0 : index
    %45 = vector.load %arg2[%c4, %c0_56, %c0_57] : memref<9x8x8xbf16, #tpu.memory_space<vmem>>, vector<1x8x8xbf16>
    %46 = vector.shape_cast %45 : vector<1x8x8xbf16> to vector<8x8xbf16>
    %cst_58 = arith.constant dense<0.000000e+00> : vector<256x8xf32>
    %47 = tpu.matmul %44, %46, %cst_58 {dimension_numbers = #tpu.dot_dimension_numbers<[1], [0], [0], [1], [0, 0, 1, 1], [], []>} : vector<256x8xbf16>, vector<8x8xbf16>, vector<256x8xf32> -> vector<256x8xf32>
    %48 = arith.addf %42, %47 : vector<256x8xf32>
    %c1_59 = arith.constant 1 : index
    %c2_60 = arith.constant 2 : index
    %c0_61 = arith.constant 0 : index
    %49 = vector.load %arg5[%c1_59, %c2_60, %c0_61] : memref<18x18x8xbf16, #tpu.memory_space<vmem>>, vector<16x16x8xbf16>
    %50 = vector.shape_cast %49 : vector<16x16x8xbf16> to vector<256x8xbf16>
    %c5 = arith.constant 5 : index
    %c0_62 = arith.constant 0 : index
    %c0_63 = arith.constant 0 : index
    %51 = vector.load %arg2[%c5, %c0_62, %c0_63] : memref<9x8x8xbf16, #tpu.memory_space<vmem>>, vector<1x8x8xbf16>
    %52 = vector.shape_cast %51 : vector<1x8x8xbf16> to vector<8x8xbf16>
    %cst_64 = arith.constant dense<0.000000e+00> : vector<256x8xf32>
    %53 = tpu.matmul %50, %52, %cst_64 {dimension_numbers = #tpu.dot_dimension_numbers<[1], [0], [0], [1], [0, 0, 1, 1], [], []>} : vector<256x8xbf16>, vector<8x8xbf16>, vector<256x8xf32> -> vector<256x8xf32>
    %54 = arith.addf %48, %53 : vector<256x8xf32>
    %c2_65 = arith.constant 2 : index
    %c0_66 = arith.constant 0 : index
    %c0_67 = arith.constant 0 : index
    %55 = vector.load %arg5[%c2_65, %c0_66, %c0_67] : memref<18x18x8xbf16, #tpu.memory_space<vmem>>, vector<16x16x8xbf16>
    %56 = vector.shape_cast %55 : vector<16x16x8xbf16> to vector<256x8xbf16>
    %c6 = arith.constant 6 : index
    %c0_68 = arith.constant 0 : index
    %c0_69 = arith.constant 0 : index
    %57 = vector.load %arg2[%c6, %c0_68, %c0_69] : memref<9x8x8xbf16, #tpu.memory_space<vmem>>, vector<1x8x8xbf16>
    %58 = vector.shape_cast %57 : vector<1x8x8xbf16> to vector<8x8xbf16>
    %cst_70 = arith.constant dense<0.000000e+00> : vector<256x8xf32>
    %59 = tpu.matmul %56, %58, %cst_70 {dimension_numbers = #tpu.dot_dimension_numbers<[1], [0], [0], [1], [0, 0, 1, 1], [], []>} : vector<256x8xbf16>, vector<8x8xbf16>, vector<256x8xf32> -> vector<256x8xf32>
    %60 = arith.addf %54, %59 : vector<256x8xf32>
    %c2_71 = arith.constant 2 : index
    %c1_72 = arith.constant 1 : index
    %c0_73 = arith.constant 0 : index
    %61 = vector.load %arg5[%c2_71, %c1_72, %c0_73] : memref<18x18x8xbf16, #tpu.memory_space<vmem>>, vector<16x16x8xbf16>
    %62 = vector.shape_cast %61 : vector<16x16x8xbf16> to vector<256x8xbf16>
    %c7 = arith.constant 7 : index
    %c0_74 = arith.constant 0 : index
    %c0_75 = arith.constant 0 : index
    %63 = vector.load %arg2[%c7, %c0_74, %c0_75] : memref<9x8x8xbf16, #tpu.memory_space<vmem>>, vector<1x8x8xbf16>
    %64 = vector.shape_cast %63 : vector<1x8x8xbf16> to vector<8x8xbf16>
    %cst_76 = arith.constant dense<0.000000e+00> : vector<256x8xf32>
    %65 = tpu.matmul %62, %64, %cst_76 {dimension_numbers = #tpu.dot_dimension_numbers<[1], [0], [0], [1], [0, 0, 1, 1], [], []>} : vector<256x8xbf16>, vector<8x8xbf16>, vector<256x8xf32> -> vector<256x8xf32>
    %66 = arith.addf %60, %65 : vector<256x8xf32>
    %c2_77 = arith.constant 2 : index
    %c2_78 = arith.constant 2 : index
    %c0_79 = arith.constant 0 : index
    %67 = vector.load %arg5[%c2_77, %c2_78, %c0_79] : memref<18x18x8xbf16, #tpu.memory_space<vmem>>, vector<16x16x8xbf16>
    %68 = vector.shape_cast %67 : vector<16x16x8xbf16> to vector<256x8xbf16>
    %c8 = arith.constant 8 : index
    %c0_80 = arith.constant 0 : index
    %c0_81 = arith.constant 0 : index
    %69 = vector.load %arg2[%c8, %c0_80, %c0_81] : memref<9x8x8xbf16, #tpu.memory_space<vmem>>, vector<1x8x8xbf16>
    %70 = vector.shape_cast %69 : vector<1x8x8xbf16> to vector<8x8xbf16>
    %cst_82 = arith.constant dense<0.000000e+00> : vector<256x8xf32>
    %71 = tpu.matmul %68, %70, %cst_82 {dimension_numbers = #tpu.dot_dimension_numbers<[1], [0], [0], [1], [0, 0, 1, 1], [], []>} : vector<256x8xbf16>, vector<8x8xbf16>, vector<256x8xf32> -> vector<256x8xf32>
    %72 = arith.addf %66, %71 : vector<256x8xf32>
    %cst_83 = arith.constant dense<0.000000e+00> : vector<8xf32>
    %73 = vector.multi_reduction <add>, %72, %cst_83 [0] : vector<256x8xf32> to vector<8xf32>
    %74 = vector.shape_cast %73 : vector<8xf32> to vector<1x8xf32>
    %75 = arith.mulf %72, %72 : vector<256x8xf32>
    %cst_84 = arith.constant dense<0.000000e+00> : vector<8xf32>
    %76 = vector.multi_reduction <add>, %75, %cst_84 [0] : vector<256x8xf32> to vector<8xf32>
    %77 = vector.shape_cast %76 : vector<8xf32> to vector<1x8xf32>
    %cst_85 = arith.constant 3.906250e-03 : f32
    %78 = vector.broadcast %cst_85 : f32 to vector<1x8xf32>
    %79 = arith.mulf %74, %78 : vector<1x8xf32>
    %cst_86 = arith.constant 3.906250e-03 : f32
    %80 = vector.broadcast %cst_86 : f32 to vector<1x8xf32>
    %81 = arith.mulf %77, %80 : vector<1x8xf32>
    %82 = arith.mulf %79, %79 : vector<1x8xf32>
    %83 = arith.subf %81, %82 : vector<1x8xf32>
    %84 = vector.broadcast %79 : vector<1x8xf32> to vector<256x8xf32>
    %85 = arith.subf %72, %84 : vector<256x8xf32>
    %cst_87 = arith.constant 9.99999974E-6 : f32
    %86 = vector.broadcast %cst_87 : f32 to vector<1x8xf32>
    %87 = arith.addf %83, %86 : vector<1x8xf32>
    %88 = math.rsqrt %87 : vector<1x8xf32>
    %89 = vector.broadcast %88 : vector<1x8xf32> to vector<256x8xf32>
    %90 = arith.mulf %85, %89 : vector<256x8xf32>
    %cst_88 = arith.constant 0.000000e+00 : f32
    %91 = vector.broadcast %cst_88 : f32 to vector<256x8xf32>
    %92 = arith.maximumf %90, %91 : vector<256x8xf32>
    %93 = arith.truncf %92 : vector<256x8xf32> to vector<256x8xbf16>
    %94 = vector.shape_cast %93 : vector<256x8xbf16> to vector<16x16x8xbf16>
    %c1_89 = arith.constant 1 : index
    %c1_90 = arith.constant 1 : index
    %c0_91 = arith.constant 0 : index
    %95 = vector.load %arg6[%c1_89, %c1_90, %c0_91] : memref<18x18x8xbf16, #tpu.memory_space<vmem>>, vector<16x16x8xbf16>
    tpu.vector_store %arg6[%c1_89, %c1_90, %c0_91], %94 {strides = array<i32>} : memref<18x18x8xbf16, #tpu.memory_space<vmem>>, vector<16x16x8xbf16>,
    %96 = vector.extract_strided_slice %94 {offsets = [1, 0, 0], sizes = [1, 16, 8], strides = [1, 1, 1]} : vector<16x16x8xbf16> to vector<1x16x8xbf16>
    %c0_92 = arith.constant 0 : index
    %c1_93 = arith.constant 1 : index
    %c0_94 = arith.constant 0 : index
    %97 = vector.load %arg6[%c0_92, %c1_93, %c0_94] : memref<18x18x8xbf16, #tpu.memory_space<vmem>>, vector<1x16x8xbf16>
    tpu.vector_store %arg6[%c0_92, %c1_93, %c0_94], %96 {strides = array<i32>} : memref<18x18x8xbf16, #tpu.memory_space<vmem>>, vector<1x16x8xbf16>,
    %98 = vector.extract_strided_slice %94 {offsets = [14, 0, 0], sizes = [1, 16, 8], strides = [1, 1, 1]} : vector<16x16x8xbf16> to vector<1x16x8xbf16>
    %c17_95 = arith.constant 17 : index
    %c1_96 = arith.constant 1 : index
    %c0_97 = arith.constant 0 : index
    %99 = vector.load %arg6[%c17_95, %c1_96, %c0_97] : memref<18x18x8xbf16, #tpu.memory_space<vmem>>, vector<1x16x8xbf16>
    tpu.vector_store %arg6[%c17_95, %c1_96, %c0_97], %98 {strides = array<i32>} : memref<18x18x8xbf16, #tpu.memory_space<vmem>>, vector<1x16x8xbf16>,
    %100 = vector.extract_strided_slice %94 {offsets = [0, 1, 0], sizes = [16, 1, 8], strides = [1, 1, 1]} : vector<16x16x8xbf16> to vector<16x1x8xbf16>
    %c1_98 = arith.constant 1 : index
    %c0_99 = arith.constant 0 : index
    %c0_100 = arith.constant 0 : index
    %101 = vector.load %arg6[%c1_98, %c0_99, %c0_100] : memref<18x18x8xbf16, #tpu.memory_space<vmem>>, vector<16x1x8xbf16>
    tpu.vector_store %arg6[%c1_98, %c0_99, %c0_100], %100 {strides = array<i32>} : memref<18x18x8xbf16, #tpu.memory_space<vmem>>, vector<16x1x8xbf16>,
    %102 = vector.extract_strided_slice %94 {offsets = [0, 14, 0], sizes = [16, 1, 8], strides = [1, 1, 1]} : vector<16x16x8xbf16> to vector<16x1x8xbf16>
    %c1_101 = arith.constant 1 : index
    %c17_102 = arith.constant 17 : index
    %c0_103 = arith.constant 0 : index
    %103 = vector.load %arg6[%c1_101, %c17_102, %c0_103] : memref<18x18x8xbf16, #tpu.memory_space<vmem>>, vector<16x1x8xbf16>
    tpu.vector_store %arg6[%c1_101, %c17_102, %c0_103], %102 {strides = array<i32>} : memref<18x18x8xbf16, #tpu.memory_space<vmem>>, vector<16x1x8xbf16>,
    %104 = vector.extract_strided_slice %94 {offsets = [1, 1, 0], sizes = [1, 1, 8], strides = [1, 1, 1]} : vector<16x16x8xbf16> to vector<1x1x8xbf16>
    %c0_104 = arith.constant 0 : index
    %c0_105 = arith.constant 0 : index
    %c0_106 = arith.constant 0 : index
    %105 = vector.load %arg6[%c0_104, %c0_105, %c0_106] : memref<18x18x8xbf16, #tpu.memory_space<vmem>>, vector<1x1x8xbf16>
    tpu.vector_store %arg6[%c0_104, %c0_105, %c0_106], %104 {strides = array<i32>} : memref<18x18x8xbf16, #tpu.memory_space<vmem>>, vector<1x1x8xbf16>,
    %106 = vector.extract_strided_slice %94 {offsets = [1, 14, 0], sizes = [1, 1, 8], strides = [1, 1, 1]} : vector<16x16x8xbf16> to vector<1x1x8xbf16>
    %c0_107 = arith.constant 0 : index
    %c17_108 = arith.constant 17 : index
    %c0_109 = arith.constant 0 : index
    %107 = vector.load %arg6[%c0_107, %c17_108, %c0_109] : memref<18x18x8xbf16, #tpu.memory_space<vmem>>, vector<1x1x8xbf16>
    tpu.vector_store %arg6[%c0_107, %c17_108, %c0_109], %106 {strides = array<i32>} : memref<18x18x8xbf16, #tpu.memory_space<vmem>>, vector<1x1x8xbf16>,
    %108 = vector.extract_strided_slice %94 {offsets = [14, 1, 0], sizes = [1, 1, 8], strides = [1, 1, 1]} : vector<16x16x8xbf16> to vector<1x1x8xbf16>
    %c17_110 = arith.constant 17 : index
    %c0_111 = arith.constant 0 : index
    %c0_112 = arith.constant 0 : index
    %109 = vector.load %arg6[%c17_110, %c0_111, %c0_112] : memref<18x18x8xbf16, #tpu.memory_space<vmem>>, vector<1x1x8xbf16>
    tpu.vector_store %arg6[%c17_110, %c0_111, %c0_112], %108 {strides = array<i32>} : memref<18x18x8xbf16, #tpu.memory_space<vmem>>, vector<1x1x8xbf16>,
    %110 = vector.extract_strided_slice %94 {offsets = [14, 14, 0], sizes = [1, 1, 8], strides = [1, 1, 1]} : vector<16x16x8xbf16> to vector<1x1x8xbf16>
    %c17_113 = arith.constant 17 : index
    %c17_114 = arith.constant 17 : index
    %c0_115 = arith.constant 0 : index
    %111 = vector.load %arg6[%c17_113, %c17_114, %c0_115] : memref<18x18x8xbf16, #tpu.memory_space<vmem>>, vector<1x1x8xbf16>
    tpu.vector_store %arg6[%c17_113, %c17_114, %c0_115], %110 {strides = array<i32>} : memref<18x18x8xbf16, #tpu.memory_space<vmem>>, vector<1x1x8xbf16>,
    %c0_116 = arith.constant 0 : index
    %c0_117 = arith.constant 0 : index
    %c0_118 = arith.constant 0 : index
    %112 = vector.load %arg6[%c0_116, %c0_117, %c0_118] : memref<18x18x8xbf16, #tpu.memory_space<vmem>>, vector<16x16x8xbf16>
    %113 = vector.shape_cast %112 : vector<16x16x8xbf16> to vector<256x8xbf16>
    %c0_119 = arith.constant 0 : index
    %c0_120 = arith.constant 0 : index
    %c0_121 = arith.constant 0 : index
    %114 = vector.load %arg3[%c0_119, %c0_120, %c0_121] : memref<9x8x8xbf16, #tpu.memory_space<vmem>>, vector<1x8x8xbf16>
    %115 = vector.shape_cast %114 : vector<1x8x8xbf16> to vector<8x8xbf16>
    %cst_122 = arith.constant dense<0.000000e+00> : vector<256x8xf32>
    %116 = tpu.matmul %113, %115, %cst_122 {dimension_numbers = #tpu.dot_dimension_numbers<[1], [0], [0], [1], [0, 0, 1, 1], [], []>} : vector<256x8xbf16>, vector<8x8xbf16>, vector<256x8xf32> -> vector<256x8xf32>
    %c0_123 = arith.constant 0 : index
    %c1_124 = arith.constant 1 : index
    %c0_125 = arith.constant 0 : index
    %117 = vector.load %arg6[%c0_123, %c1_124, %c0_125] : memref<18x18x8xbf16, #tpu.memory_space<vmem>>, vector<16x16x8xbf16>
    %118 = vector.shape_cast %117 : vector<16x16x8xbf16> to vector<256x8xbf16>
    %c1_126 = arith.constant 1 : index
    %c0_127 = arith.constant 0 : index
    %c0_128 = arith.constant 0 : index
    %119 = vector.load %arg3[%c1_126, %c0_127, %c0_128] : memref<9x8x8xbf16, #tpu.memory_space<vmem>>, vector<1x8x8xbf16>
    %120 = vector.shape_cast %119 : vector<1x8x8xbf16> to vector<8x8xbf16>
    %cst_129 = arith.constant dense<0.000000e+00> : vector<256x8xf32>
    %121 = tpu.matmul %118, %120, %cst_129 {dimension_numbers = #tpu.dot_dimension_numbers<[1], [0], [0], [1], [0, 0, 1, 1], [], []>} : vector<256x8xbf16>, vector<8x8xbf16>, vector<256x8xf32> -> vector<256x8xf32>
    %122 = arith.addf %116, %121 : vector<256x8xf32>
    %c0_130 = arith.constant 0 : index
    %c2_131 = arith.constant 2 : index
    %c0_132 = arith.constant 0 : index
    %123 = vector.load %arg6[%c0_130, %c2_131, %c0_132] : memref<18x18x8xbf16, #tpu.memory_space<vmem>>, vector<16x16x8xbf16>
    %124 = vector.shape_cast %123 : vector<16x16x8xbf16> to vector<256x8xbf16>
    %c2_133 = arith.constant 2 : index
    %c0_134 = arith.constant 0 : index
    %c0_135 = arith.constant 0 : index
    %125 = vector.load %arg3[%c2_133, %c0_134, %c0_135] : memref<9x8x8xbf16, #tpu.memory_space<vmem>>, vector<1x8x8xbf16>
    %126 = vector.shape_cast %125 : vector<1x8x8xbf16> to vector<8x8xbf16>
    %cst_136 = arith.constant dense<0.000000e+00> : vector<256x8xf32>
    %127 = tpu.matmul %124, %126, %cst_136 {dimension_numbers = #tpu.dot_dimension_numbers<[1], [0], [0], [1], [0, 0, 1, 1], [], []>} : vector<256x8xbf16>, vector<8x8xbf16>, vector<256x8xf32> -> vector<256x8xf32>
    %128 = arith.addf %122, %127 : vector<256x8xf32>
    %c1_137 = arith.constant 1 : index
    %c0_138 = arith.constant 0 : index
    %c0_139 = arith.constant 0 : index
    %129 = vector.load %arg6[%c1_137, %c0_138, %c0_139] : memref<18x18x8xbf16, #tpu.memory_space<vmem>>, vector<16x16x8xbf16>
    %130 = vector.shape_cast %129 : vector<16x16x8xbf16> to vector<256x8xbf16>
    %c3_140 = arith.constant 3 : index
    %c0_141 = arith.constant 0 : index
    %c0_142 = arith.constant 0 : index
    %131 = vector.load %arg3[%c3_140, %c0_141, %c0_142] : memref<9x8x8xbf16, #tpu.memory_space<vmem>>, vector<1x8x8xbf16>
    %132 = vector.shape_cast %131 : vector<1x8x8xbf16> to vector<8x8xbf16>
    %cst_143 = arith.constant dense<0.000000e+00> : vector<256x8xf32>
    %133 = tpu.matmul %130, %132, %cst_143 {dimension_numbers = #tpu.dot_dimension_numbers<[1], [0], [0], [1], [0, 0, 1, 1], [], []>} : vector<256x8xbf16>, vector<8x8xbf16>, vector<256x8xf32> -> vector<256x8xf32>
    %134 = arith.addf %128, %133 : vector<256x8xf32>
    %c1_144 = arith.constant 1 : index
    %c1_145 = arith.constant 1 : index
    %c0_146 = arith.constant 0 : index
    %135 = vector.load %arg6[%c1_144, %c1_145, %c0_146] : memref<18x18x8xbf16, #tpu.memory_space<vmem>>, vector<16x16x8xbf16>
    %136 = vector.shape_cast %135 : vector<16x16x8xbf16> to vector<256x8xbf16>
    %c4_147 = arith.constant 4 : index
    %c0_148 = arith.constant 0 : index
    %c0_149 = arith.constant 0 : index
    %137 = vector.load %arg3[%c4_147, %c0_148, %c0_149] : memref<9x8x8xbf16, #tpu.memory_space<vmem>>, vector<1x8x8xbf16>
    %138 = vector.shape_cast %137 : vector<1x8x8xbf16> to vector<8x8xbf16>
    %cst_150 = arith.constant dense<0.000000e+00> : vector<256x8xf32>
    %139 = tpu.matmul %136, %138, %cst_150 {dimension_numbers = #tpu.dot_dimension_numbers<[1], [0], [0], [1], [0, 0, 1, 1], [], []>} : vector<256x8xbf16>, vector<8x8xbf16>, vector<256x8xf32> -> vector<256x8xf32>
    %140 = arith.addf %134, %139 : vector<256x8xf32>
    %c1_151 = arith.constant 1 : index
    %c2_152 = arith.constant 2 : index
    %c0_153 = arith.constant 0 : index
    %141 = vector.load %arg6[%c1_151, %c2_152, %c0_153] : memref<18x18x8xbf16, #tpu.memory_space<vmem>>, vector<16x16x8xbf16>
    %142 = vector.shape_cast %141 : vector<16x16x8xbf16> to vector<256x8xbf16>
    %c5_154 = arith.constant 5 : index
    %c0_155 = arith.constant 0 : index
    %c0_156 = arith.constant 0 : index
    %143 = vector.load %arg3[%c5_154, %c0_155, %c0_156] : memref<9x8x8xbf16, #tpu.memory_space<vmem>>, vector<1x8x8xbf16>
    %144 = vector.shape_cast %143 : vector<1x8x8xbf16> to vector<8x8xbf16>
    %cst_157 = arith.constant dense<0.000000e+00> : vector<256x8xf32>
    %145 = tpu.matmul %142, %144, %cst_157 {dimension_numbers = #tpu.dot_dimension_numbers<[1], [0], [0], [1], [0, 0, 1, 1], [], []>} : vector<256x8xbf16>, vector<8x8xbf16>, vector<256x8xf32> -> vector<256x8xf32>
    %146 = arith.addf %140, %145 : vector<256x8xf32>
    %c2_158 = arith.constant 2 : index
    %c0_159 = arith.constant 0 : index
    %c0_160 = arith.constant 0 : index
    %147 = vector.load %arg6[%c2_158, %c0_159, %c0_160] : memref<18x18x8xbf16, #tpu.memory_space<vmem>>, vector<16x16x8xbf16>
    %148 = vector.shape_cast %147 : vector<16x16x8xbf16> to vector<256x8xbf16>
    %c6_161 = arith.constant 6 : index
    %c0_162 = arith.constant 0 : index
    %c0_163 = arith.constant 0 : index
    %149 = vector.load %arg3[%c6_161, %c0_162, %c0_163] : memref<9x8x8xbf16, #tpu.memory_space<vmem>>, vector<1x8x8xbf16>
    %150 = vector.shape_cast %149 : vector<1x8x8xbf16> to vector<8x8xbf16>
    %cst_164 = arith.constant dense<0.000000e+00> : vector<256x8xf32>
    %151 = tpu.matmul %148, %150, %cst_164 {dimension_numbers = #tpu.dot_dimension_numbers<[1], [0], [0], [1], [0, 0, 1, 1], [], []>} : vector<256x8xbf16>, vector<8x8xbf16>, vector<256x8xf32> -> vector<256x8xf32>
    %152 = arith.addf %146, %151 : vector<256x8xf32>
    %c2_165 = arith.constant 2 : index
    %c1_166 = arith.constant 1 : index
    %c0_167 = arith.constant 0 : index
    %153 = vector.load %arg6[%c2_165, %c1_166, %c0_167] : memref<18x18x8xbf16, #tpu.memory_space<vmem>>, vector<16x16x8xbf16>
    %154 = vector.shape_cast %153 : vector<16x16x8xbf16> to vector<256x8xbf16>
    %c7_168 = arith.constant 7 : index
    %c0_169 = arith.constant 0 : index
    %c0_170 = arith.constant 0 : index
    %155 = vector.load %arg3[%c7_168, %c0_169, %c0_170] : memref<9x8x8xbf16, #tpu.memory_space<vmem>>, vector<1x8x8xbf16>
    %156 = vector.shape_cast %155 : vector<1x8x8xbf16> to vector<8x8xbf16>
    %cst_171 = arith.constant dense<0.000000e+00> : vector<256x8xf32>
    %157 = tpu.matmul %154, %156, %cst_171 {dimension_numbers = #tpu.dot_dimension_numbers<[1], [0], [0], [1], [0, 0, 1, 1], [], []>} : vector<256x8xbf16>, vector<8x8xbf16>, vector<256x8xf32> -> vector<256x8xf32>
    %158 = arith.addf %152, %157 : vector<256x8xf32>
    %c2_172 = arith.constant 2 : index
    %c2_173 = arith.constant 2 : index
    %c0_174 = arith.constant 0 : index
    %159 = vector.load %arg6[%c2_172, %c2_173, %c0_174] : memref<18x18x8xbf16, #tpu.memory_space<vmem>>, vector<16x16x8xbf16>
    %160 = vector.shape_cast %159 : vector<16x16x8xbf16> to vector<256x8xbf16>
    %c8_175 = arith.constant 8 : index
    %c0_176 = arith.constant 0 : index
    %c0_177 = arith.constant 0 : index
    %161 = vector.load %arg3[%c8_175, %c0_176, %c0_177] : memref<9x8x8xbf16, #tpu.memory_space<vmem>>, vector<1x8x8xbf16>
    %162 = vector.shape_cast %161 : vector<1x8x8xbf16> to vector<8x8xbf16>
    %cst_178 = arith.constant dense<0.000000e+00> : vector<256x8xf32>
    %163 = tpu.matmul %160, %162, %cst_178 {dimension_numbers = #tpu.dot_dimension_numbers<[1], [0], [0], [1], [0, 0, 1, 1], [], []>} : vector<256x8xbf16>, vector<8x8xbf16>, vector<256x8xf32> -> vector<256x8xf32>
    %164 = arith.addf %158, %163 : vector<256x8xf32>
    %cst_179 = arith.constant dense<0.000000e+00> : vector<8xf32>
    %165 = vector.multi_reduction <add>, %164, %cst_179 [0] : vector<256x8xf32> to vector<8xf32>
    %166 = vector.shape_cast %165 : vector<8xf32> to vector<1x8xf32>
    %167 = arith.mulf %164, %164 : vector<256x8xf32>
    %cst_180 = arith.constant dense<0.000000e+00> : vector<8xf32>
    %168 = vector.multi_reduction <add>, %167, %cst_180 [0] : vector<256x8xf32> to vector<8xf32>
    %169 = vector.shape_cast %168 : vector<8xf32> to vector<1x8xf32>
    %cst_181 = arith.constant 3.906250e-03 : f32
    %170 = vector.broadcast %cst_181 : f32 to vector<1x8xf32>
    %171 = arith.mulf %166, %170 : vector<1x8xf32>
    %cst_182 = arith.constant 3.906250e-03 : f32
    %172 = vector.broadcast %cst_182 : f32 to vector<1x8xf32>
    %173 = arith.mulf %169, %172 : vector<1x8xf32>
    %174 = arith.mulf %171, %171 : vector<1x8xf32>
    %175 = arith.subf %173, %174 : vector<1x8xf32>
    %176 = vector.broadcast %171 : vector<1x8xf32> to vector<256x8xf32>
    %177 = arith.subf %164, %176 : vector<256x8xf32>
    %cst_183 = arith.constant 9.99999974E-6 : f32
    %178 = vector.broadcast %cst_183 : f32 to vector<1x8xf32>
    %179 = arith.addf %175, %178 : vector<1x8xf32>
    %180 = math.rsqrt %179 : vector<1x8xf32>
    %181 = vector.broadcast %180 : vector<1x8xf32> to vector<256x8xf32>
    %182 = arith.mulf %177, %181 : vector<256x8xf32>
    %183 = vector.shape_cast %182 : vector<256x8xf32> to vector<16x16x8xf32>
    %c0_184 = arith.constant 0 : index
    %c0_185 = arith.constant 0 : index
    %c0_186 = arith.constant 0 : index
    %c0_187 = arith.constant 0 : index
    %184 = vector.load %arg1[%c0_184, %c0_185, %c0_186, %c0_187] : memref<1x16x16x8xf32, #tpu.memory_space<vmem>>, vector<1x16x16x8xf32>
    %185 = vector.shape_cast %184 : vector<1x16x16x8xf32> to vector<16x16x8xf32>
    %186 = arith.addf %185, %183 : vector<16x16x8xf32>
    %c0_188 = arith.constant 0 : index
    %c0_189 = arith.constant 0 : index
    %c0_190 = arith.constant 0 : index
    %c0_191 = arith.constant 0 : index
    %187 = vector.load %arg4[%c0_188, %c0_189, %c0_190, %c0_191] : memref<1x16x16x8xf32, #tpu.memory_space<vmem>>, vector<1x16x16x8xf32>
    %188 = vector.shape_cast %187 : vector<1x16x16x8xf32> to vector<16x16x8xf32>
    %189 = vector.shape_cast %186 : vector<16x16x8xf32> to vector<1x16x16x8xf32>
    tpu.vector_store %arg4[%c0_188, %c0_189, %c0_190, %c0_191], %189 {strides = array<i32>} : memref<1x16x16x8xf32, #tpu.memory_space<vmem>>, vector<1x16x16x8xf32>,
    return
  }
  func.func @transform_0(%arg0: i32) -> (i32, i32, i32, i32) {
    %c0_i32 = arith.constant 0 : i32
    %c0_i32_0 = arith.constant 0 : i32
    %c0_i32_1 = arith.constant 0 : i32
    %c0_i32_2 = arith.constant 0 : i32
    return %arg0, %c0_i32, %c0_i32_0, %c0_i32_1 : i32, i32, i32, i32
  }
  func.func @transform_1(%arg0: i32) -> (i32, i32, i32) {
    %c0_i32 = arith.constant 0 : i32
    %c0_i32_0 = arith.constant 0 : i32
    %c0_i32_1 = arith.constant 0 : i32
    %c0_i32_2 = arith.constant 0 : i32
    return %c0_i32, %c0_i32_0, %c0_i32_1 : i32, i32, i32
  }
  func.func @transform_2(%arg0: i32) -> (i32, i32, i32) {
    %c0_i32 = arith.constant 0 : i32
    %c0_i32_0 = arith.constant 0 : i32
    %c0_i32_1 = arith.constant 0 : i32
    %c0_i32_2 = arith.constant 0 : i32
    return %c0_i32, %c0_i32_0, %c0_i32_1 : i32, i32, i32
  }
  func.func @transform_3(%arg0: i32) -> (i32, i32, i32, i32) {
    %c0_i32 = arith.constant 0 : i32
    %c0_i32_0 = arith.constant 0 : i32
    %c0_i32_1 = arith.constant 0 : i32
    %c0_i32_2 = arith.constant 0 : i32
    return %arg0, %c0_i32, %c0_i32_0, %c0_i32_1 : i32, i32, i32, i32
  }
}

</mosaic_0001>

<llo_original>
// kernel: tpu_custom_call.1
$region0: #{tpu_custom_call.1}
  #allocation0 [shape = 'u32[]', space=smem, size = 0x4, offset = 0x4, fixed_abs, tag = 'smem constant byte address 0x4 - core index']
  #allocation1 [shape = 'u32[144,128]{1,0:T(1,128)}', space=vmem, size = 0x12000, scoped, tag = 'internal scratch']
  #allocation2 [shape = 'bf16[18,18,8]{2,1,0:T(8,128)(2,1)}', space=vmem, size = 0x1b000, scoped, tag = 'scratch operand']
  #allocation3 [shape = 'bf16[18,18,8]{2,1,0:T(8,128)(2,1)}', space=vmem, size = 0x1b000, scoped, tag = 'scratch operand']
  %s0 = inlined_call_operand.vmem [shape: f32[2,16,16,8], index: 0, kind: input, shape index: {}]
  %s1 = inlined_call_operand.vmem [shape: bf16[9,8,8], index: 1, kind: input, shape index: {}]
  %s2 = inlined_call_operand.vmem [shape: bf16[9,8,8], index: 2, kind: input, shape index: {}]
  %s3 = inlined_call_operand.vmem [shape: f32[2,16,16,8], index: 3, kind: output, shape index: {}]
  %s4 = sld [smem:[#allocation0]]
  $region45: #{tpu_custom_call.1} parent=0
    _
  %s6 = ssub.s32 1, %s4
  %s7 = scalar_select 0, %s6, %s4
  loop: start=0, step=1, limit=4
  $region2: #{tpu_custom_call.1} parent=0 // loop_pre_header
    _
  $region3: #{tpu_custom_call.1} parent=0 // loop_header
    %s9 = sphi 0, %s13
    %p10 = scmp.ge.s32.totalorder %s9, 4
    %s19 = sphi 0, %s21
    %s22 = sphi 0, %s19
    %s23 = sphi 0, %s22
    %s39 = sphi 0, %s23
    %s43 = sphi 0, %s43
    %s45 = sphi 0, %s43
    %s46 = sphi 0, %s45
    %s60 = sphi 0, %s46
    %s64 = sphi 0, %s64
    %s66 = sphi 0, %s64
    %s67 = sphi 0, %s66
    %s81 = sphi 0, %s67
    %s87 = sphi 0, %s89
    %s90 = sphi 0, %s87
    %s91 = sphi 0, %s90
    %s107 = sphi 0, %s91
  $region4: #{tpu_custom_call.1} parent=0 // loop_header_branch
    %12 = sbr.rel (%p10) target = $region8
  $region5: #{tpu_custom_call.1} parent=0 // loop_body
    %s14 = ssub.s32 %s9, 1
    %s15 = ssub.s32 %s9, 2
    %s16 = sadd.s32 %s9, 1
    %s17 = ssub.s32 %s9, %s16
    %p18 = scmp.eq.s32.totalorder %s17, 0
    %s20 = sadd.s32 %s19, 1
    %s21 = scalar_select %p18, %s19, %s20
    %p24 = pneg %p18
    %p25 = scmp.eq.s32.totalorder %s9, 1
    %p26 = por %p24, %p25
    %p27 = scmp.ne.s32.totalorder %s19, %s22
    %p28 = scmp.eq.s32.totalorder %s9, 0
    %p29 = por %p27, %p28
    %p30 = scmp.ne.s32.totalorder %s19, %s22
    %p31 = scmp.eq.s32.totalorder %s14, 1
    %p32 = por %p30, %p31
    %p33 = scmp.ne.s32.totalorder %s22, %s23
    %p34 = scmp.eq.s32.totalorder %s14, 0
    %p35 = por %p33, %p34
    %p36 = scmp.ne.s32.totalorder %s22, %s23
    %p37 = scmp.eq.s32.totalorder %s15, 1
    %p38 = por %p36, %p37
    %p40 = scmp.ne.s32.totalorder %s23, %s39
    %p41 = scmp.eq.s32.totalorder %s15, 0
    %p42 = por %p40, %p41
    %s44 = sadd.s32 %s43, 1
    %p47 = scmp.eq.s32.totalorder %s9, 1
    %p48 = scmp.ne.s32.totalorder %s43, %s45
    %p49 = scmp.eq.s32.totalorder %s9, 0
    %p50 = por %p48, %p49
    %p51 = scmp.ne.s32.totalorder %s43, %s45
    %p52 = scmp.eq.s32.totalorder %s14, 1
    %p53 = por %p51, %p52
    %p54 = scmp.ne.s32.totalorder %s45, %s46
    %p55 = scmp.eq.s32.totalorder %s14, 0
    %p56 = por %p54, %p55
    %p57 = scmp.ne.s32.totalorder %s45, %s46
    %p58 = scmp.eq.s32.totalorder %s15, 1
    %p59 = por %p57, %p58
    %p61 = scmp.ne.s32.totalorder %s46, %s60
    %p62 = scmp.eq.s32.totalorder %s15, 0
    %p63 = por %p61, %p62
    %s65 = sadd.s32 %s64, 1
    %p68 = scmp.eq.s32.totalorder %s9, 1
    %p69 = scmp.ne.s32.totalorder %s64, %s66
    %p70 = scmp.eq.s32.totalorder %s9, 0
    %p71 = por %p69, %p70
    %p72 = scmp.ne.s32.totalorder %s64, %s66
    %p73 = scmp.eq.s32.totalorder %s14, 1
    %p74 = por %p72, %p73
    %p75 = scmp.ne.s32.totalorder %s66, %s67
    %p76 = scmp.eq.s32.totalorder %s14, 0
    %p77 = por %p75, %p76
    %p78 = scmp.ne.s32.totalorder %s66, %s67
    %p79 = scmp.eq.s32.totalorder %s15, 1
    %p80 = por %p78, %p79
    %p82 = scmp.ne.s32.totalorder %s67, %s81
    %p83 = scmp.eq.s32.totalorder %s15, 0
    %p84 = por %p82, %p83
    %s85 = ssub.s32 %s9, %s16
    %p86 = scmp.eq.s32.totalorder %s85, 0
    %s88 = sadd.s32 %s87, 1
    %s89 = scalar_select %p86, %s87, %s88
    %p92 = pneg %p86
    %p93 = scmp.eq.s32.totalorder %s9, 1
    %p94 = por %p92, %p93
    %p95 = scmp.ne.s32.totalorder %s87, %s90
    %p96 = scmp.eq.s32.totalorder %s9, 0
    %p97 = por %p95, %p96
    %p98 = scmp.ne.s32.totalorder %s87, %s90
    %p99 = scmp.eq.s32.totalorder %s14, 1
    %p100 = por %p98, %p99
    %p101 = scmp.ne.s32.totalorder %s90, %s91
    %p102 = scmp.eq.s32.totalorder %s14, 0
    %p103 = por %p101, %p102
    %p104 = scmp.ne.s32.totalorder %s90, %s91
    %p105 = scmp.eq.s32.totalorder %s15, 1
    %p106 = por %p104, %p105
    %p108 = scmp.ne.s32.totalorder %s91, %s107
    %p109 = scmp.eq.s32.totalorder %s15, 0
    %p110 = por %p108, %p109
    %p111 = scmp.le.s32.totalorder 1, %s9
    %p112 = scmp.lt.s32.totalorder %s9, 3
    %p113 = pnand %p111, %p112
    %p114 = pneg %p113
    // Predicated region
    $region9: #{tpu_custom_call.1} parent=5 // pred_check
      _
    $region10: #{tpu_custom_call.1} parent=5 // pred_check_branch
      %116 = sbr.rel (%p113) target = $region12
    $region11: #{tpu_custom_call.1} parent=5 // pred_region
      %s117 = ssub.s32 %s9, 1
      // Predicated region
      $region13: #{tpu_custom_call.1} parent=11 // pred_check
        %p118 = pneg %p56
      $region14: #{tpu_custom_call.1} parent=11 // pred_check_branch
        %120 = sbr.rel (%p118) target = $region16
      $region15: #{tpu_custom_call.1} parent=11 // pred_region
        _
      $region16: #{tpu_custom_call.1} parent=11 // pred_fallthru
        _
      // Predicated region
      $region17: #{tpu_custom_call.1} parent=11 // pred_check
        %p121 = pneg %p77
      $region18: #{tpu_custom_call.1} parent=11 // pred_check_branch
        %123 = sbr.rel (%p121) target = $region20
      $region19: #{tpu_custom_call.1} parent=11 // pred_region
        _
      $region20: #{tpu_custom_call.1} parent=11 // pred_fallthru
        _
    $region12: #{tpu_custom_call.1} parent=5 // pred_fallthru
      _
    %p124 = scmp.lt.s32.totalorder %s9, 2
    // Predicated region
    $region21: #{tpu_custom_call.1} parent=5 // pred_check
      %p125 = pneg %p124
    $region22: #{tpu_custom_call.1} parent=5 // pred_check_branch
      %127 = sbr.rel (%p125) target = $region24
    $region23: #{tpu_custom_call.1} parent=5 // pred_region
      // Predicated region
      $region25: #{tpu_custom_call.1} parent=23 // pred_check
        %p128 = pneg %p29
      $region26: #{tpu_custom_call.1} parent=23 // pred_check_branch
        %130 = sbr.rel (%p128) target = $region28
      $region27: #{tpu_custom_call.1} parent=23 // pred_region
        %p131 = scmp.lt.s32.totalorder %s9, 1
        %s132 = scalar_select %p131, %s9, 1
        %s133 = smul.addr %s132, 32
        %s134 = smul.addr %s133, 8
        %s135 = scalar_lea.vmem %s0, %s134
      $region28: #{tpu_custom_call.1} parent=23 // pred_fallthru
        _
    $region24: #{tpu_custom_call.1} parent=5 // pred_fallthru
      _
    %p136 = scmp.le.s32.totalorder 1, %s9
    %p137 = scmp.lt.s32.totalorder %s9, 3
    %p138 = pnand %p136, %p137
    %p139 = pneg %p138
    // Predicated region
    $region29: #{tpu_custom_call.1} parent=5 // pred_check
      _
    $region30: #{tpu_custom_call.1} parent=5 // pred_check_branch
      %141 = sbr.rel (%p138) target = $region32
    $region31: #{tpu_custom_call.1} parent=5 // pred_region
      %s142 = ssub.s32 %s9, 1
      %p143 = scmp.lt.s32.totalorder %s14, 1
      %s144 = scalar_select %p143, %s14, 1
      %s145 = smul.addr %s144, 32
      %s146 = smul.addr %s145, 8
      %s147 = scalar_lea.vmem %s0, %s146
      %p148 = pneg %p35
      %p149 = pneg %p32
      %p150 = pneg %p56
      %p151 = pneg %p53
      %p152 = pneg %p77
      %p153 = pneg %p74
      %p154 = pneg %p103
      %p155 = pneg %p100
      %p156 = scmp.lt.s32.totalorder %s14, 1
      %s157 = scalar_select %p156, %s14, 1
      %s158 = smul.addr %s157, 32
      %s159 = smul.addr %s158, 8
      %s160 = scalar_lea.vmem %s3, %s159
      %p161 = scmp.lt.s32.totalorder %s14, 1
      %s162 = scalar_select %p161, %s14, 1
      %s163 = smul.addr %s162, 32
      %s164 = smul.addr %s163, 8
      %s165 = scalar_lea.vmem %s0, %s164
      %p166 = scmp.lt.s32.totalorder %s14, 1
      %s167 = scalar_select %p166, %s14, 1
      %s168 = smul.addr %s167, 32
      %s169 = smul.addr %s168, 8
      %s170 = scalar_lea.vmem %s3, %s169
      %v172 = vld [vmem:[%s165] sm:$0xff]
      %v173 = vld [vmem:[%s165 + $0x8] sm:$0xff]
      %v174 = vld [vmem:[%s165 + $0x10] sm:$0xff]
      %v175 = vld [vmem:[%s165 + $0x18] sm:$0xff]
      %v176 = vld [vmem:[%s165 + $0x20] sm:$0xff]
      %v177 = vld [vmem:[%s165 + $0x28] sm:$0xff]
      %v178 = vld [vmem:[%s165 + $0x30] sm:$0xff]
      %v179 = vld [vmem:[%s165 + $0x38] sm:$0xff]
      %v180 = vld [vmem:[%s165 + $0x40] sm:$0xff]
      %v181 = vld [vmem:[%s165 + $0x48] sm:$0xff]
      %v182 = vld [vmem:[%s165 + $0x50] sm:$0xff]
      %v183 = vld [vmem:[%s165 + $0x58] sm:$0xff]
      %v184 = vld [vmem:[%s165 + $0x60] sm:$0xff]
      %v185 = vld [vmem:[%s165 + $0x68] sm:$0xff]
      %v186 = vld [vmem:[%s165 + $0x70] sm:$0xff]
      %v187 = vld [vmem:[%s165 + $0x78] sm:$0xff]
      %v188 = vld [vmem:[%s165 + $0x80] sm:$0xff]
      %v189 = vld [vmem:[%s165 + $0x88] sm:$0xff]
      %v190 = vld [vmem:[%s165 + $0x90] sm:$0xff]
      %v191 = vld [vmem:[%s165 + $0x98] sm:$0xff]
      %v192 = vld [vmem:[%s165 + $0xa0] sm:$0xff]
      %v193 = vld [vmem:[%s165 + $0xa8] sm:$0xff]
      %v194 = vld [vmem:[%s165 + $0xb0] sm:$0xff]
      %v195 = vld [vmem:[%s165 + $0xb8] sm:$0xff]
      %v196 = vld [vmem:[%s165 + $0xc0] sm:$0xff]
      %v197 = vld [vmem:[%s165 + $0xc8] sm:$0xff]
      %v198 = vld [vmem:[%s165 + $0xd0] sm:$0xff]
      %v199 = vld [vmem:[%s165 + $0xd8] sm:$0xff]
      %v200 = vld [vmem:[%s165 + $0xe0] sm:$0xff]
      %v201 = vld [vmem:[%s165 + $0xe8] sm:$0xff]
      %v202 = vld [vmem:[%s165 + $0xf0] sm:$0xff]
      %v203 = vld [vmem:[%s165 + $0xf8] sm:$0xff]
      %v204 = vpack.c.bf16 %v173, %v172
      %v205 = vpack.c.bf16 %v175, %v174
      %v206 = vpack.c.bf16 %v177, %v176
      %v207 = vpack.c.bf16 %v179, %v178
      %v208 = vpack.c.bf16 %v181, %v180
      %v209 = vpack.c.bf16 %v183, %v182
      %v210 = vpack.c.bf16 %v185, %v184
      %v211 = vpack.c.bf16 %v187, %v186
      %v212 = vpack.c.bf16 %v189, %v188
      %v213 = vpack.c.bf16 %v191, %v190
      %v214 = vpack.c.bf16 %v193, %v192
      %v215 = vpack.c.bf16 %v195, %v194
      %v216 = vpack.c.bf16 %v197, %v196
      %v217 = vpack.c.bf16 %v199, %v198
      %v218 = vpack.c.bf16 %v201, %v200
      %v219 = vpack.c.bf16 %v203, %v202
      %v236 = vunpack.c.l.b16 %v204
      %v237 = vunpack.c.h.b16 %v204
      %v238 = vunpack.c.l.b16 %v205
      %v239 = vunpack.c.h.b16 %v205
      %v240 = vunpack.c.l.b16 %v206
      %v241 = vunpack.c.h.b16 %v206
      %v242 = vunpack.c.l.b16 %v207
      %v243 = vunpack.c.h.b16 %v207
      %v244 = vunpack.c.l.b16 %v208
      %v245 = vunpack.c.h.b16 %v208
      %v246 = vunpack.c.l.b16 %v209
      %v247 = vunpack.c.h.b16 %v209
      %v248 = vunpack.c.l.b16 %v210
      %v249 = vunpack.c.h.b16 %v210
      %v250 = vunpack.c.l.b16 %v211
      %v251 = vunpack.c.h.b16 %v211
      %v252 = vunpack.c.l.b16 %v212
      %v253 = vunpack.c.h.b16 %v212
      %v254 = vunpack.c.l.b16 %v213
      %v255 = vunpack.c.h.b16 %v213
      %v256 = vunpack.c.l.b16 %v214
      %v257 = vunpack.c.h.b16 %v214
      %v258 = vunpack.c.l.b16 %v215
      %v259 = vunpack.c.h.b16 %v215
      %v260 = vunpack.c.l.b16 %v216
      %v261 = vunpack.c.h.b16 %v216
      %v262 = vunpack.c.l.b16 %v217
      %v263 = vunpack.c.h.b16 %v217
      %v264 = vunpack.c.l.b16 %v218
      %v265 = vunpack.c.h.b16 %v218
      %v266 = vunpack.c.l.b16 %v219
      %v267 = vunpack.c.h.b16 %v219
      %v268 = vpack.c.b16 %v236, %v236
      %v269 = vpack.c.b16 %v237, %v237
      %v270 = vpack.c.b16 %v238, %v238
      %v271 = vpack.c.b16 %v239, %v239
      %v272 = vpack.c.b16 %v240, %v240
      %v273 = vpack.c.b16 %v241, %v241
      %v274 = vpack.c.b16 %v242, %v242
      %v275 = vpack.c.b16 %v243, %v243
      %v276 = vpack.c.b16 %v244, %v244
      %v277 = vpack.c.b16 %v245, %v245
      %v278 = vpack.c.b16 %v246, %v246
      %v279 = vpack.c.b16 %v247, %v247
      %v280 = vpack.c.b16 %v248, %v248
      %v281 = vpack.c.b16 %v249, %v249
      %v282 = vpack.c.b16 %v250, %v250
      %v283 = vpack.c.b16 %v251, %v251
      %v284 = vpack.c.b16 %v252, %v252
      %v285 = vpack.c.b16 %v253, %v253
      %v286 = vpack.c.b16 %v254, %v254
      %v287 = vpack.c.b16 %v255, %v255
      %v288 = vpack.c.b16 %v256, %v256
      %v289 = vpack.c.b16 %v257, %v257
      %v290 = vpack.c.b16 %v258, %v258
      %v291 = vpack.c.b16 %v259, %v259
      %v292 = vpack.c.b16 %v260, %v260
      %v293 = vpack.c.b16 %v261, %v261
      %v294 = vpack.c.b16 %v262, %v262
      %v295 = vpack.c.b16 %v263, %v263
      %v296 = vpack.c.b16 %v264, %v264
      %v297 = vpack.c.b16 %v265, %v265
      %v298 = vpack.c.b16 %v266, %v266
      %v299 = vpack.c.b16 %v267, %v267
      %vm300 = vsmask.f32 256
      %vm301 = vsmask.f32 4368
      %vm302 = vmor %vm300, %vm301
      %v304 = vshrl.u32 %v268, 16
      %v306 = vrot.slane %v304, 7
      %v307 = vshll.u32 %v268, 16
      %v309 = vor.u32 %v306, %v307
      %v310 = vrot.slane %v306, 4
      %v312 = vshrl.u32 %v269, 16
      %v314 = vrot.slane %v312, 7
      %v315 = vshll.u32 %v269, 16
      %v317 = vor.u32 %v314, %v315
      %v318 = vsel %vm302, %v310, %v317
      %v319 = vrot.slane %v314, 4
      %v321 = vshrl.u32 %v270, 16
      %v323 = vrot.slane %v321, 7
      %v324 = vshll.u32 %v270, 16
      %v326 = vor.u32 %v323, %v324
      %v327 = vrot.slane %v323, 4
      %v329 = vshrl.u32 %v271, 16
      %v331 = vrot.slane %v329, 7
      %v332 = vshll.u32 %v271, 16
      %v334 = vor.u32 %v331, %v332
      %v335 = vsel %vm302, %v327, %v334
      %v336 = vrot.slane %v331, 4
      %v338 = vshrl.u32 %v272, 16
      %v340 = vrot.slane %v338, 7
      %v341 = vshll.u32 %v272, 16
      %v343 = vor.u32 %v340, %v341
      %v344 = vrot.slane %v340, 4
      %v346 = vshrl.u32 %v273, 16
      %v348 = vrot.slane %v346, 7
      %v349 = vshll.u32 %v273, 16
      %v351 = vor.u32 %v348, %v349
      %v352 = vsel %vm302, %v344, %v351
      %v353 = vrot.slane %v348, 4
      %v355 = vshrl.u32 %v274, 16
      %v357 = vrot.slane %v355, 7
      %v358 = vshll.u32 %v274, 16
      %v360 = vor.u32 %v357, %v358
      %v361 = vrot.slane %v357, 4
      %v363 = vshrl.u32 %v275, 16
      %v365 = vrot.slane %v363, 7
      %v366 = vshll.u32 %v275, 16
      %v368 = vor.u32 %v365, %v366
      %v369 = vsel %vm302, %v361, %v368
      %v370 = vrot.slane %v365, 4
      %v372 = vshrl.u32 %v276, 16
      %v374 = vrot.slane %v372, 7
      %v375 = vshll.u32 %v276, 16
      %v377 = vor.u32 %v374, %v375
      %v378 = vrot.slane %v374, 4
      %v380 = vshrl.u32 %v277, 16
      %v382 = vrot.slane %v380, 7
      %v383 = vshll.u32 %v277, 16
      %v385 = vor.u32 %v382, %v383
      %v386 = vsel %vm302, %v378, %v385
      %v387 = vrot.slane %v382, 4
      %v389 = vshrl.u32 %v278, 16
      %v391 = vrot.slane %v389, 7
      %v392 = vshll.u32 %v278, 16
      %v394 = vor.u32 %v391, %v392
      %v395 = vrot.slane %v391, 4
      %v397 = vshrl.u32 %v279, 16
      %v399 = vrot.slane %v397, 7
      %v400 = vshll.u32 %v279, 16
      %v402 = vor.u32 %v399, %v400
      %v403 = vsel %vm302, %v395, %v402
      %v404 = vrot.slane %v399, 4
      %v406 = vshrl.u32 %v280, 16
      %v408 = vrot.slane %v406, 7
      %v409 = vshll.u32 %v280, 16
      %v411 = vor.u32 %v408, %v409
      %v412 = vrot.slane %v408, 4
      %v414 = vshrl.u32 %v281, 16
      %v416 = vrot.slane %v414, 7
      %v417 = vshll.u32 %v281, 16
      %v419 = vor.u32 %v416, %v417
      %v420 = vsel %vm302, %v412, %v419
      %v421 = vrot.slane %v416, 4
      %v423 = vshrl.u32 %v282, 16
      %v425 = vrot.slane %v423, 7
      %v426 = vshll.u32 %v282, 16
      %v428 = vor.u32 %v425, %v426
      %v429 = vrot.slane %v425, 4
      %v431 = vshrl.u32 %v283, 16
      %v433 = vrot.slane %v431, 7
      %v434 = vshll.u32 %v283, 16
      %v436 = vor.u32 %v433, %v434
      %v437 = vsel %vm302, %v429, %v436
      %v438 = vrot.slane %v433, 4
      %v440 = vshrl.u32 %v284, 16
      %v442 = vrot.slane %v440, 7
      %v443 = vshll.u32 %v284, 16
      %v445 = vor.u32 %v442, %v443
      %v446 = vrot.slane %v442, 4
      %v448 = vshrl.u32 %v285, 16
      %v450 = vrot.slane %v448, 7
      %v451 = vshll.u32 %v285, 16
      %v453 = vor.u32 %v450, %v451
      %v454 = vsel %vm302, %v446, %v453
      %v455 = vrot.slane %v450, 4
      %v457 = vshrl.u32 %v286, 16
      %v459 = vrot.slane %v457, 7
      %v460 = vshll.u32 %v286, 16
      %v462 = vor.u32 %v459, %v460
      %v463 = vrot.slane %v459, 4
      %v465 = vshrl.u32 %v287, 16
      %v467 = vrot.slane %v465, 7
      %v468 = vshll.u32 %v287, 16
      %v470 = vor.u32 %v467, %v468
      %v471 = vsel %vm302, %v463, %v470
      %v472 = vrot.slane %v467, 4
      %v474 = vshrl.u32 %v288, 16
      %v476 = vrot.slane %v474, 7
      %v477 = vshll.u32 %v288, 16
      %v479 = vor.u32 %v476, %v477
      %v480 = vrot.slane %v476, 4
      %v482 = vshrl.u32 %v289, 16
      %v484 = vrot.slane %v482, 7
      %v485 = vshll.u32 %v289, 16
      %v487 = vor.u32 %v484, %v485
      %v488 = vsel %vm302, %v480, %v487
      %v489 = vrot.slane %v484, 4
      %v491 = vshrl.u32 %v290, 16
      %v493 = vrot.slane %v491, 7
      %v494 = vshll.u32 %v290, 16
      %v496 = vor.u32 %v493, %v494
      %v497 = vrot.slane %v493, 4
      %v499 = vshrl.u32 %v291, 16
      %v501 = vrot.slane %v499, 7
      %v502 = vshll.u32 %v291, 16
      %v504 = vor.u32 %v501, %v502
      %v505 = vsel %vm302, %v497, %v504
      %v506 = vrot.slane %v501, 4
      %v508 = vshrl.u32 %v292, 16
      %v510 = vrot.slane %v508, 7
      %v511 = vshll.u32 %v292, 16
      %v513 = vor.u32 %v510, %v511
      %v514 = vrot.slane %v510, 4
      %v516 = vshrl.u32 %v293, 16
      %v518 = vrot.slane %v516, 7
      %v519 = vshll.u32 %v293, 16
      %v521 = vor.u32 %v518, %v519
      %v522 = vsel %vm302, %v514, %v521
      %v523 = vrot.slane %v518, 4
      %v525 = vshrl.u32 %v294, 16
      %v527 = vrot.slane %v525, 7
      %v528 = vshll.u32 %v294, 16
      %v530 = vor.u32 %v527, %v528
      %v531 = vrot.slane %v527, 4
      %v533 = vshrl.u32 %v295, 16
      %v535 = vrot.slane %v533, 7
      %v536 = vshll.u32 %v295, 16
      %v538 = vor.u32 %v535, %v536
      %v539 = vsel %vm302, %v531, %v538
      %v540 = vrot.slane %v535, 4
      %v542 = vshrl.u32 %v296, 16
      %v544 = vrot.slane %v542, 7
      %v545 = vshll.u32 %v296, 16
      %v547 = vor.u32 %v544, %v545
      %v548 = vrot.slane %v544, 4
      %v550 = vshrl.u32 %v297, 16
      %v552 = vrot.slane %v550, 7
      %v553 = vshll.u32 %v297, 16
      %v555 = vor.u32 %v552, %v553
      %v556 = vsel %vm302, %v548, %v555
      %v557 = vrot.slane %v552, 4
      %v559 = vshrl.u32 %v298, 16
      %v561 = vrot.slane %v559, 7
      %v562 = vshll.u32 %v298, 16
      %v564 = vor.u32 %v561, %v562
      %v565 = vrot.slane %v561, 4
      %v567 = vshrl.u32 %v299, 16
      %v569 = vrot.slane %v567, 7
      %v570 = vshll.u32 %v299, 16
      %v572 = vor.u32 %v569, %v570
      %v573 = vsel %vm302, %v565, %v572
      %v574 = vrot.slane %v569, 4
      %s623 = scalar_lea.vmem [#allocation2], 12
      %vm624 = vcmask 60416
      %vm625 = vsmask.f32 7938
      %vm626 = vmand %vm624, %vm625
      %v627 = vld [vmem:[%s623] sm:$0xf]
      %v628 = vsel %vm626, %v309, %v627
      %629 = vst [vmem:[%s623] sm:$0xf] %v628
      %vm630 = vcmask 60416
      %631 = vst.msk [vmem:[%s623 + $0x4] sm:$0xf] %vm630, %v318
      %vm632 = vcmask 57344
      %vm633 = vmand %vm632, %vm300
      %v634 = vld [vmem:[%s623 + $0x8] sm:$0x1]
      %v635 = vsel %vm633, %v319, %v634
      %636 = vst [vmem:[%s623 + $0x8] sm:$0x1] %v635
      %v637 = vld [vmem:[%s623 + $0xc] sm:$0xf]
      %v638 = vsel %vm626, %v326, %v637
      %639 = vst [vmem:[%s623 + $0xc] sm:$0xf] %v638
      %640 = vst.msk [vmem:[%s623 + $0x10] sm:$0xf] %vm630, %v335
      %v641 = vld [vmem:[%s623 + $0x14] sm:$0x1]
      %v642 = vsel %vm633, %v336, %v641
      %643 = vst [vmem:[%s623 + $0x14] sm:$0x1] %v642
      %v644 = vld [vmem:[%s623 + $0x18] sm:$0xf]
      %v645 = vsel %vm626, %v343, %v644
      %646 = vst [vmem:[%s623 + $0x18] sm:$0xf] %v645
      %647 = vst.msk [vmem:[%s623 + $0x1c] sm:$0xf] %vm630, %v352
      %v648 = vld [vmem:[%s623 + $0x20] sm:$0x1]
      %v649 = vsel %vm633, %v353, %v648
      %650 = vst [vmem:[%s623 + $0x20] sm:$0x1] %v649
      %v651 = vld [vmem:[%s623 + $0x24] sm:$0xf]
      %v652 = vsel %vm626, %v360, %v651
      %653 = vst [vmem:[%s623 + $0x24] sm:$0xf] %v652
      %654 = vst.msk [vmem:[%s623 + $0x28] sm:$0xf] %vm630, %v369
      %v655 = vld [vmem:[%s623 + $0x2c] sm:$0x1]
      %v656 = vsel %vm633, %v370, %v655
      %657 = vst [vmem:[%s623 + $0x2c] sm:$0x1] %v656
      %v658 = vld [vmem:[%s623 + $0x30] sm:$0xf]
      %v659 = vsel %vm626, %v377, %v658
      %660 = vst [vmem:[%s623 + $0x30] sm:$0xf] %v659
      %661 = vst.msk [vmem:[%s623 + $0x34] sm:$0xf] %vm630, %v386
      %v662 = vld [vmem:[%s623 + $0x38] sm:$0x1]
      %v663 = vsel %vm633, %v387, %v662
      %664 = vst [vmem:[%s623 + $0x38] sm:$0x1] %v663
      %v665 = vld [vmem:[%s623 + $0x3c] sm:$0xf]
      %v666 = vsel %vm626, %v394, %v665
      %667 = vst [vmem:[%s623 + $0x3c] sm:$0xf] %v666
      %668 = vst.msk [vmem:[%s623 + $0x40] sm:$0xf] %vm630, %v403
      %v669 = vld [vmem:[%s623 + $0x44] sm:$0x1]
      %v670 = vsel %vm633, %v404, %v669
      %671 = vst [vmem:[%s623 + $0x44] sm:$0x1] %v670
      %v672 = vld [vmem:[%s623 + $0x48] sm:$0xf]
      %v673 = vsel %vm626, %v411, %v672
      %674 = vst [vmem:[%s623 + $0x48] sm:$0xf] %v673
      %675 = vst.msk [vmem:[%s623 + $0x4c] sm:$0xf] %vm630, %v420
      %v676 = vld [vmem:[%s623 + $0x50] sm:$0x1]
      %v677 = vsel %vm633, %v421, %v676
      %678 = vst [vmem:[%s623 + $0x50] sm:$0x1] %v677
      %v679 = vld [vmem:[%s623 + $0x54] sm:$0xf]
      %v680 = vsel %vm626, %v428, %v679
      %681 = vst [vmem:[%s623 + $0x54] sm:$0xf] %v680
      %682 = vst.msk [vmem:[%s623 + $0x58] sm:$0xf] %vm630, %v437
      %v683 = vld [vmem:[%s623 + $0x5c] sm:$0x1]
      %v684 = vsel %vm633, %v438, %v683
      %685 = vst [vmem:[%s623 + $0x5c] sm:$0x1] %v684
      %v686 = vld [vmem:[%s623 + $0x60] sm:$0xf]
      %v687 = vsel %vm626, %v445, %v686
      %688 = vst [vmem:[%s623 + $0x60] sm:$0xf] %v687
      %689 = vst.msk [vmem:[%s623 + $0x64] sm:$0xf] %vm630, %v454
      %v690 = vld [vmem:[%s623 + $0x68] sm:$0x1]
      %v691 = vsel %vm633, %v455, %v690
      %692 = vst [vmem:[%s623 + $0x68] sm:$0x1] %v691
      %v693 = vld [vmem:[%s623 + $0x6c] sm:$0xf]
      %v694 = vsel %vm626, %v462, %v693
      %695 = vst [vmem:[%s623 + $0x6c] sm:$0xf] %v694
      %696 = vst.msk [vmem:[%s623 + $0x70] sm:$0xf] %vm630, %v471
      %v697 = vld [vmem:[%s623 + $0x74] sm:$0x1]
      %v698 = vsel %vm633, %v472, %v697
      %699 = vst [vmem:[%s623 + $0x74] sm:$0x1] %v698
      %v700 = vld [vmem:[%s623 + $0x78] sm:$0xf]
      %v701 = vsel %vm626, %v479, %v700
      %702 = vst [vmem:[%s623 + $0x78] sm:$0xf] %v701
      %703 = vst.msk [vmem:[%s623 + $0x7c] sm:$0xf] %vm630, %v488
      %v704 = vld [vmem:[%s623 + $0x80] sm:$0x1]
      %v705 = vsel %vm633, %v489, %v704
      %706 = vst [vmem:[%s623 + $0x80] sm:$0x1] %v705
      %v707 = vld [vmem:[%s623 + $0x84] sm:$0xf]
      %v708 = vsel %vm626, %v496, %v707
      %709 = vst [vmem:[%s623 + $0x84] sm:$0xf] %v708
      %710 = vst.msk [vmem:[%s623 + $0x88] sm:$0xf] %vm630, %v505
      %v711 = vld [vmem:[%s623 + $0x8c] sm:$0x1]
      %v712 = vsel %vm633, %v506, %v711
      %713 = vst [vmem:[%s623 + $0x8c] sm:$0x1] %v712
      %v714 = vld [vmem:[%s623 + $0x90] sm:$0xf]
      %v715 = vsel %vm626, %v513, %v714
      %716 = vst [vmem:[%s623 + $0x90] sm:$0xf] %v715
      %717 = vst.msk [vmem:[%s623 + $0x94] sm:$0xf] %vm630, %v522
      %v718 = vld [vmem:[%s623 + $0x98] sm:$0x1]
      %v719 = vsel %vm633, %v523, %v718
      %720 = vst [vmem:[%s623 + $0x98] sm:$0x1] %v719
      %v721 = vld [vmem:[%s623 + $0x9c] sm:$0xf]
      %v722 = vsel %vm626, %v530, %v721
      %723 = vst [vmem:[%s623 + $0x9c] sm:$0xf] %v722
      %724 = vst.msk [vmem:[%s623 + $0xa0] sm:$0xf] %vm630, %v539
      %v725 = vld [vmem:[%s623 + $0xa4] sm:$0x1]
      %v726 = vsel %vm633, %v540, %v725
      %727 = vst [vmem:[%s623 + $0xa4] sm:$0x1] %v726
      %v728 = vld [vmem:[%s623 + $0xa8] sm:$0xf]
      %v729 = vsel %vm626, %v547, %v728
      %730 = vst [vmem:[%s623 + $0xa8] sm:$0xf] %v729
      %731 = vst.msk [vmem:[%s623 + $0xac] sm:$0xf] %vm630, %v556
      %v732 = vld [vmem:[%s623 + $0xb0] sm:$0x1]
      %v733 = vsel %vm633, %v557, %v732
      %734 = vst [vmem:[%s623 + $0xb0] sm:$0x1] %v733
      %v735 = vld [vmem:[%s623 + $0xb4] sm:$0xf]
      %v736 = vsel %vm626, %v564, %v735
      %737 = vst [vmem:[%s623 + $0xb4] sm:$0xf] %v736
      %738 = vst.msk [vmem:[%s623 + $0xb8] sm:$0xf] %vm630, %v573
      %v739 = vld [vmem:[%s623 + $0xbc] sm:$0x1]
      %v740 = vsel %vm633, %v574, %v739
      %741 = vst [vmem:[%s623 + $0xbc] sm:$0x1] %v740
      %v742 = vld [vmem:[#allocation2] sm:$0xf]
      %v743 = vsel %vm626, %v326, %v742
      %744 = vst [vmem:[#allocation2] sm:$0xf] %v743
      %745 = vst.msk [vmem:[#allocation2 + $0x4] sm:$0xf] %vm630, %v335
      %v746 = vld [vmem:[#allocation2 + $0x8] sm:$0x1]
      %v747 = vsel %vm633, %v336, %v746
      %748 = vst [vmem:[#allocation2 + $0x8] sm:$0x1] %v747
      %s749 = scalar_lea.vmem [#allocation2], 204
      %v750 = vld [vmem:[%s749] sm:$0xf]
      %v751 = vsel %vm626, %v547, %v750
      %752 = vst [vmem:[%s749] sm:$0xf] %v751
      %753 = vst.msk [vmem:[%s749 + $0x4] sm:$0xf] %vm630, %v556
      %v754 = vld [vmem:[%s749 + $0x8] sm:$0x1]
      %v755 = vsel %vm633, %v557, %v754
      %756 = vst [vmem:[%s749 + $0x8] sm:$0x1] %v755
      %v757 = vrot.slane %v304, 4
      %v758 = vrot.slane %v757, 4
      %v759 = vrot.slane %v321, 4
      %v760 = vrot.slane %v759, 4
      %v761 = vrot.slane %v338, 4
      %v762 = vrot.slane %v761, 4
      %v763 = vrot.slane %v355, 4
      %v764 = vrot.slane %v763, 4
      %v765 = vrot.slane %v372, 4
      %v766 = vrot.slane %v765, 4
      %v767 = vrot.slane %v389, 4
      %v768 = vrot.slane %v767, 4
      %v769 = vrot.slane %v406, 4
      %v770 = vrot.slane %v769, 4
      %v771 = vrot.slane %v423, 4
      %v772 = vrot.slane %v771, 4
      %v773 = vrot.slane %v440, 4
      %v774 = vrot.slane %v773, 4
      %v775 = vrot.slane %v457, 4
      %v776 = vrot.slane %v775, 4
      %v777 = vrot.slane %v474, 4
      %v778 = vrot.slane %v777, 4
      %v779 = vrot.slane %v491, 4
      %v780 = vrot.slane %v779, 4
      %v781 = vrot.slane %v508, 4
      %v782 = vrot.slane %v781, 4
      %v783 = vrot.slane %v525, 4
      %v784 = vrot.slane %v783, 4
      %v785 = vrot.slane %v542, 4
      %v786 = vrot.slane %v785, 4
      %v787 = vrot.slane %v559, 4
      %v788 = vrot.slane %v787, 4
      %v805 = vld [vmem:[%s623] sm:$0x1]
      %v806 = vsel %vm633, %v758, %v805
      %807 = vst [vmem:[%s623] sm:$0x1] %v806
      %v808 = vld [vmem:[%s623 + $0xc] sm:$0x1]
      %v809 = vsel %vm633, %v760, %v808
      %810 = vst [vmem:[%s623 + $0xc] sm:$0x1] %v809
      %v811 = vld [vmem:[%s623 + $0x18] sm:$0x1]
      %v812 = vsel %vm633, %v762, %v811
      %813 = vst [vmem:[%s623 + $0x18] sm:$0x1] %v812
      %v814 = vld [vmem:[%s623 + $0x24] sm:$0x1]
      %v815 = vsel %vm633, %v764, %v814
      %816 = vst [vmem:[%s623 + $0x24] sm:$0x1] %v815
      %v817 = vld [vmem:[%s623 + $0x30] sm:$0x1]
      %v818 = vsel %vm633, %v766, %v817
      %819 = vst [vmem:[%s623 + $0x30] sm:$0x1] %v818
      %v820 = vld [vmem:[%s623 + $0x3c] sm:$0x1]
      %v821 = vsel %vm633, %v768, %v820
      %822 = vst [vmem:[%s623 + $0x3c] sm:$0x1] %v821
      %v823 = vld [vmem:[%s623 + $0x48] sm:$0x1]
      %v824 = vsel %vm633, %v770, %v823
      %825 = vst [vmem:[%s623 + $0x48] sm:$0x1] %v824
      %v826 = vld [vmem:[%s623 + $0x54] sm:$0x1]
      %v827 = vsel %vm633, %v772, %v826
      %828 = vst [vmem:[%s623 + $0x54] sm:$0x1] %v827
      %v829 = vld [vmem:[%s623 + $0x60] sm:$0x1]
      %v830 = vsel %vm633, %v774, %v829
      %831 = vst [vmem:[%s623 + $0x60] sm:$0x1] %v830
      %v832 = vld [vmem:[%s623 + $0x6c] sm:$0x1]
      %v833 = vsel %vm633, %v776, %v832
      %834 = vst [vmem:[%s623 + $0x6c] sm:$0x1] %v833
      %v835 = vld [vmem:[%s623 + $0x78] sm:$0x1]
      %v836 = vsel %vm633, %v778, %v835
      %837 = vst [vmem:[%s623 + $0x78] sm:$0x1] %v836
      %v838 = vld [vmem:[%s623 + $0x84] sm:$0x1]
      %v839 = vsel %vm633, %v780, %v838
      %840 = vst [vmem:[%s623 + $0x84] sm:$0x1] %v839
      %v841 = vld [vmem:[%s623 + $0x90] sm:$0x1]
      %v842 = vsel %vm633, %v782, %v841
      %843 = vst [vmem:[%s623 + $0x90] sm:$0x1] %v842
      %v844 = vld [vmem:[%s623 + $0x9c] sm:$0x1]
      %v845 = vsel %vm633, %v784, %v844
      %846 = vst [vmem:[%s623 + $0x9c] sm:$0x1] %v845
      %v847 = vld [vmem:[%s623 + $0xa8] sm:$0x1]
      %v848 = vsel %vm633, %v786, %v847
      %849 = vst [vmem:[%s623 + $0xa8] sm:$0x1] %v848
      %v850 = vld [vmem:[%s623 + $0xb4] sm:$0x1]
      %v851 = vsel %vm633, %v788, %v850
      %852 = vst [vmem:[%s623 + $0xb4] sm:$0x1] %v851
      %v853 = vrot.slane %v315, 7
      %v854 = vrot.slane %v853, 4
      %v855 = vrot.slane %v332, 7
      %v856 = vrot.slane %v855, 4
      %v857 = vrot.slane %v349, 7
      %v858 = vrot.slane %v857, 4
      %v859 = vrot.slane %v366, 7
      %v860 = vrot.slane %v859, 4
      %v861 = vrot.slane %v383, 7
      %v862 = vrot.slane %v861, 4
      %v863 = vrot.slane %v400, 7
      %v864 = vrot.slane %v863, 4
      %v865 = vrot.slane %v417, 7
      %v866 = vrot.slane %v865, 4
      %v867 = vrot.slane %v434, 7
      %v868 = vrot.slane %v867, 4
      %v869 = vrot.slane %v451, 7
      %v870 = vrot.slane %v869, 4
      %v871 = vrot.slane %v468, 7
      %v872 = vrot.slane %v871, 4
      %v873 = vrot.slane %v485, 7
      %v874 = vrot.slane %v873, 4
      %v875 = vrot.slane %v502, 7
      %v876 = vrot.slane %v875, 4
      %v877 = vrot.slane %v519, 7
      %v878 = vrot.slane %v877, 4
      %v879 = vrot.slane %v536, 7
      %v880 = vrot.slane %v879, 4
      %v881 = vrot.slane %v553, 7
      %v882 = vrot.slane %v881, 4
      %v883 = vrot.slane %v570, 7
      %v884 = vrot.slane %v883, 4
      %vm901 = vmand %vm632, %vm625
      %v902 = vld [vmem:[%s623 + $0x8] sm:$0x1]
      %v903 = vsel %vm901, %v854, %v902
      %904 = vst [vmem:[%s623 + $0x8] sm:$0x1] %v903
      %v905 = vld [vmem:[%s623 + $0x14] sm:$0x1]
      %v906 = vsel %vm901, %v856, %v905
      %907 = vst [vmem:[%s623 + $0x14] sm:$0x1] %v906
      %v908 = vld [vmem:[%s623 + $0x20] sm:$0x1]
      %v909 = vsel %vm901, %v858, %v908
      %910 = vst [vmem:[%s623 + $0x20] sm:$0x1] %v909
      %v911 = vld [vmem:[%s623 + $0x2c] sm:$0x1]
      %v912 = vsel %vm901, %v860, %v911
      %913 = vst [vmem:[%s623 + $0x2c] sm:$0x1] %v912
      %v914 = vld [vmem:[%s623 + $0x38] sm:$0x1]
      %v915 = vsel %vm901, %v862, %v914
      %916 = vst [vmem:[%s623 + $0x38] sm:$0x1] %v915
      %v917 = vld [vmem:[%s623 + $0x44] sm:$0x1]
      %v918 = vsel %vm901, %v864, %v917
      %919 = vst [vmem:[%s623 + $0x44] sm:$0x1] %v918
      %v920 = vld [vmem:[%s623 + $0x50] sm:$0x1]
      %v921 = vsel %vm901, %v866, %v920
      %922 = vst [vmem:[%s623 + $0x50] sm:$0x1] %v921
      %v923 = vld [vmem:[%s623 + $0x5c] sm:$0x1]
      %v924 = vsel %vm901, %v868, %v923
      %925 = vst [vmem:[%s623 + $0x5c] sm:$0x1] %v924
      %v926 = vld [vmem:[%s623 + $0x68] sm:$0x1]
      %v927 = vsel %vm901, %v870, %v926
      %928 = vst [vmem:[%s623 + $0x68] sm:$0x1] %v927
      %v929 = vld [vmem:[%s623 + $0x74] sm:$0x1]
      %v930 = vsel %vm901, %v872, %v929
      %931 = vst [vmem:[%s623 + $0x74] sm:$0x1] %v930
      %v932 = vld [vmem:[%s623 + $0x80] sm:$0x1]
      %v933 = vsel %vm901, %v874, %v932
      %934 = vst [vmem:[%s623 + $0x80] sm:$0x1] %v933
      %v935 = vld [vmem:[%s623 + $0x8c] sm:$0x1]
      %v936 = vsel %vm901, %v876, %v935
      %937 = vst [vmem:[%s623 + $0x8c] sm:$0x1] %v936
      %v938 = vld [vmem:[%s623 + $0x98] sm:$0x1]
      %v939 = vsel %vm901, %v878, %v938
      %940 = vst [vmem:[%s623 + $0x98] sm:$0x1] %v939
      %v941 = vld [vmem:[%s623 + $0xa4] sm:$0x1]
      %v942 = vsel %vm901, %v880, %v941
      %943 = vst [vmem:[%s623 + $0xa4] sm:$0x1] %v942
      %v944 = vld [vmem:[%s623 + $0xb0] sm:$0x1]
      %v945 = vsel %vm901, %v882, %v944
      %946 = vst [vmem:[%s623 + $0xb0] sm:$0x1] %v945
      %v947 = vld [vmem:[%s623 + $0xbc] sm:$0x1]
      %v948 = vsel %vm901, %v884, %v947
      %949 = vst [vmem:[%s623 + $0xbc] sm:$0x1] %v948
      %v950 = vld [vmem:[#allocation2] sm:$0x1]
      %v951 = vsel %vm633, %v760, %v950
      %952 = vst [vmem:[#allocation2] sm:$0x1] %v951
      %v953 = vld [vmem:[#allocation2 + $0x8] sm:$0x1]
      %v954 = vsel %vm901, %v856, %v953
      %955 = vst [vmem:[#allocation2 + $0x8] sm:$0x1] %v954
      %v956 = vld [vmem:[%s749] sm:$0x1]
      %v957 = vsel %vm633, %v786, %v956
      %958 = vst [vmem:[%s749] sm:$0x1] %v957
      %v959 = vld [vmem:[%s749 + $0x8] sm:$0x1]
      %v960 = vsel %vm901, %v882, %v959
      %961 = vst [vmem:[%s749 + $0x8] sm:$0x1] %v960
      %v962 = vld [vmem:[#allocation2] sm:$0xf]
      %v963 = vld [vmem:[#allocation2 + $0x4] sm:$0xf]
      %v964 = vld [vmem:[#allocation2 + $0xc] sm:$0xf]
      %v965 = vld [vmem:[#allocation2 + $0x10] sm:$0xf]
      %v966 = vld [vmem:[#allocation2 + $0x18] sm:$0xf]
      %v967 = vld [vmem:[#allocation2 + $0x1c] sm:$0xf]
      %v968 = vld [vmem:[#allocation2 + $0x24] sm:$0xf]
      %v969 = vld [vmem:[#allocation2 + $0x28] sm:$0xf]
      %v970 = vld [vmem:[#allocation2 + $0x30] sm:$0xf]
      %v971 = vld [vmem:[#allocation2 + $0x34] sm:$0xf]
      %v972 = vld [vmem:[#allocation2 + $0x3c] sm:$0xf]
      %v973 = vld [vmem:[#allocation2 + $0x40] sm:$0xf]
      %v974 = vld [vmem:[#allocation2 + $0x48] sm:$0xf]
      %v975 = vld [vmem:[#allocation2 + $0x4c] sm:$0xf]
      %v976 = vld [vmem:[#allocation2 + $0x54] sm:$0xf]
      %v977 = vld [vmem:[#allocation2 + $0x58] sm:$0xf]
      %v978 = vld [vmem:[#allocation2 + $0x60] sm:$0xf]
      %v979 = vld [vmem:[#allocation2 + $0x64] sm:$0xf]
      %v980 = vld [vmem:[#allocation2 + $0x6c] sm:$0xf]
      %v981 = vld [vmem:[#allocation2 + $0x70] sm:$0xf]
      %v982 = vld [vmem:[#allocation2 + $0x78] sm:$0xf]
      %v983 = vld [vmem:[#allocation2 + $0x7c] sm:$0xf]
      %v984 = vld [vmem:[#allocation2 + $0x84] sm:$0xf]
      %v985 = vld [vmem:[#allocation2 + $0x88] sm:$0xf]
      %v986 = vld [vmem:[#allocation2 + $0x90] sm:$0xf]
      %v987 = vld [vmem:[#allocation2 + $0x94] sm:$0xf]
      %v988 = vld [vmem:[#allocation2 + $0x9c] sm:$0xf]
      %v989 = vld [vmem:[#allocation2 + $0xa0] sm:$0xf]
      %v990 = vld [vmem:[#allocation2 + $0xa8] sm:$0xf]
      %v991 = vld [vmem:[#allocation2 + $0xac] sm:$0xf]
      %v992 = vld [vmem:[#allocation2 + $0xb4] sm:$0xf]
      %v993 = vld [vmem:[#allocation2 + $0xb8] sm:$0xf]
      %v994 = vld [vmem:[%s1] sm:$0xf]
      %v995 = vld [vmem:[#allocation2 + $0x8] sm:$0x1]
      %v996 = vld [vmem:[#allocation2 + $0x14] sm:$0x1]
      %v997 = vld [vmem:[#allocation2 + $0x20] sm:$0x1]
      %v998 = vld [vmem:[#allocation2 + $0x2c] sm:$0x1]
      %v999 = vld [vmem:[#allocation2 + $0x38] sm:$0x1]
      %v1000 = vld [vmem:[#allocation2 + $0x44] sm:$0x1]
      %v1001 = vld [vmem:[#allocation2 + $0x50] sm:$0x1]
      %v1002 = vld [vmem:[#allocation2 + $0x5c] sm:$0x1]
      %v1003 = vld [vmem:[#allocation2 + $0x68] sm:$0x1]
      %v1004 = vld [vmem:[#allocation2 + $0x74] sm:$0x1]
      %v1005 = vld [vmem:[#allocation2 + $0x80] sm:$0x1]
      %v1006 = vld [vmem:[#allocation2 + $0x8c] sm:$0x1]
      %v1007 = vld [vmem:[#allocation2 + $0x98] sm:$0x1]
      %v1008 = vld [vmem:[#allocation2 + $0xa4] sm:$0x1]
      %v1009 = vld [vmem:[#allocation2 + $0xb0] sm:$0x1]
      %v1010 = vld [vmem:[#allocation2 + $0xbc] sm:$0x1]
      %vm1011 = vsmask.f32 3328
      %vm1012 = vsmask.f32 7440
      %vm1013 = vmor %vm1011, %vm1012
      %v1015 = vshrl.u32 %v962, 16
      %v1017 = vrot.slane %v1015, 4
      %v1018 = vshll.u32 %v962, 16
      %v1020 = vrot.slane %v1018, 5
      %v1021 = vor.u32 %v1017, %v1020
      %v1022 = vrot.slane %v1021, 4
      %v1024 = vshll.u32 %v963, 16
      %v1026 = vrot.slane %v1024, 5
      %v1027 = vsel %vm1013, %v1022, %v1026
      %v1028 = vshrl.u32 %v963, 16
      %v1030 = vrot.slane %v1028, 4
      %v1031 = vor.u32 %v1030, %v1026
      %v1032 = vrot.slane %v1031, 4
      %v1034 = vshll.u32 %v995, 16
      %v1036 = vrot.slane %v1034, 5
      %v1037 = vsel %vm1013, %v1032, %v1036
      %v1039 = vshrl.u32 %v964, 16
      %v1041 = vrot.slane %v1039, 4
      %v1042 = vshll.u32 %v964, 16
      %v1044 = vrot.slane %v1042, 5
      %v1045 = vor.u32 %v1041, %v1044
      %v1046 = vrot.slane %v1045, 4
      %v1048 = vshll.u32 %v965, 16
      %v1050 = vrot.slane %v1048, 5
      %v1051 = vsel %vm1013, %v1046, %v1050
      %v1052 = vshrl.u32 %v965, 16
      %v1054 = vrot.slane %v1052, 4
      %v1055 = vor.u32 %v1054, %v1050
      %v1056 = vrot.slane %v1055, 4
      %v1058 = vshll.u32 %v996, 16
      %v1060 = vrot.slane %v1058, 5
      %v1061 = vsel %vm1013, %v1056, %v1060
      %v1063 = vshrl.u32 %v966, 16
      %v1065 = vrot.slane %v1063, 4
      %v1066 = vshll.u32 %v966, 16
      %v1068 = vrot.slane %v1066, 5
      %v1069 = vor.u32 %v1065, %v1068
      %v1070 = vrot.slane %v1069, 4
      %v1072 = vshll.u32 %v967, 16
      %v1074 = vrot.slane %v1072, 5
      %v1075 = vsel %vm1013, %v1070, %v1074
      %v1076 = vshrl.u32 %v967, 16
      %v1078 = vrot.slane %v1076, 4
      %v1079 = vor.u32 %v1078, %v1074
      %v1080 = vrot.slane %v1079, 4
      %v1082 = vshll.u32 %v997, 16
      %v1084 = vrot.slane %v1082, 5
      %v1085 = vsel %vm1013, %v1080, %v1084
      %v1087 = vshrl.u32 %v968, 16
      %v1089 = vrot.slane %v1087, 4
      %v1090 = vshll.u32 %v968, 16
      %v1092 = vrot.slane %v1090, 5
      %v1093 = vor.u32 %v1089, %v1092
      %v1094 = vrot.slane %v1093, 4
      %v1096 = vshll.u32 %v969, 16
      %v1098 = vrot.slane %v1096, 5
      %v1099 = vsel %vm1013, %v1094, %v1098
      %v1100 = vshrl.u32 %v969, 16
      %v1102 = vrot.slane %v1100, 4
      %v1103 = vor.u32 %v1102, %v1098
      %v1104 = vrot.slane %v1103, 4
      %v1106 = vshll.u32 %v998, 16
      %v1108 = vrot.slane %v1106, 5
      %v1109 = vsel %vm1013, %v1104, %v1108
      %v1111 = vshrl.u32 %v970, 16
      %v1113 = vrot.slane %v1111, 4
      %v1114 = vshll.u32 %v970, 16
      %v1116 = vrot.slane %v1114, 5
      %v1117 = vor.u32 %v1113, %v1116
      %v1118 = vrot.slane %v1117, 4
      %v1120 = vshll.u32 %v971, 16
      %v1122 = vrot.slane %v1120, 5
      %v1123 = vsel %vm1013, %v1118, %v1122
      %v1124 = vshrl.u32 %v971, 16
      %v1126 = vrot.slane %v1124, 4
      %v1127 = vor.u32 %v1126, %v1122
      %v1128 = vrot.slane %v1127, 4
      %v1130 = vshll.u32 %v999, 16
      %v1132 = vrot.slane %v1130, 5
      %v1133 = vsel %vm1013, %v1128, %v1132
      %v1135 = vshrl.u32 %v972, 16
      %v1137 = vrot.slane %v1135, 4
      %v1138 = vshll.u32 %v972, 16
      %v1140 = vrot.slane %v1138, 5
      %v1141 = vor.u32 %v1137, %v1140
      %v1142 = vrot.slane %v1141, 4
      %v1144 = vshll.u32 %v973, 16
      %v1146 = vrot.slane %v1144, 5
      %v1147 = vsel %vm1013, %v1142, %v1146
      %v1148 = vshrl.u32 %v973, 16
      %v1150 = vrot.slane %v1148, 4
      %v1151 = vor.u32 %v1150, %v1146
      %v1152 = vrot.slane %v1151, 4
      %v1154 = vshll.u32 %v1000, 16
      %v1156 = vrot.slane %v1154, 5
      %v1157 = vsel %vm1013, %v1152, %v1156
      %v1159 = vshrl.u32 %v974, 16
      %v1161 = vrot.slane %v1159, 4
      %v1162 = vshll.u32 %v974, 16
      %v1164 = vrot.slane %v1162, 5
      %v1165 = vor.u32 %v1161, %v1164
      %v1166 = vrot.slane %v1165, 4
      %v1168 = vshll.u32 %v975, 16
      %v1170 = vrot.slane %v1168, 5
      %v1171 = vsel %vm1013, %v1166, %v1170
      %v1172 = vshrl.u32 %v975, 16
      %v1174 = vrot.slane %v1172, 4
      %v1175 = vor.u32 %v1174, %v1170
      %v1176 = vrot.slane %v1175, 4
      %v1178 = vshll.u32 %v1001, 16
      %v1180 = vrot.slane %v1178, 5
      %v1181 = vsel %vm1013, %v1176, %v1180
      %v1183 = vshrl.u32 %v976, 16
      %v1185 = vrot.slane %v1183, 4
      %v1186 = vshll.u32 %v976, 16
      %v1188 = vrot.slane %v1186, 5
      %v1189 = vor.u32 %v1185, %v1188
      %v1190 = vrot.slane %v1189, 4
      %v1192 = vshll.u32 %v977, 16
      %v1194 = vrot.slane %v1192, 5
      %v1195 = vsel %vm1013, %v1190, %v1194
      %v1196 = vshrl.u32 %v977, 16
      %v1198 = vrot.slane %v1196, 4
      %v1199 = vor.u32 %v1198, %v1194
      %v1200 = vrot.slane %v1199, 4
      %v1202 = vshll.u32 %v1002, 16
      %v1204 = vrot.slane %v1202, 5
      %v1205 = vsel %vm1013, %v1200, %v1204
      %v1207 = vshrl.u32 %v978, 16
      %v1209 = vrot.slane %v1207, 4
      %v1210 = vshll.u32 %v978, 16
      %v1212 = vrot.slane %v1210, 5
      %v1213 = vor.u32 %v1209, %v1212
      %v1214 = vrot.slane %v1213, 4
      %v1216 = vshll.u32 %v979, 16
      %v1218 = vrot.slane %v1216, 5
      %v1219 = vsel %vm1013, %v1214, %v1218
      %v1220 = vshrl.u32 %v979, 16
      %v1222 = vrot.slane %v1220, 4
      %v1223 = vor.u32 %v1222, %v1218
      %v1224 = vrot.slane %v1223, 4
      %v1226 = vshll.u32 %v1003, 16
      %v1228 = vrot.slane %v1226, 5
      %v1229 = vsel %vm1013, %v1224, %v1228
      %v1231 = vshrl.u32 %v980, 16
      %v1233 = vrot.slane %v1231, 4
      %v1234 = vshll.u32 %v980, 16
      %v1236 = vrot.slane %v1234, 5
      %v1237 = vor.u32 %v1233, %v1236
      %v1238 = vrot.slane %v1237, 4
      %v1240 = vshll.u32 %v981, 16
      %v1242 = vrot.slane %v1240, 5
      %v1243 = vsel %vm1013, %v1238, %v1242
      %v1244 = vshrl.u32 %v981, 16
      %v1246 = vrot.slane %v1244, 4
      %v1247 = vor.u32 %v1246, %v1242
      %v1248 = vrot.slane %v1247, 4
      %v1250 = vshll.u32 %v1004, 16
      %v1252 = vrot.slane %v1250, 5
      %v1253 = vsel %vm1013, %v1248, %v1252
      %v1255 = vshrl.u32 %v982, 16
      %v1257 = vrot.slane %v1255, 4
      %v1258 = vshll.u32 %v982, 16
      %v1260 = vrot.slane %v1258, 5
      %v1261 = vor.u32 %v1257, %v1260
      %v1262 = vrot.slane %v1261, 4
      %v1264 = vshll.u32 %v983, 16
      %v1266 = vrot.slane %v1264, 5
      %v1267 = vsel %vm1013, %v1262, %v1266
      %v1268 = vshrl.u32 %v983, 16
      %v1270 = vrot.slane %v1268, 4
      %v1271 = vor.u32 %v1270, %v1266
      %v1272 = vrot.slane %v1271, 4
      %v1274 = vshll.u32 %v1005, 16
      %v1276 = vrot.slane %v1274, 5
      %v1277 = vsel %vm1013, %v1272, %v1276
      %v1279 = vshrl.u32 %v984, 16
      %v1281 = vrot.slane %v1279, 4
      %v1282 = vshll.u32 %v984, 16
      %v1284 = vrot.slane %v1282, 5
      %v1285 = vor.u32 %v1281, %v1284
      %v1286 = vrot.slane %v1285, 4
      %v1288 = vshll.u32 %v985, 16
      %v1290 = vrot.slane %v1288, 5
      %v1291 = vsel %vm1013, %v1286, %v1290
      %v1292 = vshrl.u32 %v985, 16
      %v1294 = vrot.slane %v1292, 4
      %v1295 = vor.u32 %v1294, %v1290
      %v1296 = vrot.slane %v1295, 4
      %v1298 = vshll.u32 %v1006, 16
      %v1300 = vrot.slane %v1298, 5
      %v1301 = vsel %vm1013, %v1296, %v1300
      %v1303 = vshrl.u32 %v986, 16
      %v1305 = vrot.slane %v1303, 4
      %v1306 = vshll.u32 %v986, 16
      %v1308 = vrot.slane %v1306, 5
      %v1309 = vor.u32 %v1305, %v1308
      %v1310 = vrot.slane %v1309, 4
      %v1312 = vshll.u32 %v987, 16
      %v1314 = vrot.slane %v1312, 5
      %v1315 = vsel %vm1013, %v1310, %v1314
      %v1316 = vshrl.u32 %v987, 16
      %v1318 = vrot.slane %v1316, 4
      %v1319 = vor.u32 %v1318, %v1314
      %v1320 = vrot.slane %v1319, 4
      %v1322 = vshll.u32 %v1007, 16
      %v1324 = vrot.slane %v1322, 5
      %v1325 = vsel %vm1013, %v1320, %v1324
      %v1327 = vshrl.u32 %v988, 16
      %v1329 = vrot.slane %v1327, 4
      %v1330 = vshll.u32 %v988, 16
      %v1332 = vrot.slane %v1330, 5
      %v1333 = vor.u32 %v1329, %v1332
      %v1334 = vrot.slane %v1333, 4
      %v1336 = vshll.u32 %v989, 16
      %v1338 = vrot.slane %v1336, 5
      %v1339 = vsel %vm1013, %v1334, %v1338
      %v1340 = vshrl.u32 %v989, 16
      %v1342 = vrot.slane %v1340, 4
      %v1343 = vor.u32 %v1342, %v1338
      %v1344 = vrot.slane %v1343, 4
      %v1346 = vshll.u32 %v1008, 16
      %v1348 = vrot.slane %v1346, 5
      %v1349 = vsel %vm1013, %v1344, %v1348
      %v1351 = vshrl.u32 %v990, 16
      %v1353 = vrot.slane %v1351, 4
      %v1354 = vshll.u32 %v990, 16
      %v1356 = vrot.slane %v1354, 5
      %v1357 = vor.u32 %v1353, %v1356
      %v1358 = vrot.slane %v1357, 4
      %v1360 = vshll.u32 %v991, 16
      %v1362 = vrot.slane %v1360, 5
      %v1363 = vsel %vm1013, %v1358, %v1362
      %v1364 = vshrl.u32 %v991, 16
      %v1366 = vrot.slane %v1364, 4
      %v1367 = vor.u32 %v1366, %v1362
      %v1368 = vrot.slane %v1367, 4
      %v1370 = vshll.u32 %v1009, 16
      %v1372 = vrot.slane %v1370, 5
      %v1373 = vsel %vm1013, %v1368, %v1372
      %v1375 = vshrl.u32 %v992, 16
      %v1377 = vrot.slane %v1375, 4
      %v1378 = vshll.u32 %v992, 16
      %v1380 = vrot.slane %v1378, 5
      %v1381 = vor.u32 %v1377, %v1380
      %v1382 = vrot.slane %v1381, 4
      %v1384 = vshll.u32 %v993, 16
      %v1386 = vrot.slane %v1384, 5
      %v1387 = vsel %vm1013, %v1382, %v1386
      %v1388 = vshrl.u32 %v993, 16
      %v1390 = vrot.slane %v1388, 4
      %v1391 = vor.u32 %v1390, %v1386
      %v1392 = vrot.slane %v1391, 4
      %v1394 = vshll.u32 %v1010, 16
      %v1396 = vrot.slane %v1394, 5
      %v1397 = vsel %vm1013, %v1392, %v1396
      %s1398 = scalar_lea.vmem %s1, 4
      %v1399 = vld [vmem:[%s1398] sm:$0xf]
      %v1400 = vunpack.c.l.b16 %v1027
      %v1401 = vunpack.c.l.b16 %v1037
      %v1402 = vunpack.c.l.b16 %v1051
      %v1403 = vunpack.c.l.b16 %v1061
      %v1404 = vunpack.c.l.b16 %v1075
      %v1405 = vunpack.c.l.b16 %v1085
      %v1406 = vunpack.c.l.b16 %v1099
      %v1407 = vunpack.c.l.b16 %v1109
      %v1408 = vunpack.c.l.b16 %v1123
      %v1409 = vunpack.c.l.b16 %v1133
      %v1410 = vunpack.c.l.b16 %v1147
      %v1411 = vunpack.c.l.b16 %v1157
      %v1412 = vunpack.c.l.b16 %v1171
      %v1413 = vunpack.c.l.b16 %v1181
      %v1414 = vunpack.c.l.b16 %v1195
      %v1415 = vunpack.c.l.b16 %v1205
      %v1416 = vunpack.c.l.b16 %v1219
      %v1417 = vunpack.c.l.b16 %v1229
      %v1418 = vunpack.c.l.b16 %v1243
      %v1419 = vunpack.c.l.b16 %v1253
      %v1420 = vunpack.c.l.b16 %v1267
      %v1421 = vunpack.c.l.b16 %v1277
      %v1422 = vunpack.c.l.b16 %v1291
      %v1423 = vunpack.c.l.b16 %v1301
      %v1424 = vunpack.c.l.b16 %v1315
      %v1425 = vunpack.c.l.b16 %v1325
      %v1426 = vunpack.c.l.b16 %v1339
      %v1427 = vunpack.c.l.b16 %v1349
      %v1428 = vunpack.c.l.b16 %v1363
      %v1429 = vunpack.c.l.b16 %v1373
      %v1430 = vunpack.c.l.b16 %v1387
      %v1431 = vunpack.c.l.b16 %v1397
      %v1432 = vpack.c.b16 %v1401, %v1400
      %v1433 = vpack.c.b16 %v1403, %v1402
      %v1434 = vpack.c.b16 %v1405, %v1404
      %v1435 = vpack.c.b16 %v1407, %v1406
      %v1436 = vpack.c.b16 %v1409, %v1408
      %v1437 = vpack.c.b16 %v1411, %v1410
      %v1438 = vpack.c.b16 %v1413, %v1412
      %v1439 = vpack.c.b16 %v1415, %v1414
      %v1440 = vpack.c.b16 %v1417, %v1416
      %v1441 = vpack.c.b16 %v1419, %v1418
      %v1442 = vpack.c.b16 %v1421, %v1420
      %v1443 = vpack.c.b16 %v1423, %v1422
      %v1444 = vpack.c.b16 %v1425, %v1424
      %v1445 = vpack.c.b16 %v1427, %v1426
      %v1446 = vpack.c.b16 %v1429, %v1428
      %v1447 = vpack.c.b16 %v1431, %v1430
      %vm1448 = vcmask 64512
      %v1450 = vsel %vm1448, %v1432, 0
      %v1453 = vsel %vm1448, %v1433, 0
      %v1456 = vsel %vm1448, %v1434, 0
      %v1459 = vsel %vm1448, %v1435, 0
      %v1462 = vsel %vm1448, %v1436, 0
      %v1465 = vsel %vm1448, %v1437, 0
      %v1468 = vsel %vm1448, %v1438, 0
      %v1471 = vsel %vm1448, %v1439, 0
      %v1474 = vsel %vm1448, %v1440, 0
      %v1477 = vsel %vm1448, %v1441, 0
      %v1480 = vsel %vm1448, %v1442, 0
      %v1483 = vsel %vm1448, %v1443, 0
      %v1486 = vsel %vm1448, %v1444, 0
      %v1489 = vsel %vm1448, %v1445, 0
      %v1492 = vsel %vm1448, %v1446, 0
      %v1495 = vsel %vm1448, %v1447, 0
      %vm1497 = vcmask 1043456
      %v1499 = vsel %vm1497, %v1399, 0
      %1501 = vmatprep.subr.bf16.mxu0 0
      %1502 = vmatpush1.bf16.msra.mxu0 %v1499
      %1503 = vmatprep.subr.bf16.mxu0 0
      %1504 = vmatpush1.bf16.msra.mxu0 0
      %1505 = vmatprep.subr.bf16.mxu0 0
      %1506 = vmatpush1.bf16.msra.mxu0 0
      %1507 = vmatprep.subr.bf16.mxu0 0
      %1508 = vmatpush1.bf16.msra.mxu0 0
      %1509 = vmatprep.subr.bf16.mxu0 0
      %1510 = vmatpush1.bf16.msra.mxu0 0
      %1511 = vmatprep.subr.bf16.mxu0 0
      %1512 = vmatpush1.bf16.msra.mxu0 0
      %1513 = vmatprep.subr.bf16.mxu0 0
      %1514 = vmatpush1.bf16.msra.mxu0 0
      %1515 = vmatprep.subr.bf16.mxu0 0
      %1516 = vmatpush1.bf16.msra.mxu0 0
      %1517 = vmatprep.subr.bf16.mxu0 0
      %1518 = vmatpush1.bf16.msra.mxu0 0
      %1519 = vmatprep.subr.bf16.mxu0 0
      %1520 = vmatpush1.bf16.msra.mxu0 0
      %1521 = vmatprep.subr.bf16.mxu0 0
      %1522 = vmatpush1.bf16.msra.mxu0 0
      %1523 = vmatprep.subr.bf16.mxu0 0
      %1524 = vmatpush1.bf16.msra.mxu0 0
      %1525 = vmatprep.subr.bf16.mxu0 0
      %1526 = vmatpush1.bf16.msra.mxu0 0
      %1527 = vmatprep.subr.bf16.mxu0 0
      %1528 = vmatpush1.bf16.msra.mxu0 0
      %1529 = vmatprep.subr.bf16.mxu0 0
      %1530 = vmatpush1.bf16.msra.mxu0 0
      %1531 = vmatprep.subr.bf16.mxu0 0
      %1532 = vmatpush1.bf16.msra.mxu0 0
      %1533 = vmatprep.mubr.bf16.mxu0 0
      %1534 = vmatmul.mubr.bf16.gmra.mrb[0].mxu0 %v1450
      %v1535 = vpop.f32.mrb[0].mxu0
      %v1536 = vadd.f32 0.0, %v1535
      %v1537 = vpop.f32.mrb[0].mxu0
      %v1538 = vpop.f32.mrb[0].mxu0
      %v1539 = vadd.f32 0.0, %v1538
      %v1540 = vpop.f32.mrb[0].mxu0
      %1541 = vmatprep.mubr.bf16.mxu0 0
      %1542 = vmatmul.mubr.bf16.gmra.mrb[0].mxu0 %v1453
      %v1543 = vpop.f32.mrb[0].mxu0
      %v1544 = vadd.f32 0.0, %v1543
      %v1545 = vpop.f32.mrb[0].mxu0
      %v1546 = vpop.f32.mrb[0].mxu0
      %v1547 = vadd.f32 0.0, %v1546
      %v1548 = vpop.f32.mrb[0].mxu0
      %1549 = vmatprep.mubr.bf16.mxu0 0
      %1550 = vmatmul.mubr.bf16.gmra.mrb[0].mxu0 %v1456
      %v1551 = vpop.f32.mrb[0].mxu0
      %v1552 = vadd.f32 0.0, %v1551
      %v1553 = vpop.f32.mrb[0].mxu0
      %v1554 = vpop.f32.mrb[0].mxu0
      %v1555 = vadd.f32 0.0, %v1554
      %v1556 = vpop.f32.mrb[0].mxu0
      %1557 = vmatprep.mubr.bf16.mxu0 0
      %1558 = vmatmul.mubr.bf16.gmra.mrb[0].mxu0 %v1459
      %v1559 = vpop.f32.mrb[0].mxu0
      %v1560 = vadd.f32 0.0, %v1559
      %v1561 = vpop.f32.mrb[0].mxu0
      %v1562 = vpop.f32.mrb[0].mxu0
      %v1563 = vadd.f32 0.0, %v1562
      %v1564 = vpop.f32.mrb[0].mxu0
      %1565 = vmatprep.mubr.bf16.mxu0 0
      %1566 = vmatmul.mubr.bf16.gmra.mrb[0].mxu0 %v1462
      %v1567 = vpop.f32.mrb[0].mxu0
      %v1568 = vadd.f32 0.0, %v1567
      %v1569 = vpop.f32.mrb[0].mxu0
      %v1570 = vpop.f32.mrb[0].mxu0
      %v1571 = vadd.f32 0.0, %v1570
      %v1572 = vpop.f32.mrb[0].mxu0
      %1573 = vmatprep.mubr.bf16.mxu0 0
      %1574 = vmatmul.mubr.bf16.gmra.mrb[0].mxu0 %v1465
      %v1575 = vpop.f32.mrb[0].mxu0
      %v1576 = vadd.f32 0.0, %v1575
      %v1577 = vpop.f32.mrb[0].mxu0
      %v1578 = vpop.f32.mrb[0].mxu0
      %v1579 = vadd.f32 0.0, %v1578
      %v1580 = vpop.f32.mrb[0].mxu0
      %1581 = vmatprep.mubr.bf16.mxu0 0
      %1582 = vmatmul.mubr.bf16.gmra.mrb[0].mxu0 %v1468
      %v1583 = vpop.f32.mrb[0].mxu0
      %v1584 = vadd.f32 0.0, %v1583
      %v1585 = vpop.f32.mrb[0].mxu0
      %v1586 = vpop.f32.mrb[0].mxu0
      %v1587 = vadd.f32 0.0, %v1586
      %v1588 = vpop.f32.mrb[0].mxu0
      %1589 = vmatprep.mubr.bf16.mxu0 0
      %1590 = vmatmul.mubr.bf16.gmra.mrb[0].mxu0 %v1471
      %v1591 = vpop.f32.mrb[0].mxu0
      %v1592 = vadd.f32 0.0, %v1591
      %v1593 = vpop.f32.mrb[0].mxu0
      %v1594 = vpop.f32.mrb[0].mxu0
      %v1595 = vadd.f32 0.0, %v1594
      %v1596 = vpop.f32.mrb[0].mxu0
      %1597 = vmatprep.mubr.bf16.mxu0 0
      %1598 = vmatmul.mubr.bf16.gmra.mrb[0].mxu0 %v1474
      %v1599 = vpop.f32.mrb[0].mxu0
      %v1600 = vadd.f32 0.0, %v1599
      %v1601 = vpop.f32.mrb[0].mxu0
      %v1602 = vpop.f32.mrb[0].mxu0
      %v1603 = vadd.f32 0.0, %v1602
      %v1604 = vpop.f32.mrb[0].mxu0
      %1605 = vmatprep.mubr.bf16.mxu0 0
      %1606 = vmatmul.mubr.bf16.gmra.mrb[0].mxu0 %v1477
      %v1607 = vpop.f32.mrb[0].mxu0
      %v1608 = vadd.f32 0.0, %v1607
      %v1609 = vpop.f32.mrb[0].mxu0
      %v1610 = vpop.f32.mrb[0].mxu0
      %v1611 = vadd.f32 0.0, %v1610
      %v1612 = vpop.f32.mrb[0].mxu0
      %1613 = vmatprep.mubr.bf16.mxu0 0
      %1614 = vmatmul.mubr.bf16.gmra.mrb[0].mxu0 %v1480
      %v1615 = vpop.f32.mrb[0].mxu0
      %v1616 = vadd.f32 0.0, %v1615
      %v1617 = vpop.f32.mrb[0].mxu0
      %v1618 = vpop.f32.mrb[0].mxu0
      %v1619 = vadd.f32 0.0, %v1618
      %v1620 = vpop.f32.mrb[0].mxu0
      %1621 = vmatprep.mubr.bf16.mxu0 0
      %1622 = vmatmul.mubr.bf16.gmra.mrb[0].mxu0 %v1483
      %v1623 = vpop.f32.mrb[0].mxu0
      %v1624 = vadd.f32 0.0, %v1623
      %v1625 = vpop.f32.mrb[0].mxu0
      %v1626 = vpop.f32.mrb[0].mxu0
      %v1627 = vadd.f32 0.0, %v1626
      %v1628 = vpop.f32.mrb[0].mxu0
      %1629 = vmatprep.mubr.bf16.mxu0 0
      %1630 = vmatmul.mubr.bf16.gmra.mrb[0].mxu0 %v1486
      %v1631 = vpop.f32.mrb[0].mxu0
      %v1632 = vadd.f32 0.0, %v1631
      %v1633 = vpop.f32.mrb[0].mxu0
      %v1634 = vpop.f32.mrb[0].mxu0
      %v1635 = vadd.f32 0.0, %v1634
      %v1636 = vpop.f32.mrb[0].mxu0
      %1637 = vmatprep.mubr.bf16.mxu0 0
      %1638 = vmatmul.mubr.bf16.gmra.mrb[0].mxu0 %v1489
      %v1639 = vpop.f32.mrb[0].mxu0
      %v1640 = vadd.f32 0.0, %v1639
      %v1641 = vpop.f32.mrb[0].mxu0
      %v1642 = vpop.f32.mrb[0].mxu0
      %v1643 = vadd.f32 0.0, %v1642
      %v1644 = vpop.f32.mrb[0].mxu0
      %1645 = vmatprep.mubr.bf16.mxu0 0
      %1646 = vmatmul.mubr.bf16.gmra.mrb[0].mxu0 %v1492
      %v1647 = vpop.f32.mrb[0].mxu0
      %v1648 = vadd.f32 0.0, %v1647
      %v1649 = vpop.f32.mrb[0].mxu0
      %v1650 = vpop.f32.mrb[0].mxu0
      %v1651 = vadd.f32 0.0, %v1650
      %v1652 = vpop.f32.mrb[0].mxu0
      %1653 = vmatprep.mubr.bf16.mxu0 0
      %1654 = vmatmul.mubr.bf16.gmra.mrb[0].mxu0 %v1495
      %v1655 = vpop.f32.mrb[0].mxu0
      %v1656 = vadd.f32 0.0, %v1655
      %v1657 = vpop.f32.mrb[0].mxu0
      %v1658 = vpop.f32.mrb[0].mxu0
      %v1659 = vadd.f32 0.0, %v1658
      %v1660 = vpop.f32.mrb[0].mxu0
      %1661 = vdwg.mxu0
      %v1694 = vunpack.c.l.b16 %v962
      %v1695 = vunpack.c.l.b16 %v963
      %v1696 = vunpack.c.l.b16 %v964
      %v1697 = vunpack.c.l.b16 %v965
      %v1698 = vunpack.c.l.b16 %v966
      %v1699 = vunpack.c.l.b16 %v967
      %v1700 = vunpack.c.l.b16 %v968
      %v1701 = vunpack.c.l.b16 %v969
      %v1702 = vunpack.c.l.b16 %v970
      %v1703 = vunpack.c.l.b16 %v971
      %v1704 = vunpack.c.l.b16 %v972
      %v1705 = vunpack.c.l.b16 %v973
      %v1706 = vunpack.c.l.b16 %v974
      %v1707 = vunpack.c.l.b16 %v975
      %v1708 = vunpack.c.l.b16 %v976
      %v1709 = vunpack.c.l.b16 %v977
      %v1710 = vunpack.c.l.b16 %v978
      %v1711 = vunpack.c.l.b16 %v979
      %v1712 = vunpack.c.l.b16 %v980
      %v1713 = vunpack.c.l.b16 %v981
      %v1714 = vunpack.c.l.b16 %v982
      %v1715 = vunpack.c.l.b16 %v983
      %v1716 = vunpack.c.l.b16 %v984
      %v1717 = vunpack.c.l.b16 %v985
      %v1718 = vunpack.c.l.b16 %v986
      %v1719 = vunpack.c.l.b16 %v987
      %v1720 = vunpack.c.l.b16 %v988
      %v1721 = vunpack.c.l.b16 %v989
      %v1722 = vunpack.c.l.b16 %v990
      %v1723 = vunpack.c.l.b16 %v991
      %v1724 = vunpack.c.l.b16 %v992
      %v1725 = vunpack.c.l.b16 %v993
      %v1726 = vpack.c.b16 %v1695, %v1694
      %v1727 = vpack.c.b16 %v1697, %v1696
      %v1728 = vpack.c.b16 %v1699, %v1698
      %v1729 = vpack.c.b16 %v1701, %v1700
      %v1730 = vpack.c.b16 %v1703, %v1702
      %v1731 = vpack.c.b16 %v1705, %v1704
      %v1732 = vpack.c.b16 %v1707, %v1706
      %v1733 = vpack.c.b16 %v1709, %v1708
      %v1734 = vpack.c.b16 %v1711, %v1710
      %v1735 = vpack.c.b16 %v1713, %v1712
      %v1736 = vpack.c.b16 %v1715, %v1714
      %v1737 = vpack.c.b16 %v1717, %v1716
      %v1738 = vpack.c.b16 %v1719, %v1718
      %v1739 = vpack.c.b16 %v1721, %v1720
      %v1740 = vpack.c.b16 %v1723, %v1722
      %v1741 = vpack.c.b16 %v1725, %v1724
      %v1743 = vsel %vm1448, %v1726, 0
      %v1746 = vsel %vm1448, %v1727, 0
      %v1749 = vsel %vm1448, %v1728, 0
      %v1752 = vsel %vm1448, %v1729, 0
      %v1755 = vsel %vm1448, %v1730, 0
      %v1758 = vsel %vm1448, %v1731, 0
      %v1761 = vsel %vm1448, %v1732, 0
      %v1764 = vsel %vm1448, %v1733, 0
      %v1767 = vsel %vm1448, %v1734, 0
      %v1770 = vsel %vm1448, %v1735, 0
      %v1773 = vsel %vm1448, %v1736, 0
      %v1776 = vsel %vm1448, %v1737, 0
      %v1779 = vsel %vm1448, %v1738, 0
      %v1782 = vsel %vm1448, %v1739, 0
      %v1785 = vsel %vm1448, %v1740, 0
      %v1788 = vsel %vm1448, %v1741, 0
      %v1791 = vsel %vm1497, %v994, 0
      %1793 = vmatprep.subr.bf16.mxu0 0
      %1794 = vmatpush1.bf16.msra.mxu0 %v1791
      %1795 = vmatprep.subr.bf16.mxu0 0
      %1796 = vmatpush1.bf16.msra.mxu0 0
      %1797 = vmatprep.subr.bf16.mxu0 0
      %1798 = vmatpush1.bf16.msra.mxu0 0
      %1799 = vmatprep.subr.bf16.mxu0 0
      %1800 = vmatpush1.bf16.msra.mxu0 0
      %1801 = vmatprep.subr.bf16.mxu0 0
      %1802 = vmatpush1.bf16.msra.mxu0 0
      %1803 = vmatprep.subr.bf16.mxu0 0
      %1804 = vmatpush1.bf16.msra.mxu0 0
      %1805 = vmatprep.subr.bf16.mxu0 0
      %1806 = vmatpush1.bf16.msra.mxu0 0
      %1807 = vmatprep.subr.bf16.mxu0 0
      %1808 = vmatpush1.bf16.msra.mxu0 0
      %1809 = vmatprep.subr.bf16.mxu0 0
      %1810 = vmatpush1.bf16.msra.mxu0 0
      %1811 = vmatprep.subr.bf16.mxu0 0
      %1812 = vmatpush1.bf16.msra.mxu0 0
      %1813 = vmatprep.subr.bf16.mxu0 0
      %1814 = vmatpush1.bf16.msra.mxu0 0
      %1815 = vmatprep.subr.bf16.mxu0 0
      %1816 = vmatpush1.bf16.msra.mxu0 0
      %1817 = vmatprep.subr.bf16.mxu0 0
      %1818 = vmatpush1.bf16.msra.mxu0 0
      %1819 = vmatprep.subr.bf16.mxu0 0
      %1820 = vmatpush1.bf16.msra.mxu0 0
      %1821 = vmatprep.subr.bf16.mxu0 0
      %1822 = vmatpush1.bf16.msra.mxu0 0
      %1823 = vmatprep.subr.bf16.mxu0 0
      %1824 = vmatpush1.bf16.msra.mxu0 0
      %1825 = vmatprep.mubr.bf16.mxu0 0
      %1826 = vmatmul.mubr.bf16.gmra.mrb[0].mxu0 %v1743
      %v1827 = vpop.f32.mrb[0].mxu0
      %v1828 = vadd.f32 %v1536, %v1827
      %v1829 = vpop.f32.mrb[0].mxu0
      %v1830 = vpop.f32.mrb[0].mxu0
      %v1831 = vadd.f32 %v1539, %v1830
      %v1832 = vpop.f32.mrb[0].mxu0
      %1833 = vmatprep.mubr.bf16.mxu0 0
      %1834 = vmatmul.mubr.bf16.gmra.mrb[0].mxu0 %v1746
      %v1835 = vpop.f32.mrb[0].mxu0
      %v1836 = vadd.f32 %v1544, %v1835
      %v1837 = vpop.f32.mrb[0].mxu0
      %v1838 = vpop.f32.mrb[0].mxu0
      %v1839 = vadd.f32 %v1547, %v1838
      %v1840 = vpop.f32.mrb[0].mxu0
      %1841 = vmatprep.mubr.bf16.mxu0 0
      %1842 = vmatmul.mubr.bf16.gmra.mrb[0].mxu0 %v1749
      %v1843 = vpop.f32.mrb[0].mxu0
      %v1844 = vadd.f32 %v1552, %v1843
      %v1845 = vpop.f32.mrb[0].mxu0
      %v1846 = vpop.f32.mrb[0].mxu0
      %v1847 = vadd.f32 %v1555, %v1846
      %v1848 = vpop.f32.mrb[0].mxu0
      %1849 = vmatprep.mubr.bf16.mxu0 0
      %1850 = vmatmul.mubr.bf16.gmra.mrb[0].mxu0 %v1752
      %v1851 = vpop.f32.mrb[0].mxu0
      %v1852 = vadd.f32 %v1560, %v1851
      %v1853 = vpop.f32.mrb[0].mxu0
      %v1854 = vpop.f32.mrb[0].mxu0
      %v1855 = vadd.f32 %v1563, %v1854
      %v1856 = vpop.f32.mrb[0].mxu0
      %1857 = vmatprep.mubr.bf16.mxu0 0
      %1858 = vmatmul.mubr.bf16.gmra.mrb[0].mxu0 %v1755
      %v1859 = vpop.f32.mrb[0].mxu0
      %v1860 = vadd.f32 %v1568, %v1859
      %v1861 = vpop.f32.mrb[0].mxu0
      %v1862 = vpop.f32.mrb[0].mxu0
      %v1863 = vadd.f32 %v1571, %v1862
      %v1864 = vpop.f32.mrb[0].mxu0
      %1865 = vmatprep.mubr.bf16.mxu0 0
      %1866 = vmatmul.mubr.bf16.gmra.mrb[0].mxu0 %v1758
      %v1867 = vpop.f32.mrb[0].mxu0
      %v1868 = vadd.f32 %v1576, %v1867
      %v1869 = vpop.f32.mrb[0].mxu0
      %v1870 = vpop.f32.mrb[0].mxu0
      %v1871 = vadd.f32 %v1579, %v1870
      %v1872 = vpop.f32.mrb[0].mxu0
      %1873 = vmatprep.mubr.bf16.mxu0 0
      %1874 = vmatmul.mubr.bf16.gmra.mrb[0].mxu0 %v1761
      %v1875 = vpop.f32.mrb[0].mxu0
      %v1876 = vadd.f32 %v1584, %v1875
      %v1877 = vpop.f32.mrb[0].mxu0
      %v1878 = vpop.f32.mrb[0].mxu0
      %v1879 = vadd.f32 %v1587, %v1878
      %v1880 = vpop.f32.mrb[0].mxu0
      %1881 = vmatprep.mubr.bf16.mxu0 0
      %1882 = vmatmul.mubr.bf16.gmra.mrb[0].mxu0 %v1764
      %v1883 = vpop.f32.mrb[0].mxu0
      %v1884 = vadd.f32 %v1592, %v1883
      %v1885 = vpop.f32.mrb[0].mxu0
      %v1886 = vpop.f32.mrb[0].mxu0
      %v1887 = vadd.f32 %v1595, %v1886
      %v1888 = vpop.f32.mrb[0].mxu0
      %1889 = vmatprep.mubr.bf16.mxu0 0
      %1890 = vmatmul.mubr.bf16.gmra.mrb[0].mxu0 %v1767
      %v1891 = vpop.f32.mrb[0].mxu0
      %v1892 = vadd.f32 %v1600, %v1891
      %v1893 = vpop.f32.mrb[0].mxu0
      %v1894 = vpop.f32.mrb[0].mxu0
      %v1895 = vadd.f32 %v1603, %v1894
      %v1896 = vpop.f32.mrb[0].mxu0
      %1897 = vmatprep.mubr.bf16.mxu0 0
      %1898 = vmatmul.mubr.bf16.gmra.mrb[0].mxu0 %v1770
      %v1899 = vpop.f32.mrb[0].mxu0
      %v1900 = vadd.f32 %v1608, %v1899
      %v1901 = vpop.f32.mrb[0].mxu0
      %v1902 = vpop.f32.mrb[0].mxu0
      %v1903 = vadd.f32 %v1611, %v1902
      %v1904 = vpop.f32.mrb[0].mxu0
      %1905 = vmatprep.mubr.bf16.mxu0 0
      %1906 = vmatmul.mubr.bf16.gmra.mrb[0].mxu0 %v1773
      %v1907 = vpop.f32.mrb[0].mxu0
      %v1908 = vadd.f32 %v1616, %v1907
      %v1909 = vpop.f32.mrb[0].mxu0
      %v1910 = vpop.f32.mrb[0].mxu0
      %v1911 = vadd.f32 %v1619, %v1910
      %v1912 = vpop.f32.mrb[0].mxu0
      %1913 = vmatprep.mubr.bf16.mxu0 0
      %1914 = vmatmul.mubr.bf16.gmra.mrb[0].mxu0 %v1776
      %v1915 = vpop.f32.mrb[0].mxu0
      %v1916 = vadd.f32 %v1624, %v1915
      %v1917 = vpop.f32.mrb[0].mxu0
      %v1918 = vpop.f32.mrb[0].mxu0
      %v1919 = vadd.f32 %v1627, %v1918
      %v1920 = vpop.f32.mrb[0].mxu0
      %1921 = vmatprep.mubr.bf16.mxu0 0
      %1922 = vmatmul.mubr.bf16.gmra.mrb[0].mxu0 %v1779
      %v1923 = vpop.f32.mrb[0].mxu0
      %v1924 = vadd.f32 %v1632, %v1923
      %v1925 = vpop.f32.mrb[0].mxu0
      %v1926 = vpop.f32.mrb[0].mxu0
      %v1927 = vadd.f32 %v1635, %v1926
      %v1928 = vpop.f32.mrb[0].mxu0
      %1929 = vmatprep.mubr.bf16.mxu0 0
      %1930 = vmatmul.mubr.bf16.gmra.mrb[0].mxu0 %v1782
      %v1931 = vpop.f32.mrb[0].mxu0
      %v1932 = vadd.f32 %v1640, %v1931
      %v1933 = vpop.f32.mrb[0].mxu0
      %v1934 = vpop.f32.mrb[0].mxu0
      %v1935 = vadd.f32 %v1643, %v1934
      %v1936 = vpop.f32.mrb[0].mxu0
      %1937 = vmatprep.mubr.bf16.mxu0 0
      %1938 = vmatmul.mubr.bf16.gmra.mrb[0].mxu0 %v1785
      %v1939 = vpop.f32.mrb[0].mxu0
      %v1940 = vadd.f32 %v1648, %v1939
      %v1941 = vpop.f32.mrb[0].mxu0
      %v1942 = vpop.f32.mrb[0].mxu0
      %v1943 = vadd.f32 %v1651, %v1942
      %v1944 = vpop.f32.mrb[0].mxu0
      %1945 = vmatprep.mubr.bf16.mxu0 0
      %1946 = vmatmul.mubr.bf16.gmra.mrb[0].mxu0 %v1788
      %v1947 = vpop.f32.mrb[0].mxu0
      %v1948 = vadd.f32 %v1656, %v1947
      %v1949 = vpop.f32.mrb[0].mxu0
      %v1950 = vpop.f32.mrb[0].mxu0
      %v1951 = vadd.f32 %v1659, %v1950
      %v1952 = vpop.f32.mrb[0].mxu0
      %1953 = vdwg.mxu0
      %v1954 = vld [vmem:[#allocation2] sm:$0xe]
      %v1955 = vld [vmem:[#allocation2 + $0xc] sm:$0xe]
      %v1956 = vld [vmem:[#allocation2 + $0x18] sm:$0xe]
      %v1957 = vld [vmem:[#allocation2 + $0x24] sm:$0xe]
      %v1958 = vld [vmem:[#allocation2 + $0x30] sm:$0xe]
      %v1959 = vld [vmem:[#allocation2 + $0x3c] sm:$0xe]
      %v1960 = vld [vmem:[#allocation2 + $0x48] sm:$0xe]
      %v1961 = vld [vmem:[#allocation2 + $0x54] sm:$0xe]
      %v1962 = vld [vmem:[#allocation2 + $0x60] sm:$0xe]
      %v1963 = vld [vmem:[#allocation2 + $0x6c] sm:$0xe]
      %v1964 = vld [vmem:[#allocation2 + $0x78] sm:$0xe]
      %v1965 = vld [vmem:[#allocation2 + $0x84] sm:$0xe]
      %v1966 = vld [vmem:[#allocation2 + $0x90] sm:$0xe]
      %v1967 = vld [vmem:[#allocation2 + $0x9c] sm:$0xe]
      %v1968 = vld [vmem:[#allocation2 + $0xa8] sm:$0xe]
      %v1969 = vld [vmem:[#allocation2 + $0xb4] sm:$0xe]
      %vm2002 = vcmask 1042432
      %vm2003 = vcmask 1046532
      %vm2004 = vmor %vm2002, %vm2003
      %v2005 = vrot.slane %v1954, 5
      %v2006 = vrot.slane %v2005, 4
      %v2007 = vrot.slane %v963, 5
      %v2008 = vsel %vm2004, %v2006, %v2007
      %v2009 = vrot.slane %v2007, 4
      %v2010 = vrot.slane %v995, 5
      %v2011 = vsel %vm2004, %v2009, %v2010
      %v2012 = vrot.slane %v1955, 5
      %v2013 = vrot.slane %v2012, 4
      %v2014 = vrot.slane %v965, 5
      %v2015 = vsel %vm2004, %v2013, %v2014
      %v2016 = vrot.slane %v2014, 4
      %v2017 = vrot.slane %v996, 5
      %v2018 = vsel %vm2004, %v2016, %v2017
      %v2019 = vrot.slane %v1956, 5
      %v2020 = vrot.slane %v2019, 4
      %v2021 = vrot.slane %v967, 5
      %v2022 = vsel %vm2004, %v2020, %v2021
      %v2023 = vrot.slane %v2021, 4
      %v2024 = vrot.slane %v997, 5
      %v2025 = vsel %vm2004, %v2023, %v2024
      %v2026 = vrot.slane %v1957, 5
      %v2027 = vrot.slane %v2026, 4
      %v2028 = vrot.slane %v969, 5
      %v2029 = vsel %vm2004, %v2027, %v2028
      %v2030 = vrot.slane %v2028, 4
      %v2031 = vrot.slane %v998, 5
      %v2032 = vsel %vm2004, %v2030, %v2031
      %v2033 = vrot.slane %v1958, 5
      %v2034 = vrot.slane %v2033, 4
      %v2035 = vrot.slane %v971, 5
      %v2036 = vsel %vm2004, %v2034, %v2035
      %v2037 = vrot.slane %v2035, 4
      %v2038 = vrot.slane %v999, 5
      %v2039 = vsel %vm2004, %v2037, %v2038
      %v2040 = vrot.slane %v1959, 5
      %v2041 = vrot.slane %v2040, 4
      %v2042 = vrot.slane %v973, 5
      %v2043 = vsel %vm2004, %v2041, %v2042
      %v2044 = vrot.slane %v2042, 4
      %v2045 = vrot.slane %v1000, 5
      %v2046 = vsel %vm2004, %v2044, %v2045
      %v2047 = vrot.slane %v1960, 5
      %v2048 = vrot.slane %v2047, 4
      %v2049 = vrot.slane %v975, 5
      %v2050 = vsel %vm2004, %v2048, %v2049
      %v2051 = vrot.slane %v2049, 4
      %v2052 = vrot.slane %v1001, 5
      %v2053 = vsel %vm2004, %v2051, %v2052
      %v2054 = vrot.slane %v1961, 5
      %v2055 = vrot.slane %v2054, 4
      %v2056 = vrot.slane %v977, 5
      %v2057 = vsel %vm2004, %v2055, %v2056
      %v2058 = vrot.slane %v2056, 4
      %v2059 = vrot.slane %v1002, 5
      %v2060 = vsel %vm2004, %v2058, %v2059
      %v2061 = vrot.slane %v1962, 5
      %v2062 = vrot.slane %v2061, 4
      %v2063 = vrot.slane %v979, 5
      %v2064 = vsel %vm2004, %v2062, %v2063
      %v2065 = vrot.slane %v2063, 4
      %v2066 = vrot.slane %v1003, 5
      %v2067 = vsel %vm2004, %v2065, %v2066
      %v2068 = vrot.slane %v1963, 5
      %v2069 = vrot.slane %v2068, 4
      %v2070 = vrot.slane %v981, 5
      %v2071 = vsel %vm2004, %v2069, %v2070
      %v2072 = vrot.slane %v2070, 4
      %v2073 = vrot.slane %v1004, 5
      %v2074 = vsel %vm2004, %v2072, %v2073
      %v2075 = vrot.slane %v1964, 5
      %v2076 = vrot.slane %v2075, 4
      %v2077 = vrot.slane %v983, 5
      %v2078 = vsel %vm2004, %v2076, %v2077
      %v2079 = vrot.slane %v2077, 4
      %v2080 = vrot.slane %v1005, 5
      %v2081 = vsel %vm2004, %v2079, %v2080
      %v2082 = vrot.slane %v1965, 5
      %v2083 = vrot.slane %v2082, 4
      %v2084 = vrot.slane %v985, 5
      %v2085 = vsel %vm2004, %v2083, %v2084
      %v2086 = vrot.slane %v2084, 4
      %v2087 = vrot.slane %v1006, 5
      %v2088 = vsel %vm2004, %v2086, %v2087
      %v2089 = vrot.slane %v1966, 5
      %v2090 = vrot.slane %v2089, 4
      %v2091 = vrot.slane %v987, 5
      %v2092 = vsel %vm2004, %v2090, %v2091
      %v2093 = vrot.slane %v2091, 4
      %v2094 = vrot.slane %v1007, 5
      %v2095 = vsel %vm2004, %v2093, %v2094
      %v2096 = vrot.slane %v1967, 5
      %v2097 = vrot.slane %v2096, 4
      %v2098 = vrot.slane %v989, 5
      %v2099 = vsel %vm2004, %v2097, %v2098
      %v2100 = vrot.slane %v2098, 4
      %v2101 = vrot.slane %v1008, 5
      %v2102 = vsel %vm2004, %v2100, %v2101
      %v2103 = vrot.slane %v1968, 5
      %v2104 = vrot.slane %v2103, 4
      %v2105 = vrot.slane %v991, 5
      %v2106 = vsel %vm2004, %v2104, %v2105
      %v2107 = vrot.slane %v2105, 4
      %v2108 = vrot.slane %v1009, 5
      %v2109 = vsel %vm2004, %v2107, %v2108
      %v2110 = vrot.slane %v1969, 5
      %v2111 = vrot.slane %v2110, 4
      %v2112 = vrot.slane %v993, 5
      %v2113 = vsel %vm2004, %v2111, %v2112
      %v2114 = vrot.slane %v2112, 4
      %v2115 = vrot.slane %v1010, 5
      %v2116 = vsel %vm2004, %v2114, %v2115
      %s2117 = scalar_lea.vmem %s1, 8
      %v2118 = vld [vmem:[%s2117] sm:$0xf]
      %v2119 = vunpack.c.l.b16 %v2008
      %v2120 = vunpack.c.l.b16 %v2011
      %v2121 = vunpack.c.l.b16 %v2015
      %v2122 = vunpack.c.l.b16 %v2018
      %v2123 = vunpack.c.l.b16 %v2022
      %v2124 = vunpack.c.l.b16 %v2025
      %v2125 = vunpack.c.l.b16 %v2029
      %v2126 = vunpack.c.l.b16 %v2032
      %v2127 = vunpack.c.l.b16 %v2036
      %v2128 = vunpack.c.l.b16 %v2039
      %v2129 = vunpack.c.l.b16 %v2043
      %v2130 = vunpack.c.l.b16 %v2046
      %v2131 = vunpack.c.l.b16 %v2050
      %v2132 = vunpack.c.l.b16 %v2053
      %v2133 = vunpack.c.l.b16 %v2057
      %v2134 = vunpack.c.l.b16 %v2060
      %v2135 = vunpack.c.l.b16 %v2064
      %v2136 = vunpack.c.l.b16 %v2067
      %v2137 = vunpack.c.l.b16 %v2071
      %v2138 = vunpack.c.l.b16 %v2074
      %v2139 = vunpack.c.l.b16 %v2078
      %v2140 = vunpack.c.l.b16 %v2081
      %v2141 = vunpack.c.l.b16 %v2085
      %v2142 = vunpack.c.l.b16 %v2088
      %v2143 = vunpack.c.l.b16 %v2092
      %v2144 = vunpack.c.l.b16 %v2095
      %v2145 = vunpack.c.l.b16 %v2099
      %v2146 = vunpack.c.l.b16 %v2102
      %v2147 = vunpack.c.l.b16 %v2106
      %v2148 = vunpack.c.l.b16 %v2109
      %v2149 = vunpack.c.l.b16 %v2113
      %v2150 = vunpack.c.l.b16 %v2116
      %v2151 = vpack.c.b16 %v2120, %v2119
      %v2152 = vpack.c.b16 %v2122, %v2121
      %v2153 = vpack.c.b16 %v2124, %v2123
      %v2154 = vpack.c.b16 %v2126, %v2125
      %v2155 = vpack.c.b16 %v2128, %v2127
      %v2156 = vpack.c.b16 %v2130, %v2129
      %v2157 = vpack.c.b16 %v2132, %v2131
      %v2158 = vpack.c.b16 %v2134, %v2133
      %v2159 = vpack.c.b16 %v2136, %v2135
      %v2160 = vpack.c.b16 %v2138, %v2137
      %v2161 = vpack.c.b16 %v2140, %v2139
      %v2162 = vpack.c.b16 %v2142, %v2141
      %v2163 = vpack.c.b16 %v2144, %v2143
      %v2164 = vpack.c.b16 %v2146, %v2145
      %v2165 = vpack.c.b16 %v2148, %v2147
      %v2166 = vpack.c.b16 %v2150, %v2149
      %v2168 = vsel %vm1448, %v2151, 0
      %v2171 = vsel %vm1448, %v2152, 0
      %v2174 = vsel %vm1448, %v2153, 0
      %v2177 = vsel %vm1448, %v2154, 0
      %v2180 = vsel %vm1448, %v2155, 0
      %v2183 = vsel %vm1448, %v2156, 0
      %v2186 = vsel %vm1448, %v2157, 0
      %v2189 = vsel %vm1448, %v2158, 0
      %v2192 = vsel %vm1448, %v2159, 0
      %v2195 = vsel %vm1448, %v2160, 0
      %v2198 = vsel %vm1448, %v2161, 0
      %v2201 = vsel %vm1448, %v2162, 0
      %v2204 = vsel %vm1448, %v2163, 0
      %v2207 = vsel %vm1448, %v2164, 0
      %v2210 = vsel %vm1448, %v2165, 0
      %v2213 = vsel %vm1448, %v2166, 0
      %v2216 = vsel %vm1497, %v2118, 0
      %2218 = vmatprep.subr.bf16.mxu0 0
      %2219 = vmatpush1.bf16.msra.mxu0 %v2216
      %2220 = vmatprep.subr.bf16.mxu0 0
      %2221 = vmatpush1.bf16.msra.mxu0 0
      %2222 = vmatprep.subr.bf16.mxu0 0
      %2223 = vmatpush1.bf16.msra.mxu0 0
      %2224 = vmatprep.subr.bf16.mxu0 0
      %2225 = vmatpush1.bf16.msra.mxu0 0
      %2226 = vmatprep.subr.bf16.mxu0 0
      %2227 = vmatpush1.bf16.msra.mxu0 0
      %2228 = vmatprep.subr.bf16.mxu0 0
      %2229 = vmatpush1.bf16.msra.mxu0 0
      %2230 = vmatprep.subr.bf16.mxu0 0
      %2231 = vmatpush1.bf16.msra.mxu0 0
      %2232 = vmatprep.subr.bf16.mxu0 0
      %2233 = vmatpush1.bf16.msra.mxu0 0
      %2234 = vmatprep.subr.bf16.mxu0 0
      %2235 = vmatpush1.bf16.msra.mxu0 0
      %2236 = vmatprep.subr.bf16.mxu0 0
      %2237 = vmatpush1.bf16.msra.mxu0 0
      %2238 = vmatprep.subr.bf16.mxu0 0
      %2239 = vmatpush1.bf16.msra.mxu0 0
      %2240 = vmatprep.subr.bf16.mxu0 0
      %2241 = vmatpush1.bf16.msra.mxu0 0
      %2242 = vmatprep.subr.bf16.mxu0 0
      %2243 = vmatpush1.bf16.msra.mxu0 0
      %2244 = vmatprep.subr.bf16.mxu0 0
      %2245 = vmatpush1.bf16.msra.mxu0 0
      %2246 = vmatprep.subr.bf16.mxu0 0
      %2247 = vmatpush1.bf16.msra.mxu0 0
      %2248 = vmatprep.subr.bf16.mxu0 0
      %2249 = vmatpush1.bf16.msra.mxu0 0
      %2250 = vmatprep.mubr.bf16.mxu0 0
      %2251 = vmatmul.mubr.bf16.gmra.mrb[0].mxu0 %v2168
      %v2252 = vpop.f32.mrb[0].mxu0
      %v2253 = vadd.f32 0.0, %v2252
      %v2254 = vpop.f32.mrb[0].mxu0
      %v2255 = vpop.f32.mrb[0].mxu0
      %v2256 = vadd.f32 0.0, %v2255
      %v2257 = vpop.f32.mrb[0].mxu0
      %2258 = vmatprep.mubr.bf16.mxu0 0
      %2259 = vmatmul.mubr.bf16.gmra.mrb[0].mxu0 %v2171
      %v2260 = vpop.f32.mrb[0].mxu0
      %v2261 = vadd.f32 0.0, %v2260
      %v2262 = vpop.f32.mrb[0].mxu0
      %v2263 = vpop.f32.mrb[0].mxu0
      %v2264 = vadd.f32 0.0, %v2263
      %v2265 = vpop.f32.mrb[0].mxu0
      %2266 = vmatprep.mubr.bf16.mxu0 0
      %2267 = vmatmul.mubr.bf16.gmra.mrb[0].mxu0 %v2174
      %v2268 = vpop.f32.mrb[0].mxu0
      %v2269 = vadd.f32 0.0, %v2268
      %v2270 = vpop.f32.mrb[0].mxu0
      %v2271 = vpop.f32.mrb[0].mxu0
      %v2272 = vadd.f32 0.0, %v2271
      %v2273 = vpop.f32.mrb[0].mxu0
      %2274 = vmatprep.mubr.bf16.mxu0 0
      %2275 = vmatmul.mubr.bf16.gmra.mrb[0].mxu0 %v2177
      %v2276 = vpop.f32.mrb[0].mxu0
      %v2277 = vadd.f32 0.0, %v2276
      %v2278 = vpop.f32.mrb[0].mxu0
      %v2279 = vpop.f32.mrb[0].mxu0
      %v2280 = vadd.f32 0.0, %v2279
      %v2281 = vpop.f32.mrb[0].mxu0
      %2282 = vmatprep.mubr.bf16.mxu0 0
      %2283 = vmatmul.mubr.bf16.gmra.mrb[0].mxu0 %v2180
      %v2284 = vpop.f32.mrb[0].mxu0
      %v2285 = vadd.f32 0.0, %v2284
      %v2286 = vpop.f32.mrb[0].mxu0
      %v2287 = vpop.f32.mrb[0].mxu0
      %v2288 = vadd.f32 0.0, %v2287
      %v2289 = vpop.f32.mrb[0].mxu0
      %2290 = vmatprep.mubr.bf16.mxu0 0
      %2291 = vmatmul.mubr.bf16.gmra.mrb[0].mxu0 %v2183
      %v2292 = vpop.f32.mrb[0].mxu0
      %v2293 = vadd.f32 0.0, %v2292
      %v2294 = vpop.f32.mrb[0].mxu0
      %v2295 = vpop.f32.mrb[0].mxu0
      %v2296 = vadd.f32 0.0, %v2295
      %v2297 = vpop.f32.mrb[0].mxu0
      %2298 = vmatprep.mubr.bf16.mxu0 0
      %2299 = vmatmul.mubr.bf16.gmra.mrb[0].mxu0 %v2186
      %v2300 = vpop.f32.mrb[0].mxu0
      %v2301 = vadd.f32 0.0, %v2300
      %v2302 = vpop.f32.mrb[0].mxu0
      %v2303 = vpop.f32.mrb[0].mxu0
      %v2304 = vadd.f32 0.0, %v2303
      %v2305 = vpop.f32.mrb[0].mxu0
      %2306 = vmatprep.mubr.bf16.mxu0 0
      %2307 = vmatmul.mubr.bf16.gmra.mrb[0].mxu0 %v2189
      %v2308 = vpop.f32.mrb[0].mxu0
      %v2309 = vadd.f32 0.0, %v2308
      %v2310 = vpop.f32.mrb[0].mxu0
      %v2311 = vpop.f32.mrb[0].mxu0
      %v2312 = vadd.f32 0.0, %v2311
      %v2313 = vpop.f32.mrb[0].mxu0
      %2314 = vmatprep.mubr.bf16.mxu0 0
      %2315 = vmatmul.mubr.bf16.gmra.mrb[0].mxu0 %v2192
      %v2316 = vpop.f32.mrb[0].mxu0
      %v2317 = vadd.f32 0.0, %v2316
      %v2318 = vpop.f32.mrb[0].mxu0
      %v2319 = vpop.f32.mrb[0].mxu0
      %v2320 = vadd.f32 0.0, %v2319
      %v2321 = vpop.f32.mrb[0].mxu0
      %2322 = vmatprep.mubr.bf16.mxu0 0
      %2323 = vmatmul.mubr.bf16.gmra.mrb[0].mxu0 %v2195
      %v2324 = vpop.f32.mrb[0].mxu0
      %v2325 = vadd.f32 0.0, %v2324
      %v2326 = vpop.f32.mrb[0].mxu0
      %v2327 = vpop.f32.mrb[0].mxu0
      %v2328 = vadd.f32 0.0, %v2327
      %v2329 = vpop.f32.mrb[0].mxu0
      %2330 = vmatprep.mubr.bf16.mxu0 0
      %2331 = vmatmul.mubr.bf16.gmra.mrb[0].mxu0 %v2198
      %v2332 = vpop.f32.mrb[0].mxu0
      %v2333 = vadd.f32 0.0, %v2332
      %v2334 = vpop.f32.mrb[0].mxu0
      %v2335 = vpop.f32.mrb[0].mxu0
      %v2336 = vadd.f32 0.0, %v2335
      %v2337 = vpop.f32.mrb[0].mxu0
      %2338 = vmatprep.mubr.bf16.mxu0 0
      %2339 = vmatmul.mubr.bf16.gmra.mrb[0].mxu0 %v2201
      %v2340 = vpop.f32.mrb[0].mxu0
      %v2341 = vadd.f32 0.0, %v2340
      %v2342 = vpop.f32.mrb[0].mxu0
      %v2343 = vpop.f32.mrb[0].mxu0
      %v2344 = vadd.f32 0.0, %v2343
      %v2345 = vpop.f32.mrb[0].mxu0
      %2346 = vmatprep.mubr.bf16.mxu0 0
      %2347 = vmatmul.mubr.bf16.gmra.mrb[0].mxu0 %v2204
      %v2348 = vpop.f32.mrb[0].mxu0
      %v2349 = vadd.f32 0.0, %v2348
      %v2350 = vpop.f32.mrb[0].mxu0
      %v2351 = vpop.f32.mrb[0].mxu0
      %v2352 = vadd.f32 0.0, %v2351
      %v2353 = vpop.f32.mrb[0].mxu0
      %2354 = vmatprep.mubr.bf16.mxu0 0
      %2355 = vmatmul.mubr.bf16.gmra.mrb[0].mxu0 %v2207
      %v2356 = vpop.f32.mrb[0].mxu0
      %v2357 = vadd.f32 0.0, %v2356
      %v2358 = vpop.f32.mrb[0].mxu0
      %v2359 = vpop.f32.mrb[0].mxu0
      %v2360 = vadd.f32 0.0, %v2359
      %v2361 = vpop.f32.mrb[0].mxu0
      %2362 = vmatprep.mubr.bf16.mxu0 0
      %2363 = vmatmul.mubr.bf16.gmra.mrb[0].mxu0 %v2210
      %v2364 = vpop.f32.mrb[0].mxu0
      %v2365 = vadd.f32 0.0, %v2364
      %v2366 = vpop.f32.mrb[0].mxu0
      %v2367 = vpop.f32.mrb[0].mxu0
      %v2368 = vadd.f32 0.0, %v2367
      %v2369 = vpop.f32.mrb[0].mxu0
      %2370 = vmatprep.mubr.bf16.mxu0 0
      %2371 = vmatmul.mubr.bf16.gmra.mrb[0].mxu0 %v2213
      %v2372 = vpop.f32.mrb[0].mxu0
      %v2373 = vadd.f32 0.0, %v2372
      %v2374 = vpop.f32.mrb[0].mxu0
      %v2375 = vpop.f32.mrb[0].mxu0
      %v2376 = vadd.f32 0.0, %v2375
      %v2377 = vpop.f32.mrb[0].mxu0
      %2378 = vdwg.mxu0
      %v2379 = vadd.f32 %v1828, %v2253
      %v2380 = vadd.f32 %v1831, %v2256
      %v2381 = vadd.f32 %v1836, %v2261
      %v2382 = vadd.f32 %v1839, %v2264
      %v2383 = vadd.f32 %v1844, %v2269
      %v2384 = vadd.f32 %v1847, %v2272
      %v2385 = vadd.f32 %v1852, %v2277
      %v2386 = vadd.f32 %v1855, %v2280
      %v2387 = vadd.f32 %v1860, %v2285
      %v2388 = vadd.f32 %v1863, %v2288
      %v2389 = vadd.f32 %v1868, %v2293
      %v2390 = vadd.f32 %v1871, %v2296
      %v2391 = vadd.f32 %v1876, %v2301
      %v2392 = vadd.f32 %v1879, %v2304
      %v2393 = vadd.f32 %v1884, %v2309
      %v2394 = vadd.f32 %v1887, %v2312
      %v2395 = vadd.f32 %v1892, %v2317
      %v2396 = vadd.f32 %v1895, %v2320
      %v2397 = vadd.f32 %v1900, %v2325
      %v2398 = vadd.f32 %v1903, %v2328
      %v2399 = vadd.f32 %v1908, %v2333
      %v2400 = vadd.f32 %v1911, %v2336
      %v2401 = vadd.f32 %v1916, %v2341
      %v2402 = vadd.f32 %v1919, %v2344
      %v2403 = vadd.f32 %v1924, %v2349
      %v2404 = vadd.f32 %v1927, %v2352
      %v2405 = vadd.f32 %v1932, %v2357
      %v2406 = vadd.f32 %v1935, %v2360
      %v2407 = vadd.f32 %v1940, %v2365
      %v2408 = vadd.f32 %v1943, %v2368
      %v2409 = vadd.f32 %v1948, %v2373
      %v2410 = vadd.f32 %v1951, %v2376
      %v2411 = vld [vmem:[%s623] sm:$0xf]
      %v2412 = vld [vmem:[%s623 + $0x4] sm:$0xf]
      %v2413 = vld [vmem:[%s623 + $0xc] sm:$0xf]
      %v2414 = vld [vmem:[%s623 + $0x10] sm:$0xf]
      %v2415 = vld [vmem:[%s623 + $0x18] sm:$0xf]
      %v2416 = vld [vmem:[%s623 + $0x1c] sm:$0xf]
      %v2417 = vld [vmem:[%s623 + $0x24] sm:$0xf]
      %v2418 = vld [vmem:[%s623 + $0x28] sm:$0xf]
      %v2419 = vld [vmem:[%s623 + $0x30] sm:$0xf]
      %v2420 = vld [vmem:[%s623 + $0x34] sm:$0xf]
      %v2421 = vld [vmem:[%s623 + $0x3c] sm:$0xf]
      %v2422 = vld [vmem:[%s623 + $0x40] sm:$0xf]
      %v2423 = vld [vmem:[%s623 + $0x48] sm:$0xf]
      %v2424 = vld [vmem:[%s623 + $0x4c] sm:$0xf]
      %v2425 = vld [vmem:[%s623 + $0x54] sm:$0xf]
      %v2426 = vld [vmem:[%s623 + $0x58] sm:$0xf]
      %v2427 = vld [vmem:[%s623 + $0x60] sm:$0xf]
      %v2428 = vld [vmem:[%s623 + $0x64] sm:$0xf]
      %v2429 = vld [vmem:[%s623 + $0x6c] sm:$0xf]
      %v2430 = vld [vmem:[%s623 + $0x70] sm:$0xf]
      %v2431 = vld [vmem:[%s623 + $0x78] sm:$0xf]
      %v2432 = vld [vmem:[%s623 + $0x7c] sm:$0xf]
      %v2433 = vld [vmem:[%s623 + $0x84] sm:$0xf]
      %v2434 = vld [vmem:[%s623 + $0x88] sm:$0xf]
      %v2435 = vld [vmem:[%s623 + $0x90] sm:$0xf]
      %v2436 = vld [vmem:[%s623 + $0x94] sm:$0xf]
      %v2437 = vld [vmem:[%s623 + $0x9c] sm:$0xf]
      %v2438 = vld [vmem:[%s623 + $0xa0] sm:$0xf]
      %v2439 = vld [vmem:[%s623 + $0xa8] sm:$0xf]
      %v2440 = vld [vmem:[%s623 + $0xac] sm:$0xf]
      %v2441 = vld [vmem:[%s623 + $0xb4] sm:$0xf]
      %v2442 = vld [vmem:[%s623 + $0xb8] sm:$0xf]
      %s2443 = scalar_lea.vmem %s1, 12
      %v2444 = vld [vmem:[%s2443] sm:$0xf]
      %v2477 = vunpack.c.l.b16 %v2411
      %v2478 = vunpack.c.l.b16 %v2412
      %v2479 = vunpack.c.l.b16 %v2413
      %v2480 = vunpack.c.l.b16 %v2414
      %v2481 = vunpack.c.l.b16 %v2415
      %v2482 = vunpack.c.l.b16 %v2416
      %v2483 = vunpack.c.l.b16 %v2417
      %v2484 = vunpack.c.l.b16 %v2418
      %v2485 = vunpack.c.l.b16 %v2419
      %v2486 = vunpack.c.l.b16 %v2420
      %v2487 = vunpack.c.l.b16 %v2421
      %v2488 = vunpack.c.l.b16 %v2422
      %v2489 = vunpack.c.l.b16 %v2423
      %v2490 = vunpack.c.l.b16 %v2424
      %v2491 = vunpack.c.l.b16 %v2425
      %v2492 = vunpack.c.l.b16 %v2426
      %v2493 = vunpack.c.l.b16 %v2427
      %v2494 = vunpack.c.l.b16 %v2428
      %v2495 = vunpack.c.l.b16 %v2429
      %v2496 = vunpack.c.l.b16 %v2430
      %v2497 = vunpack.c.l.b16 %v2431
      %v2498 = vunpack.c.l.b16 %v2432
      %v2499 = vunpack.c.l.b16 %v2433
      %v2500 = vunpack.c.l.b16 %v2434
      %v2501 = vunpack.c.l.b16 %v2435
      %v2502 = vunpack.c.l.b16 %v2436
      %v2503 = vunpack.c.l.b16 %v2437
      %v2504 = vunpack.c.l.b16 %v2438
      %v2505 = vunpack.c.l.b16 %v2439
      %v2506 = vunpack.c.l.b16 %v2440
      %v2507 = vunpack.c.l.b16 %v2441
      %v2508 = vunpack.c.l.b16 %v2442
      %v2509 = vpack.c.b16 %v2478, %v2477
      %v2510 = vpack.c.b16 %v2480, %v2479
      %v2511 = vpack.c.b16 %v2482, %v2481
      %v2512 = vpack.c.b16 %v2484, %v2483
      %v2513 = vpack.c.b16 %v2486, %v2485
      %v2514 = vpack.c.b16 %v2488, %v2487
      %v2515 = vpack.c.b16 %v2490, %v2489
      %v2516 = vpack.c.b16 %v2492, %v2491
      %v2517 = vpack.c.b16 %v2494, %v2493
      %v2518 = vpack.c.b16 %v2496, %v2495
      %v2519 = vpack.c.b16 %v2498, %v2497
      %v2520 = vpack.c.b16 %v2500, %v2499
      %v2521 = vpack.c.b16 %v2502, %v2501
      %v2522 = vpack.c.b16 %v2504, %v2503
      %v2523 = vpack.c.b16 %v2506, %v2505
      %v2524 = vpack.c.b16 %v2508, %v2507
      %v2526 = vsel %vm1448, %v2509, 0
      %v2529 = vsel %vm1448, %v2510, 0
      %v2532 = vsel %vm1448, %v2511, 0
      %v2535 = vsel %vm1448, %v2512, 0
      %v2538 = vsel %vm1448, %v2513, 0
      %v2541 = vsel %vm1448, %v2514, 0
      %v2544 = vsel %vm1448, %v2515, 0
      %v2547 = vsel %vm1448, %v2516, 0
      %v2550 = vsel %vm1448, %v2517, 0
      %v2553 = vsel %vm1448, %v2518, 0
      %v2556 = vsel %vm1448, %v2519, 0
      %v2559 = vsel %vm1448, %v2520, 0
      %v2562 = vsel %vm1448, %v2521, 0
      %v2565 = vsel %vm1448, %v2522, 0
      %v2568 = vsel %vm1448, %v2523, 0
      %v2571 = vsel %vm1448, %v2524, 0
      %v2574 = vsel %vm1497, %v2444, 0
      %2576 = vmatprep.subr.bf16.mxu0 0
      %2577 = vmatpush1.bf16.msra.mxu0 %v2574
      %2578 = vmatprep.subr.bf16.mxu0 0
      %2579 = vmatpush1.bf16.msra.mxu0 0
      %2580 = vmatprep.subr.bf16.mxu0 0
      %2581 = vmatpush1.bf16.msra.mxu0 0
      %2582 = vmatprep.subr.bf16.mxu0 0
      %2583 = vmatpush1.bf16.msra.mxu0 0
      %2584 = vmatprep.subr.bf16.mxu0 0
      %2585 = vmatpush1.bf16.msra.mxu0 0
      %2586 = vmatprep.subr.bf16.mxu0 0
      %2587 = vmatpush1.bf16.msra.mxu0 0
      %2588 = vmatprep.subr.bf16.mxu0 0
      %2589 = vmatpush1.bf16.msra.mxu0 0
      %2590 = vmatprep.subr.bf16.mxu0 0
      %2591 = vmatpush1.bf16.msra.mxu0 0
      %2592 = vmatprep.subr.bf16.mxu0 0
      %2593 = vmatpush1.bf16.msra.mxu0 0
      %2594 = vmatprep.subr.bf16.mxu0 0
      %2595 = vmatpush1.bf16.msra.mxu0 0
      %2596 = vmatprep.subr.bf16.mxu0 0
      %2597 = vmatpush1.bf16.msra.mxu0 0
      %2598 = vmatprep.subr.bf16.mxu0 0
      %2599 = vmatpush1.bf16.msra.mxu0 0
      %2600 = vmatprep.subr.bf16.mxu0 0
      %2601 = vmatpush1.bf16.msra.mxu0 0
      %2602 = vmatprep.subr.bf16.mxu0 0
      %2603 = vmatpush1.bf16.msra.mxu0 0
      %2604 = vmatprep.subr.bf16.mxu0 0
      %2605 = vmatpush1.bf16.msra.mxu0 0
      %2606 = vmatprep.subr.bf16.mxu0 0
      %2607 = vmatpush1.bf16.msra.mxu0 0
      %2608 = vmatprep.mubr.bf16.mxu0 0
      %2609 = vmatmul.mubr.bf16.gmra.mrb[0].mxu0 %v2526
      %v2610 = vpop.f32.mrb[0].mxu0
      %v2611 = vadd.f32 0.0, %v2610
      %v2612 = vpop.f32.mrb[0].mxu0
      %v2613 = vpop.f32.mrb[0].mxu0
      %v2614 = vadd.f32 0.0, %v2613
      %v2615 = vpop.f32.mrb[0].mxu0
      %2616 = vmatprep.mubr.bf16.mxu0 0
      %2617 = vmatmul.mubr.bf16.gmra.mrb[0].mxu0 %v2529
      %v2618 = vpop.f32.mrb[0].mxu0
      %v2619 = vadd.f32 0.0, %v2618
      %v2620 = vpop.f32.mrb[0].mxu0
      %v2621 = vpop.f32.mrb[0].mxu0
      %v2622 = vadd.f32 0.0, %v2621
      %v2623 = vpop.f32.mrb[0].mxu0
      %2624 = vmatprep.mubr.bf16.mxu0 0
      %2625 = vmatmul.mubr.bf16.gmra.mrb[0].mxu0 %v2532
      %v2626 = vpop.f32.mrb[0].mxu0
      %v2627 = vadd.f32 0.0, %v2626
      %v2628 = vpop.f32.mrb[0].mxu0
      %v2629 = vpop.f32.mrb[0].mxu0
      %v2630 = vadd.f32 0.0, %v2629
      %v2631 = vpop.f32.mrb[0].mxu0
      %2632 = vmatprep.mubr.bf16.mxu0 0
      %2633 = vmatmul.mubr.bf16.gmra.mrb[0].mxu0 %v2535
      %v2634 = vpop.f32.mrb[0].mxu0
      %v2635 = vadd.f32 0.0, %v2634
      %v2636 = vpop.f32.mrb[0].mxu0
      %v2637 = vpop.f32.mrb[0].mxu0
      %v2638 = vadd.f32 0.0, %v2637
      %v2639 = vpop.f32.mrb[0].mxu0
      %2640 = vmatprep.mubr.bf16.mxu0 0
      %2641 = vmatmul.mubr.bf16.gmra.mrb[0].mxu0 %v2538
      %v2642 = vpop.f32.mrb[0].mxu0
      %v2643 = vadd.f32 0.0, %v2642
      %v2644 = vpop.f32.mrb[0].mxu0
      %v2645 = vpop.f32.mrb[0].mxu0
      %v2646 = vadd.f32 0.0, %v2645
      %v2647 = vpop.f32.mrb[0].mxu0
      %2648 = vmatprep.mubr.bf16.mxu0 0
      %2649 = vmatmul.mubr.bf16.gmra.mrb[0].mxu0 %v2541
      %v2650 = vpop.f32.mrb[0].mxu0
      %v2651 = vadd.f32 0.0, %v2650
      %v2652 = vpop.f32.mrb[0].mxu0
      %v2653 = vpop.f32.mrb[0].mxu0
      %v2654 = vadd.f32 0.0, %v2653
      %v2655 = vpop.f32.mrb[0].mxu0
      %2656 = vmatprep.mubr.bf16.mxu0 0
      %2657 = vmatmul.mubr.bf16.gmra.mrb[0].mxu0 %v2544
      %v2658 = vpop.f32.mrb[0].mxu0
      %v2659 = vadd.f32 0.0, %v2658
      %v2660 = vpop.f32.mrb[0].mxu0
      %v2661 = vpop.f32.mrb[0].mxu0
      %v2662 = vadd.f32 0.0, %v2661
      %v2663 = vpop.f32.mrb[0].mxu0
      %2664 = vmatprep.mubr.bf16.mxu0 0
      %2665 = vmatmul.mubr.bf16.gmra.mrb[0].mxu0 %v2547
      %v2666 = vpop.f32.mrb[0].mxu0
      %v2667 = vadd.f32 0.0, %v2666
      %v2668 = vpop.f32.mrb[0].mxu0
      %v2669 = vpop.f32.mrb[0].mxu0
      %v2670 = vadd.f32 0.0, %v2669
      %v2671 = vpop.f32.mrb[0].mxu0
      %2672 = vmatprep.mubr.bf16.mxu0 0
      %2673 = vmatmul.mubr.bf16.gmra.mrb[0].mxu0 %v2550
      %v2674 = vpop.f32.mrb[0].mxu0
      %v2675 = vadd.f32 0.0, %v2674
      %v2676 = vpop.f32.mrb[0].mxu0
      %v2677 = vpop.f32.mrb[0].mxu0
      %v2678 = vadd.f32 0.0, %v2677
      %v2679 = vpop.f32.mrb[0].mxu0
      %2680 = vmatprep.mubr.bf16.mxu0 0
      %2681 = vmatmul.mubr.bf16.gmra.mrb[0].mxu0 %v2553
      %v2682 = vpop.f32.mrb[0].mxu0
      %v2683 = vadd.f32 0.0, %v2682
      %v2684 = vpop.f32.mrb[0].mxu0
      %v2685 = vpop.f32.mrb[0].mxu0
      %v2686 = vadd.f32 0.0, %v2685
      %v2687 = vpop.f32.mrb[0].mxu0
      %2688 = vmatprep.mubr.bf16.mxu0 0
      %2689 = vmatmul.mubr.bf16.gmra.mrb[0].mxu0 %v2556
      %v2690 = vpop.f32.mrb[0].mxu0
      %v2691 = vadd.f32 0.0, %v2690
      %v2692 = vpop.f32.mrb[0].mxu0
      %v2693 = vpop.f32.mrb[0].mxu0
      %v2694 = vadd.f32 0.0, %v2693
      %v2695 = vpop.f32.mrb[0].mxu0
      %2696 = vmatprep.mubr.bf16.mxu0 0
      %2697 = vmatmul.mubr.bf16.gmra.mrb[0].mxu0 %v2559
      %v2698 = vpop.f32.mrb[0].mxu0
      %v2699 = vadd.f32 0.0, %v2698
      %v2700 = vpop.f32.mrb[0].mxu0
      %v2701 = vpop.f32.mrb[0].mxu0
      %v2702 = vadd.f32 0.0, %v2701
      %v2703 = vpop.f32.mrb[0].mxu0
      %2704 = vmatprep.mubr.bf16.mxu0 0
      %2705 = vmatmul.mubr.bf16.gmra.mrb[0].mxu0 %v2562
      %v2706 = vpop.f32.mrb[0].mxu0
      %v2707 = vadd.f32 0.0, %v2706
      %v2708 = vpop.f32.mrb[0].mxu0
      %v2709 = vpop.f32.mrb[0].mxu0
      %v2710 = vadd.f32 0.0, %v2709
      %v2711 = vpop.f32.mrb[0].mxu0
      %2712 = vmatprep.mubr.bf16.mxu0 0
      %2713 = vmatmul.mubr.bf16.gmra.mrb[0].mxu0 %v2565
      %v2714 = vpop.f32.mrb[0].mxu0
      %v2715 = vadd.f32 0.0, %v2714
      %v2716 = vpop.f32.mrb[0].mxu0
      %v2717 = vpop.f32.mrb[0].mxu0
      %v2718 = vadd.f32 0.0, %v2717
      %v2719 = vpop.f32.mrb[0].mxu0
      %2720 = vmatprep.mubr.bf16.mxu0 0
      %2721 = vmatmul.mubr.bf16.gmra.mrb[0].mxu0 %v2568
      %v2722 = vpop.f32.mrb[0].mxu0
      %v2723 = vadd.f32 0.0, %v2722
      %v2724 = vpop.f32.mrb[0].mxu0
      %v2725 = vpop.f32.mrb[0].mxu0
      %v2726 = vadd.f32 0.0, %v2725
      %v2727 = vpop.f32.mrb[0].mxu0
      %2728 = vmatprep.mubr.bf16.mxu0 0
      %2729 = vmatmul.mubr.bf16.gmra.mrb[0].mxu0 %v2571
      %v2730 = vpop.f32.mrb[0].mxu0
      %v2731 = vadd.f32 0.0, %v2730
      %v2732 = vpop.f32.mrb[0].mxu0
      %v2733 = vpop.f32.mrb[0].mxu0
      %v2734 = vadd.f32 0.0, %v2733
      %v2735 = vpop.f32.mrb[0].mxu0
      %2736 = vdwg.mxu0
      %v2737 = vadd.f32 %v2379, %v2611
      %v2738 = vadd.f32 %v2380, %v2614
      %v2739 = vadd.f32 %v2381, %v2619
      %v2740 = vadd.f32 %v2382, %v2622
      %v2741 = vadd.f32 %v2383, %v2627
      %v2742 = vadd.f32 %v2384, %v2630
      %v2743 = vadd.f32 %v2385, %v2635
      %v2744 = vadd.f32 %v2386, %v2638
      %v2745 = vadd.f32 %v2387, %v2643
      %v2746 = vadd.f32 %v2388, %v2646
      %v2747 = vadd.f32 %v2389, %v2651
      %v2748 = vadd.f32 %v2390, %v2654
      %v2749 = vadd.f32 %v2391, %v2659
      %v2750 = vadd.f32 %v2392, %v2662
      %v2751 = vadd.f32 %v2393, %v2667
      %v2752 = vadd.f32 %v2394, %v2670
      %v2753 = vadd.f32 %v2395, %v2675
      %v2754 = vadd.f32 %v2396, %v2678
      %v2755 = vadd.f32 %v2397, %v2683
      %v2756 = vadd.f32 %v2398, %v2686
      %v2757 = vadd.f32 %v2399, %v2691
      %v2758 = vadd.f32 %v2400, %v2694
      %v2759 = vadd.f32 %v2401, %v2699
      %v2760 = vadd.f32 %v2402, %v2702
      %v2761 = vadd.f32 %v2403, %v2707
      %v2762 = vadd.f32 %v2404, %v2710
      %v2763 = vadd.f32 %v2405, %v2715
      %v2764 = vadd.f32 %v2406, %v2718
      %v2765 = vadd.f32 %v2407, %v2723
      %v2766 = vadd.f32 %v2408, %v2726
      %v2767 = vadd.f32 %v2409, %v2731
      %v2768 = vadd.f32 %v2410, %v2734
      %v2769 = vld [vmem:[%s623] sm:$0xf]
      %v2770 = vld [vmem:[%s623 + $0x4] sm:$0xf]
      %v2771 = vld [vmem:[%s623 + $0x8] sm:$0x1]
      %v2772 = vld [vmem:[%s623 + $0xc] sm:$0xf]
      %v2773 = vld [vmem:[%s623 + $0x10] sm:$0xf]
      %v2774 = vld [vmem:[%s623 + $0x14] sm:$0x1]
      %v2775 = vld [vmem:[%s623 + $0x18] sm:$0xf]
      %v2776 = vld [vmem:[%s623 + $0x1c] sm:$0xf]
      %v2777 = vld [vmem:[%s623 + $0x20] sm:$0x1]
      %v2778 = vld [vmem:[%s623 + $0x24] sm:$0xf]
      %v2779 = vld [vmem:[%s623 + $0x28] sm:$0xf]
      %v2780 = vld [vmem:[%s623 + $0x2c] sm:$0x1]
      %v2781 = vld [vmem:[%s623 + $0x30] sm:$0xf]
      %v2782 = vld [vmem:[%s623 + $0x34] sm:$0xf]
      %v2783 = vld [vmem:[%s623 + $0x38] sm:$0x1]
      %v2784 = vld [vmem:[%s623 + $0x3c] sm:$0xf]
      %v2785 = vld [vmem:[%s623 + $0x40] sm:$0xf]
      %v2786 = vld [vmem:[%s623 + $0x44] sm:$0x1]
      %v2787 = vld [vmem:[%s623 + $0x48] sm:$0xf]
      %v2788 = vld [vmem:[%s623 + $0x4c] sm:$0xf]
      %v2789 = vld [vmem:[%s623 + $0x50] sm:$0x1]
      %v2790 = vld [vmem:[%s623 + $0x54] sm:$0xf]
      %v2791 = vld [vmem:[%s623 + $0x58] sm:$0xf]
      %v2792 = vld [vmem:[%s623 + $0x5c] sm:$0x1]
      %v2793 = vld [vmem:[%s623 + $0x60] sm:$0xf]
      %v2794 = vld [vmem:[%s623 + $0x64] sm:$0xf]
      %v2795 = vld [vmem:[%s623 + $0x68] sm:$0x1]
      %v2796 = vld [vmem:[%s623 + $0x6c] sm:$0xf]
      %v2797 = vld [vmem:[%s623 + $0x70] sm:$0xf]
      %v2798 = vld [vmem:[%s623 + $0x74] sm:$0x1]
      %v2799 = vld [vmem:[%s623 + $0x78] sm:$0xf]
      %v2800 = vld [vmem:[%s623 + $0x7c] sm:$0xf]
      %v2801 = vld [vmem:[%s623 + $0x80] sm:$0x1]
      %v2802 = vld [vmem:[%s623 + $0x84] sm:$0xf]
      %v2803 = vld [vmem:[%s623 + $0x88] sm:$0xf]
      %v2804 = vld [vmem:[%s623 + $0x8c] sm:$0x1]
      %v2805 = vld [vmem:[%s623 + $0x90] sm:$0xf]
      %v2806 = vld [vmem:[%s623 + $0x94] sm:$0xf]
      %v2807 = vld [vmem:[%s623 + $0x98] sm:$0x1]
      %v2808 = vld [vmem:[%s623 + $0x9c] sm:$0xf]
      %v2809 = vld [vmem:[%s623 + $0xa0] sm:$0xf]
      %v2810 = vld [vmem:[%s623 + $0xa4] sm:$0x1]
      %v2811 = vld [vmem:[%s623 + $0xa8] sm:$0xf]
      %v2812 = vld [vmem:[%s623 + $0xac] sm:$0xf]
      %v2813 = vld [vmem:[%s623 + $0xb0] sm:$0x1]
      %v2814 = vld [vmem:[%s623 + $0xb4] sm:$0xf]
      %v2815 = vld [vmem:[%s623 + $0xb8] sm:$0xf]
      %v2816 = vld [vmem:[%s623 + $0xbc] sm:$0x1]
      %v2818 = vshrl.u32 %v2769, 16
      %v2820 = vrot.slane %v2818, 4
      %v2821 = vshll.u32 %v2769, 16
      %v2823 = vrot.slane %v2821, 5
      %v2824 = vor.u32 %v2820, %v2823
      %v2825 = vrot.slane %v2824, 4
      %v2827 = vshll.u32 %v2770, 16
      %v2829 = vrot.slane %v2827, 5
      %v2830 = vsel %vm1013, %v2825, %v2829
      %v2831 = vshrl.u32 %v2770, 16
      %v2833 = vrot.slane %v2831, 4
      %v2834 = vor.u32 %v2833, %v2829
      %v2835 = vrot.slane %v2834, 4
      %v2837 = vshll.u32 %v2771, 16
      %v2839 = vrot.slane %v2837, 5
      %v2840 = vsel %vm1013, %v2835, %v2839
      %v2842 = vshrl.u32 %v2772, 16
      %v2844 = vrot.slane %v2842, 4
      %v2845 = vshll.u32 %v2772, 16
      %v2847 = vrot.slane %v2845, 5
      %v2848 = vor.u32 %v2844, %v2847
      %v2849 = vrot.slane %v2848, 4
      %v2851 = vshll.u32 %v2773, 16
      %v2853 = vrot.slane %v2851, 5
      %v2854 = vsel %vm1013, %v2849, %v2853
      %v2855 = vshrl.u32 %v2773, 16
      %v2857 = vrot.slane %v2855, 4
      %v2858 = vor.u32 %v2857, %v2853
      %v2859 = vrot.slane %v2858, 4
      %v2861 = vshll.u32 %v2774, 16
      %v2863 = vrot.slane %v2861, 5
      %v2864 = vsel %vm1013, %v2859, %v2863
      %v2866 = vshrl.u32 %v2775, 16
      %v2868 = vrot.slane %v2866, 4
      %v2869 = vshll.u32 %v2775, 16
      %v2871 = vrot.slane %v2869, 5
      %v2872 = vor.u32 %v2868, %v2871
      %v2873 = vrot.slane %v2872, 4
      %v2875 = vshll.u32 %v2776, 16
      %v2877 = vrot.slane %v2875, 5
      %v2878 = vsel %vm1013, %v2873, %v2877
      %v2879 = vshrl.u32 %v2776, 16
      %v2881 = vrot.slane %v2879, 4
      %v2882 = vor.u32 %v2881, %v2877
      %v2883 = vrot.slane %v2882, 4
      %v2885 = vshll.u32 %v2777, 16
      %v2887 = vrot.slane %v2885, 5
      %v2888 = vsel %vm1013, %v2883, %v2887
      %v2890 = vshrl.u32 %v2778, 16
      %v2892 = vrot.slane %v2890, 4
      %v2893 = vshll.u32 %v2778, 16
      %v2895 = vrot.slane %v2893, 5
      %v2896 = vor.u32 %v2892, %v2895
      %v2897 = vrot.slane %v2896, 4
      %v2899 = vshll.u32 %v2779, 16
      %v2901 = vrot.slane %v2899, 5
      %v2902 = vsel %vm1013, %v2897, %v2901
      %v2903 = vshrl.u32 %v2779, 16
      %v2905 = vrot.slane %v2903, 4
      %v2906 = vor.u32 %v2905, %v2901
      %v2907 = vrot.slane %v2906, 4
      %v2909 = vshll.u32 %v2780, 16
      %v2911 = vrot.slane %v2909, 5
      %v2912 = vsel %vm1013, %v2907, %v2911
      %v2914 = vshrl.u32 %v2781, 16
      %v2916 = vrot.slane %v2914, 4
      %v2917 = vshll.u32 %v2781, 16
      %v2919 = vrot.slane %v2917, 5
      %v2920 = vor.u32 %v2916, %v2919
      %v2921 = vrot.slane %v2920, 4
      %v2923 = vshll.u32 %v2782, 16
      %v2925 = vrot.slane %v2923, 5
      %v2926 = vsel %vm1013, %v2921, %v2925
      %v2927 = vshrl.u32 %v2782, 16
      %v2929 = vrot.slane %v2927, 4
      %v2930 = vor.u32 %v2929, %v2925
      %v2931 = vrot.slane %v2930, 4
      %v2933 = vshll.u32 %v2783, 16
      %v2935 = vrot.slane %v2933, 5
      %v2936 = vsel %vm1013, %v2931, %v2935
      %v2938 = vshrl.u32 %v2784, 16
      %v2940 = vrot.slane %v2938, 4
      %v2941 = vshll.u32 %v2784, 16
      %v2943 = vrot.slane %v2941, 5
      %v2944 = vor.u32 %v2940, %v2943
      %v2945 = vrot.slane %v2944, 4
      %v2947 = vshll.u32 %v2785, 16
      %v2949 = vrot.slane %v2947, 5
      %v2950 = vsel %vm1013, %v2945, %v2949
      %v2951 = vshrl.u32 %v2785, 16
      %v2953 = vrot.slane %v2951, 4
      %v2954 = vor.u32 %v2953, %v2949
      %v2955 = vrot.slane %v2954, 4
      %v2957 = vshll.u32 %v2786, 16
      %v2959 = vrot.slane %v2957, 5
      %v2960 = vsel %vm1013, %v2955, %v2959
      %v2962 = vshrl.u32 %v2787, 16
      %v2964 = vrot.slane %v2962, 4
      %v2965 = vshll.u32 %v2787, 16
      %v2967 = vrot.slane %v2965, 5
      %v2968 = vor.u32 %v2964, %v2967
      %v2969 = vrot.slane %v2968, 4
      %v2971 = vshll.u32 %v2788, 16
      %v2973 = vrot.slane %v2971, 5
      %v2974 = vsel %vm1013, %v2969, %v2973
      %v2975 = vshrl.u32 %v2788, 16
      %v2977 = vrot.slane %v2975, 4
      %v2978 = vor.u32 %v2977, %v2973
      %v2979 = vrot.slane %v2978, 4
      %v2981 = vshll.u32 %v2789, 16
      %v2983 = vrot.slane %v2981, 5
      %v2984 = vsel %vm1013, %v2979, %v2983
      %v2986 = vshrl.u32 %v2790, 16
      %v2988 = vrot.slane %v2986, 4
      %v2989 = vshll.u32 %v2790, 16
      %v2991 = vrot.slane %v2989, 5
      %v2992 = vor.u32 %v2988, %v2991
      %v2993 = vrot.slane %v2992, 4
      %v2995 = vshll.u32 %v2791, 16
      %v2997 = vrot.slane %v2995, 5
      %v2998 = vsel %vm1013, %v2993, %v2997
      %v2999 = vshrl.u32 %v2791, 16
      %v3001 = vrot.slane %v2999, 4
      %v3002 = vor.u32 %v3001, %v2997
      %v3003 = vrot.slane %v3002, 4
      %v3005 = vshll.u32 %v2792, 16
      %v3007 = vrot.slane %v3005, 5
      %v3008 = vsel %vm1013, %v3003, %v3007
      %v3010 = vshrl.u32 %v2793, 16
      %v3012 = vrot.slane %v3010, 4
      %v3013 = vshll.u32 %v2793, 16
      %v3015 = vrot.slane %v3013, 5
      %v3016 = vor.u32 %v3012, %v3015
      %v3017 = vrot.slane %v3016, 4
      %v3019 = vshll.u32 %v2794, 16
      %v3021 = vrot.slane %v3019, 5
      %v3022 = vsel %vm1013, %v3017, %v3021
      %v3023 = vshrl.u32 %v2794, 16
      %v3025 = vrot.slane %v3023, 4
      %v3026 = vor.u32 %v3025, %v3021
      %v3027 = vrot.slane %v3026, 4
      %v3029 = vshll.u32 %v2795, 16
      %v3031 = vrot.slane %v3029, 5
      %v3032 = vsel %vm1013, %v3027, %v3031
      %v3034 = vshrl.u32 %v2796, 16
      %v3036 = vrot.slane %v3034, 4
      %v3037 = vshll.u32 %v2796, 16
      %v3039 = vrot.slane %v3037, 5
      %v3040 = vor.u32 %v3036, %v3039
      %v3041 = vrot.slane %v3040, 4
      %v3043 = vshll.u32 %v2797, 16
      %v3045 = vrot.slane %v3043, 5
      %v3046 = vsel %vm1013, %v3041, %v3045
      %v3047 = vshrl.u32 %v2797, 16
      %v3049 = vrot.slane %v3047, 4
      %v3050 = vor.u32 %v3049, %v3045
      %v3051 = vrot.slane %v3050, 4
      %v3053 = vshll.u32 %v2798, 16
      %v3055 = vrot.slane %v3053, 5
      %v3056 = vsel %vm1013, %v3051, %v3055
      %v3058 = vshrl.u32 %v2799, 16
      %v3060 = vrot.slane %v3058, 4
      %v3061 = vshll.u32 %v2799, 16
      %v3063 = vrot.slane %v3061, 5
      %v3064 = vor.u32 %v3060, %v3063
      %v3065 = vrot.slane %v3064, 4
      %v3067 = vshll.u32 %v2800, 16
      %v3069 = vrot.slane %v3067, 5
      %v3070 = vsel %vm1013, %v3065, %v3069
      %v3071 = vshrl.u32 %v2800, 16
      %v3073 = vrot.slane %v3071, 4
      %v3074 = vor.u32 %v3073, %v3069
      %v3075 = vrot.slane %v3074, 4
      %v3077 = vshll.u32 %v2801, 16
      %v3079 = vrot.slane %v3077, 5
      %v3080 = vsel %vm1013, %v3075, %v3079
      %v3082 = vshrl.u32 %v2802, 16
      %v3084 = vrot.slane %v3082, 4
      %v3085 = vshll.u32 %v2802, 16
      %v3087 = vrot.slane %v3085, 5
      %v3088 = vor.u32 %v3084, %v3087
      %v3089 = vrot.slane %v3088, 4
      %v3091 = vshll.u32 %v2803, 16
      %v3093 = vrot.slane %v3091, 5
      %v3094 = vsel %vm1013, %v3089, %v3093
      %v3095 = vshrl.u32 %v2803, 16
      %v3097 = vrot.slane %v3095, 4
      %v3098 = vor.u32 %v3097, %v3093
      %v3099 = vrot.slane %v3098, 4
      %v3101 = vshll.u32 %v2804, 16
      %v3103 = vrot.slane %v3101, 5
      %v3104 = vsel %vm1013, %v3099, %v3103
      %v3106 = vshrl.u32 %v2805, 16
      %v3108 = vrot.slane %v3106, 4
      %v3109 = vshll.u32 %v2805, 16
      %v3111 = vrot.slane %v3109, 5
      %v3112 = vor.u32 %v3108, %v3111
      %v3113 = vrot.slane %v3112, 4
      %v3115 = vshll.u32 %v2806, 16
      %v3117 = vrot.slane %v3115, 5
      %v3118 = vsel %vm1013, %v3113, %v3117
      %v3119 = vshrl.u32 %v2806, 16
      %v3121 = vrot.slane %v3119, 4
      %v3122 = vor.u32 %v3121, %v3117
      %v3123 = vrot.slane %v3122, 4
      %v3125 = vshll.u32 %v2807, 16
      %v3127 = vrot.slane %v3125, 5
      %v3128 = vsel %vm1013, %v3123, %v3127
      %v3130 = vshrl.u32 %v2808, 16
      %v3132 = vrot.slane %v3130, 4
      %v3133 = vshll.u32 %v2808, 16
      %v3135 = vrot.slane %v3133, 5
      %v3136 = vor.u32 %v3132, %v3135
      %v3137 = vrot.slane %v3136, 4
      %v3139 = vshll.u32 %v2809, 16
      %v3141 = vrot.slane %v3139, 5
      %v3142 = vsel %vm1013, %v3137, %v3141
      %v3143 = vshrl.u32 %v2809, 16
      %v3145 = vrot.slane %v3143, 4
      %v3146 = vor.u32 %v3145, %v3141
      %v3147 = vrot.slane %v3146, 4
      %v3149 = vshll.u32 %v2810, 16
      %v3151 = vrot.slane %v3149, 5
      %v3152 = vsel %vm1013, %v3147, %v3151
      %v3154 = vshrl.u32 %v2811, 16
      %v3156 = vrot.slane %v3154, 4
      %v3157 = vshll.u32 %v2811, 16
      %v3159 = vrot.slane %v3157, 5
      %v3160 = vor.u32 %v3156, %v3159
      %v3161 = vrot.slane %v3160, 4
      %v3163 = vshll.u32 %v2812, 16
      %v3165 = vrot.slane %v3163, 5
      %v3166 = vsel %vm1013, %v3161, %v3165
      %v3167 = vshrl.u32 %v2812, 16
      %v3169 = vrot.slane %v3167, 4
      %v3170 = vor.u32 %v3169, %v3165
      %v3171 = vrot.slane %v3170, 4
      %v3173 = vshll.u32 %v2813, 16
      %v3175 = vrot.slane %v3173, 5
      %v3176 = vsel %vm1013, %v3171, %v3175
      %v3178 = vshrl.u32 %v2814, 16
      %v3180 = vrot.slane %v3178, 4
      %v3181 = vshll.u32 %v2814, 16
      %v3183 = vrot.slane %v3181, 5
      %v3184 = vor.u32 %v3180, %v3183
      %v3185 = vrot.slane %v3184, 4
      %v3187 = vshll.u32 %v2815, 16
      %v3189 = vrot.slane %v3187, 5
      %v3190 = vsel %vm1013, %v3185, %v3189
      %v3191 = vshrl.u32 %v2815, 16
      %v3193 = vrot.slane %v3191, 4
      %v3194 = vor.u32 %v3193, %v3189
      %v3195 = vrot.slane %v3194, 4
      %v3197 = vshll.u32 %v2816, 16
      %v3199 = vrot.slane %v3197, 5
      %v3200 = vsel %vm1013, %v3195, %v3199
      %s3201 = scalar_lea.vmem %s1, 16
      %v3202 = vld [vmem:[%s3201] sm:$0xf]
      %v3203 = vunpack.c.l.b16 %v2830
      %v3204 = vunpack.c.l.b16 %v2840
      %v3205 = vunpack.c.l.b16 %v2854
      %v3206 = vunpack.c.l.b16 %v2864
      %v3207 = vunpack.c.l.b16 %v2878
      %v3208 = vunpack.c.l.b16 %v2888
      %v3209 = vunpack.c.l.b16 %v2902
      %v3210 = vunpack.c.l.b16 %v2912
      %v3211 = vunpack.c.l.b16 %v2926
      %v3212 = vunpack.c.l.b16 %v2936
      %v3213 = vunpack.c.l.b16 %v2950
      %v3214 = vunpack.c.l.b16 %v2960
      %v3215 = vunpack.c.l.b16 %v2974
      %v3216 = vunpack.c.l.b16 %v2984
      %v3217 = vunpack.c.l.b16 %v2998
      %v3218 = vunpack.c.l.b16 %v3008
      %v3219 = vunpack.c.l.b16 %v3022
      %v3220 = vunpack.c.l.b16 %v3032
      %v3221 = vunpack.c.l.b16 %v3046
      %v3222 = vunpack.c.l.b16 %v3056
      %v3223 = vunpack.c.l.b16 %v3070
      %v3224 = vunpack.c.l.b16 %v3080
      %v3225 = vunpack.c.l.b16 %v3094
      %v3226 = vunpack.c.l.b16 %v3104
      %v3227 = vunpack.c.l.b16 %v3118
      %v3228 = vunpack.c.l.b16 %v3128
      %v3229 = vunpack.c.l.b16 %v3142
      %v3230 = vunpack.c.l.b16 %v3152
      %v3231 = vunpack.c.l.b16 %v3166
      %v3232 = vunpack.c.l.b16 %v3176
      %v3233 = vunpack.c.l.b16 %v3190
      %v3234 = vunpack.c.l.b16 %v3200
      %v3235 = vpack.c.b16 %v3204, %v3203
      %v3236 = vpack.c.b16 %v3206, %v3205
      %v3237 = vpack.c.b16 %v3208, %v3207
      %v3238 = vpack.c.b16 %v3210, %v3209
      %v3239 = vpack.c.b16 %v3212, %v3211
      %v3240 = vpack.c.b16 %v3214, %v3213
      %v3241 = vpack.c.b16 %v3216, %v3215
      %v3242 = vpack.c.b16 %v3218, %v3217
      %v3243 = vpack.c.b16 %v3220, %v3219
      %v3244 = vpack.c.b16 %v3222, %v3221
      %v3245 = vpack.c.b16 %v3224, %v3223
      %v3246 = vpack.c.b16 %v3226, %v3225
      %v3247 = vpack.c.b16 %v3228, %v3227
      %v3248 = vpack.c.b16 %v3230, %v3229
      %v3249 = vpack.c.b16 %v3232, %v3231
      %v3250 = vpack.c.b16 %v3234, %v3233
      %v3252 = vsel %vm1448, %v3235, 0
      %v3255 = vsel %vm1448, %v3236, 0
      %v3258 = vsel %vm1448, %v3237, 0
      %v3261 = vsel %vm1448, %v3238, 0
      %v3264 = vsel %vm1448, %v3239, 0
      %v3267 = vsel %vm1448, %v3240, 0
      %v3270 = vsel %vm1448, %v3241, 0
      %v3273 = vsel %vm1448, %v3242, 0
      %v3276 = vsel %vm1448, %v3243, 0
      %v3279 = vsel %vm1448, %v3244, 0
      %v3282 = vsel %vm1448, %v3245, 0
      %v3285 = vsel %vm1448, %v3246, 0
      %v3288 = vsel %vm1448, %v3247, 0
      %v3291 = vsel %vm1448, %v3248, 0
      %v3294 = vsel %vm1448, %v3249, 0
      %v3297 = vsel %vm1448, %v3250, 0
      %v3300 = vsel %vm1497, %v3202, 0
      %3302 = vmatprep.subr.bf16.mxu0 0
      %3303 = vmatpush1.bf16.msra.mxu0 %v3300
      %3304 = vmatprep.subr.bf16.mxu0 0
      %3305 = vmatpush1.bf16.msra.mxu0 0
      %3306 = vmatprep.subr.bf16.mxu0 0
      %3307 = vmatpush1.bf16.msra.mxu0 0
      %3308 = vmatprep.subr.bf16.mxu0 0
      %3309 = vmatpush1.bf16.msra.mxu0 0
      %3310 = vmatprep.subr.bf16.mxu0 0
      %3311 = vmatpush1.bf16.msra.mxu0 0
      %3312 = vmatprep.subr.bf16.mxu0 0
      %3313 = vmatpush1.bf16.msra.mxu0 0
      %3314 = vmatprep.subr.bf16.mxu0 0
      %3315 = vmatpush1.bf16.msra.mxu0 0
      %3316 = vmatprep.subr.bf16.mxu0 0
      %3317 = vmatpush1.bf16.msra.mxu0 0
      %3318 = vmatprep.subr.bf16.mxu0 0
      %3319 = vmatpush1.bf16.msra.mxu0 0
      %3320 = vmatprep.subr.bf16.mxu0 0
      %3321 = vmatpush1.bf16.msra.mxu0 0
      %3322 = vmatprep.subr.bf16.mxu0 0
      %3323 = vmatpush1.bf16.msra.mxu0 0
      %3324 = vmatprep.subr.bf16.mxu0 0
      %3325 = vmatpush1.bf16.msra.mxu0 0
      %3326 = vmatprep.subr.bf16.mxu0 0
      %3327 = vmatpush1.bf16.msra.mxu0 0
      %3328 = vmatprep.subr.bf16.mxu0 0
      %3329 = vmatpush1.bf16.msra.mxu0 0
      %3330 = vmatprep.subr.bf16.mxu0 0
      %3331 = vmatpush1.bf16.msra.mxu0 0
      %3332 = vmatprep.subr.bf16.mxu0 0
      %3333 = vmatpush1.bf16.msra.mxu0 0
      %3334 = vmatprep.mubr.bf16.mxu0 0
      %3335 = vmatmul.mubr.bf16.gmra.mrb[0].mxu0 %v3252
      %v3336 = vpop.f32.mrb[0].mxu0
      %v3337 = vadd.f32 0.0, %v3336
      %v3338 = vpop.f32.mrb[0].mxu0
      %v3339 = vpop.f32.mrb[0].mxu0
      %v3340 = vadd.f32 0.0, %v3339
      %v3341 = vpop.f32.mrb[0].mxu0
      %3342 = vmatprep.mubr.bf16.mxu0 0
      %3343 = vmatmul.mubr.bf16.gmra.mrb[0].mxu0 %v3255
      %v3344 = vpop.f32.mrb[0].mxu0
      %v3345 = vadd.f32 0.0, %v3344
      %v3346 = vpop.f32.mrb[0].mxu0
      %v3347 = vpop.f32.mrb[0].mxu0
      %v3348 = vadd.f32 0.0, %v3347
      %v3349 = vpop.f32.mrb[0].mxu0
      %3350 = vmatprep.mubr.bf16.mxu0 0
      %3351 = vmatmul.mubr.bf16.gmra.mrb[0].mxu0 %v3258
      %v3352 = vpop.f32.mrb[0].mxu0
      %v3353 = vadd.f32 0.0, %v3352
      %v3354 = vpop.f32.mrb[0].mxu0
      %v3355 = vpop.f32.mrb[0].mxu0
      %v3356 = vadd.f32 0.0, %v3355
      %v3357 = vpop.f32.mrb[0].mxu0
      %3358 = vmatprep.mubr.bf16.mxu0 0
      %3359 = vmatmul.mubr.bf16.gmra.mrb[0].mxu0 %v3261
      %v3360 = vpop.f32.mrb[0].mxu0
      %v3361 = vadd.f32 0.0, %v3360
      %v3362 = vpop.f32.mrb[0].mxu0
      %v3363 = vpop.f32.mrb[0].mxu0
      %v3364 = vadd.f32 0.0, %v3363
      %v3365 = vpop.f32.mrb[0].mxu0
      %3366 = vmatprep.mubr.bf16.mxu0 0
      %3367 = vmatmul.mubr.bf16.gmra.mrb[0].mxu0 %v3264
      %v3368 = vpop.f32.mrb[0].mxu0
      %v3369 = vadd.f32 0.0, %v3368
      %v3370 = vpop.f32.mrb[0].mxu0
      %v3371 = vpop.f32.mrb[0].mxu0
      %v3372 = vadd.f32 0.0, %v3371
      %v3373 = vpop.f32.mrb[0].mxu0
      %3374 = vmatprep.mubr.bf16.mxu0 0
      %3375 = vmatmul.mubr.bf16.gmra.mrb[0].mxu0 %v3267
      %v3376 = vpop.f32.mrb[0].mxu0
      %v3377 = vadd.f32 0.0, %v3376
      %v3378 = vpop.f32.mrb[0].mxu0
      %v3379 = vpop.f32.mrb[0].mxu0
      %v3380 = vadd.f32 0.0, %v3379
      %v3381 = vpop.f32.mrb[0].mxu0
      %3382 = vmatprep.mubr.bf16.mxu0 0
      %3383 = vmatmul.mubr.bf16.gmra.mrb[0].mxu0 %v3270
      %v3384 = vpop.f32.mrb[0].mxu0
      %v3385 = vadd.f32 0.0, %v3384
      %v3386 = vpop.f32.mrb[0].mxu0
      %v3387 = vpop.f32.mrb[0].mxu0
      %v3388 = vadd.f32 0.0, %v3387
      %v3389 = vpop.f32.mrb[0].mxu0
      %3390 = vmatprep.mubr.bf16.mxu0 0
      %3391 = vmatmul.mubr.bf16.gmra.mrb[0].mxu0 %v3273
      %v3392 = vpop.f32.mrb[0].mxu0
      %v3393 = vadd.f32 0.0, %v3392
      %v3394 = vpop.f32.mrb[0].mxu0
      %v3395 = vpop.f32.mrb[0].mxu0
      %v3396 = vadd.f32 0.0, %v3395
      %v3397 = vpop.f32.mrb[0].mxu0
      %3398 = vmatprep.mubr.bf16.mxu0 0
      %3399 = vmatmul.mubr.bf16.gmra.mrb[0].mxu0 %v3276
      %v3400 = vpop.f32.mrb[0].mxu0
      %v3401 = vadd.f32 0.0, %v3400
      %v3402 = vpop.f32.mrb[0].mxu0
      %v3403 = vpop.f32.mrb[0].mxu0
      %v3404 = vadd.f32 0.0, %v3403
      %v3405 = vpop.f32.mrb[0].mxu0
      %3406 = vmatprep.mubr.bf16.mxu0 0
      %3407 = vmatmul.mubr.bf16.gmra.mrb[0].mxu0 %v3279
      %v3408 = vpop.f32.mrb[0].mxu0
      %v3409 = vadd.f32 0.0, %v3408
      %v3410 = vpop.f32.mrb[0].mxu0
      %v3411 = vpop.f32.mrb[0].mxu0
      %v3412 = vadd.f32 0.0, %v3411
      %v3413 = vpop.f32.mrb[0].mxu0
      %3414 = vmatprep.mubr.bf16.mxu0 0
      %3415 = vmatmul.mubr.bf16.gmra.mrb[0].mxu0 %v3282
      %v3416 = vpop.f32.mrb[0].mxu0
      %v3417 = vadd.f32 0.0, %v3416
      %v3418 = vpop.f32.mrb[0].mxu0
      %v3419 = vpop.f32.mrb[0].mxu0
      %v3420 = vadd.f32 0.0, %v3419
      %v3421 = vpop.f32.mrb[0].mxu0
      %3422 = vmatprep.mubr.bf16.mxu0 0
      %3423 = vmatmul.mubr.bf16.gmra.mrb[0].mxu0 %v3285
      %v3424 = vpop.f32.mrb[0].mxu0
      %v3425 = vadd.f32 0.0, %v3424
      %v3426 = vpop.f32.mrb[0].mxu0
      %v3427 = vpop.f32.mrb[0].mxu0
      %v3428 = vadd.f32 0.0, %v3427
      %v3429 = vpop.f32.mrb[0].mxu0
      %3430 = vmatprep.mubr.bf16.mxu0 0
      %3431 = vmatmul.mubr.bf16.gmra.mrb[0].mxu0 %v3288
      %v3432 = vpop.f32.mrb[0].mxu0
      %v3433 = vadd.f32 0.0, %v3432
      %v3434 = vpop.f32.mrb[0].mxu0
      %v3435 = vpop.f32.mrb[0].mxu0
      %v3436 = vadd.f32 0.0, %v3435
      %v3437 = vpop.f32.mrb[0].mxu0
      %3438 = vmatprep.mubr.bf16.mxu0 0
      %3439 = vmatmul.mubr.bf16.gmra.mrb[0].mxu0 %v3291
      %v3440 = vpop.f32.mrb[0].mxu0
      %v3441 = vadd.f32 0.0, %v3440
      %v3442 = vpop.f32.mrb[0].mxu0
      %v3443 = vpop.f32.mrb[0].mxu0
      %v3444 = vadd.f32 0.0, %v3443
      %v3445 = vpop.f32.mrb[0].mxu0
      %3446 = vmatprep.mubr.bf16.mxu0 0
      %3447 = vmatmul.mubr.bf16.gmra.mrb[0].mxu0 %v3294
      %v3448 = vpop.f32.mrb[0].mxu0
      %v3449 = vadd.f32 0.0, %v3448
      %v3450 = vpop.f32.mrb[0].mxu0
      %v3451 = vpop.f32.mrb[0].mxu0
      %v3452 = vadd.f32 0.0, %v3451
      %v3453 = vpop.f32.mrb[0].mxu0
      %3454 = vmatprep.mubr.bf16.mxu0 0
      %3455 = vmatmul.mubr.bf16.gmra.mrb[0].mxu0 %v3297
      %v3456 = vpop.f32.mrb[0].mxu0
      %v3457 = vadd.f32 0.0, %v3456
      %v3458 = vpop.f32.mrb[0].mxu0
      %v3459 = vpop.f32.mrb[0].mxu0
      %v3460 = vadd.f32 0.0, %v3459
      %v3461 = vpop.f32.mrb[0].mxu0
      %3462 = vdwg.mxu0
      %v3463 = vadd.f32 %v2737, %v3337
      %v3464 = vadd.f32 %v2738, %v3340
      %v3465 = vadd.f32 %v2739, %v3345
      %v3466 = vadd.f32 %v2740, %v3348
      %v3467 = vadd.f32 %v2741, %v3353
      %v3468 = vadd.f32 %v2742, %v3356
      %v3469 = vadd.f32 %v2743, %v3361
      %v3470 = vadd.f32 %v2744, %v3364
      %v3471 = vadd.f32 %v2745, %v3369
      %v3472 = vadd.f32 %v2746, %v3372
      %v3473 = vadd.f32 %v2747, %v3377
      %v3474 = vadd.f32 %v2748, %v3380
      %v3475 = vadd.f32 %v2749, %v3385
      %v3476 = vadd.f32 %v2750, %v3388
      %v3477 = vadd.f32 %v2751, %v3393
      %v3478 = vadd.f32 %v2752, %v3396
      %v3479 = vadd.f32 %v2753, %v3401
      %v3480 = vadd.f32 %v2754, %v3404
      %v3481 = vadd.f32 %v2755, %v3409
      %v3482 = vadd.f32 %v2756, %v3412
      %v3483 = vadd.f32 %v2757, %v3417
      %v3484 = vadd.f32 %v2758, %v3420
      %v3485 = vadd.f32 %v2759, %v3425
      %v3486 = vadd.f32 %v2760, %v3428
      %v3487 = vadd.f32 %v2761, %v3433
      %v3488 = vadd.f32 %v2762, %v3436
      %v3489 = vadd.f32 %v2763, %v3441
      %v3490 = vadd.f32 %v2764, %v3444
      %v3491 = vadd.f32 %v2765, %v3449
      %v3492 = vadd.f32 %v2766, %v3452
      %v3493 = vadd.f32 %v2767, %v3457
      %v3494 = vadd.f32 %v2768, %v3460
      %v3495 = vld [vmem:[%s623] sm:$0xe]
      %v3496 = vld [vmem:[%s623 + $0xc] sm:$0xe]
      %v3497 = vld [vmem:[%s623 + $0x18] sm:$0xe]
      %v3498 = vld [vmem:[%s623 + $0x24] sm:$0xe]
      %v3499 = vld [vmem:[%s623 + $0x30] sm:$0xe]
      %v3500 = vld [vmem:[%s623 + $0x3c] sm:$0xe]
      %v3501 = vld [vmem:[%s623 + $0x48] sm:$0xe]
      %v3502 = vld [vmem:[%s623 + $0x54] sm:$0xe]
      %v3503 = vld [vmem:[%s623 + $0x60] sm:$0xe]
      %v3504 = vld [vmem:[%s623 + $0x6c] sm:$0xe]
      %v3505 = vld [vmem:[%s623 + $0x78] sm:$0xe]
      %v3506 = vld [vmem:[%s623 + $0x84] sm:$0xe]
      %v3507 = vld [vmem:[%s623 + $0x90] sm:$0xe]
      %v3508 = vld [vmem:[%s623 + $0x9c] sm:$0xe]
      %v3509 = vld [vmem:[%s623 + $0xa8] sm:$0xe]
      %v3510 = vld [vmem:[%s623 + $0xb4] sm:$0xe]
      %v3559 = vrot.slane %v3495, 5
      %v3560 = vrot.slane %v3559, 4
      %v3561 = vrot.slane %v2770, 5
      %v3562 = vsel %vm2004, %v3560, %v3561
      %v3563 = vrot.slane %v3561, 4
      %v3564 = vrot.slane %v2771, 5
      %v3565 = vsel %vm2004, %v3563, %v3564
      %v3566 = vrot.slane %v3496, 5
      %v3567 = vrot.slane %v3566, 4
      %v3568 = vrot.slane %v2773, 5
      %v3569 = vsel %vm2004, %v3567, %v3568
      %v3570 = vrot.slane %v3568, 4
      %v3571 = vrot.slane %v2774, 5
      %v3572 = vsel %vm2004, %v3570, %v3571
      %v3573 = vrot.slane %v3497, 5
      %v3574 = vrot.slane %v3573, 4
      %v3575 = vrot.slane %v2776, 5
      %v3576 = vsel %vm2004, %v3574, %v3575
      %v3577 = vrot.slane %v3575, 4
      %v3578 = vrot.slane %v2777, 5
      %v3579 = vsel %vm2004, %v3577, %v3578
      %v3580 = vrot.slane %v3498, 5
      %v3581 = vrot.slane %v3580, 4
      %v3582 = vrot.slane %v2779, 5
      %v3583 = vsel %vm2004, %v3581, %v3582
      %v3584 = vrot.slane %v3582, 4
      %v3585 = vrot.slane %v2780, 5
      %v3586 = vsel %vm2004, %v3584, %v3585
      %v3587 = vrot.slane %v3499, 5
      %v3588 = vrot.slane %v3587, 4
      %v3589 = vrot.slane %v2782, 5
      %v3590 = vsel %vm2004, %v3588, %v3589
      %v3591 = vrot.slane %v3589, 4
      %v3592 = vrot.slane %v2783, 5
      %v3593 = vsel %vm2004, %v3591, %v3592
      %v3594 = vrot.slane %v3500, 5
      %v3595 = vrot.slane %v3594, 4
      %v3596 = vrot.slane %v2785, 5
      %v3597 = vsel %vm2004, %v3595, %v3596
      %v3598 = vrot.slane %v3596, 4
      %v3599 = vrot.slane %v2786, 5
      %v3600 = vsel %vm2004, %v3598, %v3599
      %v3601 = vrot.slane %v3501, 5
      %v3602 = vrot.slane %v3601, 4
      %v3603 = vrot.slane %v2788, 5
      %v3604 = vsel %vm2004, %v3602, %v3603
      %v3605 = vrot.slane %v3603, 4
      %v3606 = vrot.slane %v2789, 5
      %v3607 = vsel %vm2004, %v3605, %v3606
      %v3608 = vrot.slane %v3502, 5
      %v3609 = vrot.slane %v3608, 4
      %v3610 = vrot.slane %v2791, 5
      %v3611 = vsel %vm2004, %v3609, %v3610
      %v3612 = vrot.slane %v3610, 4
      %v3613 = vrot.slane %v2792, 5
      %v3614 = vsel %vm2004, %v3612, %v3613
      %v3615 = vrot.slane %v3503, 5
      %v3616 = vrot.slane %v3615, 4
      %v3617 = vrot.slane %v2794, 5
      %v3618 = vsel %vm2004, %v3616, %v3617
      %v3619 = vrot.slane %v3617, 4
      %v3620 = vrot.slane %v2795, 5
      %v3621 = vsel %vm2004, %v3619, %v3620
      %v3622 = vrot.slane %v3504, 5
      %v3623 = vrot.slane %v3622, 4
      %v3624 = vrot.slane %v2797, 5
      %v3625 = vsel %vm2004, %v3623, %v3624
      %v3626 = vrot.slane %v3624, 4
      %v3627 = vrot.slane %v2798, 5
      %v3628 = vsel %vm2004, %v3626, %v3627
      %v3629 = vrot.slane %v3505, 5
      %v3630 = vrot.slane %v3629, 4
      %v3631 = vrot.slane %v2800, 5
      %v3632 = vsel %vm2004, %v3630, %v3631
      %v3633 = vrot.slane %v3631, 4
      %v3634 = vrot.slane %v2801, 5
      %v3635 = vsel %vm2004, %v3633, %v3634
      %v3636 = vrot.slane %v3506, 5
      %v3637 = vrot.slane %v3636, 4
      %v3638 = vrot.slane %v2803, 5
      %v3639 = vsel %vm2004, %v3637, %v3638
      %v3640 = vrot.slane %v3638, 4
      %v3641 = vrot.slane %v2804, 5
      %v3642 = vsel %vm2004, %v3640, %v3641
      %v3643 = vrot.slane %v3507, 5
      %v3644 = vrot.slane %v3643, 4
      %v3645 = vrot.slane %v2806, 5
      %v3646 = vsel %vm2004, %v3644, %v3645
      %v3647 = vrot.slane %v3645, 4
      %v3648 = vrot.slane %v2807, 5
      %v3649 = vsel %vm2004, %v3647, %v3648
      %v3650 = vrot.slane %v3508, 5
      %v3651 = vrot.slane %v3650, 4
      %v3652 = vrot.slane %v2809, 5
      %v3653 = vsel %vm2004, %v3651, %v3652
      %v3654 = vrot.slane %v3652, 4
      %v3655 = vrot.slane %v2810, 5
      %v3656 = vsel %vm2004, %v3654, %v3655
      %v3657 = vrot.slane %v3509, 5
      %v3658 = vrot.slane %v3657, 4
      %v3659 = vrot.slane %v2812, 5
      %v3660 = vsel %vm2004, %v3658, %v3659
      %v3661 = vrot.slane %v3659, 4
      %v3662 = vrot.slane %v2813, 5
      %v3663 = vsel %vm2004, %v3661, %v3662
      %v3664 = vrot.slane %v3510, 5
      %v3665 = vrot.slane %v3664, 4
      %v3666 = vrot.slane %v2815, 5
      %v3667 = vsel %vm2004, %v3665, %v3666
      %v3668 = vrot.slane %v3666, 4
      %v3669 = vrot.slane %v2816, 5
      %v3670 = vsel %vm2004, %v3668, %v3669
      %s3671 = scalar_lea.vmem %s1, 20
      %v3672 = vld [vmem:[%s3671] sm:$0xf]
      %v3673 = vunpack.c.l.b16 %v3562
      %v3674 = vunpack.c.l.b16 %v3565
      %v3675 = vunpack.c.l.b16 %v3569
      %v3676 = vunpack.c.l.b16 %v3572
      %v3677 = vunpack.c.l.b16 %v3576
      %v3678 = vunpack.c.l.b16 %v3579
      %v3679 = vunpack.c.l.b16 %v3583
      %v3680 = vunpack.c.l.b16 %v3586
      %v3681 = vunpack.c.l.b16 %v3590
      %v3682 = vunpack.c.l.b16 %v3593
      %v3683 = vunpack.c.l.b16 %v3597
      %v3684 = vunpack.c.l.b16 %v3600
      %v3685 = vunpack.c.l.b16 %v3604
      %v3686 = vunpack.c.l.b16 %v3607
      %v3687 = vunpack.c.l.b16 %v3611
      %v3688 = vunpack.c.l.b16 %v3614
      %v3689 = vunpack.c.l.b16 %v3618
      %v3690 = vunpack.c.l.b16 %v3621
      %v3691 = vunpack.c.l.b16 %v3625
      %v3692 = vunpack.c.l.b16 %v3628
      %v3693 = vunpack.c.l.b16 %v3632
      %v3694 = vunpack.c.l.b16 %v3635
      %v3695 = vunpack.c.l.b16 %v3639
      %v3696 = vunpack.c.l.b16 %v3642
      %v3697 = vunpack.c.l.b16 %v3646
      %v3698 = vunpack.c.l.b16 %v3649
      %v3699 = vunpack.c.l.b16 %v3653
      %v3700 = vunpack.c.l.b16 %v3656
      %v3701 = vunpack.c.l.b16 %v3660
      %v3702 = vunpack.c.l.b16 %v3663
      %v3703 = vunpack.c.l.b16 %v3667
      %v3704 = vunpack.c.l.b16 %v3670
      %v3705 = vpack.c.b16 %v3674, %v3673
      %v3706 = vpack.c.b16 %v3676, %v3675
      %v3707 = vpack.c.b16 %v3678, %v3677
      %v3708 = vpack.c.b16 %v3680, %v3679
      %v3709 = vpack.c.b16 %v3682, %v3681
      %v3710 = vpack.c.b16 %v3684, %v3683
      %v3711 = vpack.c.b16 %v3686, %v3685
      %v3712 = vpack.c.b16 %v3688, %v3687
      %v3713 = vpack.c.b16 %v3690, %v3689
      %v3714 = vpack.c.b16 %v3692, %v3691
      %v3715 = vpack.c.b16 %v3694, %v3693
      %v3716 = vpack.c.b16 %v3696, %v3695
      %v3717 = vpack.c.b16 %v3698, %v3697
      %v3718 = vpack.c.b16 %v3700, %v3699
      %v3719 = vpack.c.b16 %v3702, %v3701
      %v3720 = vpack.c.b16 %v3704, %v3703
      %v3722 = vsel %vm1448, %v3705, 0
      %v3725 = vsel %vm1448, %v3706, 0
      %v3728 = vsel %vm1448, %v3707, 0
      %v3731 = vsel %vm1448, %v3708, 0
      %v3734 = vsel %vm1448, %v3709, 0
      %v3737 = vsel %vm1448, %v3710, 0
      %v3740 = vsel %vm1448, %v3711, 0
      %v3743 = vsel %vm1448, %v3712, 0
      %v3746 = vsel %vm1448, %v3713, 0
      %v3749 = vsel %vm1448, %v3714, 0
      %v3752 = vsel %vm1448, %v3715, 0
      %v3755 = vsel %vm1448, %v3716, 0
      %v3758 = vsel %vm1448, %v3717, 0
      %v3761 = vsel %vm1448, %v3718, 0
      %v3764 = vsel %vm1448, %v3719, 0
      %v3767 = vsel %vm1448, %v3720, 0
      %v3770 = vsel %vm1497, %v3672, 0
      %3772 = vmatprep.subr.bf16.mxu0 0
      %3773 = vmatpush1.bf16.msra.mxu0 %v3770
      %3774 = vmatprep.subr.bf16.mxu0 0
      %3775 = vmatpush1.bf16.msra.mxu0 0
      %3776 = vmatprep.subr.bf16.mxu0 0
      %3777 = vmatpush1.bf16.msra.mxu0 0
      %3778 = vmatprep.subr.bf16.mxu0 0
      %3779 = vmatpush1.bf16.msra.mxu0 0
      %3780 = vmatprep.subr.bf16.mxu0 0
      %3781 = vmatpush1.bf16.msra.mxu0 0
      %3782 = vmatprep.subr.bf16.mxu0 0
      %3783 = vmatpush1.bf16.msra.mxu0 0
      %3784 = vmatprep.subr.bf16.mxu0 0
      %3785 = vmatpush1.bf16.msra.mxu0 0
      %3786 = vmatprep.subr.bf16.mxu0 0
      %3787 = vmatpush1.bf16.msra.mxu0 0
      %3788 = vmatprep.subr.bf16.mxu0 0
      %3789 = vmatpush1.bf16.msra.mxu0 0
      %3790 = vmatprep.subr.bf16.mxu0 0
      %3791 = vmatpush1.bf16.msra.mxu0 0
      %3792 = vmatprep.subr.bf16.mxu0 0
      %3793 = vmatpush1.bf16.msra.mxu0 0
      %3794 = vmatprep.subr.bf16.mxu0 0
      %3795 = vmatpush1.bf16.msra.mxu0 0
      %3796 = vmatprep.subr.bf16.mxu0 0
      %3797 = vmatpush1.bf16.msra.mxu0 0
      %3798 = vmatprep.subr.bf16.mxu0 0
      %3799 = vmatpush1.bf16.msra.mxu0 0
      %3800 = vmatprep.subr.bf16.mxu0 0
      %3801 = vmatpush1.bf16.msra.mxu0 0
      %3802 = vmatprep.subr.bf16.mxu0 0
      %3803 = vmatpush1.bf16.msra.mxu0 0
      %3804 = vmatprep.mubr.bf16.mxu0 0
      %3805 = vmatmul.mubr.bf16.gmra.mrb[0].mxu0 %v3722
      %v3806 = vpop.f32.mrb[0].mxu0
      %v3807 = vadd.f32 0.0, %v3806
      %v3808 = vpop.f32.mrb[0].mxu0
      %v3809 = vpop.f32.mrb[0].mxu0
      %v3810 = vadd.f32 0.0, %v3809
      %v3811 = vpop.f32.mrb[0].mxu0
      %3812 = vmatprep.mubr.bf16.mxu0 0
      %3813 = vmatmul.mubr.bf16.gmra.mrb[0].mxu0 %v3725
      %v3814 = vpop.f32.mrb[0].mxu0
      %v3815 = vadd.f32 0.0, %v3814
      %v3816 = vpop.f32.mrb[0].mxu0
      %v3817 = vpop.f32.mrb[0].mxu0
      %v3818 = vadd.f32 0.0, %v3817
      %v3819 = vpop.f32.mrb[0].mxu0
      %3820 = vmatprep.mubr.bf16.mxu0 0
      %3821 = vmatmul.mubr.bf16.gmra.mrb[0].mxu0 %v3728
      %v3822 = vpop.f32.mrb[0].mxu0
      %v3823 = vadd.f32 0.0, %v3822
      %v3824 = vpop.f32.mrb[0].mxu0
      %v3825 = vpop.f32.mrb[0].mxu0
      %v3826 = vadd.f32 0.0, %v3825
      %v3827 = vpop.f32.mrb[0].mxu0
      %3828 = vmatprep.mubr.bf16.mxu0 0
      %3829 = vmatmul.mubr.bf16.gmra.mrb[0].mxu0 %v3731
      %v3830 = vpop.f32.mrb[0].mxu0
      %v3831 = vadd.f32 0.0, %v3830
      %v3832 = vpop.f32.mrb[0].mxu0
      %v3833 = vpop.f32.mrb[0].mxu0
      %v3834 = vadd.f32 0.0, %v3833
      %v3835 = vpop.f32.mrb[0].mxu0
      %3836 = vmatprep.mubr.bf16.mxu0 0
      %3837 = vmatmul.mubr.bf16.gmra.mrb[0].mxu0 %v3734
      %v3838 = vpop.f32.mrb[0].mxu0
      %v3839 = vadd.f32 0.0, %v3838
      %v3840 = vpop.f32.mrb[0].mxu0
      %v3841 = vpop.f32.mrb[0].mxu0
      %v3842 = vadd.f32 0.0, %v3841
      %v3843 = vpop.f32.mrb[0].mxu0
      %3844 = vmatprep.mubr.bf16.mxu0 0
      %3845 = vmatmul.mubr.bf16.gmra.mrb[0].mxu0 %v3737
      %v3846 = vpop.f32.mrb[0].mxu0
      %v3847 = vadd.f32 0.0, %v3846
      %v3848 = vpop.f32.mrb[0].mxu0
      %v3849 = vpop.f32.mrb[0].mxu0
      %v3850 = vadd.f32 0.0, %v3849
      %v3851 = vpop.f32.mrb[0].mxu0
      %3852 = vmatprep.mubr.bf16.mxu0 0
      %3853 = vmatmul.mubr.bf16.gmra.mrb[0].mxu0 %v3740
      %v3854 = vpop.f32.mrb[0].mxu0
      %v3855 = vadd.f32 0.0, %v3854
      %v3856 = vpop.f32.mrb[0].mxu0
      %v3857 = vpop.f32.mrb[0].mxu0
      %v3858 = vadd.f32 0.0, %v3857
      %v3859 = vpop.f32.mrb[0].mxu0
      %3860 = vmatprep.mubr.bf16.mxu0 0
      %3861 = vmatmul.mubr.bf16.gmra.mrb[0].mxu0 %v3743
      %v3862 = vpop.f32.mrb[0].mxu0
      %v3863 = vadd.f32 0.0, %v3862
      %v3864 = vpop.f32.mrb[0].mxu0
      %v3865 = vpop.f32.mrb[0].mxu0
      %v3866 = vadd.f32 0.0, %v3865
      %v3867 = vpop.f32.mrb[0].mxu0
      %3868 = vmatprep.mubr.bf16.mxu0 0
      %3869 = vmatmul.mubr.bf16.gmra.mrb[0].mxu0 %v3746
      %v3870 = vpop.f32.mrb[0].mxu0
      %v3871 = vadd.f32 0.0, %v3870
      %v3872 = vpop.f32.mrb[0].mxu0
      %v3873 = vpop.f32.mrb[0].mxu0
      %v3874 = vadd.f32 0.0, %v3873
      %v3875 = vpop.f32.mrb[0].mxu0
      %3876 = vmatprep.mubr.bf16.mxu0 0
      %3877 = vmatmul.mubr.bf16.gmra.mrb[0].mxu0 %v3749
      %v3878 = vpop.f32.mrb[0].mxu0
      %v3879 = vadd.f32 0.0, %v3878
      %v3880 = vpop.f32.mrb[0].mxu0
      %v3881 = vpop.f32.mrb[0].mxu0
      %v3882 = vadd.f32 0.0, %v3881
      %v3883 = vpop.f32.mrb[0].mxu0
      %3884 = vmatprep.mubr.bf16.mxu0 0
      %3885 = vmatmul.mubr.bf16.gmra.mrb[0].mxu0 %v3752
      %v3886 = vpop.f32.mrb[0].mxu0
      %v3887 = vadd.f32 0.0, %v3886
      %v3888 = vpop.f32.mrb[0].mxu0
      %v3889 = vpop.f32.mrb[0].mxu0
      %v3890 = vadd.f32 0.0, %v3889
      %v3891 = vpop.f32.mrb[0].mxu0
      %3892 = vmatprep.mubr.bf16.mxu0 0
      %3893 = vmatmul.mubr.bf16.gmra.mrb[0].mxu0 %v3755
      %v3894 = vpop.f32.mrb[0].mxu0
      %v3895 = vadd.f32 0.0, %v3894
      %v3896 = vpop.f32.mrb[0].mxu0
      %v3897 = vpop.f32.mrb[0].mxu0
      %v3898 = vadd.f32 0.0, %v3897
      %v3899 = vpop.f32.mrb[0].mxu0
      %3900 = vmatprep.mubr.bf16.mxu0 0
      %3901 = vmatmul.mubr.bf16.gmra.mrb[0].mxu0 %v3758
      %v3902 = vpop.f32.mrb[0].mxu0
      %v3903 = vadd.f32 0.0, %v3902
      %v3904 = vpop.f32.mrb[0].mxu0
      %v3905 = vpop.f32.mrb[0].mxu0
      %v3906 = vadd.f32 0.0, %v3905
      %v3907 = vpop.f32.mrb[0].mxu0
      %3908 = vmatprep.mubr.bf16.mxu0 0
      %3909 = vmatmul.mubr.bf16.gmra.mrb[0].mxu0 %v3761
      %v3910 = vpop.f32.mrb[0].mxu0
      %v3911 = vadd.f32 0.0, %v3910
      %v3912 = vpop.f32.mrb[0].mxu0
      %v3913 = vpop.f32.mrb[0].mxu0
      %v3914 = vadd.f32 0.0, %v3913
      %v3915 = vpop.f32.mrb[0].mxu0
      %3916 = vmatprep.mubr.bf16.mxu0 0
      %3917 = vmatmul.mubr.bf16.gmra.mrb[0].mxu0 %v3764
      %v3918 = vpop.f32.mrb[0].mxu0
      %v3919 = vadd.f32 0.0, %v3918
      %v3920 = vpop.f32.mrb[0].mxu0
      %v3921 = vpop.f32.mrb[0].mxu0
      %v3922 = vadd.f32 0.0, %v3921
      %v3923 = vpop.f32.mrb[0].mxu0
      %3924 = vmatprep.mubr.bf16.mxu0 0
      %3925 = vmatmul.mubr.bf16.gmra.mrb[0].mxu0 %v3767
      %v3926 = vpop.f32.mrb[0].mxu0
      %v3927 = vadd.f32 0.0, %v3926
      %v3928 = vpop.f32.mrb[0].mxu0
      %v3929 = vpop.f32.mrb[0].mxu0
      %v3930 = vadd.f32 0.0, %v3929
      %v3931 = vpop.f32.mrb[0].mxu0
      %3932 = vdwg.mxu0
      %v3933 = vadd.f32 %v3463, %v3807
      %v3934 = vadd.f32 %v3464, %v3810
      %v3935 = vadd.f32 %v3465, %v3815
      %v3936 = vadd.f32 %v3466, %v3818
      %v3937 = vadd.f32 %v3467, %v3823
      %v3938 = vadd.f32 %v3468, %v3826
      %v3939 = vadd.f32 %v3469, %v3831
      %v3940 = vadd.f32 %v3470, %v3834
      %v3941 = vadd.f32 %v3471, %v3839
      %v3942 = vadd.f32 %v3472, %v3842
      %v3943 = vadd.f32 %v3473, %v3847
      %v3944 = vadd.f32 %v3474, %v3850
      %v3945 = vadd.f32 %v3475, %v3855
      %v3946 = vadd.f32 %v3476, %v3858
      %v3947 = vadd.f32 %v3477, %v3863
      %v3948 = vadd.f32 %v3478, %v3866
      %v3949 = vadd.f32 %v3479, %v3871
      %v3950 = vadd.f32 %v3480, %v3874
      %v3951 = vadd.f32 %v3481, %v3879
      %v3952 = vadd.f32 %v3482, %v3882
      %v3953 = vadd.f32 %v3483, %v3887
      %v3954 = vadd.f32 %v3484, %v3890
      %v3955 = vadd.f32 %v3485, %v3895
      %v3956 = vadd.f32 %v3486, %v3898
      %v3957 = vadd.f32 %v3487, %v3903
      %v3958 = vadd.f32 %v3488, %v3906
      %v3959 = vadd.f32 %v3489, %v3911
      %v3960 = vadd.f32 %v3490, %v3914
      %v3961 = vadd.f32 %v3491, %v3919
      %v3962 = vadd.f32 %v3492, %v3922
      %v3963 = vadd.f32 %v3493, %v3927
      %v3964 = vadd.f32 %v3494, %v3930
      %s3965 = scalar_lea.vmem [#allocation2], 24
      %v3966 = vld [vmem:[%s3965] sm:$0xf]
      %v3967 = vld [vmem:[%s3965 + $0x4] sm:$0xf]
      %v3968 = vld [vmem:[%s3965 + $0xc] sm:$0xf]
      %v3969 = vld [vmem:[%s3965 + $0x10] sm:$0xf]
      %v3970 = vld [vmem:[%s3965 + $0x18] sm:$0xf]
      %v3971 = vld [vmem:[%s3965 + $0x1c] sm:$0xf]
      %v3972 = vld [vmem:[%s3965 + $0x24] sm:$0xf]
      %v3973 = vld [vmem:[%s3965 + $0x28] sm:$0xf]
      %v3974 = vld [vmem:[%s3965 + $0x30] sm:$0xf]
      %v3975 = vld [vmem:[%s3965 + $0x34] sm:$0xf]
      %v3976 = vld [vmem:[%s3965 + $0x3c] sm:$0xf]
      %v3977 = vld [vmem:[%s3965 + $0x40] sm:$0xf]
      %v3978 = vld [vmem:[%s3965 + $0x48] sm:$0xf]
      %v3979 = vld [vmem:[%s3965 + $0x4c] sm:$0xf]
      %v3980 = vld [vmem:[%s3965 + $0x54] sm:$0xf]
      %v3981 = vld [vmem:[%s3965 + $0x58] sm:$0xf]
      %v3982 = vld [vmem:[%s3965 + $0x60] sm:$0xf]
      %v3983 = vld [vmem:[%s3965 + $0x64] sm:$0xf]
      %v3984 = vld [vmem:[%s3965 + $0x6c] sm:$0xf]
      %v3985 = vld [vmem:[%s3965 + $0x70] sm:$0xf]
      %v3986 = vld [vmem:[%s3965 + $0x78] sm:$0xf]
      %v3987 = vld [vmem:[%s3965 + $0x7c] sm:$0xf]
      %v3988 = vld [vmem:[%s3965 + $0x84] sm:$0xf]
      %v3989 = vld [vmem:[%s3965 + $0x88] sm:$0xf]
      %v3990 = vld [vmem:[%s3965 + $0x90] sm:$0xf]
      %v3991 = vld [vmem:[%s3965 + $0x94] sm:$0xf]
      %v3992 = vld [vmem:[%s3965 + $0x9c] sm:$0xf]
      %v3993 = vld [vmem:[%s3965 + $0xa0] sm:$0xf]
      %v3994 = vld [vmem:[%s3965 + $0xa8] sm:$0xf]
      %v3995 = vld [vmem:[%s3965 + $0xac] sm:$0xf]
      %v3996 = vld [vmem:[%s3965 + $0xb4] sm:$0xf]
      %v3997 = vld [vmem:[%s3965 + $0xb8] sm:$0xf]
      %s3998 = scalar_lea.vmem %s1, 24
      %v3999 = vld [vmem:[%s3998] sm:$0xf]
      %v4032 = vunpack.c.l.b16 %v3966
      %v4033 = vunpack.c.l.b16 %v3967
      %v4034 = vunpack.c.l.b16 %v3968
      %v4035 = vunpack.c.l.b16 %v3969
      %v4036 = vunpack.c.l.b16 %v3970
      %v4037 = vunpack.c.l.b16 %v3971
      %v4038 = vunpack.c.l.b16 %v3972
      %v4039 = vunpack.c.l.b16 %v3973
      %v4040 = vunpack.c.l.b16 %v3974
      %v4041 = vunpack.c.l.b16 %v3975
      %v4042 = vunpack.c.l.b16 %v3976
      %v4043 = vunpack.c.l.b16 %v3977
      %v4044 = vunpack.c.l.b16 %v3978
      %v4045 = vunpack.c.l.b16 %v3979
      %v4046 = vunpack.c.l.b16 %v3980
      %v4047 = vunpack.c.l.b16 %v3981
      %v4048 = vunpack.c.l.b16 %v3982
      %v4049 = vunpack.c.l.b16 %v3983
      %v4050 = vunpack.c.l.b16 %v3984
      %v4051 = vunpack.c.l.b16 %v3985
      %v4052 = vunpack.c.l.b16 %v3986
      %v4053 = vunpack.c.l.b16 %v3987
      %v4054 = vunpack.c.l.b16 %v3988
      %v4055 = vunpack.c.l.b16 %v3989
      %v4056 = vunpack.c.l.b16 %v3990
      %v4057 = vunpack.c.l.b16 %v3991
      %v4058 = vunpack.c.l.b16 %v3992
      %v4059 = vunpack.c.l.b16 %v3993
      %v4060 = vunpack.c.l.b16 %v3994
      %v4061 = vunpack.c.l.b16 %v3995
      %v4062 = vunpack.c.l.b16 %v3996
      %v4063 = vunpack.c.l.b16 %v3997
      %v4064 = vpack.c.b16 %v4033, %v4032
      %v4065 = vpack.c.b16 %v4035, %v4034
      %v4066 = vpack.c.b16 %v4037, %v4036
      %v4067 = vpack.c.b16 %v4039, %v4038
      %v4068 = vpack.c.b16 %v4041, %v4040
      %v4069 = vpack.c.b16 %v4043, %v4042
      %v4070 = vpack.c.b16 %v4045, %v4044
      %v4071 = vpack.c.b16 %v4047, %v4046
      %v4072 = vpack.c.b16 %v4049, %v4048
      %v4073 = vpack.c.b16 %v4051, %v4050
      %v4074 = vpack.c.b16 %v4053, %v4052
      %v4075 = vpack.c.b16 %v4055, %v4054
      %v4076 = vpack.c.b16 %v4057, %v4056
      %v4077 = vpack.c.b16 %v4059, %v4058
      %v4078 = vpack.c.b16 %v4061, %v4060
      %v4079 = vpack.c.b16 %v4063, %v4062
      %v4081 = vsel %vm1448, %v4064, 0
      %v4084 = vsel %vm1448, %v4065, 0
      %v4087 = vsel %vm1448, %v4066, 0
      %v4090 = vsel %vm1448, %v4067, 0
      %v4093 = vsel %vm1448, %v4068, 0
      %v4096 = vsel %vm1448, %v4069, 0
      %v4099 = vsel %vm1448, %v4070, 0
      %v4102 = vsel %vm1448, %v4071, 0
      %v4105 = vsel %vm1448, %v4072, 0
      %v4108 = vsel %vm1448, %v4073, 0
      %v4111 = vsel %vm1448, %v4074, 0
      %v4114 = vsel %vm1448, %v4075, 0
      %v4117 = vsel %vm1448, %v4076, 0
      %v4120 = vsel %vm1448, %v4077, 0
      %v4123 = vsel %vm1448, %v4078, 0
      %v4126 = vsel %vm1448, %v4079, 0
      %v4129 = vsel %vm1497, %v3999, 0
      %4131 = vmatprep.subr.bf16.mxu0 0
      %4132 = vmatpush1.bf16.msra.mxu0 %v4129
      %4133 = vmatprep.subr.bf16.mxu0 0
      %4134 = vmatpush1.bf16.msra.mxu0 0
      %4135 = vmatprep.subr.bf16.mxu0 0
      %4136 = vmatpush1.bf16.msra.mxu0 0
      %4137 = vmatprep.subr.bf16.mxu0 0
      %4138 = vmatpush1.bf16.msra.mxu0 0
      %4139 = vmatprep.subr.bf16.mxu0 0
      %4140 = vmatpush1.bf16.msra.mxu0 0
      %4141 = vmatprep.subr.bf16.mxu0 0
      %4142 = vmatpush1.bf16.msra.mxu0 0
      %4143 = vmatprep.subr.bf16.mxu0 0
      %4144 = vmatpush1.bf16.msra.mxu0 0
      %4145 = vmatprep.subr.bf16.mxu0 0
      %4146 = vmatpush1.bf16.msra.mxu0 0
      %4147 = vmatprep.subr.bf16.mxu0 0
      %4148 = vmatpush1.bf16.msra.mxu0 0
      %4149 = vmatprep.subr.bf16.mxu0 0
      %4150 = vmatpush1.bf16.msra.mxu0 0
      %4151 = vmatprep.subr.bf16.mxu0 0
      %4152 = vmatpush1.bf16.msra.mxu0 0
      %4153 = vmatprep.subr.bf16.mxu0 0
      %4154 = vmatpush1.bf16.msra.mxu0 0
      %4155 = vmatprep.subr.bf16.mxu0 0
      %4156 = vmatpush1.bf16.msra.mxu0 0
      %4157 = vmatprep.subr.bf16.mxu0 0
      %4158 = vmatpush1.bf16.msra.mxu0 0
      %4159 = vmatprep.subr.bf16.mxu0 0
      %4160 = vmatpush1.bf16.msra.mxu0 0
      %4161 = vmatprep.subr.bf16.mxu0 0
      %4162 = vmatpush1.bf16.msra.mxu0 0
      %4163 = vmatprep.mubr.bf16.mxu0 0
      %4164 = vmatmul.mubr.bf16.gmra.mrb[0].mxu0 %v4081
      %v4165 = vpop.f32.mrb[0].mxu0
      %v4166 = vadd.f32 0.0, %v4165
      %v4167 = vpop.f32.mrb[0].mxu0
      %v4168 = vpop.f32.mrb[0].mxu0
      %v4169 = vadd.f32 0.0, %v4168
      %v4170 = vpop.f32.mrb[0].mxu0
      %4171 = vmatprep.mubr.bf16.mxu0 0
      %4172 = vmatmul.mubr.bf16.gmra.mrb[0].mxu0 %v4084
      %v4173 = vpop.f32.mrb[0].mxu0
      %v4174 = vadd.f32 0.0, %v4173
      %v4175 = vpop.f32.mrb[0].mxu0
      %v4176 = vpop.f32.mrb[0].mxu0
      %v4177 = vadd.f32 0.0, %v4176
      %v4178 = vpop.f32.mrb[0].mxu0
      %4179 = vmatprep.mubr.bf16.mxu0 0
      %4180 = vmatmul.mubr.bf16.gmra.mrb[0].mxu0 %v4087
      %v4181 = vpop.f32.mrb[0].mxu0
      %v4182 = vadd.f32 0.0, %v4181
      %v4183 = vpop.f32.mrb[0].mxu0
      %v4184 = vpop.f32.mrb[0].mxu0
      %v4185 = vadd.f32 0.0, %v4184
      %v4186 = vpop.f32.mrb[0].mxu0
      %4187 = vmatprep.mubr.bf16.mxu0 0
      %4188 = vmatmul.mubr.bf16.gmra.mrb[0].mxu0 %v4090
      %v4189 = vpop.f32.mrb[0].mxu0
      %v4190 = vadd.f32 0.0, %v4189
      %v4191 = vpop.f32.mrb[0].mxu0
      %v4192 = vpop.f32.mrb[0].mxu0
      %v4193 = vadd.f32 0.0, %v4192
      %v4194 = vpop.f32.mrb[0].mxu0
      %4195 = vmatprep.mubr.bf16.mxu0 0
      %4196 = vmatmul.mubr.bf16.gmra.mrb[0].mxu0 %v4093
      %v4197 = vpop.f32.mrb[0].mxu0
      %v4198 = vadd.f32 0.0, %v4197
      %v4199 = vpop.f32.mrb[0].mxu0
      %v4200 = vpop.f32.mrb[0].mxu0
      %v4201 = vadd.f32 0.0, %v4200
      %v4202 = vpop.f32.mrb[0].mxu0
      %4203 = vmatprep.mubr.bf16.mxu0 0
      %4204 = vmatmul.mubr.bf16.gmra.mrb[0].mxu0 %v4096
      %v4205 = vpop.f32.mrb[0].mxu0
      %v4206 = vadd.f32 0.0, %v4205
      %v4207 = vpop.f32.mrb[0].mxu0
      %v4208 = vpop.f32.mrb[0].mxu0
      %v4209 = vadd.f32 0.0, %v4208
      %v4210 = vpop.f32.mrb[0].mxu0
      %4211 = vmatprep.mubr.bf16.mxu0 0
      %4212 = vmatmul.mubr.bf16.gmra.mrb[0].mxu0 %v4099
      %v4213 = vpop.f32.mrb[0].mxu0
      %v4214 = vadd.f32 0.0, %v4213
      %v4215 = vpop.f32.mrb[0].mxu0
      %v4216 = vpop.f32.mrb[0].mxu0
      %v4217 = vadd.f32 0.0, %v4216
      %v4218 = vpop.f32.mrb[0].mxu0
      %4219 = vmatprep.mubr.bf16.mxu0 0
      %4220 = vmatmul.mubr.bf16.gmra.mrb[0].mxu0 %v4102
      %v4221 = vpop.f32.mrb[0].mxu0
      %v4222 = vadd.f32 0.0, %v4221
      %v4223 = vpop.f32.mrb[0].mxu0
      %v4224 = vpop.f32.mrb[0].mxu0
      %v4225 = vadd.f32 0.0, %v4224
      %v4226 = vpop.f32.mrb[0].mxu0
      %4227 = vmatprep.mubr.bf16.mxu0 0
      %4228 = vmatmul.mubr.bf16.gmra.mrb[0].mxu0 %v4105
      %v4229 = vpop.f32.mrb[0].mxu0
      %v4230 = vadd.f32 0.0, %v4229
      %v4231 = vpop.f32.mrb[0].mxu0
      %v4232 = vpop.f32.mrb[0].mxu0
      %v4233 = vadd.f32 0.0, %v4232
      %v4234 = vpop.f32.mrb[0].mxu0
      %4235 = vmatprep.mubr.bf16.mxu0 0
      %4236 = vmatmul.mubr.bf16.gmra.mrb[0].mxu0 %v4108
      %v4237 = vpop.f32.mrb[0].mxu0
      %v4238 = vadd.f32 0.0, %v4237
      %v4239 = vpop.f32.mrb[0].mxu0
      %v4240 = vpop.f32.mrb[0].mxu0
      %v4241 = vadd.f32 0.0, %v4240
      %v4242 = vpop.f32.mrb[0].mxu0
      %4243 = vmatprep.mubr.bf16.mxu0 0
      %4244 = vmatmul.mubr.bf16.gmra.mrb[0].mxu0 %v4111
      %v4245 = vpop.f32.mrb[0].mxu0
      %v4246 = vadd.f32 0.0, %v4245
      %v4247 = vpop.f32.mrb[0].mxu0
      %v4248 = vpop.f32.mrb[0].mxu0
      %v4249 = vadd.f32 0.0, %v4248
      %v4250 = vpop.f32.mrb[0].mxu0
      %4251 = vmatprep.mubr.bf16.mxu0 0
      %4252 = vmatmul.mubr.bf16.gmra.mrb[0].mxu0 %v4114
      %v4253 = vpop.f32.mrb[0].mxu0
      %v4254 = vadd.f32 0.0, %v4253
      %v4255 = vpop.f32.mrb[0].mxu0
      %v4256 = vpop.f32.mrb[0].mxu0
      %v4257 = vadd.f32 0.0, %v4256
      %v4258 = vpop.f32.mrb[0].mxu0
      %4259 = vmatprep.mubr.bf16.mxu0 0
      %4260 = vmatmul.mubr.bf16.gmra.mrb[0].mxu0 %v4117
      %v4261 = vpop.f32.mrb[0].mxu0
      %v4262 = vadd.f32 0.0, %v4261
      %v4263 = vpop.f32.mrb[0].mxu0
      %v4264 = vpop.f32.mrb[0].mxu0
      %v4265 = vadd.f32 0.0, %v4264
      %v4266 = vpop.f32.mrb[0].mxu0
      %4267 = vmatprep.mubr.bf16.mxu0 0
      %4268 = vmatmul.mubr.bf16.gmra.mrb[0].mxu0 %v4120
      %v4269 = vpop.f32.mrb[0].mxu0
      %v4270 = vadd.f32 0.0, %v4269
      %v4271 = vpop.f32.mrb[0].mxu0
      %v4272 = vpop.f32.mrb[0].mxu0
      %v4273 = vadd.f32 0.0, %v4272
      %v4274 = vpop.f32.mrb[0].mxu0
      %4275 = vmatprep.mubr.bf16.mxu0 0
      %4276 = vmatmul.mubr.bf16.gmra.mrb[0].mxu0 %v4123
      %v4277 = vpop.f32.mrb[0].mxu0
      %v4278 = vadd.f32 0.0, %v4277
      %v4279 = vpop.f32.mrb[0].mxu0
      %v4280 = vpop.f32.mrb[0].mxu0
      %v4281 = vadd.f32 0.0, %v4280
      %v4282 = vpop.f32.mrb[0].mxu0
      %4283 = vmatprep.mubr.bf16.mxu0 0
      %4284 = vmatmul.mubr.bf16.gmra.mrb[0].mxu0 %v4126
      %v4285 = vpop.f32.mrb[0].mxu0
      %v4286 = vadd.f32 0.0, %v4285
      %v4287 = vpop.f32.mrb[0].mxu0
      %v4288 = vpop.f32.mrb[0].mxu0
      %v4289 = vadd.f32 0.0, %v4288
      %v4290 = vpop.f32.mrb[0].mxu0
      %4291 = vdwg.mxu0
      %v4292 = vadd.f32 %v3933, %v4166
      %v4293 = vadd.f32 %v3934, %v4169
      %v4294 = vadd.f32 %v3935, %v4174
      %v4295 = vadd.f32 %v3936, %v4177
      %v4296 = vadd.f32 %v3937, %v4182
      %v4297 = vadd.f32 %v3938, %v4185
      %v4298 = vadd.f32 %v3939, %v4190
      %v4299 = vadd.f32 %v3940, %v4193
      %v4300 = vadd.f32 %v3941, %v4198
      %v4301 = vadd.f32 %v3942, %v4201
      %v4302 = vadd.f32 %v3943, %v4206
      %v4303 = vadd.f32 %v3944, %v4209
      %v4304 = vadd.f32 %v3945, %v4214
      %v4305 = vadd.f32 %v3946, %v4217
      %v4306 = vadd.f32 %v3947, %v4222
      %v4307 = vadd.f32 %v3948, %v4225
      %v4308 = vadd.f32 %v3949, %v4230
      %v4309 = vadd.f32 %v3950, %v4233
      %v4310 = vadd.f32 %v3951, %v4238
      %v4311 = vadd.f32 %v3952, %v4241
      %v4312 = vadd.f32 %v3953, %v4246
      %v4313 = vadd.f32 %v3954, %v4249
      %v4314 = vadd.f32 %v3955, %v4254
      %v4315 = vadd.f32 %v3956, %v4257
      %v4316 = vadd.f32 %v3957, %v4262
      %v4317 = vadd.f32 %v3958, %v4265
      %v4318 = vadd.f32 %v3959, %v4270
      %v4319 = vadd.f32 %v3960, %v4273
      %v4320 = vadd.f32 %v3961, %v4278
      %v4321 = vadd.f32 %v3962, %v4281
      %v4322 = vadd.f32 %v3963, %v4286
      %v4323 = vadd.f32 %v3964, %v4289
      %v4324 = vld [vmem:[%s3965] sm:$0xf]
      %v4325 = vld [vmem:[%s3965 + $0x4] sm:$0xf]
      %v4326 = vld [vmem:[%s3965 + $0x8] sm:$0x1]
      %v4327 = vld [vmem:[%s3965 + $0xc] sm:$0xf]
      %v4328 = vld [vmem:[%s3965 + $0x10] sm:$0xf]
      %v4329 = vld [vmem:[%s3965 + $0x14] sm:$0x1]
      %v4330 = vld [vmem:[%s3965 + $0x18] sm:$0xf]
      %v4331 = vld [vmem:[%s3965 + $0x1c] sm:$0xf]
      %v4332 = vld [vmem:[%s3965 + $0x20] sm:$0x1]
      %v4333 = vld [vmem:[%s3965 + $0x24] sm:$0xf]
      %v4334 = vld [vmem:[%s3965 + $0x28] sm:$0xf]
      %v4335 = vld [vmem:[%s3965 + $0x2c] sm:$0x1]
      %v4336 = vld [vmem:[%s3965 + $0x30] sm:$0xf]
      %v4337 = vld [vmem:[%s3965 + $0x34] sm:$0xf]
      %v4338 = vld [vmem:[%s3965 + $0x38] sm:$0x1]
      %v4339 = vld [vmem:[%s3965 + $0x3c] sm:$0xf]
      %v4340 = vld [vmem:[%s3965 + $0x40] sm:$0xf]
      %v4341 = vld [vmem:[%s3965 + $0x44] sm:$0x1]
      %v4342 = vld [vmem:[%s3965 + $0x48] sm:$0xf]
      %v4343 = vld [vmem:[%s3965 + $0x4c] sm:$0xf]
      %v4344 = vld [vmem:[%s3965 + $0x50] sm:$0x1]
      %v4345 = vld [vmem:[%s3965 + $0x54] sm:$0xf]
      %v4346 = vld [vmem:[%s3965 + $0x58] sm:$0xf]
      %v4347 = vld [vmem:[%s3965 + $0x5c] sm:$0x1]
      %v4348 = vld [vmem:[%s3965 + $0x60] sm:$0xf]
      %v4349 = vld [vmem:[%s3965 + $0x64] sm:$0xf]
      %v4350 = vld [vmem:[%s3965 + $0x68] sm:$0x1]
      %v4351 = vld [vmem:[%s3965 + $0x6c] sm:$0xf]
      %v4352 = vld [vmem:[%s3965 + $0x70] sm:$0xf]
      %v4353 = vld [vmem:[%s3965 + $0x74] sm:$0x1]
      %v4354 = vld [vmem:[%s3965 + $0x78] sm:$0xf]
      %v4355 = vld [vmem:[%s3965 + $0x7c] sm:$0xf]
      %v4356 = vld [vmem:[%s3965 + $0x80] sm:$0x1]
      %v4357 = vld [vmem:[%s3965 + $0x84] sm:$0xf]
      %v4358 = vld [vmem:[%s3965 + $0x88] sm:$0xf]
      %v4359 = vld [vmem:[%s3965 + $0x8c] sm:$0x1]
      %v4360 = vld [vmem:[%s3965 + $0x90] sm:$0xf]
      %v4361 = vld [vmem:[%s3965 + $0x94] sm:$0xf]
      %v4362 = vld [vmem:[%s3965 + $0x98] sm:$0x1]
      %v4363 = vld [vmem:[%s3965 + $0x9c] sm:$0xf]
      %v4364 = vld [vmem:[%s3965 + $0xa0] sm:$0xf]
      %v4365 = vld [vmem:[%s3965 + $0xa4] sm:$0x1]
      %v4366 = vld [vmem:[%s3965 + $0xa8] sm:$0xf]
      %v4367 = vld [vmem:[%s3965 + $0xac] sm:$0xf]
      %v4368 = vld [vmem:[%s3965 + $0xb0] sm:$0x1]
      %v4369 = vld [vmem:[%s3965 + $0xb4] sm:$0xf]
      %v4370 = vld [vmem:[%s3965 + $0xb8] sm:$0xf]
      %v4371 = vld [vmem:[%s3965 + $0xbc] sm:$0x1]
      %v4373 = vshrl.u32 %v4324, 16
      %v4375 = vrot.slane %v4373, 4
      %v4376 = vshll.u32 %v4324, 16
      %v4378 = vrot.slane %v4376, 5
      %v4379 = vor.u32 %v4375, %v4378
      %v4380 = vrot.slane %v4379, 4
      %v4382 = vshll.u32 %v4325, 16
      %v4384 = vrot.slane %v4382, 5
      %v4385 = vsel %vm1013, %v4380, %v4384
      %v4386 = vshrl.u32 %v4325, 16
      %v4388 = vrot.slane %v4386, 4
      %v4389 = vor.u32 %v4388, %v4384
      %v4390 = vrot.slane %v4389, 4
      %v4392 = vshll.u32 %v4326, 16
      %v4394 = vrot.slane %v4392, 5
      %v4395 = vsel %vm1013, %v4390, %v4394
      %v4397 = vshrl.u32 %v4327, 16
      %v4399 = vrot.slane %v4397, 4
      %v4400 = vshll.u32 %v4327, 16
      %v4402 = vrot.slane %v4400, 5
      %v4403 = vor.u32 %v4399, %v4402
      %v4404 = vrot.slane %v4403, 4
      %v4406 = vshll.u32 %v4328, 16
      %v4408 = vrot.slane %v4406, 5
      %v4409 = vsel %vm1013, %v4404, %v4408
      %v4410 = vshrl.u32 %v4328, 16
      %v4412 = vrot.slane %v4410, 4
      %v4413 = vor.u32 %v4412, %v4408
      %v4414 = vrot.slane %v4413, 4
      %v4416 = vshll.u32 %v4329, 16
      %v4418 = vrot.slane %v4416, 5
      %v4419 = vsel %vm1013, %v4414, %v4418
      %v4421 = vshrl.u32 %v4330, 16
      %v4423 = vrot.slane %v4421, 4
      %v4424 = vshll.u32 %v4330, 16
      %v4426 = vrot.slane %v4424, 5
      %v4427 = vor.u32 %v4423, %v4426
      %v4428 = vrot.slane %v4427, 4
      %v4430 = vshll.u32 %v4331, 16
      %v4432 = vrot.slane %v4430, 5
      %v4433 = vsel %vm1013, %v4428, %v4432
      %v4434 = vshrl.u32 %v4331, 16
      %v4436 = vrot.slane %v4434, 4
      %v4437 = vor.u32 %v4436, %v4432
      %v4438 = vrot.slane %v4437, 4
      %v4440 = vshll.u32 %v4332, 16
      %v4442 = vrot.slane %v4440, 5
      %v4443 = vsel %vm1013, %v4438, %v4442
      %v4445 = vshrl.u32 %v4333, 16
      %v4447 = vrot.slane %v4445, 4
      %v4448 = vshll.u32 %v4333, 16
      %v4450 = vrot.slane %v4448, 5
      %v4451 = vor.u32 %v4447, %v4450
      %v4452 = vrot.slane %v4451, 4
      %v4454 = vshll.u32 %v4334, 16
      %v4456 = vrot.slane %v4454, 5
      %v4457 = vsel %vm1013, %v4452, %v4456
      %v4458 = vshrl.u32 %v4334, 16
      %v4460 = vrot.slane %v4458, 4
      %v4461 = vor.u32 %v4460, %v4456
      %v4462 = vrot.slane %v4461, 4
      %v4464 = vshll.u32 %v4335, 16
      %v4466 = vrot.slane %v4464, 5
      %v4467 = vsel %vm1013, %v4462, %v4466
      %v4469 = vshrl.u32 %v4336, 16
      %v4471 = vrot.slane %v4469, 4
      %v4472 = vshll.u32 %v4336, 16
      %v4474 = vrot.slane %v4472, 5
      %v4475 = vor.u32 %v4471, %v4474
      %v4476 = vrot.slane %v4475, 4
      %v4478 = vshll.u32 %v4337, 16
      %v4480 = vrot.slane %v4478, 5
      %v4481 = vsel %vm1013, %v4476, %v4480
      %v4482 = vshrl.u32 %v4337, 16
      %v4484 = vrot.slane %v4482, 4
      %v4485 = vor.u32 %v4484, %v4480
      %v4486 = vrot.slane %v4485, 4
      %v4488 = vshll.u32 %v4338, 16
      %v4490 = vrot.slane %v4488, 5
      %v4491 = vsel %vm1013, %v4486, %v4490
      %v4493 = vshrl.u32 %v4339, 16
      %v4495 = vrot.slane %v4493, 4
      %v4496 = vshll.u32 %v4339, 16
      %v4498 = vrot.slane %v4496, 5
      %v4499 = vor.u32 %v4495, %v4498
      %v4500 = vrot.slane %v4499, 4
      %v4502 = vshll.u32 %v4340, 16
      %v4504 = vrot.slane %v4502, 5
      %v4505 = vsel %vm1013, %v4500, %v4504
      %v4506 = vshrl.u32 %v4340, 16
      %v4508 = vrot.slane %v4506, 4
      %v4509 = vor.u32 %v4508, %v4504
      %v4510 = vrot.slane %v4509, 4
      %v4512 = vshll.u32 %v4341, 16
      %v4514 = vrot.slane %v4512, 5
      %v4515 = vsel %vm1013, %v4510, %v4514
      %v4517 = vshrl.u32 %v4342, 16
      %v4519 = vrot.slane %v4517, 4
      %v4520 = vshll.u32 %v4342, 16
      %v4522 = vrot.slane %v4520, 5
      %v4523 = vor.u32 %v4519, %v4522
      %v4524 = vrot.slane %v4523, 4
      %v4526 = vshll.u32 %v4343, 16
      %v4528 = vrot.slane %v4526, 5
      %v4529 = vsel %vm1013, %v4524, %v4528
      %v4530 = vshrl.u32 %v4343, 16
      %v4532 = vrot.slane %v4530, 4
      %v4533 = vor.u32 %v4532, %v4528
      %v4534 = vrot.slane %v4533, 4
      %v4536 = vshll.u32 %v4344, 16
      %v4538 = vrot.slane %v4536, 5
      %v4539 = vsel %vm1013, %v4534, %v4538
      %v4541 = vshrl.u32 %v4345, 16
      %v4543 = vrot.slane %v4541, 4
      %v4544 = vshll.u32 %v4345, 16
      %v4546 = vrot.slane %v4544, 5
      %v4547 = vor.u32 %v4543, %v4546
      %v4548 = vrot.slane %v4547, 4
      %v4550 = vshll.u32 %v4346, 16
      %v4552 = vrot.slane %v4550, 5
      %v4553 = vsel %vm1013, %v4548, %v4552
      %v4554 = vshrl.u32 %v4346, 16
      %v4556 = vrot.slane %v4554, 4
      %v4557 = vor.u32 %v4556, %v4552
      %v4558 = vrot.slane %v4557, 4
      %v4560 = vshll.u32 %v4347, 16
      %v4562 = vrot.slane %v4560, 5
      %v4563 = vsel %vm1013, %v4558, %v4562
      %v4565 = vshrl.u32 %v4348, 16
      %v4567 = vrot.slane %v4565, 4
      %v4568 = vshll.u32 %v4348, 16
      %v4570 = vrot.slane %v4568, 5
      %v4571 = vor.u32 %v4567, %v4570
      %v4572 = vrot.slane %v4571, 4
      %v4574 = vshll.u32 %v4349, 16
      %v4576 = vrot.slane %v4574, 5
      %v4577 = vsel %vm1013, %v4572, %v4576
      %v4578 = vshrl.u32 %v4349, 16
      %v4580 = vrot.slane %v4578, 4
      %v4581 = vor.u32 %v4580, %v4576
      %v4582 = vrot.slane %v4581, 4
      %v4584 = vshll.u32 %v4350, 16
      %v4586 = vrot.slane %v4584, 5
      %v4587 = vsel %vm1013, %v4582, %v4586
      %v4589 = vshrl.u32 %v4351, 16
      %v4591 = vrot.slane %v4589, 4
      %v4592 = vshll.u32 %v4351, 16
      %v4594 = vrot.slane %v4592, 5
      %v4595 = vor.u32 %v4591, %v4594
      %v4596 = vrot.slane %v4595, 4
      %v4598 = vshll.u32 %v4352, 16
      %v4600 = vrot.slane %v4598, 5
      %v4601 = vsel %vm1013, %v4596, %v4600
      %v4602 = vshrl.u32 %v4352, 16
      %v4604 = vrot.slane %v4602, 4
      %v4605 = vor.u32 %v4604, %v4600
      %v4606 = vrot.slane %v4605, 4
      %v4608 = vshll.u32 %v4353, 16
      %v4610 = vrot.slane %v4608, 5
      %v4611 = vsel %vm1013, %v4606, %v4610
      %v4613 = vshrl.u32 %v4354, 16
      %v4615 = vrot.slane %v4613, 4
      %v4616 = vshll.u32 %v4354, 16
      %v4618 = vrot.slane %v4616, 5
      %v4619 = vor.u32 %v4615, %v4618
      %v4620 = vrot.slane %v4619, 4
      %v4622 = vshll.u32 %v4355, 16
      %v4624 = vrot.slane %v4622, 5
      %v4625 = vsel %vm1013, %v4620, %v4624
      %v4626 = vshrl.u32 %v4355, 16
      %v4628 = vrot.slane %v4626, 4
      %v4629 = vor.u32 %v4628, %v4624
      %v4630 = vrot.slane %v4629, 4
      %v4632 = vshll.u32 %v4356, 16
      %v4634 = vrot.slane %v4632, 5
      %v4635 = vsel %vm1013, %v4630, %v4634
      %v4637 = vshrl.u32 %v4357, 16
      %v4639 = vrot.slane %v4637, 4
      %v4640 = vshll.u32 %v4357, 16
      %v4642 = vrot.slane %v4640, 5
      %v4643 = vor.u32 %v4639, %v4642
      %v4644 = vrot.slane %v4643, 4
      %v4646 = vshll.u32 %v4358, 16
      %v4648 = vrot.slane %v4646, 5
      %v4649 = vsel %vm1013, %v4644, %v4648
      %v4650 = vshrl.u32 %v4358, 16
      %v4652 = vrot.slane %v4650, 4
      %v4653 = vor.u32 %v4652, %v4648
      %v4654 = vrot.slane %v4653, 4
      %v4656 = vshll.u32 %v4359, 16
      %v4658 = vrot.slane %v4656, 5
      %v4659 = vsel %vm1013, %v4654, %v4658
      %v4661 = vshrl.u32 %v4360, 16
      %v4663 = vrot.slane %v4661, 4
      %v4664 = vshll.u32 %v4360, 16
      %v4666 = vrot.slane %v4664, 5
      %v4667 = vor.u32 %v4663, %v4666
      %v4668 = vrot.slane %v4667, 4
      %v4670 = vshll.u32 %v4361, 16
      %v4672 = vrot.slane %v4670, 5
      %v4673 = vsel %vm1013, %v4668, %v4672
      %v4674 = vshrl.u32 %v4361, 16
      %v4676 = vrot.slane %v4674, 4
      %v4677 = vor.u32 %v4676, %v4672
      %v4678 = vrot.slane %v4677, 4
      %v4680 = vshll.u32 %v4362, 16
      %v4682 = vrot.slane %v4680, 5
      %v4683 = vsel %vm1013, %v4678, %v4682
      %v4685 = vshrl.u32 %v4363, 16
      %v4687 = vrot.slane %v4685, 4
      %v4688 = vshll.u32 %v4363, 16
      %v4690 = vrot.slane %v4688, 5
      %v4691 = vor.u32 %v4687, %v4690
      %v4692 = vrot.slane %v4691, 4
      %v4694 = vshll.u32 %v4364, 16
      %v4696 = vrot.slane %v4694, 5
      %v4697 = vsel %vm1013, %v4692, %v4696
      %v4698 = vshrl.u32 %v4364, 16
      %v4700 = vrot.slane %v4698, 4
      %v4701 = vor.u32 %v4700, %v4696
      %v4702 = vrot.slane %v4701, 4
      %v4704 = vshll.u32 %v4365, 16
      %v4706 = vrot.slane %v4704, 5
      %v4707 = vsel %vm1013, %v4702, %v4706
      %v4709 = vshrl.u32 %v4366, 16
      %v4711 = vrot.slane %v4709, 4
      %v4712 = vshll.u32 %v4366, 16
      %v4714 = vrot.slane %v4712, 5
      %v4715 = vor.u32 %v4711, %v4714
      %v4716 = vrot.slane %v4715, 4
      %v4718 = vshll.u32 %v4367, 16
      %v4720 = vrot.slane %v4718, 5
      %v4721 = vsel %vm1013, %v4716, %v4720
      %v4722 = vshrl.u32 %v4367, 16
      %v4724 = vrot.slane %v4722, 4
      %v4725 = vor.u32 %v4724, %v4720
      %v4726 = vrot.slane %v4725, 4
      %v4728 = vshll.u32 %v4368, 16
      %v4730 = vrot.slane %v4728, 5
      %v4731 = vsel %vm1013, %v4726, %v4730
      %v4733 = vshrl.u32 %v4369, 16
      %v4735 = vrot.slane %v4733, 4
      %v4736 = vshll.u32 %v4369, 16
      %v4738 = vrot.slane %v4736, 5
      %v4739 = vor.u32 %v4735, %v4738
      %v4740 = vrot.slane %v4739, 4
      %v4742 = vshll.u32 %v4370, 16
      %v4744 = vrot.slane %v4742, 5
      %v4745 = vsel %vm1013, %v4740, %v4744
      %v4746 = vshrl.u32 %v4370, 16
      %v4748 = vrot.slane %v4746, 4
      %v4749 = vor.u32 %v4748, %v4744
      %v4750 = vrot.slane %v4749, 4
      %v4752 = vshll.u32 %v4371, 16
      %v4754 = vrot.slane %v4752, 5
      %v4755 = vsel %vm1013, %v4750, %v4754
      %s4756 = scalar_lea.vmem %s1, 28
      %v4757 = vld [vmem:[%s4756] sm:$0xf]
      %v4758 = vunpack.c.l.b16 %v4385
      %v4759 = vunpack.c.l.b16 %v4395
      %v4760 = vunpack.c.l.b16 %v4409
      %v4761 = vunpack.c.l.b16 %v4419
      %v4762 = vunpack.c.l.b16 %v4433
      %v4763 = vunpack.c.l.b16 %v4443
      %v4764 = vunpack.c.l.b16 %v4457
      %v4765 = vunpack.c.l.b16 %v4467
      %v4766 = vunpack.c.l.b16 %v4481
      %v4767 = vunpack.c.l.b16 %v4491
      %v4768 = vunpack.c.l.b16 %v4505
      %v4769 = vunpack.c.l.b16 %v4515
      %v4770 = vunpack.c.l.b16 %v4529
      %v4771 = vunpack.c.l.b16 %v4539
      %v4772 = vunpack.c.l.b16 %v4553
      %v4773 = vunpack.c.l.b16 %v4563
      %v4774 = vunpack.c.l.b16 %v4577
      %v4775 = vunpack.c.l.b16 %v4587
      %v4776 = vunpack.c.l.b16 %v4601
      %v4777 = vunpack.c.l.b16 %v4611
      %v4778 = vunpack.c.l.b16 %v4625
      %v4779 = vunpack.c.l.b16 %v4635
      %v4780 = vunpack.c.l.b16 %v4649
      %v4781 = vunpack.c.l.b16 %v4659
      %v4782 = vunpack.c.l.b16 %v4673
      %v4783 = vunpack.c.l.b16 %v4683
      %v4784 = vunpack.c.l.b16 %v4697
      %v4785 = vunpack.c.l.b16 %v4707
      %v4786 = vunpack.c.l.b16 %v4721
      %v4787 = vunpack.c.l.b16 %v4731
      %v4788 = vunpack.c.l.b16 %v4745
      %v4789 = vunpack.c.l.b16 %v4755
      %v4790 = vpack.c.b16 %v4759, %v4758
      %v4791 = vpack.c.b16 %v4761, %v4760
      %v4792 = vpack.c.b16 %v4763, %v4762
      %v4793 = vpack.c.b16 %v4765, %v4764
      %v4794 = vpack.c.b16 %v4767, %v4766
      %v4795 = vpack.c.b16 %v4769, %v4768
      %v4796 = vpack.c.b16 %v4771, %v4770
      %v4797 = vpack.c.b16 %v4773, %v4772
      %v4798 = vpack.c.b16 %v4775, %v4774
      %v4799 = vpack.c.b16 %v4777, %v4776
      %v4800 = vpack.c.b16 %v4779, %v4778
      %v4801 = vpack.c.b16 %v4781, %v4780
      %v4802 = vpack.c.b16 %v4783, %v4782
      %v4803 = vpack.c.b16 %v4785, %v4784
      %v4804 = vpack.c.b16 %v4787, %v4786
      %v4805 = vpack.c.b16 %v4789, %v4788
      %v4807 = vsel %vm1448, %v4790, 0
      %v4810 = vsel %vm1448, %v4791, 0
      %v4813 = vsel %vm1448, %v4792, 0
      %v4816 = vsel %vm1448, %v4793, 0
      %v4819 = vsel %vm1448, %v4794, 0
      %v4822 = vsel %vm1448, %v4795, 0
      %v4825 = vsel %vm1448, %v4796, 0
      %v4828 = vsel %vm1448, %v4797, 0
      %v4831 = vsel %vm1448, %v4798, 0
      %v4834 = vsel %vm1448, %v4799, 0
      %v4837 = vsel %vm1448, %v4800, 0
      %v4840 = vsel %vm1448, %v4801, 0
      %v4843 = vsel %vm1448, %v4802, 0
      %v4846 = vsel %vm1448, %v4803, 0
      %v4849 = vsel %vm1448, %v4804, 0
      %v4852 = vsel %vm1448, %v4805, 0
      %v4855 = vsel %vm1497, %v4757, 0
      %4857 = vmatprep.subr.bf16.mxu0 0
      %4858 = vmatpush1.bf16.msra.mxu0 %v4855
      %4859 = vmatprep.subr.bf16.mxu0 0
      %4860 = vmatpush1.bf16.msra.mxu0 0
      %4861 = vmatprep.subr.bf16.mxu0 0
      %4862 = vmatpush1.bf16.msra.mxu0 0
      %4863 = vmatprep.subr.bf16.mxu0 0
      %4864 = vmatpush1.bf16.msra.mxu0 0
      %4865 = vmatprep.subr.bf16.mxu0 0
      %4866 = vmatpush1.bf16.msra.mxu0 0
      %4867 = vmatprep.subr.bf16.mxu0 0
      %4868 = vmatpush1.bf16.msra.mxu0 0
      %4869 = vmatprep.subr.bf16.mxu0 0
      %4870 = vmatpush1.bf16.msra.mxu0 0
      %4871 = vmatprep.subr.bf16.mxu0 0
      %4872 = vmatpush1.bf16.msra.mxu0 0
      %4873 = vmatprep.subr.bf16.mxu0 0
      %4874 = vmatpush1.bf16.msra.mxu0 0
      %4875 = vmatprep.subr.bf16.mxu0 0
      %4876 = vmatpush1.bf16.msra.mxu0 0
      %4877 = vmatprep.subr.bf16.mxu0 0
      %4878 = vmatpush1.bf16.msra.mxu0 0
      %4879 = vmatprep.subr.bf16.mxu0 0
      %4880 = vmatpush1.bf16.msra.mxu0 0
      %4881 = vmatprep.subr.bf16.mxu0 0
      %4882 = vmatpush1.bf16.msra.mxu0 0
      %4883 = vmatprep.subr.bf16.mxu0 0
      %4884 = vmatpush1.bf16.msra.mxu0 0
      %4885 = vmatprep.subr.bf16.mxu0 0
      %4886 = vmatpush1.bf16.msra.mxu0 0
      %4887 = vmatprep.subr.bf16.mxu0 0
      %4888 = vmatpush1.bf16.msra.mxu0 0
      %4889 = vmatprep.mubr.bf16.mxu0 0
      %4890 = vmatmul.mubr.bf16.gmra.mrb[0].mxu0 %v4807
      %v4891 = vpop.f32.mrb[0].mxu0
      %v4892 = vadd.f32 0.0, %v4891
      %v4893 = vpop.f32.mrb[0].mxu0
      %v4894 = vpop.f32.mrb[0].mxu0
      %v4895 = vadd.f32 0.0, %v4894
      %v4896 = vpop.f32.mrb[0].mxu0
      %4897 = vmatprep.mubr.bf16.mxu0 0
      %4898 = vmatmul.mubr.bf16.gmra.mrb[0].mxu0 %v4810
      %v4899 = vpop.f32.mrb[0].mxu0
      %v4900 = vadd.f32 0.0, %v4899
      %v4901 = vpop.f32.mrb[0].mxu0
      %v4902 = vpop.f32.mrb[0].mxu0
      %v4903 = vadd.f32 0.0, %v4902
      %v4904 = vpop.f32.mrb[0].mxu0
      %4905 = vmatprep.mubr.bf16.mxu0 0
      %4906 = vmatmul.mubr.bf16.gmra.mrb[0].mxu0 %v4813
      %v4907 = vpop.f32.mrb[0].mxu0
      %v4908 = vadd.f32 0.0, %v4907
      %v4909 = vpop.f32.mrb[0].mxu0
      %v4910 = vpop.f32.mrb[0].mxu0
      %v4911 = vadd.f32 0.0, %v4910
      %v4912 = vpop.f32.mrb[0].mxu0
      %4913 = vmatprep.mubr.bf16.mxu0 0
      %4914 = vmatmul.mubr.bf16.gmra.mrb[0].mxu0 %v4816
      %v4915 = vpop.f32.mrb[0].mxu0
      %v4916 = vadd.f32 0.0, %v4915
      %v4917 = vpop.f32.mrb[0].mxu0
      %v4918 = vpop.f32.mrb[0].mxu0
      %v4919 = vadd.f32 0.0, %v4918
      %v4920 = vpop.f32.mrb[0].mxu0
      %4921 = vmatprep.mubr.bf16.mxu0 0
      %4922 = vmatmul.mubr.bf16.gmra.mrb[0].mxu0 %v4819
      %v4923 = vpop.f32.mrb[0].mxu0
      %v4924 = vadd.f32 0.0, %v4923
      %v4925 = vpop.f32.mrb[0].mxu0
      %v4926 = vpop.f32.mrb[0].mxu0
      %v4927 = vadd.f32 0.0, %v4926
      %v4928 = vpop.f32.mrb[0].mxu0
      %4929 = vmatprep.mubr.bf16.mxu0 0
      %4930 = vmatmul.mubr.bf16.gmra.mrb[0].mxu0 %v4822
      %v4931 = vpop.f32.mrb[0].mxu0
      %v4932 = vadd.f32 0.0, %v4931
      %v4933 = vpop.f32.mrb[0].mxu0
      %v4934 = vpop.f32.mrb[0].mxu0
      %v4935 = vadd.f32 0.0, %v4934
      %v4936 = vpop.f32.mrb[0].mxu0
      %4937 = vmatprep.mubr.bf16.mxu0 0
      %4938 = vmatmul.mubr.bf16.gmra.mrb[0].mxu0 %v4825
      %v4939 = vpop.f32.mrb[0].mxu0
      %v4940 = vadd.f32 0.0, %v4939
      %v4941 = vpop.f32.mrb[0].mxu0
      %v4942 = vpop.f32.mrb[0].mxu0
      %v4943 = vadd.f32 0.0, %v4942
      %v4944 = vpop.f32.mrb[0].mxu0
      %4945 = vmatprep.mubr.bf16.mxu0 0
      %4946 = vmatmul.mubr.bf16.gmra.mrb[0].mxu0 %v4828
      %v4947 = vpop.f32.mrb[0].mxu0
      %v4948 = vadd.f32 0.0, %v4947
      %v4949 = vpop.f32.mrb[0].mxu0
      %v4950 = vpop.f32.mrb[0].mxu0
      %v4951 = vadd.f32 0.0, %v4950
      %v4952 = vpop.f32.mrb[0].mxu0
      %4953 = vmatprep.mubr.bf16.mxu0 0
      %4954 = vmatmul.mubr.bf16.gmra.mrb[0].mxu0 %v4831
      %v4955 = vpop.f32.mrb[0].mxu0
      %v4956 = vadd.f32 0.0, %v4955
      %v4957 = vpop.f32.mrb[0].mxu0
      %v4958 = vpop.f32.mrb[0].mxu0
      %v4959 = vadd.f32 0.0, %v4958
      %v4960 = vpop.f32.mrb[0].mxu0
      %4961 = vmatprep.mubr.bf16.mxu0 0
      %4962 = vmatmul.mubr.bf16.gmra.mrb[0].mxu0 %v4834
      %v4963 = vpop.f32.mrb[0].mxu0
      %v4964 = vadd.f32 0.0, %v4963
      %v4965 = vpop.f32.mrb[0].mxu0
      %v4966 = vpop.f32.mrb[0].mxu0
      %v4967 = vadd.f32 0.0, %v4966
      %v4968 = vpop.f32.mrb[0].mxu0
      %4969 = vmatprep.mubr.bf16.mxu0 0
      %4970 = vmatmul.mubr.bf16.gmra.mrb[0].mxu0 %v4837
      %v4971 = vpop.f32.mrb[0].mxu0
      %v4972 = vadd.f32 0.0, %v4971
      %v4973 = vpop.f32.mrb[0].mxu0
      %v4974 = vpop.f32.mrb[0].mxu0
      %v4975 = vadd.f32 0.0, %v4974
      %v4976 = vpop.f32.mrb[0].mxu0
      %4977 = vmatprep.mubr.bf16.mxu0 0
      %4978 = vmatmul.mubr.bf16.gmra.mrb[0].mxu0 %v4840
      %v4979 = vpop.f32.mrb[0].mxu0
      %v4980 = vadd.f32 0.0, %v4979
      %v4981 = vpop.f32.mrb[0].mxu0
      %v4982 = vpop.f32.mrb[0].mxu0
      %v4983 = vadd.f32 0.0, %v4982
      %v4984 = vpop.f32.mrb[0].mxu0
      %4985 = vmatprep.mubr.bf16.mxu0 0
      %4986 = vmatmul.mubr.bf16.gmra.mrb[0].mxu0 %v4843
      %v4987 = vpop.f32.mrb[0].mxu0
      %v4988 = vadd.f32 0.0, %v4987
      %v4989 = vpop.f32.mrb[0].mxu0
      %v4990 = vpop.f32.mrb[0].mxu0
      %v4991 = vadd.f32 0.0, %v4990
      %v4992 = vpop.f32.mrb[0].mxu0
      %4993 = vmatprep.mubr.bf16.mxu0 0
      %4994 = vmatmul.mubr.bf16.gmra.mrb[0].mxu0 %v4846
      %v4995 = vpop.f32.mrb[0].mxu0
      %v4996 = vadd.f32 0.0, %v4995
      %v4997 = vpop.f32.mrb[0].mxu0
      %v4998 = vpop.f32.mrb[0].mxu0
      %v4999 = vadd.f32 0.0, %v4998
      %v5000 = vpop.f32.mrb[0].mxu0
      %5001 = vmatprep.mubr.bf16.mxu0 0
      %5002 = vmatmul.mubr.bf16.gmra.mrb[0].mxu0 %v4849
      %v5003 = vpop.f32.mrb[0].mxu0
      %v5004 = vadd.f32 0.0, %v5003
      %v5005 = vpop.f32.mrb[0].mxu0
      %v5006 = vpop.f32.mrb[0].mxu0
      %v5007 = vadd.f32 0.0, %v5006
      %v5008 = vpop.f32.mrb[0].mxu0
      %5009 = vmatprep.mubr.bf16.mxu0 0
      %5010 = vmatmul.mubr.bf16.gmra.mrb[0].mxu0 %v4852
      %v5011 = vpop.f32.mrb[0].mxu0
      %v5012 = vadd.f32 0.0, %v5011
      %v5013 = vpop.f32.mrb[0].mxu0
      %v5014 = vpop.f32.mrb[0].mxu0
      %v5015 = vadd.f32 0.0, %v5014
      %v5016 = vpop.f32.mrb[0].mxu0
      %5017 = vdwg.mxu0
      %v5018 = vadd.f32 %v4292, %v4892
      %v5019 = vadd.f32 %v4293, %v4895
      %v5020 = vadd.f32 %v4294, %v4900
      %v5021 = vadd.f32 %v4295, %v4903
      %v5022 = vadd.f32 %v4296, %v4908
      %v5023 = vadd.f32 %v4297, %v4911
      %v5024 = vadd.f32 %v4298, %v4916
      %v5025 = vadd.f32 %v4299, %v4919
      %v5026 = vadd.f32 %v4300, %v4924
      %v5027 = vadd.f32 %v4301, %v4927
      %v5028 = vadd.f32 %v4302, %v4932
      %v5029 = vadd.f32 %v4303, %v4935
      %v5030 = vadd.f32 %v4304, %v4940
      %v5031 = vadd.f32 %v4305, %v4943
      %v5032 = vadd.f32 %v4306, %v4948
      %v5033 = vadd.f32 %v4307, %v4951
      %v5034 = vadd.f32 %v4308, %v4956
      %v5035 = vadd.f32 %v4309, %v4959
      %v5036 = vadd.f32 %v4310, %v4964
      %v5037 = vadd.f32 %v4311, %v4967
      %v5038 = vadd.f32 %v4312, %v4972
      %v5039 = vadd.f32 %v4313, %v4975
      %v5040 = vadd.f32 %v4314, %v4980
      %v5041 = vadd.f32 %v4315, %v4983
      %v5042 = vadd.f32 %v4316, %v4988
      %v5043 = vadd.f32 %v4317, %v4991
      %v5044 = vadd.f32 %v4318, %v4996
      %v5045 = vadd.f32 %v4319, %v4999
      %v5046 = vadd.f32 %v4320, %v5004
      %v5047 = vadd.f32 %v4321, %v5007
      %v5048 = vadd.f32 %v4322, %v5012
      %v5049 = vadd.f32 %v4323, %v5015
      %v5050 = vld [vmem:[%s3965] sm:$0xe]
      %v5051 = vld [vmem:[%s3965 + $0xc] sm:$0xe]
      %v5052 = vld [vmem:[%s3965 + $0x18] sm:$0xe]
      %v5053 = vld [vmem:[%s3965 + $0x24] sm:$0xe]
      %v5054 = vld [vmem:[%s3965 + $0x30] sm:$0xe]
      %v5055 = vld [vmem:[%s3965 + $0x3c] sm:$0xe]
      %v5056 = vld [vmem:[%s3965 + $0x48] sm:$0xe]
      %v5057 = vld [vmem:[%s3965 + $0x54] sm:$0xe]
      %v5058 = vld [vmem:[%s3965 + $0x60] sm:$0xe]
      %v5059 = vld [vmem:[%s3965 + $0x6c] sm:$0xe]
      %v5060 = vld [vmem:[%s3965 + $0x78] sm:$0xe]
      %v5061 = vld [vmem:[%s3965 + $0x84] sm:$0xe]
      %v5062 = vld [vmem:[%s3965 + $0x90] sm:$0xe]
      %v5063 = vld [vmem:[%s3965 + $0x9c] sm:$0xe]
      %v5064 = vld [vmem:[%s3965 + $0xa8] sm:$0xe]
      %v5065 = vld [vmem:[%s3965 + $0xb4] sm:$0xe]
      %v5114 = vrot.slane %v5050, 5
      %v5115 = vrot.slane %v5114, 4
      %v5116 = vrot.slane %v4325, 5
      %v5117 = vsel %vm2004, %v5115, %v5116
      %v5118 = vrot.slane %v5116, 4
      %v5119 = vrot.slane %v4326, 5
      %v5120 = vsel %vm2004, %v5118, %v5119
      %v5121 = vrot.slane %v5051, 5
      %v5122 = vrot.slane %v5121, 4
      %v5123 = vrot.slane %v4328, 5
      %v5124 = vsel %vm2004, %v5122, %v5123
      %v5125 = vrot.slane %v5123, 4
      %v5126 = vrot.slane %v4329, 5
      %v5127 = vsel %vm2004, %v5125, %v5126
      %v5128 = vrot.slane %v5052, 5
      %v5129 = vrot.slane %v5128, 4
      %v5130 = vrot.slane %v4331, 5
      %v5131 = vsel %vm2004, %v5129, %v5130
      %v5132 = vrot.slane %v5130, 4
      %v5133 = vrot.slane %v4332, 5
      %v5134 = vsel %vm2004, %v5132, %v5133
      %v5135 = vrot.slane %v5053, 5
      %v5136 = vrot.slane %v5135, 4
      %v5137 = vrot.slane %v4334, 5
      %v5138 = vsel %vm2004, %v5136, %v5137
      %v5139 = vrot.slane %v5137, 4
      %v5140 = vrot.slane %v4335, 5
      %v5141 = vsel %vm2004, %v5139, %v5140
      %v5142 = vrot.slane %v5054, 5
      %v5143 = vrot.slane %v5142, 4
      %v5144 = vrot.slane %v4337, 5
      %v5145 = vsel %vm2004, %v5143, %v5144
      %v5146 = vrot.slane %v5144, 4
      %v5147 = vrot.slane %v4338, 5
      %v5148 = vsel %vm2004, %v5146, %v5147
      %v5149 = vrot.slane %v5055, 5
      %v5150 = vrot.slane %v5149, 4
      %v5151 = vrot.slane %v4340, 5
      %v5152 = vsel %vm2004, %v5150, %v5151
      %v5153 = vrot.slane %v5151, 4
      %v5154 = vrot.slane %v4341, 5
      %v5155 = vsel %vm2004, %v5153, %v5154
      %v5156 = vrot.slane %v5056, 5
      %v5157 = vrot.slane %v5156, 4
      %v5158 = vrot.slane %v4343, 5
      %v5159 = vsel %vm2004, %v5157, %v5158
      %v5160 = vrot.slane %v5158, 4
      %v5161 = vrot.slane %v4344, 5
      %v5162 = vsel %vm2004, %v5160, %v5161
      %v5163 = vrot.slane %v5057, 5
      %v5164 = vrot.slane %v5163, 4
      %v5165 = vrot.slane %v4346, 5
      %v5166 = vsel %vm2004, %v5164, %v5165
      %v5167 = vrot.slane %v5165, 4
      %v5168 = vrot.slane %v4347, 5
      %v5169 = vsel %vm2004, %v5167, %v5168
      %v5170 = vrot.slane %v5058, 5
      %v5171 = vrot.slane %v5170, 4
      %v5172 = vrot.slane %v4349, 5
      %v5173 = vsel %vm2004, %v5171, %v5172
      %v5174 = vrot.slane %v5172, 4
      %v5175 = vrot.slane %v4350, 5
      %v5176 = vsel %vm2004, %v5174, %v5175
      %v5177 = vrot.slane %v5059, 5
      %v5178 = vrot.slane %v5177, 4
      %v5179 = vrot.slane %v4352, 5
      %v5180 = vsel %vm2004, %v5178, %v5179
      %v5181 = vrot.slane %v5179, 4
      %v5182 = vrot.slane %v4353, 5
      %v5183 = vsel %vm2004, %v5181, %v5182
      %v5184 = vrot.slane %v5060, 5
      %v5185 = vrot.slane %v5184, 4
      %v5186 = vrot.slane %v4355, 5
      %v5187 = vsel %vm2004, %v5185, %v5186
      %v5188 = vrot.slane %v5186, 4
      %v5189 = vrot.slane %v4356, 5
      %v5190 = vsel %vm2004, %v5188, %v5189
      %v5191 = vrot.slane %v5061, 5
      %v5192 = vrot.slane %v5191, 4
      %v5193 = vrot.slane %v4358, 5
      %v5194 = vsel %vm2004, %v5192, %v5193
      %v5195 = vrot.slane %v5193, 4
      %v5196 = vrot.slane %v4359, 5
      %v5197 = vsel %vm2004, %v5195, %v5196
      %v5198 = vrot.slane %v5062, 5
      %v5199 = vrot.slane %v5198, 4
      %v5200 = vrot.slane %v4361, 5
      %v5201 = vsel %vm2004, %v5199, %v5200
      %v5202 = vrot.slane %v5200, 4
      %v5203 = vrot.slane %v4362, 5
      %v5204 = vsel %vm2004, %v5202, %v5203
      %v5205 = vrot.slane %v5063, 5
      %v5206 = vrot.slane %v5205, 4
      %v5207 = vrot.slane %v4364, 5
      %v5208 = vsel %vm2004, %v5206, %v5207
      %v5209 = vrot.slane %v5207, 4
      %v5210 = vrot.slane %v4365, 5
      %v5211 = vsel %vm2004, %v5209, %v5210
      %v5212 = vrot.slane %v5064, 5
      %v5213 = vrot.slane %v5212, 4
      %v5214 = vrot.slane %v4367, 5
      %v5215 = vsel %vm2004, %v5213, %v5214
      %v5216 = vrot.slane %v5214, 4
      %v5217 = vrot.slane %v4368, 5
      %v5218 = vsel %vm2004, %v5216, %v5217
      %v5219 = vrot.slane %v5065, 5
      %v5220 = vrot.slane %v5219, 4
      %v5221 = vrot.slane %v4370, 5
      %v5222 = vsel %vm2004, %v5220, %v5221
      %v5223 = vrot.slane %v5221, 4
      %v5224 = vrot.slane %v4371, 5
      %v5225 = vsel %vm2004, %v5223, %v5224
      %s5226 = scalar_lea.vmem %s1, 32
      %v5227 = vld [vmem:[%s5226] sm:$0xf]
      %v5228 = vunpack.c.l.b16 %v5117
      %v5229 = vunpack.c.l.b16 %v5120
      %v5230 = vunpack.c.l.b16 %v5124
      %v5231 = vunpack.c.l.b16 %v5127
      %v5232 = vunpack.c.l.b16 %v5131
      %v5233 = vunpack.c.l.b16 %v5134
      %v5234 = vunpack.c.l.b16 %v5138
      %v5235 = vunpack.c.l.b16 %v5141
      %v5236 = vunpack.c.l.b16 %v5145
      %v5237 = vunpack.c.l.b16 %v5148
      %v5238 = vunpack.c.l.b16 %v5152
      %v5239 = vunpack.c.l.b16 %v5155
      %v5240 = vunpack.c.l.b16 %v5159
      %v5241 = vunpack.c.l.b16 %v5162
      %v5242 = vunpack.c.l.b16 %v5166
      %v5243 = vunpack.c.l.b16 %v5169
      %v5244 = vunpack.c.l.b16 %v5173
      %v5245 = vunpack.c.l.b16 %v5176
      %v5246 = vunpack.c.l.b16 %v5180
      %v5247 = vunpack.c.l.b16 %v5183
      %v5248 = vunpack.c.l.b16 %v5187
      %v5249 = vunpack.c.l.b16 %v5190
      %v5250 = vunpack.c.l.b16 %v5194
      %v5251 = vunpack.c.l.b16 %v5197
      %v5252 = vunpack.c.l.b16 %v5201
      %v5253 = vunpack.c.l.b16 %v5204
      %v5254 = vunpack.c.l.b16 %v5208
      %v5255 = vunpack.c.l.b16 %v5211
      %v5256 = vunpack.c.l.b16 %v5215
      %v5257 = vunpack.c.l.b16 %v5218
      %v5258 = vunpack.c.l.b16 %v5222
      %v5259 = vunpack.c.l.b16 %v5225
      %v5260 = vpack.c.b16 %v5229, %v5228
      %v5261 = vpack.c.b16 %v5231, %v5230
      %v5262 = vpack.c.b16 %v5233, %v5232
      %v5263 = vpack.c.b16 %v5235, %v5234
      %v5264 = vpack.c.b16 %v5237, %v5236
      %v5265 = vpack.c.b16 %v5239, %v5238
      %v5266 = vpack.c.b16 %v5241, %v5240
      %v5267 = vpack.c.b16 %v5243, %v5242
      %v5268 = vpack.c.b16 %v5245, %v5244
      %v5269 = vpack.c.b16 %v5247, %v5246
      %v5270 = vpack.c.b16 %v5249, %v5248
      %v5271 = vpack.c.b16 %v5251, %v5250
      %v5272 = vpack.c.b16 %v5253, %v5252
      %v5273 = vpack.c.b16 %v5255, %v5254
      %v5274 = vpack.c.b16 %v5257, %v5256
      %v5275 = vpack.c.b16 %v5259, %v5258
      %v5277 = vsel %vm1448, %v5260, 0
      %v5280 = vsel %vm1448, %v5261, 0
      %v5283 = vsel %vm1448, %v5262, 0
      %v5286 = vsel %vm1448, %v5263, 0
      %v5289 = vsel %vm1448, %v5264, 0
      %v5292 = vsel %vm1448, %v5265, 0
      %v5295 = vsel %vm1448, %v5266, 0
      %v5298 = vsel %vm1448, %v5267, 0
      %v5301 = vsel %vm1448, %v5268, 0
      %v5304 = vsel %vm1448, %v5269, 0
      %v5307 = vsel %vm1448, %v5270, 0
      %v5310 = vsel %vm1448, %v5271, 0
      %v5313 = vsel %vm1448, %v5272, 0
      %v5316 = vsel %vm1448, %v5273, 0
      %v5319 = vsel %vm1448, %v5274, 0
      %v5322 = vsel %vm1448, %v5275, 0
      %v5325 = vsel %vm1497, %v5227, 0
      %5327 = vmatprep.subr.bf16.mxu0 0
      %5328 = vmatpush1.bf16.msra.mxu0 %v5325
      %5329 = vmatprep.subr.bf16.mxu0 0
      %5330 = vmatpush1.bf16.msra.mxu0 0
      %5331 = vmatprep.subr.bf16.mxu0 0
      %5332 = vmatpush1.bf16.msra.mxu0 0
      %5333 = vmatprep.subr.bf16.mxu0 0
      %5334 = vmatpush1.bf16.msra.mxu0 0
      %5335 = vmatprep.subr.bf16.mxu0 0
      %5336 = vmatpush1.bf16.msra.mxu0 0
      %5337 = vmatprep.subr.bf16.mxu0 0
      %5338 = vmatpush1.bf16.msra.mxu0 0
      %5339 = vmatprep.subr.bf16.mxu0 0
      %5340 = vmatpush1.bf16.msra.mxu0 0
      %5341 = vmatprep.subr.bf16.mxu0 0
      %5342 = vmatpush1.bf16.msra.mxu0 0
      %5343 = vmatprep.subr.bf16.mxu0 0
      %5344 = vmatpush1.bf16.msra.mxu0 0
      %5345 = vmatprep.subr.bf16.mxu0 0
      %5346 = vmatpush1.bf16.msra.mxu0 0
      %5347 = vmatprep.subr.bf16.mxu0 0
      %5348 = vmatpush1.bf16.msra.mxu0 0
      %5349 = vmatprep.subr.bf16.mxu0 0
      %5350 = vmatpush1.bf16.msra.mxu0 0
      %5351 = vmatprep.subr.bf16.mxu0 0
      %5352 = vmatpush1.bf16.msra.mxu0 0
      %5353 = vmatprep.subr.bf16.mxu0 0
      %5354 = vmatpush1.bf16.msra.mxu0 0
      %5355 = vmatprep.subr.bf16.mxu0 0
      %5356 = vmatpush1.bf16.msra.mxu0 0
      %5357 = vmatprep.subr.bf16.mxu0 0
      %5358 = vmatpush1.bf16.msra.mxu0 0
      %5359 = vmatprep.mubr.bf16.mxu0 0
      %5360 = vmatmul.mubr.bf16.gmra.mrb[0].mxu0 %v5277
      %v5361 = vpop.f32.mrb[0].mxu0
      %v5362 = vadd.f32 0.0, %v5361
      %v5363 = vpop.f32.mrb[0].mxu0
      %v5364 = vpop.f32.mrb[0].mxu0
      %v5365 = vadd.f32 0.0, %v5364
      %v5366 = vpop.f32.mrb[0].mxu0
      %5367 = vmatprep.mubr.bf16.mxu0 0
      %5368 = vmatmul.mubr.bf16.gmra.mrb[0].mxu0 %v5280
      %v5369 = vpop.f32.mrb[0].mxu0
      %v5370 = vadd.f32 0.0, %v5369
      %v5371 = vpop.f32.mrb[0].mxu0
      %v5372 = vpop.f32.mrb[0].mxu0
      %v5373 = vadd.f32 0.0, %v5372
      %v5374 = vpop.f32.mrb[0].mxu0
      %5375 = vmatprep.mubr.bf16.mxu0 0
      %5376 = vmatmul.mubr.bf16.gmra.mrb[0].mxu0 %v5283
      %v5377 = vpop.f32.mrb[0].mxu0
      %v5378 = vadd.f32 0.0, %v5377
      %v5379 = vpop.f32.mrb[0].mxu0
      %v5380 = vpop.f32.mrb[0].mxu0
      %v5381 = vadd.f32 0.0, %v5380
      %v5382 = vpop.f32.mrb[0].mxu0
      %5383 = vmatprep.mubr.bf16.mxu0 0
      %5384 = vmatmul.mubr.bf16.gmra.mrb[0].mxu0 %v5286
      %v5385 = vpop.f32.mrb[0].mxu0
      %v5386 = vadd.f32 0.0, %v5385
      %v5387 = vpop.f32.mrb[0].mxu0
      %v5388 = vpop.f32.mrb[0].mxu0
      %v5389 = vadd.f32 0.0, %v5388
      %v5390 = vpop.f32.mrb[0].mxu0
      %5391 = vmatprep.mubr.bf16.mxu0 0
      %5392 = vmatmul.mubr.bf16.gmra.mrb[0].mxu0 %v5289
      %v5393 = vpop.f32.mrb[0].mxu0
      %v5394 = vadd.f32 0.0, %v5393
      %v5395 = vpop.f32.mrb[0].mxu0
      %v5396 = vpop.f32.mrb[0].mxu0
      %v5397 = vadd.f32 0.0, %v5396
      %v5398 = vpop.f32.mrb[0].mxu0
      %5399 = vmatprep.mubr.bf16.mxu0 0
      %5400 = vmatmul.mubr.bf16.gmra.mrb[0].mxu0 %v5292
      %v5401 = vpop.f32.mrb[0].mxu0
      %v5402 = vadd.f32 0.0, %v5401
      %v5403 = vpop.f32.mrb[0].mxu0
      %v5404 = vpop.f32.mrb[0].mxu0
      %v5405 = vadd.f32 0.0, %v5404
      %v5406 = vpop.f32.mrb[0].mxu0
      %5407 = vmatprep.mubr.bf16.mxu0 0
      %5408 = vmatmul.mubr.bf16.gmra.mrb[0].mxu0 %v5295
      %v5409 = vpop.f32.mrb[0].mxu0
      %v5410 = vadd.f32 0.0, %v5409
      %v5411 = vpop.f32.mrb[0].mxu0
      %v5412 = vpop.f32.mrb[0].mxu0
      %v5413 = vadd.f32 0.0, %v5412
      %v5414 = vpop.f32.mrb[0].mxu0
      %5415 = vmatprep.mubr.bf16.mxu0 0
      %5416 = vmatmul.mubr.bf16.gmra.mrb[0].mxu0 %v5298
      %v5417 = vpop.f32.mrb[0].mxu0
      %v5418 = vadd.f32 0.0, %v5417
      %v5419 = vpop.f32.mrb[0].mxu0
      %v5420 = vpop.f32.mrb[0].mxu0
      %v5421 = vadd.f32 0.0, %v5420
      %v5422 = vpop.f32.mrb[0].mxu0
      %5423 = vmatprep.mubr.bf16.mxu0 0
      %5424 = vmatmul.mubr.bf16.gmra.mrb[0].mxu0 %v5301
      %v5425 = vpop.f32.mrb[0].mxu0
      %v5426 = vadd.f32 0.0, %v5425
      %v5427 = vpop.f32.mrb[0].mxu0
      %v5428 = vpop.f32.mrb[0].mxu0
      %v5429 = vadd.f32 0.0, %v5428
      %v5430 = vpop.f32.mrb[0].mxu0
      %5431 = vmatprep.mubr.bf16.mxu0 0
      %5432 = vmatmul.mubr.bf16.gmra.mrb[0].mxu0 %v5304
      %v5433 = vpop.f32.mrb[0].mxu0
      %v5434 = vadd.f32 0.0, %v5433
      %v5435 = vpop.f32.mrb[0].mxu0
      %v5436 = vpop.f32.mrb[0].mxu0
      %v5437 = vadd.f32 0.0, %v5436
      %v5438 = vpop.f32.mrb[0].mxu0
      %5439 = vmatprep.mubr.bf16.mxu0 0
      %5440 = vmatmul.mubr.bf16.gmra.mrb[0].mxu0 %v5307
      %v5441 = vpop.f32.mrb[0].mxu0
      %v5442 = vadd.f32 0.0, %v5441
      %v5443 = vpop.f32.mrb[0].mxu0
      %v5444 = vpop.f32.mrb[0].mxu0
      %v5445 = vadd.f32 0.0, %v5444
      %v5446 = vpop.f32.mrb[0].mxu0
      %5447 = vmatprep.mubr.bf16.mxu0 0
      %5448 = vmatmul.mubr.bf16.gmra.mrb[0].mxu0 %v5310
      %v5449 = vpop.f32.mrb[0].mxu0
      %v5450 = vadd.f32 0.0, %v5449
      %v5451 = vpop.f32.mrb[0].mxu0
      %v5452 = vpop.f32.mrb[0].mxu0
      %v5453 = vadd.f32 0.0, %v5452
      %v5454 = vpop.f32.mrb[0].mxu0
      %5455 = vmatprep.mubr.bf16.mxu0 0
      %5456 = vmatmul.mubr.bf16.gmra.mrb[0].mxu0 %v5313
      %v5457 = vpop.f32.mrb[0].mxu0
      %v5458 = vadd.f32 0.0, %v5457
      %v5459 = vpop.f32.mrb[0].mxu0
      %v5460 = vpop.f32.mrb[0].mxu0
      %v5461 = vadd.f32 0.0, %v5460
      %v5462 = vpop.f32.mrb[0].mxu0
      %5463 = vmatprep.mubr.bf16.mxu0 0
      %5464 = vmatmul.mubr.bf16.gmra.mrb[0].mxu0 %v5316
      %v5465 = vpop.f32.mrb[0].mxu0
      %v5466 = vadd.f32 0.0, %v5465
      %v5467 = vpop.f32.mrb[0].mxu0
      %v5468 = vpop.f32.mrb[0].mxu0
      %v5469 = vadd.f32 0.0, %v5468
      %v5470 = vpop.f32.mrb[0].mxu0
      %5471 = vmatprep.mubr.bf16.mxu0 0
      %5472 = vmatmul.mubr.bf16.gmra.mrb[0].mxu0 %v5319
      %v5473 = vpop.f32.mrb[0].mxu0
      %v5474 = vadd.f32 0.0, %v5473
      %v5475 = vpop.f32.mrb[0].mxu0
      %v5476 = vpop.f32.mrb[0].mxu0
      %v5477 = vadd.f32 0.0, %v5476
      %v5478 = vpop.f32.mrb[0].mxu0
      %5479 = vmatprep.mubr.bf16.mxu0 0
      %5480 = vmatmul.mubr.bf16.gmra.mrb[0].mxu0 %v5322
      %v5481 = vpop.f32.mrb[0].mxu0
      %v5482 = vadd.f32 0.0, %v5481
      %v5483 = vpop.f32.mrb[0].mxu0
      %v5484 = vpop.f32.mrb[0].mxu0
      %v5485 = vadd.f32 0.0, %v5484
      %v5486 = vpop.f32.mrb[0].mxu0
      %5487 = vdwg.mxu0
      %v5488 = vadd.f32 %v5018, %v5362
      %v5489 = vadd.f32 %v5019, %v5365
      %v5490 = vadd.f32 %v5020, %v5370
      %v5491 = vadd.f32 %v5021, %v5373
      %v5492 = vadd.f32 %v5022, %v5378
      %v5493 = vadd.f32 %v5023, %v5381
      %v5494 = vadd.f32 %v5024, %v5386
      %v5495 = vadd.f32 %v5025, %v5389
      %v5496 = vadd.f32 %v5026, %v5394
      %v5497 = vadd.f32 %v5027, %v5397
      %v5498 = vadd.f32 %v5028, %v5402
      %v5499 = vadd.f32 %v5029, %v5405
      %v5500 = vadd.f32 %v5030, %v5410
      %v5501 = vadd.f32 %v5031, %v5413
      %v5502 = vadd.f32 %v5032, %v5418
      %v5503 = vadd.f32 %v5033, %v5421
      %v5504 = vadd.f32 %v5034, %v5426
      %v5505 = vadd.f32 %v5035, %v5429
      %v5506 = vadd.f32 %v5036, %v5434
      %v5507 = vadd.f32 %v5037, %v5437
      %v5508 = vadd.f32 %v5038, %v5442
      %v5509 = vadd.f32 %v5039, %v5445
      %v5510 = vadd.f32 %v5040, %v5450
      %v5511 = vadd.f32 %v5041, %v5453
      %v5512 = vadd.f32 %v5042, %v5458
      %v5513 = vadd.f32 %v5043, %v5461
      %v5514 = vadd.f32 %v5044, %v5466
      %v5515 = vadd.f32 %v5045, %v5469
      %v5516 = vadd.f32 %v5046, %v5474
      %v5517 = vadd.f32 %v5047, %v5477
      %v5518 = vadd.f32 %v5048, %v5482
      %v5519 = vadd.f32 %v5049, %v5485
      %v5520 = vsel %vm1448, %v5488, 0.0
      %v5521 = vsel %vm1448, %v5489, 0.0
      %v5522 = vadd.f32 %v5520, %v5521
      %v5523 = vsel %vm1448, %v5490, 0.0
      %v5524 = vadd.f32 %v5522, %v5523
      %v5525 = vsel %vm1448, %v5491, 0.0
      %v5526 = vadd.f32 %v5524, %v5525
      %v5527 = vsel %vm1448, %v5492, 0.0
      %v5528 = vadd.f32 %v5526, %v5527
      %v5529 = vsel %vm1448, %v5493, 0.0
      %v5530 = vadd.f32 %v5528, %v5529
      %v5531 = vsel %vm1448, %v5494, 0.0
      %v5532 = vadd.f32 %v5530, %v5531
      %v5533 = vsel %vm1448, %v5495, 0.0
      %v5534 = vadd.f32 %v5532, %v5533
      %v5535 = vsel %vm1448, %v5496, 0.0
      %v5536 = vadd.f32 %v5534, %v5535
      %v5537 = vsel %vm1448, %v5497, 0.0
      %v5538 = vadd.f32 %v5536, %v5537
      %v5539 = vsel %vm1448, %v5498, 0.0
      %v5540 = vadd.f32 %v5538, %v5539
      %v5541 = vsel %vm1448, %v5499, 0.0
      %v5542 = vadd.f32 %v5540, %v5541
      %v5543 = vsel %vm1448, %v5500, 0.0
      %v5544 = vadd.f32 %v5542, %v5543
      %v5545 = vsel %vm1448, %v5501, 0.0
      %v5546 = vadd.f32 %v5544, %v5545
      %v5547 = vsel %vm1448, %v5502, 0.0
      %v5548 = vadd.f32 %v5546, %v5547
      %v5549 = vsel %vm1448, %v5503, 0.0
      %v5550 = vadd.f32 %v5548, %v5549
      %v5551 = vsel %vm1448, %v5504, 0.0
      %v5552 = vadd.f32 %v5550, %v5551
      %v5553 = vsel %vm1448, %v5505, 0.0
      %v5554 = vadd.f32 %v5552, %v5553
      %v5555 = vsel %vm1448, %v5506, 0.0
      %v5556 = vadd.f32 %v5554, %v5555
      %v5557 = vsel %vm1448, %v5507, 0.0
      %v5558 = vadd.f32 %v5556, %v5557
      %v5559 = vsel %vm1448, %v5508, 0.0
      %v5560 = vadd.f32 %v5558, %v5559
      %v5561 = vsel %vm1448, %v5509, 0.0
      %v5562 = vadd.f32 %v5560, %v5561
      %v5563 = vsel %vm1448, %v5510, 0.0
      %v5564 = vadd.f32 %v5562, %v5563
      %v5565 = vsel %vm1448, %v5511, 0.0
      %v5566 = vadd.f32 %v5564, %v5565
      %v5567 = vsel %vm1448, %v5512, 0.0
      %v5568 = vadd.f32 %v5566, %v5567
      %v5569 = vsel %vm1448, %v5513, 0.0
      %v5570 = vadd.f32 %v5568, %v5569
      %v5571 = vsel %vm1448, %v5514, 0.0
      %v5572 = vadd.f32 %v5570, %v5571
      %v5573 = vsel %vm1448, %v5515, 0.0
      %v5574 = vadd.f32 %v5572, %v5573
      %v5575 = vsel %vm1448, %v5516, 0.0
      %v5576 = vadd.f32 %v5574, %v5575
      %v5577 = vsel %vm1448, %v5517, 0.0
      %v5578 = vadd.f32 %v5576, %v5577
      %v5579 = vsel %vm1448, %v5518, 0.0
      %v5580 = vadd.f32 %v5578, %v5579
      %v5581 = vsel %vm1448, %v5519, 0.0
      %v5582 = vadd.f32 %v5580, %v5581
      %v5583 = vrot.slane %v5582, 4
      %v5584 = vadd.f32 %v5582, %v5583
      %v5585 = vrot.slane %v5584, 2
      %v5586 = vadd.f32 %v5584, %v5585
      %v5587 = vrot.slane %v5586, 1
      %v5588 = vadd.f32 %v5586, %v5587
      %v5589 = vmul.f32 %v5488, %v5488
      %v5590 = vmul.f32 %v5489, %v5489
      %v5591 = vmul.f32 %v5490, %v5490
      %v5592 = vmul.f32 %v5491, %v5491
      %v5593 = vmul.f32 %v5492, %v5492
      %v5594 = vmul.f32 %v5493, %v5493
      %v5595 = vmul.f32 %v5494, %v5494
      %v5596 = vmul.f32 %v5495, %v5495
      %v5597 = vmul.f32 %v5496, %v5496
      %v5598 = vmul.f32 %v5497, %v5497
      %v5599 = vmul.f32 %v5498, %v5498
      %v5600 = vmul.f32 %v5499, %v5499
      %v5601 = vmul.f32 %v5500, %v5500
      %v5602 = vmul.f32 %v5501, %v5501
      %v5603 = vmul.f32 %v5502, %v5502
      %v5604 = vmul.f32 %v5503, %v5503
      %v5605 = vmul.f32 %v5504, %v5504
      %v5606 = vmul.f32 %v5505, %v5505
      %v5607 = vmul.f32 %v5506, %v5506
      %v5608 = vmul.f32 %v5507, %v5507
      %v5609 = vmul.f32 %v5508, %v5508
      %v5610 = vmul.f32 %v5509, %v5509
      %v5611 = vmul.f32 %v5510, %v5510
      %v5612 = vmul.f32 %v5511, %v5511
      %v5613 = vmul.f32 %v5512, %v5512
      %v5614 = vmul.f32 %v5513, %v5513
      %v5615 = vmul.f32 %v5514, %v5514
      %v5616 = vmul.f32 %v5515, %v5515
      %v5617 = vmul.f32 %v5516, %v5516
      %v5618 = vmul.f32 %v5517, %v5517
      %v5619 = vmul.f32 %v5518, %v5518
      %v5620 = vmul.f32 %v5519, %v5519
      %v5621 = vsel %vm1448, %v5589, 0.0
      %v5622 = vsel %vm1448, %v5590, 0.0
      %v5623 = vadd.f32 %v5621, %v5622
      %v5624 = vsel %vm1448, %v5591, 0.0
      %v5625 = vadd.f32 %v5623, %v5624
      %v5626 = vsel %vm1448, %v5592, 0.0
      %v5627 = vadd.f32 %v5625, %v5626
      %v5628 = vsel %vm1448, %v5593, 0.0
      %v5629 = vadd.f32 %v5627, %v5628
      %v5630 = vsel %vm1448, %v5594, 0.0
      %v5631 = vadd.f32 %v5629, %v5630
      %v5632 = vsel %vm1448, %v5595, 0.0
      %v5633 = vadd.f32 %v5631, %v5632
      %v5634 = vsel %vm1448, %v5596, 0.0
      %v5635 = vadd.f32 %v5633, %v5634
      %v5636 = vsel %vm1448, %v5597, 0.0
      %v5637 = vadd.f32 %v5635, %v5636
      %v5638 = vsel %vm1448, %v5598, 0.0
      %v5639 = vadd.f32 %v5637, %v5638
      %v5640 = vsel %vm1448, %v5599, 0.0
      %v5641 = vadd.f32 %v5639, %v5640
      %v5642 = vsel %vm1448, %v5600, 0.0
      %v5643 = vadd.f32 %v5641, %v5642
      %v5644 = vsel %vm1448, %v5601, 0.0
      %v5645 = vadd.f32 %v5643, %v5644
      %v5646 = vsel %vm1448, %v5602, 0.0
      %v5647 = vadd.f32 %v5645, %v5646
      %v5648 = vsel %vm1448, %v5603, 0.0
      %v5649 = vadd.f32 %v5647, %v5648
      %v5650 = vsel %vm1448, %v5604, 0.0
      %v5651 = vadd.f32 %v5649, %v5650
      %v5652 = vsel %vm1448, %v5605, 0.0
      %v5653 = vadd.f32 %v5651, %v5652
      %v5654 = vsel %vm1448, %v5606, 0.0
      %v5655 = vadd.f32 %v5653, %v5654
      %v5656 = vsel %vm1448, %v5607, 0.0
      %v5657 = vadd.f32 %v5655, %v5656
      %v5658 = vsel %vm1448, %v5608, 0.0
      %v5659 = vadd.f32 %v5657, %v5658
      %v5660 = vsel %vm1448, %v5609, 0.0
      %v5661 = vadd.f32 %v5659, %v5660
      %v5662 = vsel %vm1448, %v5610, 0.0
      %v5663 = vadd.f32 %v5661, %v5662
      %v5664 = vsel %vm1448, %v5611, 0.0
      %v5665 = vadd.f32 %v5663, %v5664
      %v5666 = vsel %vm1448, %v5612, 0.0
      %v5667 = vadd.f32 %v5665, %v5666
      %v5668 = vsel %vm1448, %v5613, 0.0
      %v5669 = vadd.f32 %v5667, %v5668
      %v5670 = vsel %vm1448, %v5614, 0.0
      %v5671 = vadd.f32 %v5669, %v5670
      %v5672 = vsel %vm1448, %v5615, 0.0
      %v5673 = vadd.f32 %v5671, %v5672
      %v5674 = vsel %vm1448, %v5616, 0.0
      %v5675 = vadd.f32 %v5673, %v5674
      %v5676 = vsel %vm1448, %v5617, 0.0
      %v5677 = vadd.f32 %v5675, %v5676
      %v5678 = vsel %vm1448, %v5618, 0.0
      %v5679 = vadd.f32 %v5677, %v5678
      %v5680 = vsel %vm1448, %v5619, 0.0
      %v5681 = vadd.f32 %v5679, %v5680
      %v5682 = vsel %vm1448, %v5620, 0.0
      %v5683 = vadd.f32 %v5681, %v5682
      %v5684 = vrot.slane %v5683, 4
      %v5685 = vadd.f32 %v5683, %v5684
      %v5686 = vrot.slane %v5685, 2
      %v5687 = vadd.f32 %v5685, %v5686
      %v5688 = vrot.slane %v5687, 1
      %v5689 = vadd.f32 %v5687, %v5688
      %v5690 = vmul.f32 %v5588, 0.00390625
      %v5691 = vmul.f32 %v5689, 0.00390625
      %v5692 = vmul.f32 %v5690, %v5690
      %v5693 = vsub.f32 %v5691, %v5692
      %v5694 = vsub.f32 %v5488, %v5690
      %v5695 = vsub.f32 %v5489, %v5690
      %v5696 = vsub.f32 %v5490, %v5690
      %v5697 = vsub.f32 %v5491, %v5690
      %v5698 = vsub.f32 %v5492, %v5690
      %v5699 = vsub.f32 %v5493, %v5690
      %v5700 = vsub.f32 %v5494, %v5690
      %v5701 = vsub.f32 %v5495, %v5690
      %v5702 = vsub.f32 %v5496, %v5690
      %v5703 = vsub.f32 %v5497, %v5690
      %v5704 = vsub.f32 %v5498, %v5690
      %v5705 = vsub.f32 %v5499, %v5690
      %v5706 = vsub.f32 %v5500, %v5690
      %v5707 = vsub.f32 %v5501, %v5690
      %v5708 = vsub.f32 %v5502, %v5690
      %v5709 = vsub.f32 %v5503, %v5690
      %v5710 = vsub.f32 %v5504, %v5690
      %v5711 = vsub.f32 %v5505, %v5690
      %v5712 = vsub.f32 %v5506, %v5690
      %v5713 = vsub.f32 %v5507, %v5690
      %v5714 = vsub.f32 %v5508, %v5690
      %v5715 = vsub.f32 %v5509, %v5690
      %v5716 = vsub.f32 %v5510, %v5690
      %v5717 = vsub.f32 %v5511, %v5690
      %v5718 = vsub.f32 %v5512, %v5690
      %v5719 = vsub.f32 %v5513, %v5690
      %v5720 = vsub.f32 %v5514, %v5690
      %v5721 = vsub.f32 %v5515, %v5690
      %v5722 = vsub.f32 %v5516, %v5690
      %v5723 = vsub.f32 %v5517, %v5690
      %v5724 = vsub.f32 %v5518, %v5690
      %v5725 = vsub.f32 %v5519, %v5690
      %v5726 = vadd.f32 %v5693, 1e-05
      %v5727 = vrsqrt.pop %v5726
      %v5728 = vmul.f32 %v5694, %v5727
      %v5729 = vmul.f32 %v5695, %v5727
      %v5730 = vmul.f32 %v5696, %v5727
      %v5731 = vmul.f32 %v5697, %v5727
      %v5732 = vmul.f32 %v5698, %v5727
      %v5733 = vmul.f32 %v5699, %v5727
      %v5734 = vmul.f32 %v5700, %v5727
      %v5735 = vmul.f32 %v5701, %v5727
      %v5736 = vmul.f32 %v5702, %v5727
      %v5737 = vmul.f32 %v5703, %v5727
      %v5738 = vmul.f32 %v5704, %v5727
      %v5739 = vmul.f32 %v5705, %v5727
      %v5740 = vmul.f32 %v5706, %v5727
      %v5741 = vmul.f32 %v5707, %v5727
      %v5742 = vmul.f32 %v5708, %v5727
      %v5743 = vmul.f32 %v5709, %v5727
      %v5744 = vmul.f32 %v5710, %v5727
      %v5745 = vmul.f32 %v5711, %v5727
      %v5746 = vmul.f32 %v5712, %v5727
      %v5747 = vmul.f32 %v5713, %v5727
      %v5748 = vmul.f32 %v5714, %v5727
      %v5749 = vmul.f32 %v5715, %v5727
      %v5750 = vmul.f32 %v5716, %v5727
      %v5751 = vmul.f32 %v5717, %v5727
      %v5752 = vmul.f32 %v5718, %v5727
      %v5753 = vmul.f32 %v5719, %v5727
      %v5754 = vmul.f32 %v5720, %v5727
      %v5755 = vmul.f32 %v5721, %v5727
      %v5756 = vmul.f32 %v5722, %v5727
      %v5757 = vmul.f32 %v5723, %v5727
      %v5758 = vmul.f32 %v5724, %v5727
      %v5759 = vmul.f32 %v5725, %v5727
      %v5760 = vmax.f32 %v5728, 0.0
      %v5761 = vmax.f32 %v5729, 0.0
      %v5762 = vmax.f32 %v5730, 0.0
      %v5763 = vmax.f32 %v5731, 0.0
      %v5764 = vmax.f32 %v5732, 0.0
      %v5765 = vmax.f32 %v5733, 0.0
      %v5766 = vmax.f32 %v5734, 0.0
      %v5767 = vmax.f32 %v5735, 0.0
      %v5768 = vmax.f32 %v5736, 0.0
      %v5769 = vmax.f32 %v5737, 0.0
      %v5770 = vmax.f32 %v5738, 0.0
      %v5771 = vmax.f32 %v5739, 0.0
      %v5772 = vmax.f32 %v5740, 0.0
      %v5773 = vmax.f32 %v5741, 0.0
      %v5774 = vmax.f32 %v5742, 0.0
      %v5775 = vmax.f32 %v5743, 0.0
      %v5776 = vmax.f32 %v5744, 0.0
      %v5777 = vmax.f32 %v5745, 0.0
      %v5778 = vmax.f32 %v5746, 0.0
      %v5779 = vmax.f32 %v5747, 0.0
      %v5780 = vmax.f32 %v5748, 0.0
      %v5781 = vmax.f32 %v5749, 0.0
      %v5782 = vmax.f32 %v5750, 0.0
      %v5783 = vmax.f32 %v5751, 0.0
      %v5784 = vmax.f32 %v5752, 0.0
      %v5785 = vmax.f32 %v5753, 0.0
      %v5786 = vmax.f32 %v5754, 0.0
      %v5787 = vmax.f32 %v5755, 0.0
      %v5788 = vmax.f32 %v5756, 0.0
      %v5789 = vmax.f32 %v5757, 0.0
      %v5790 = vmax.f32 %v5758, 0.0
      %v5791 = vmax.f32 %v5759, 0.0
      %v5792 = vpack.c.bf16 %v5761, %v5760
      %v5793 = vpack.c.bf16 %v5763, %v5762
      %v5794 = vpack.c.bf16 %v5765, %v5764
      %v5795 = vpack.c.bf16 %v5767, %v5766
      %v5796 = vpack.c.bf16 %v5769, %v5768
      %v5797 = vpack.c.bf16 %v5771, %v5770
      %v5798 = vpack.c.bf16 %v5773, %v5772
      %v5799 = vpack.c.bf16 %v5775, %v5774
      %v5800 = vpack.c.bf16 %v5777, %v5776
      %v5801 = vpack.c.bf16 %v5779, %v5778
      %v5802 = vpack.c.bf16 %v5781, %v5780
      %v5803 = vpack.c.bf16 %v5783, %v5782
      %v5804 = vpack.c.bf16 %v5785, %v5784
      %v5805 = vpack.c.bf16 %v5787, %v5786
      %v5806 = vpack.c.bf16 %v5789, %v5788
      %v5807 = vpack.c.bf16 %v5791, %v5790
      %v5824 = vunpack.c.l.b16 %v5792
      %v5825 = vunpack.c.h.b16 %v5792
      %v5826 = vunpack.c.l.b16 %v5793
      %v5827 = vunpack.c.h.b16 %v5793
      %v5828 = vunpack.c.l.b16 %v5794
      %v5829 = vunpack.c.h.b16 %v5794
      %v5830 = vunpack.c.l.b16 %v5795
      %v5831 = vunpack.c.h.b16 %v5795
      %v5832 = vunpack.c.l.b16 %v5796
      %v5833 = vunpack.c.h.b16 %v5796
      %v5834 = vunpack.c.l.b16 %v5797
      %v5835 = vunpack.c.h.b16 %v5797
      %v5836 = vunpack.c.l.b16 %v5798
      %v5837 = vunpack.c.h.b16 %v5798
      %v5838 = vunpack.c.l.b16 %v5799
      %v5839 = vunpack.c.h.b16 %v5799
      %v5840 = vunpack.c.l.b16 %v5800
      %v5841 = vunpack.c.h.b16 %v5800
      %v5842 = vunpack.c.l.b16 %v5801
      %v5843 = vunpack.c.h.b16 %v5801
      %v5844 = vunpack.c.l.b16 %v5802
      %v5845 = vunpack.c.h.b16 %v5802
      %v5846 = vunpack.c.l.b16 %v5803
      %v5847 = vunpack.c.h.b16 %v5803
      %v5848 = vunpack.c.l.b16 %v5804
      %v5849 = vunpack.c.h.b16 %v5804
      %v5850 = vunpack.c.l.b16 %v5805
      %v5851 = vunpack.c.h.b16 %v5805
      %v5852 = vunpack.c.l.b16 %v5806
      %v5853 = vunpack.c.h.b16 %v5806
      %v5854 = vunpack.c.l.b16 %v5807
      %v5855 = vunpack.c.h.b16 %v5807
      %v5856 = vpack.c.b16 %v5824, %v5824
      %v5857 = vpack.c.b16 %v5825, %v5825
      %v5858 = vpack.c.b16 %v5826, %v5826
      %v5859 = vpack.c.b16 %v5827, %v5827
      %v5860 = vpack.c.b16 %v5828, %v5828
      %v5861 = vpack.c.b16 %v5829, %v5829
      %v5862 = vpack.c.b16 %v5830, %v5830
      %v5863 = vpack.c.b16 %v5831, %v5831
      %v5864 = vpack.c.b16 %v5832, %v5832
      %v5865 = vpack.c.b16 %v5833, %v5833
      %v5866 = vpack.c.b16 %v5834, %v5834
      %v5867 = vpack.c.b16 %v5835, %v5835
      %v5868 = vpack.c.b16 %v5836, %v5836
      %v5869 = vpack.c.b16 %v5837, %v5837
      %v5870 = vpack.c.b16 %v5838, %v5838
      %v5871 = vpack.c.b16 %v5839, %v5839
      %v5872 = vpack.c.b16 %v5840, %v5840
      %v5873 = vpack.c.b16 %v5841, %v5841
      %v5874 = vpack.c.b16 %v5842, %v5842
      %v5875 = vpack.c.b16 %v5843, %v5843
      %v5876 = vpack.c.b16 %v5844, %v5844
      %v5877 = vpack.c.b16 %v5845, %v5845
      %v5878 = vpack.c.b16 %v5846, %v5846
      %v5879 = vpack.c.b16 %v5847, %v5847
      %v5880 = vpack.c.b16 %v5848, %v5848
      %v5881 = vpack.c.b16 %v5849, %v5849
      %v5882 = vpack.c.b16 %v5850, %v5850
      %v5883 = vpack.c.b16 %v5851, %v5851
      %v5884 = vpack.c.b16 %v5852, %v5852
      %v5885 = vpack.c.b16 %v5853, %v5853
      %v5886 = vpack.c.b16 %v5854, %v5854
      %v5887 = vpack.c.b16 %v5855, %v5855
      %v5889 = vshrl.u32 %v5856, 16
      %v5891 = vrot.slane %v5889, 7
      %v5892 = vshll.u32 %v5856, 16
      %v5894 = vor.u32 %v5891, %v5892
      %v5895 = vrot.slane %v5891, 4
      %v5897 = vshrl.u32 %v5857, 16
      %v5899 = vrot.slane %v5897, 7
      %v5900 = vshll.u32 %v5857, 16
      %v5902 = vor.u32 %v5899, %v5900
      %v5903 = vsel %vm302, %v5895, %v5902
      %v5904 = vrot.slane %v5899, 4
      %v5906 = vshrl.u32 %v5858, 16
      %v5908 = vrot.slane %v5906, 7
      %v5909 = vshll.u32 %v5858, 16
      %v5911 = vor.u32 %v5908, %v5909
      %v5912 = vrot.slane %v5908, 4
      %v5914 = vshrl.u32 %v5859, 16
      %v5916 = vrot.slane %v5914, 7
      %v5917 = vshll.u32 %v5859, 16
      %v5919 = vor.u32 %v5916, %v5917
      %v5920 = vsel %vm302, %v5912, %v5919
      %v5921 = vrot.slane %v5916, 4
      %v5923 = vshrl.u32 %v5860, 16
      %v5925 = vrot.slane %v5923, 7
      %v5926 = vshll.u32 %v5860, 16
      %v5928 = vor.u32 %v5925, %v5926
      %v5929 = vrot.slane %v5925, 4
      %v5931 = vshrl.u32 %v5861, 16
      %v5933 = vrot.slane %v5931, 7
      %v5934 = vshll.u32 %v5861, 16
      %v5936 = vor.u32 %v5933, %v5934
      %v5937 = vsel %vm302, %v5929, %v5936
      %v5938 = vrot.slane %v5933, 4
      %v5940 = vshrl.u32 %v5862, 16
      %v5942 = vrot.slane %v5940, 7
      %v5943 = vshll.u32 %v5862, 16
      %v5945 = vor.u32 %v5942, %v5943
      %v5946 = vrot.slane %v5942, 4
      %v5948 = vshrl.u32 %v5863, 16
      %v5950 = vrot.slane %v5948, 7
      %v5951 = vshll.u32 %v5863, 16
      %v5953 = vor.u32 %v5950, %v5951
      %v5954 = vsel %vm302, %v5946, %v5953
      %v5955 = vrot.slane %v5950, 4
      %v5957 = vshrl.u32 %v5864, 16
      %v5959 = vrot.slane %v5957, 7
      %v5960 = vshll.u32 %v5864, 16
      %v5962 = vor.u32 %v5959, %v5960
      %v5963 = vrot.slane %v5959, 4
      %v5965 = vshrl.u32 %v5865, 16
      %v5967 = vrot.slane %v5965, 7
      %v5968 = vshll.u32 %v5865, 16
      %v5970 = vor.u32 %v5967, %v5968
      %v5971 = vsel %vm302, %v5963, %v5970
      %v5972 = vrot.slane %v5967, 4
      %v5974 = vshrl.u32 %v5866, 16
      %v5976 = vrot.slane %v5974, 7
      %v5977 = vshll.u32 %v5866, 16
      %v5979 = vor.u32 %v5976, %v5977
      %v5980 = vrot.slane %v5976, 4
      %v5982 = vshrl.u32 %v5867, 16
      %v5984 = vrot.slane %v5982, 7
      %v5985 = vshll.u32 %v5867, 16
      %v5987 = vor.u32 %v5984, %v5985
      %v5988 = vsel %vm302, %v5980, %v5987
      %v5989 = vrot.slane %v5984, 4
      %v5991 = vshrl.u32 %v5868, 16
      %v5993 = vrot.slane %v5991, 7
      %v5994 = vshll.u32 %v5868, 16
      %v5996 = vor.u32 %v5993, %v5994
      %v5997 = vrot.slane %v5993, 4
      %v5999 = vshrl.u32 %v5869, 16
      %v6001 = vrot.slane %v5999, 7
      %v6002 = vshll.u32 %v5869, 16
      %v6004 = vor.u32 %v6001, %v6002
      %v6005 = vsel %vm302, %v5997, %v6004
      %v6006 = vrot.slane %v6001, 4
      %v6008 = vshrl.u32 %v5870, 16
      %v6010 = vrot.slane %v6008, 7
      %v6011 = vshll.u32 %v5870, 16
      %v6013 = vor.u32 %v6010, %v6011
      %v6014 = vrot.slane %v6010, 4
      %v6016 = vshrl.u32 %v5871, 16
      %v6018 = vrot.slane %v6016, 7
      %v6019 = vshll.u32 %v5871, 16
      %v6021 = vor.u32 %v6018, %v6019
      %v6022 = vsel %vm302, %v6014, %v6021
      %v6023 = vrot.slane %v6018, 4
      %v6025 = vshrl.u32 %v5872, 16
      %v6027 = vrot.slane %v6025, 7
      %v6028 = vshll.u32 %v5872, 16
      %v6030 = vor.u32 %v6027, %v6028
      %v6031 = vrot.slane %v6027, 4
      %v6033 = vshrl.u32 %v5873, 16
      %v6035 = vrot.slane %v6033, 7
      %v6036 = vshll.u32 %v5873, 16
      %v6038 = vor.u32 %v6035, %v6036
      %v6039 = vsel %vm302, %v6031, %v6038
      %v6040 = vrot.slane %v6035, 4
      %v6042 = vshrl.u32 %v5874, 16
      %v6044 = vrot.slane %v6042, 7
      %v6045 = vshll.u32 %v5874, 16
      %v6047 = vor.u32 %v6044, %v6045
      %v6048 = vrot.slane %v6044, 4
      %v6050 = vshrl.u32 %v5875, 16
      %v6052 = vrot.slane %v6050, 7
      %v6053 = vshll.u32 %v5875, 16
      %v6055 = vor.u32 %v6052, %v6053
      %v6056 = vsel %vm302, %v6048, %v6055
      %v6057 = vrot.slane %v6052, 4
      %v6059 = vshrl.u32 %v5876, 16
      %v6061 = vrot.slane %v6059, 7
      %v6062 = vshll.u32 %v5876, 16
      %v6064 = vor.u32 %v6061, %v6062
      %v6065 = vrot.slane %v6061, 4
      %v6067 = vshrl.u32 %v5877, 16
      %v6069 = vrot.slane %v6067, 7
      %v6070 = vshll.u32 %v5877, 16
      %v6072 = vor.u32 %v6069, %v6070
      %v6073 = vsel %vm302, %v6065, %v6072
      %v6074 = vrot.slane %v6069, 4
      %v6076 = vshrl.u32 %v5878, 16
      %v6078 = vrot.slane %v6076, 7
      %v6079 = vshll.u32 %v5878, 16
      %v6081 = vor.u32 %v6078, %v6079
      %v6082 = vrot.slane %v6078, 4
      %v6084 = vshrl.u32 %v5879, 16
      %v6086 = vrot.slane %v6084, 7
      %v6087 = vshll.u32 %v5879, 16
      %v6089 = vor.u32 %v6086, %v6087
      %v6090 = vsel %vm302, %v6082, %v6089
      %v6091 = vrot.slane %v6086, 4
      %v6093 = vshrl.u32 %v5880, 16
      %v6095 = vrot.slane %v6093, 7
      %v6096 = vshll.u32 %v5880, 16
      %v6098 = vor.u32 %v6095, %v6096
      %v6099 = vrot.slane %v6095, 4
      %v6101 = vshrl.u32 %v5881, 16
      %v6103 = vrot.slane %v6101, 7
      %v6104 = vshll.u32 %v5881, 16
      %v6106 = vor.u32 %v6103, %v6104
      %v6107 = vsel %vm302, %v6099, %v6106
      %v6108 = vrot.slane %v6103, 4
      %v6110 = vshrl.u32 %v5882, 16
      %v6112 = vrot.slane %v6110, 7
      %v6113 = vshll.u32 %v5882, 16
      %v6115 = vor.u32 %v6112, %v6113
      %v6116 = vrot.slane %v6112, 4
      %v6118 = vshrl.u32 %v5883, 16
      %v6120 = vrot.slane %v6118, 7
      %v6121 = vshll.u32 %v5883, 16
      %v6123 = vor.u32 %v6120, %v6121
      %v6124 = vsel %vm302, %v6116, %v6123
      %v6125 = vrot.slane %v6120, 4
      %v6127 = vshrl.u32 %v5884, 16
      %v6129 = vrot.slane %v6127, 7
      %v6130 = vshll.u32 %v5884, 16
      %v6132 = vor.u32 %v6129, %v6130
      %v6133 = vrot.slane %v6129, 4
      %v6135 = vshrl.u32 %v5885, 16
      %v6137 = vrot.slane %v6135, 7
      %v6138 = vshll.u32 %v5885, 16
      %v6140 = vor.u32 %v6137, %v6138
      %v6141 = vsel %vm302, %v6133, %v6140
      %v6142 = vrot.slane %v6137, 4
      %v6144 = vshrl.u32 %v5886, 16
      %v6146 = vrot.slane %v6144, 7
      %v6147 = vshll.u32 %v5886, 16
      %v6149 = vor.u32 %v6146, %v6147
      %v6150 = vrot.slane %v6146, 4
      %v6152 = vshrl.u32 %v5887, 16
      %v6154 = vrot.slane %v6152, 7
      %v6155 = vshll.u32 %v5887, 16
      %v6157 = vor.u32 %v6154, %v6155
      %v6158 = vsel %vm302, %v6150, %v6157
      %v6159 = vrot.slane %v6154, 4
      %s6208 = scalar_lea.vmem [#allocation3], 12
      %v6209 = vld [vmem:[%s6208] sm:$0xf]
      %v6210 = vsel %vm626, %v5894, %v6209
      %6211 = vst [vmem:[%s6208] sm:$0xf] %v6210
      %6212 = vst.msk [vmem:[%s6208 + $0x4] sm:$0xf] %vm630, %v5903
      %v6213 = vld [vmem:[%s6208 + $0x8] sm:$0x1]
      %v6214 = vsel %vm633, %v5904, %v6213
      %6215 = vst [vmem:[%s6208 + $0x8] sm:$0x1] %v6214
      %v6216 = vld [vmem:[%s6208 + $0xc] sm:$0xf]
      %v6217 = vsel %vm626, %v5911, %v6216
      %6218 = vst [vmem:[%s6208 + $0xc] sm:$0xf] %v6217
      %6219 = vst.msk [vmem:[%s6208 + $0x10] sm:$0xf] %vm630, %v5920
      %v6220 = vld [vmem:[%s6208 + $0x14] sm:$0x1]
      %v6221 = vsel %vm633, %v5921, %v6220
      %6222 = vst [vmem:[%s6208 + $0x14] sm:$0x1] %v6221
      %v6223 = vld [vmem:[%s6208 + $0x18] sm:$0xf]
      %v6224 = vsel %vm626, %v5928, %v6223
      %6225 = vst [vmem:[%s6208 + $0x18] sm:$0xf] %v6224
      %6226 = vst.msk [vmem:[%s6208 + $0x1c] sm:$0xf] %vm630, %v5937
      %v6227 = vld [vmem:[%s6208 + $0x20] sm:$0x1]
      %v6228 = vsel %vm633, %v5938, %v6227
      %6229 = vst [vmem:[%s6208 + $0x20] sm:$0x1] %v6228
      %v6230 = vld [vmem:[%s6208 + $0x24] sm:$0xf]
      %v6231 = vsel %vm626, %v5945, %v6230
      %6232 = vst [vmem:[%s6208 + $0x24] sm:$0xf] %v6231
      %6233 = vst.msk [vmem:[%s6208 + $0x28] sm:$0xf] %vm630, %v5954
      %v6234 = vld [vmem:[%s6208 + $0x2c] sm:$0x1]
      %v6235 = vsel %vm633, %v5955, %v6234
      %6236 = vst [vmem:[%s6208 + $0x2c] sm:$0x1] %v6235
      %v6237 = vld [vmem:[%s6208 + $0x30] sm:$0xf]
      %v6238 = vsel %vm626, %v5962, %v6237
      %6239 = vst [vmem:[%s6208 + $0x30] sm:$0xf] %v6238
      %6240 = vst.msk [vmem:[%s6208 + $0x34] sm:$0xf] %vm630, %v5971
      %v6241 = vld [vmem:[%s6208 + $0x38] sm:$0x1]
      %v6242 = vsel %vm633, %v5972, %v6241
      %6243 = vst [vmem:[%s6208 + $0x38] sm:$0x1] %v6242
      %v6244 = vld [vmem:[%s6208 + $0x3c] sm:$0xf]
      %v6245 = vsel %vm626, %v5979, %v6244
      %6246 = vst [vmem:[%s6208 + $0x3c] sm:$0xf] %v6245
      %6247 = vst.msk [vmem:[%s6208 + $0x40] sm:$0xf] %vm630, %v5988
      %v6248 = vld [vmem:[%s6208 + $0x44] sm:$0x1]
      %v6249 = vsel %vm633, %v5989, %v6248
      %6250 = vst [vmem:[%s6208 + $0x44] sm:$0x1] %v6249
      %v6251 = vld [vmem:[%s6208 + $0x48] sm:$0xf]
      %v6252 = vsel %vm626, %v5996, %v6251
      %6253 = vst [vmem:[%s6208 + $0x48] sm:$0xf] %v6252
      %6254 = vst.msk [vmem:[%s6208 + $0x4c] sm:$0xf] %vm630, %v6005
      %v6255 = vld [vmem:[%s6208 + $0x50] sm:$0x1]
      %v6256 = vsel %vm633, %v6006, %v6255
      %6257 = vst [vmem:[%s6208 + $0x50] sm:$0x1] %v6256
      %v6258 = vld [vmem:[%s6208 + $0x54] sm:$0xf]
      %v6259 = vsel %vm626, %v6013, %v6258
      %6260 = vst [vmem:[%s6208 + $0x54] sm:$0xf] %v6259
      %6261 = vst.msk [vmem:[%s6208 + $0x58] sm:$0xf] %vm630, %v6022
      %v6262 = vld [vmem:[%s6208 + $0x5c] sm:$0x1]
      %v6263 = vsel %vm633, %v6023, %v6262
      %6264 = vst [vmem:[%s6208 + $0x5c] sm:$0x1] %v6263
      %v6265 = vld [vmem:[%s6208 + $0x60] sm:$0xf]
      %v6266 = vsel %vm626, %v6030, %v6265
      %6267 = vst [vmem:[%s6208 + $0x60] sm:$0xf] %v6266
      %6268 = vst.msk [vmem:[%s6208 + $0x64] sm:$0xf] %vm630, %v6039
      %v6269 = vld [vmem:[%s6208 + $0x68] sm:$0x1]
      %v6270 = vsel %vm633, %v6040, %v6269
      %6271 = vst [vmem:[%s6208 + $0x68] sm:$0x1] %v6270
      %v6272 = vld [vmem:[%s6208 + $0x6c] sm:$0xf]
      %v6273 = vsel %vm626, %v6047, %v6272
      %6274 = vst [vmem:[%s6208 + $0x6c] sm:$0xf] %v6273
      %6275 = vst.msk [vmem:[%s6208 + $0x70] sm:$0xf] %vm630, %v6056
      %v6276 = vld [vmem:[%s6208 + $0x74] sm:$0x1]
      %v6277 = vsel %vm633, %v6057, %v6276
      %6278 = vst [vmem:[%s6208 + $0x74] sm:$0x1] %v6277
      %v6279 = vld [vmem:[%s6208 + $0x78] sm:$0xf]
      %v6280 = vsel %vm626, %v6064, %v6279
      %6281 = vst [vmem:[%s6208 + $0x78] sm:$0xf] %v6280
      %6282 = vst.msk [vmem:[%s6208 + $0x7c] sm:$0xf] %vm630, %v6073
      %v6283 = vld [vmem:[%s6208 + $0x80] sm:$0x1]
      %v6284 = vsel %vm633, %v6074, %v6283
      %6285 = vst [vmem:[%s6208 + $0x80] sm:$0x1] %v6284
      %v6286 = vld [vmem:[%s6208 + $0x84] sm:$0xf]
      %v6287 = vsel %vm626, %v6081, %v6286
      %6288 = vst [vmem:[%s6208 + $0x84] sm:$0xf] %v6287
      %6289 = vst.msk [vmem:[%s6208 + $0x88] sm:$0xf] %vm630, %v6090
      %v6290 = vld [vmem:[%s6208 + $0x8c] sm:$0x1]
      %v6291 = vsel %vm633, %v6091, %v6290
      %6292 = vst [vmem:[%s6208 + $0x8c] sm:$0x1] %v6291
      %v6293 = vld [vmem:[%s6208 + $0x90] sm:$0xf]
      %v6294 = vsel %vm626, %v6098, %v6293
      %6295 = vst [vmem:[%s6208 + $0x90] sm:$0xf] %v6294
      %6296 = vst.msk [vmem:[%s6208 + $0x94] sm:$0xf] %vm630, %v6107
      %v6297 = vld [vmem:[%s6208 + $0x98] sm:$0x1]
      %v6298 = vsel %vm633, %v6108, %v6297
      %6299 = vst [vmem:[%s6208 + $0x98] sm:$0x1] %v6298
      %v6300 = vld [vmem:[%s6208 + $0x9c] sm:$0xf]
      %v6301 = vsel %vm626, %v6115, %v6300
      %6302 = vst [vmem:[%s6208 + $0x9c] sm:$0xf] %v6301
      %6303 = vst.msk [vmem:[%s6208 + $0xa0] sm:$0xf] %vm630, %v6124
      %v6304 = vld [vmem:[%s6208 + $0xa4] sm:$0x1]
      %v6305 = vsel %vm633, %v6125, %v6304
      %6306 = vst [vmem:[%s6208 + $0xa4] sm:$0x1] %v6305
      %v6307 = vld [vmem:[%s6208 + $0xa8] sm:$0xf]
      %v6308 = vsel %vm626, %v6132, %v6307
      %6309 = vst [vmem:[%s6208 + $0xa8] sm:$0xf] %v6308
      %6310 = vst.msk [vmem:[%s6208 + $0xac] sm:$0xf] %vm630, %v6141
      %v6311 = vld [vmem:[%s6208 + $0xb0] sm:$0x1]
      %v6312 = vsel %vm633, %v6142, %v6311
      %6313 = vst [vmem:[%s6208 + $0xb0] sm:$0x1] %v6312
      %v6314 = vld [vmem:[%s6208 + $0xb4] sm:$0xf]
      %v6315 = vsel %vm626, %v6149, %v6314
      %6316 = vst [vmem:[%s6208 + $0xb4] sm:$0xf] %v6315
      %6317 = vst.msk [vmem:[%s6208 + $0xb8] sm:$0xf] %vm630, %v6158
      %v6318 = vld [vmem:[%s6208 + $0xbc] sm:$0x1]
      %v6319 = vsel %vm633, %v6159, %v6318
      %6320 = vst [vmem:[%s6208 + $0xbc] sm:$0x1] %v6319
      %v6321 = vld [vmem:[#allocation3] sm:$0xf]
      %v6322 = vsel %vm626, %v5911, %v6321
      %6323 = vst [vmem:[#allocation3] sm:$0xf] %v6322
      %6324 = vst.msk [vmem:[#allocation3 + $0x4] sm:$0xf] %vm630, %v5920
      %v6325 = vld [vmem:[#allocation3 + $0x8] sm:$0x1]
      %v6326 = vsel %vm633, %v5921, %v6325
      %6327 = vst [vmem:[#allocation3 + $0x8] sm:$0x1] %v6326
      %s6328 = scalar_lea.vmem [#allocation3], 204
      %v6329 = vld [vmem:[%s6328] sm:$0xf]
      %v6330 = vsel %vm626, %v6132, %v6329
      %6331 = vst [vmem:[%s6328] sm:$0xf] %v6330
      %6332 = vst.msk [vmem:[%s6328 + $0x4] sm:$0xf] %vm630, %v6141
      %v6333 = vld [vmem:[%s6328 + $0x8] sm:$0x1]
      %v6334 = vsel %vm633, %v6142, %v6333
      %6335 = vst [vmem:[%s6328 + $0x8] sm:$0x1] %v6334
      %v6336 = vrot.slane %v5889, 4
      %v6337 = vrot.slane %v6336, 4
      %v6338 = vrot.slane %v5906, 4
      %v6339 = vrot.slane %v6338, 4
      %v6340 = vrot.slane %v5923, 4
      %v6341 = vrot.slane %v6340, 4
      %v6342 = vrot.slane %v5940, 4
      %v6343 = vrot.slane %v6342, 4
      %v6344 = vrot.slane %v5957, 4
      %v6345 = vrot.slane %v6344, 4
      %v6346 = vrot.slane %v5974, 4
      %v6347 = vrot.slane %v6346, 4
      %v6348 = vrot.slane %v5991, 4
      %v6349 = vrot.slane %v6348, 4
      %v6350 = vrot.slane %v6008, 4
      %v6351 = vrot.slane %v6350, 4
      %v6352 = vrot.slane %v6025, 4
      %v6353 = vrot.slane %v6352, 4
      %v6354 = vrot.slane %v6042, 4
      %v6355 = vrot.slane %v6354, 4
      %v6356 = vrot.slane %v6059, 4
      %v6357 = vrot.slane %v6356, 4
      %v6358 = vrot.slane %v6076, 4
      %v6359 = vrot.slane %v6358, 4
      %v6360 = vrot.slane %v6093, 4
      %v6361 = vrot.slane %v6360, 4
      %v6362 = vrot.slane %v6110, 4
      %v6363 = vrot.slane %v6362, 4
      %v6364 = vrot.slane %v6127, 4
      %v6365 = vrot.slane %v6364, 4
      %v6366 = vrot.slane %v6144, 4
      %v6367 = vrot.slane %v6366, 4
      %v6384 = vld [vmem:[%s6208] sm:$0x1]
      %v6385 = vsel %vm633, %v6337, %v6384
      %6386 = vst [vmem:[%s6208] sm:$0x1] %v6385
      %v6387 = vld [vmem:[%s6208 + $0xc] sm:$0x1]
      %v6388 = vsel %vm633, %v6339, %v6387
      %6389 = vst [vmem:[%s6208 + $0xc] sm:$0x1] %v6388
      %v6390 = vld [vmem:[%s6208 + $0x18] sm:$0x1]
      %v6391 = vsel %vm633, %v6341, %v6390
      %6392 = vst [vmem:[%s6208 + $0x18] sm:$0x1] %v6391
      %v6393 = vld [vmem:[%s6208 + $0x24] sm:$0x1]
      %v6394 = vsel %vm633, %v6343, %v6393
      %6395 = vst [vmem:[%s6208 + $0x24] sm:$0x1] %v6394
      %v6396 = vld [vmem:[%s6208 + $0x30] sm:$0x1]
      %v6397 = vsel %vm633, %v6345, %v6396
      %6398 = vst [vmem:[%s6208 + $0x30] sm:$0x1] %v6397
      %v6399 = vld [vmem:[%s6208 + $0x3c] sm:$0x1]
      %v6400 = vsel %vm633, %v6347, %v6399
      %6401 = vst [vmem:[%s6208 + $0x3c] sm:$0x1] %v6400
      %v6402 = vld [vmem:[%s6208 + $0x48] sm:$0x1]
      %v6403 = vsel %vm633, %v6349, %v6402
      %6404 = vst [vmem:[%s6208 + $0x48] sm:$0x1] %v6403
      %v6405 = vld [vmem:[%s6208 + $0x54] sm:$0x1]
      %v6406 = vsel %vm633, %v6351, %v6405
      %6407 = vst [vmem:[%s6208 + $0x54] sm:$0x1] %v6406
      %v6408 = vld [vmem:[%s6208 + $0x60] sm:$0x1]
      %v6409 = vsel %vm633, %v6353, %v6408
      %6410 = vst [vmem:[%s6208 + $0x60] sm:$0x1] %v6409
      %v6411 = vld [vmem:[%s6208 + $0x6c] sm:$0x1]
      %v6412 = vsel %vm633, %v6355, %v6411
      %6413 = vst [vmem:[%s6208 + $0x6c] sm:$0x1] %v6412
      %v6414 = vld [vmem:[%s6208 + $0x78] sm:$0x1]
      %v6415 = vsel %vm633, %v6357, %v6414
      %6416 = vst [vmem:[%s6208 + $0x78] sm:$0x1] %v6415
      %v6417 = vld [vmem:[%s6208 + $0x84] sm:$0x1]
      %v6418 = vsel %vm633, %v6359, %v6417
      %6419 = vst [vmem:[%s6208 + $0x84] sm:$0x1] %v6418
      %v6420 = vld [vmem:[%s6208 + $0x90] sm:$0x1]
      %v6421 = vsel %vm633, %v6361, %v6420
      %6422 = vst [vmem:[%s6208 + $0x90] sm:$0x1] %v6421
      %v6423 = vld [vmem:[%s6208 + $0x9c] sm:$0x1]
      %v6424 = vsel %vm633, %v6363, %v6423
      %6425 = vst [vmem:[%s6208 + $0x9c] sm:$0x1] %v6424
      %v6426 = vld [vmem:[%s6208 + $0xa8] sm:$0x1]
      %v6427 = vsel %vm633, %v6365, %v6426
      %6428 = vst [vmem:[%s6208 + $0xa8] sm:$0x1] %v6427
      %v6429 = vld [vmem:[%s6208 + $0xb4] sm:$0x1]
      %v6430 = vsel %vm633, %v6367, %v6429
      %6431 = vst [vmem:[%s6208 + $0xb4] sm:$0x1] %v6430
      %v6432 = vrot.slane %v5900, 7
      %v6433 = vrot.slane %v6432, 4
      %v6434 = vrot.slane %v5917, 7
      %v6435 = vrot.slane %v6434, 4
      %v6436 = vrot.slane %v5934, 7
      %v6437 = vrot.slane %v6436, 4
      %v6438 = vrot.slane %v5951, 7
      %v6439 = vrot.slane %v6438, 4
      %v6440 = vrot.slane %v5968, 7
      %v6441 = vrot.slane %v6440, 4
      %v6442 = vrot.slane %v5985, 7
      %v6443 = vrot.slane %v6442, 4
      %v6444 = vrot.slane %v6002, 7
      %v6445 = vrot.slane %v6444, 4
      %v6446 = vrot.slane %v6019, 7
      %v6447 = vrot.slane %v6446, 4
      %v6448 = vrot.slane %v6036, 7
      %v6449 = vrot.slane %v6448, 4
      %v6450 = vrot.slane %v6053, 7
      %v6451 = vrot.slane %v6450, 4
      %v6452 = vrot.slane %v6070, 7
      %v6453 = vrot.slane %v6452, 4
      %v6454 = vrot.slane %v6087, 7
      %v6455 = vrot.slane %v6454, 4
      %v6456 = vrot.slane %v6104, 7
      %v6457 = vrot.slane %v6456, 4
      %v6458 = vrot.slane %v6121, 7
      %v6459 = vrot.slane %v6458, 4
      %v6460 = vrot.slane %v6138, 7
      %v6461 = vrot.slane %v6460, 4
      %v6462 = vrot.slane %v6155, 7
      %v6463 = vrot.slane %v6462, 4
      %v6480 = vld [vmem:[%s6208 + $0x8] sm:$0x1]
      %v6481 = vsel %vm901, %v6433, %v6480
      %6482 = vst [vmem:[%s6208 + $0x8] sm:$0x1] %v6481
      %v6483 = vld [vmem:[%s6208 + $0x14] sm:$0x1]
      %v6484 = vsel %vm901, %v6435, %v6483
      %6485 = vst [vmem:[%s6208 + $0x14] sm:$0x1] %v6484
      %v6486 = vld [vmem:[%s6208 + $0x20] sm:$0x1]
      %v6487 = vsel %vm901, %v6437, %v6486
      %6488 = vst [vmem:[%s6208 + $0x20] sm:$0x1] %v6487
      %v6489 = vld [vmem:[%s6208 + $0x2c] sm:$0x1]
      %v6490 = vsel %vm901, %v6439, %v6489
      %6491 = vst [vmem:[%s6208 + $0x2c] sm:$0x1] %v6490
      %v6492 = vld [vmem:[%s6208 + $0x38] sm:$0x1]
      %v6493 = vsel %vm901, %v6441, %v6492
      %6494 = vst [vmem:[%s6208 + $0x38] sm:$0x1] %v6493
      %v6495 = vld [vmem:[%s6208 + $0x44] sm:$0x1]
      %v6496 = vsel %vm901, %v6443, %v6495
      %6497 = vst [vmem:[%s6208 + $0x44] sm:$0x1] %v6496
      %v6498 = vld [vmem:[%s6208 + $0x50] sm:$0x1]
      %v6499 = vsel %vm901, %v6445, %v6498
      %6500 = vst [vmem:[%s6208 + $0x50] sm:$0x1] %v6499
      %v6501 = vld [vmem:[%s6208 + $0x5c] sm:$0x1]
      %v6502 = vsel %vm901, %v6447, %v6501
      %6503 = vst [vmem:[%s6208 + $0x5c] sm:$0x1] %v6502
      %v6504 = vld [vmem:[%s6208 + $0x68] sm:$0x1]
      %v6505 = vsel %vm901, %v6449, %v6504
      %6506 = vst [vmem:[%s6208 + $0x68] sm:$0x1] %v6505
      %v6507 = vld [vmem:[%s6208 + $0x74] sm:$0x1]
      %v6508 = vsel %vm901, %v6451, %v6507
      %6509 = vst [vmem:[%s6208 + $0x74] sm:$0x1] %v6508
      %v6510 = vld [vmem:[%s6208 + $0x80] sm:$0x1]
      %v6511 = vsel %vm901, %v6453, %v6510
      %6512 = vst [vmem:[%s6208 + $0x80] sm:$0x1] %v6511
      %v6513 = vld [vmem:[%s6208 + $0x8c] sm:$0x1]
      %v6514 = vsel %vm901, %v6455, %v6513
      %6515 = vst [vmem:[%s6208 + $0x8c] sm:$0x1] %v6514
      %v6516 = vld [vmem:[%s6208 + $0x98] sm:$0x1]
      %v6517 = vsel %vm901, %v6457, %v6516
      %6518 = vst [vmem:[%s6208 + $0x98] sm:$0x1] %v6517
      %v6519 = vld [vmem:[%s6208 + $0xa4] sm:$0x1]
      %v6520 = vsel %vm901, %v6459, %v6519
      %6521 = vst [vmem:[%s6208 + $0xa4] sm:$0x1] %v6520
      %v6522 = vld [vmem:[%s6208 + $0xb0] sm:$0x1]
      %v6523 = vsel %vm901, %v6461, %v6522
      %6524 = vst [vmem:[%s6208 + $0xb0] sm:$0x1] %v6523
      %v6525 = vld [vmem:[%s6208 + $0xbc] sm:$0x1]
      %v6526 = vsel %vm901, %v6463, %v6525
      %6527 = vst [vmem:[%s6208 + $0xbc] sm:$0x1] %v6526
      %v6528 = vld [vmem:[#allocation3] sm:$0x1]
      %v6529 = vsel %vm633, %v6339, %v6528
      %6530 = vst [vmem:[#allocation3] sm:$0x1] %v6529
      %v6531 = vld [vmem:[#allocation3 + $0x8] sm:$0x1]
      %v6532 = vsel %vm901, %v6435, %v6531
      %6533 = vst [vmem:[#allocation3 + $0x8] sm:$0x1] %v6532
      %v6534 = vld [vmem:[%s6328] sm:$0x1]
      %v6535 = vsel %vm633, %v6365, %v6534
      %6536 = vst [vmem:[%s6328] sm:$0x1] %v6535
      %v6537 = vld [vmem:[%s6328 + $0x8] sm:$0x1]
      %v6538 = vsel %vm901, %v6461, %v6537
      %6539 = vst [vmem:[%s6328 + $0x8] sm:$0x1] %v6538
      %v6540 = vld [vmem:[#allocation3] sm:$0xf]
      %v6541 = vld [vmem:[#allocation3 + $0x4] sm:$0xf]
      %v6542 = vld [vmem:[#allocation3 + $0xc] sm:$0xf]
      %v6543 = vld [vmem:[#allocation3 + $0x10] sm:$0xf]
      %v6544 = vld [vmem:[#allocation3 + $0x18] sm:$0xf]
      %v6545 = vld [vmem:[#allocation3 + $0x1c] sm:$0xf]
      %v6546 = vld [vmem:[#allocation3 + $0x24] sm:$0xf]
      %v6547 = vld [vmem:[#allocation3 + $0x28] sm:$0xf]
      %v6548 = vld [vmem:[#allocation3 + $0x30] sm:$0xf]
      %v6549 = vld [vmem:[#allocation3 + $0x34] sm:$0xf]
      %v6550 = vld [vmem:[#allocation3 + $0x3c] sm:$0xf]
      %v6551 = vld [vmem:[#allocation3 + $0x40] sm:$0xf]
      %v6552 = vld [vmem:[#allocation3 + $0x48] sm:$0xf]
      %v6553 = vld [vmem:[#allocation3 + $0x4c] sm:$0xf]
      %v6554 = vld [vmem:[#allocation3 + $0x54] sm:$0xf]
      %v6555 = vld [vmem:[#allocation3 + $0x58] sm:$0xf]
      %v6556 = vld [vmem:[#allocation3 + $0x60] sm:$0xf]
      %v6557 = vld [vmem:[#allocation3 + $0x64] sm:$0xf]
      %v6558 = vld [vmem:[#allocation3 + $0x6c] sm:$0xf]
      %v6559 = vld [vmem:[#allocation3 + $0x70] sm:$0xf]
      %v6560 = vld [vmem:[#allocation3 + $0x78] sm:$0xf]
      %v6561 = vld [vmem:[#allocation3 + $0x7c] sm:$0xf]
      %v6562 = vld [vmem:[#allocation3 + $0x84] sm:$0xf]
      %v6563 = vld [vmem:[#allocation3 + $0x88] sm:$0xf]
      %v6564 = vld [vmem:[#allocation3 + $0x90] sm:$0xf]
      %v6565 = vld [vmem:[#allocation3 + $0x94] sm:$0xf]
      %v6566 = vld [vmem:[#allocation3 + $0x9c] sm:$0xf]
      %v6567 = vld [vmem:[#allocation3 + $0xa0] sm:$0xf]
      %v6568 = vld [vmem:[#allocation3 + $0xa8] sm:$0xf]
      %v6569 = vld [vmem:[#allocation3 + $0xac] sm:$0xf]
      %v6570 = vld [vmem:[#allocation3 + $0xb4] sm:$0xf]
      %v6571 = vld [vmem:[#allocation3 + $0xb8] sm:$0xf]
      %v6572 = vld [vmem:[%s2] sm:$0xf]
      %v6573 = vld [vmem:[#allocation3 + $0x8] sm:$0x1]
      %v6574 = vld [vmem:[#allocation3 + $0x14] sm:$0x1]
      %v6575 = vld [vmem:[#allocation3 + $0x20] sm:$0x1]
      %v6576 = vld [vmem:[#allocation3 + $0x2c] sm:$0x1]
      %v6577 = vld [vmem:[#allocation3 + $0x38] sm:$0x1]
      %v6578 = vld [vmem:[#allocation3 + $0x44] sm:$0x1]
      %v6579 = vld [vmem:[#allocation3 + $0x50] sm:$0x1]
      %v6580 = vld [vmem:[#allocation3 + $0x5c] sm:$0x1]
      %v6581 = vld [vmem:[#allocation3 + $0x68] sm:$0x1]
      %v6582 = vld [vmem:[#allocation3 + $0x74] sm:$0x1]
      %v6583 = vld [vmem:[#allocation3 + $0x80] sm:$0x1]
      %v6584 = vld [vmem:[#allocation3 + $0x8c] sm:$0x1]
      %v6585 = vld [vmem:[#allocation3 + $0x98] sm:$0x1]
      %v6586 = vld [vmem:[#allocation3 + $0xa4] sm:$0x1]
      %v6587 = vld [vmem:[#allocation3 + $0xb0] sm:$0x1]
      %v6588 = vld [vmem:[#allocation3 + $0xbc] sm:$0x1]
      %v6590 = vshrl.u32 %v6540, 16
      %v6592 = vrot.slane %v6590, 4
      %v6593 = vshll.u32 %v6540, 16
      %v6595 = vrot.slane %v6593, 5
      %v6596 = vor.u32 %v6592, %v6595
      %v6597 = vrot.slane %v6596, 4
      %v6599 = vshll.u32 %v6541, 16
      %v6601 = vrot.slane %v6599, 5
      %v6602 = vsel %vm1013, %v6597, %v6601
      %v6603 = vshrl.u32 %v6541, 16
      %v6605 = vrot.slane %v6603, 4
      %v6606 = vor.u32 %v6605, %v6601
      %v6607 = vrot.slane %v6606, 4
      %v6609 = vshll.u32 %v6573, 16
      %v6611 = vrot.slane %v6609, 5
      %v6612 = vsel %vm1013, %v6607, %v6611
      %v6614 = vshrl.u32 %v6542, 16
      %v6616 = vrot.slane %v6614, 4
      %v6617 = vshll.u32 %v6542, 16
      %v6619 = vrot.slane %v6617, 5
      %v6620 = vor.u32 %v6616, %v6619
      %v6621 = vrot.slane %v6620, 4
      %v6623 = vshll.u32 %v6543, 16
      %v6625 = vrot.slane %v6623, 5
      %v6626 = vsel %vm1013, %v6621, %v6625
      %v6627 = vshrl.u32 %v6543, 16
      %v6629 = vrot.slane %v6627, 4
      %v6630 = vor.u32 %v6629, %v6625
      %v6631 = vrot.slane %v6630, 4
      %v6633 = vshll.u32 %v6574, 16
      %v6635 = vrot.slane %v6633, 5
      %v6636 = vsel %vm1013, %v6631, %v6635
      %v6638 = vshrl.u32 %v6544, 16
      %v6640 = vrot.slane %v6638, 4
      %v6641 = vshll.u32 %v6544, 16
      %v6643 = vrot.slane %v6641, 5
      %v6644 = vor.u32 %v6640, %v6643
      %v6645 = vrot.slane %v6644, 4
      %v6647 = vshll.u32 %v6545, 16
      %v6649 = vrot.slane %v6647, 5
      %v6650 = vsel %vm1013, %v6645, %v6649
      %v6651 = vshrl.u32 %v6545, 16
      %v6653 = vrot.slane %v6651, 4
      %v6654 = vor.u32 %v6653, %v6649
      %v6655 = vrot.slane %v6654, 4
      %v6657 = vshll.u32 %v6575, 16
      %v6659 = vrot.slane %v6657, 5
      %v6660 = vsel %vm1013, %v6655, %v6659
      %v6662 = vshrl.u32 %v6546, 16
      %v6664 = vrot.slane %v6662, 4
      %v6665 = vshll.u32 %v6546, 16
      %v6667 = vrot.slane %v6665, 5
      %v6668 = vor.u32 %v6664, %v6667
      %v6669 = vrot.slane %v6668, 4
      %v6671 = vshll.u32 %v6547, 16
      %v6673 = vrot.slane %v6671, 5
      %v6674 = vsel %vm1013, %v6669, %v6673
      %v6675 = vshrl.u32 %v6547, 16
      %v6677 = vrot.slane %v6675, 4
      %v6678 = vor.u32 %v6677, %v6673
      %v6679 = vrot.slane %v6678, 4
      %v6681 = vshll.u32 %v6576, 16
      %v6683 = vrot.slane %v6681, 5
      %v6684 = vsel %vm1013, %v6679, %v6683
      %v6686 = vshrl.u32 %v6548, 16
      %v6688 = vrot.slane %v6686, 4
      %v6689 = vshll.u32 %v6548, 16
      %v6691 = vrot.slane %v6689, 5
      %v6692 = vor.u32 %v6688, %v6691
      %v6693 = vrot.slane %v6692, 4
      %v6695 = vshll.u32 %v6549, 16
      %v6697 = vrot.slane %v6695, 5
      %v6698 = vsel %vm1013, %v6693, %v6697
      %v6699 = vshrl.u32 %v6549, 16
      %v6701 = vrot.slane %v6699, 4
      %v6702 = vor.u32 %v6701, %v6697
      %v6703 = vrot.slane %v6702, 4
      %v6705 = vshll.u32 %v6577, 16
      %v6707 = vrot.slane %v6705, 5
      %v6708 = vsel %vm1013, %v6703, %v6707
      %v6710 = vshrl.u32 %v6550, 16
      %v6712 = vrot.slane %v6710, 4
      %v6713 = vshll.u32 %v6550, 16
      %v6715 = vrot.slane %v6713, 5
      %v6716 = vor.u32 %v6712, %v6715
      %v6717 = vrot.slane %v6716, 4
      %v6719 = vshll.u32 %v6551, 16
      %v6721 = vrot.slane %v6719, 5
      %v6722 = vsel %vm1013, %v6717, %v6721
      %v6723 = vshrl.u32 %v6551, 16
      %v6725 = vrot.slane %v6723, 4
      %v6726 = vor.u32 %v6725, %v6721
      %v6727 = vrot.slane %v6726, 4
      %v6729 = vshll.u32 %v6578, 16
      %v6731 = vrot.slane %v6729, 5
      %v6732 = vsel %vm1013, %v6727, %v6731
      %v6734 = vshrl.u32 %v6552, 16
      %v6736 = vrot.slane %v6734, 4
      %v6737 = vshll.u32 %v6552, 16
      %v6739 = vrot.slane %v6737, 5
      %v6740 = vor.u32 %v6736, %v6739
      %v6741 = vrot.slane %v6740, 4
      %v6743 = vshll.u32 %v6553, 16
      %v6745 = vrot.slane %v6743, 5
      %v6746 = vsel %vm1013, %v6741, %v6745
      %v6747 = vshrl.u32 %v6553, 16
      %v6749 = vrot.slane %v6747, 4
      %v6750 = vor.u32 %v6749, %v6745
      %v6751 = vrot.slane %v6750, 4
      %v6753 = vshll.u32 %v6579, 16
      %v6755 = vrot.slane %v6753, 5
      %v6756 = vsel %vm1013, %v6751, %v6755
      %v6758 = vshrl.u32 %v6554, 16
      %v6760 = vrot.slane %v6758, 4
      %v6761 = vshll.u32 %v6554, 16
      %v6763 = vrot.slane %v6761, 5
      %v6764 = vor.u32 %v6760, %v6763
      %v6765 = vrot.slane %v6764, 4
      %v6767 = vshll.u32 %v6555, 16
      %v6769 = vrot.slane %v6767, 5
      %v6770 = vsel %vm1013, %v6765, %v6769
      %v6771 = vshrl.u32 %v6555, 16
      %v6773 = vrot.slane %v6771, 4
      %v6774 = vor.u32 %v6773, %v6769
      %v6775 = vrot.slane %v6774, 4
      %v6777 = vshll.u32 %v6580, 16
      %v6779 = vrot.slane %v6777, 5
      %v6780 = vsel %vm1013, %v6775, %v6779
      %v6782 = vshrl.u32 %v6556, 16
      %v6784 = vrot.slane %v6782, 4
      %v6785 = vshll.u32 %v6556, 16
      %v6787 = vrot.slane %v6785, 5
      %v6788 = vor.u32 %v6784, %v6787
      %v6789 = vrot.slane %v6788, 4
      %v6791 = vshll.u32 %v6557, 16
      %v6793 = vrot.slane %v6791, 5
      %v6794 = vsel %vm1013, %v6789, %v6793
      %v6795 = vshrl.u32 %v6557, 16
      %v6797 = vrot.slane %v6795, 4
      %v6798 = vor.u32 %v6797, %v6793
      %v6799 = vrot.slane %v6798, 4
      %v6801 = vshll.u32 %v6581, 16
      %v6803 = vrot.slane %v6801, 5
      %v6804 = vsel %vm1013, %v6799, %v6803
      %v6806 = vshrl.u32 %v6558, 16
      %v6808 = vrot.slane %v6806, 4
      %v6809 = vshll.u32 %v6558, 16
      %v6811 = vrot.slane %v6809, 5
      %v6812 = vor.u32 %v6808, %v6811
      %v6813 = vrot.slane %v6812, 4
      %v6815 = vshll.u32 %v6559, 16
      %v6817 = vrot.slane %v6815, 5
      %v6818 = vsel %vm1013, %v6813, %v6817
      %v6819 = vshrl.u32 %v6559, 16
      %v6821 = vrot.slane %v6819, 4
      %v6822 = vor.u32 %v6821, %v6817
      %v6823 = vrot.slane %v6822, 4
      %v6825 = vshll.u32 %v6582, 16
      %v6827 = vrot.slane %v6825, 5
      %v6828 = vsel %vm1013, %v6823, %v6827
      %v6830 = vshrl.u32 %v6560, 16
      %v6832 = vrot.slane %v6830, 4
      %v6833 = vshll.u32 %v6560, 16
      %v6835 = vrot.slane %v6833, 5
      %v6836 = vor.u32 %v6832, %v6835
      %v6837 = vrot.slane %v6836, 4
      %v6839 = vshll.u32 %v6561, 16
      %v6841 = vrot.slane %v6839, 5
      %v6842 = vsel %vm1013, %v6837, %v6841
      %v6843 = vshrl.u32 %v6561, 16
      %v6845 = vrot.slane %v6843, 4
      %v6846 = vor.u32 %v6845, %v6841
      %v6847 = vrot.slane %v6846, 4
      %v6849 = vshll.u32 %v6583, 16
      %v6851 = vrot.slane %v6849, 5
      %v6852 = vsel %vm1013, %v6847, %v6851
      %v6854 = vshrl.u32 %v6562, 16
      %v6856 = vrot.slane %v6854, 4
      %v6857 = vshll.u32 %v6562, 16
      %v6859 = vrot.slane %v6857, 5
      %v6860 = vor.u32 %v6856, %v6859
      %v6861 = vrot.slane %v6860, 4
      %v6863 = vshll.u32 %v6563, 16
      %v6865 = vrot.slane %v6863, 5
      %v6866 = vsel %vm1013, %v6861, %v6865
      %v6867 = vshrl.u32 %v6563, 16
      %v6869 = vrot.slane %v6867, 4
      %v6870 = vor.u32 %v6869, %v6865
      %v6871 = vrot.slane %v6870, 4
      %v6873 = vshll.u32 %v6584, 16
      %v6875 = vrot.slane %v6873, 5
      %v6876 = vsel %vm1013, %v6871, %v6875
      %v6878 = vshrl.u32 %v6564, 16
      %v6880 = vrot.slane %v6878, 4
      %v6881 = vshll.u32 %v6564, 16
      %v6883 = vrot.slane %v6881, 5
      %v6884 = vor.u32 %v6880, %v6883
      %v6885 = vrot.slane %v6884, 4
      %v6887 = vshll.u32 %v6565, 16
      %v6889 = vrot.slane %v6887, 5
      %v6890 = vsel %vm1013, %v6885, %v6889
      %v6891 = vshrl.u32 %v6565, 16
      %v6893 = vrot.slane %v6891, 4
      %v6894 = vor.u32 %v6893, %v6889
      %v6895 = vrot.slane %v6894, 4
      %v6897 = vshll.u32 %v6585, 16
      %v6899 = vrot.slane %v6897, 5
      %v6900 = vsel %vm1013, %v6895, %v6899
      %v6902 = vshrl.u32 %v6566, 16
      %v6904 = vrot.slane %v6902, 4
      %v6905 = vshll.u32 %v6566, 16
      %v6907 = vrot.slane %v6905, 5
      %v6908 = vor.u32 %v6904, %v6907
      %v6909 = vrot.slane %v6908, 4
      %v6911 = vshll.u32 %v6567, 16
      %v6913 = vrot.slane %v6911, 5
      %v6914 = vsel %vm1013, %v6909, %v6913
      %v6915 = vshrl.u32 %v6567, 16
      %v6917 = vrot.slane %v6915, 4
      %v6918 = vor.u32 %v6917, %v6913
      %v6919 = vrot.slane %v6918, 4
      %v6921 = vshll.u32 %v6586, 16
      %v6923 = vrot.slane %v6921, 5
      %v6924 = vsel %vm1013, %v6919, %v6923
      %v6926 = vshrl.u32 %v6568, 16
      %v6928 = vrot.slane %v6926, 4
      %v6929 = vshll.u32 %v6568, 16
      %v6931 = vrot.slane %v6929, 5
      %v6932 = vor.u32 %v6928, %v6931
      %v6933 = vrot.slane %v6932, 4
      %v6935 = vshll.u32 %v6569, 16
      %v6937 = vrot.slane %v6935, 5
      %v6938 = vsel %vm1013, %v6933, %v6937
      %v6939 = vshrl.u32 %v6569, 16
      %v6941 = vrot.slane %v6939, 4
      %v6942 = vor.u32 %v6941, %v6937
      %v6943 = vrot.slane %v6942, 4
      %v6945 = vshll.u32 %v6587, 16
      %v6947 = vrot.slane %v6945, 5
      %v6948 = vsel %vm1013, %v6943, %v6947
      %v6950 = vshrl.u32 %v6570, 16
      %v6952 = vrot.slane %v6950, 4
      %v6953 = vshll.u32 %v6570, 16
      %v6955 = vrot.slane %v6953, 5
      %v6956 = vor.u32 %v6952, %v6955
      %v6957 = vrot.slane %v6956, 4
      %v6959 = vshll.u32 %v6571, 16
      %v6961 = vrot.slane %v6959, 5
      %v6962 = vsel %vm1013, %v6957, %v6961
      %v6963 = vshrl.u32 %v6571, 16
      %v6965 = vrot.slane %v6963, 4
      %v6966 = vor.u32 %v6965, %v6961
      %v6967 = vrot.slane %v6966, 4
      %v6969 = vshll.u32 %v6588, 16
      %v6971 = vrot.slane %v6969, 5
      %v6972 = vsel %vm1013, %v6967, %v6971
      %s6973 = scalar_lea.vmem %s2, 4
      %v6974 = vld [vmem:[%s6973] sm:$0xf]
      %v6975 = vunpack.c.l.b16 %v6602
      %v6976 = vunpack.c.l.b16 %v6612
      %v6977 = vunpack.c.l.b16 %v6626
      %v6978 = vunpack.c.l.b16 %v6636
      %v6979 = vunpack.c.l.b16 %v6650
      %v6980 = vunpack.c.l.b16 %v6660
      %v6981 = vunpack.c.l.b16 %v6674
      %v6982 = vunpack.c.l.b16 %v6684
      %v6983 = vunpack.c.l.b16 %v6698
      %v6984 = vunpack.c.l.b16 %v6708
      %v6985 = vunpack.c.l.b16 %v6722
      %v6986 = vunpack.c.l.b16 %v6732
      %v6987 = vunpack.c.l.b16 %v6746
      %v6988 = vunpack.c.l.b16 %v6756
      %v6989 = vunpack.c.l.b16 %v6770
      %v6990 = vunpack.c.l.b16 %v6780
      %v6991 = vunpack.c.l.b16 %v6794
      %v6992 = vunpack.c.l.b16 %v6804
      %v6993 = vunpack.c.l.b16 %v6818
      %v6994 = vunpack.c.l.b16 %v6828
      %v6995 = vunpack.c.l.b16 %v6842
      %v6996 = vunpack.c.l.b16 %v6852
      %v6997 = vunpack.c.l.b16 %v6866
      %v6998 = vunpack.c.l.b16 %v6876
      %v6999 = vunpack.c.l.b16 %v6890
      %v7000 = vunpack.c.l.b16 %v6900
      %v7001 = vunpack.c.l.b16 %v6914
      %v7002 = vunpack.c.l.b16 %v6924
      %v7003 = vunpack.c.l.b16 %v6938
      %v7004 = vunpack.c.l.b16 %v6948
      %v7005 = vunpack.c.l.b16 %v6962
      %v7006 = vunpack.c.l.b16 %v6972
      %v7007 = vpack.c.b16 %v6976, %v6975
      %v7008 = vpack.c.b16 %v6978, %v6977
      %v7009 = vpack.c.b16 %v6980, %v6979
      %v7010 = vpack.c.b16 %v6982, %v6981
      %v7011 = vpack.c.b16 %v6984, %v6983
      %v7012 = vpack.c.b16 %v6986, %v6985
      %v7013 = vpack.c.b16 %v6988, %v6987
      %v7014 = vpack.c.b16 %v6990, %v6989
      %v7015 = vpack.c.b16 %v6992, %v6991
      %v7016 = vpack.c.b16 %v6994, %v6993
      %v7017 = vpack.c.b16 %v6996, %v6995
      %v7018 = vpack.c.b16 %v6998, %v6997
      %v7019 = vpack.c.b16 %v7000, %v6999
      %v7020 = vpack.c.b16 %v7002, %v7001
      %v7021 = vpack.c.b16 %v7004, %v7003
      %v7022 = vpack.c.b16 %v7006, %v7005
      %v7024 = vsel %vm1448, %v7007, 0
      %v7027 = vsel %vm1448, %v7008, 0
      %v7030 = vsel %vm1448, %v7009, 0
      %v7033 = vsel %vm1448, %v7010, 0
      %v7036 = vsel %vm1448, %v7011, 0
      %v7039 = vsel %vm1448, %v7012, 0
      %v7042 = vsel %vm1448, %v7013, 0
      %v7045 = vsel %vm1448, %v7014, 0
      %v7048 = vsel %vm1448, %v7015, 0
      %v7051 = vsel %vm1448, %v7016, 0
      %v7054 = vsel %vm1448, %v7017, 0
      %v7057 = vsel %vm1448, %v7018, 0
      %v7060 = vsel %vm1448, %v7019, 0
      %v7063 = vsel %vm1448, %v7020, 0
      %v7066 = vsel %vm1448, %v7021, 0
      %v7069 = vsel %vm1448, %v7022, 0
      %v7072 = vsel %vm1497, %v6974, 0
      %7074 = vmatprep.subr.bf16.mxu0 0
      %7075 = vmatpush1.bf16.msra.mxu0 %v7072
      %7076 = vmatprep.subr.bf16.mxu0 0
      %7077 = vmatpush1.bf16.msra.mxu0 0
      %7078 = vmatprep.subr.bf16.mxu0 0
      %7079 = vmatpush1.bf16.msra.mxu0 0
      %7080 = vmatprep.subr.bf16.mxu0 0
      %7081 = vmatpush1.bf16.msra.mxu0 0
      %7082 = vmatprep.subr.bf16.mxu0 0
      %7083 = vmatpush1.bf16.msra.mxu0 0
      %7084 = vmatprep.subr.bf16.mxu0 0
      %7085 = vmatpush1.bf16.msra.mxu0 0
      %7086 = vmatprep.subr.bf16.mxu0 0
      %7087 = vmatpush1.bf16.msra.mxu0 0
      %7088 = vmatprep.subr.bf16.mxu0 0
      %7089 = vmatpush1.bf16.msra.mxu0 0
      %7090 = vmatprep.subr.bf16.mxu0 0
      %7091 = vmatpush1.bf16.msra.mxu0 0
      %7092 = vmatprep.subr.bf16.mxu0 0
      %7093 = vmatpush1.bf16.msra.mxu0 0
      %7094 = vmatprep.subr.bf16.mxu0 0
      %7095 = vmatpush1.bf16.msra.mxu0 0
      %7096 = vmatprep.subr.bf16.mxu0 0
      %7097 = vmatpush1.bf16.msra.mxu0 0
      %7098 = vmatprep.subr.bf16.mxu0 0
      %7099 = vmatpush1.bf16.msra.mxu0 0
      %7100 = vmatprep.subr.bf16.mxu0 0
      %7101 = vmatpush1.bf16.msra.mxu0 0
      %7102 = vmatprep.subr.bf16.mxu0 0
      %7103 = vmatpush1.bf16.msra.mxu0 0
      %7104 = vmatprep.subr.bf16.mxu0 0
      %7105 = vmatpush1.bf16.msra.mxu0 0
      %7106 = vmatprep.mubr.bf16.mxu0 0
      %7107 = vmatmul.mubr.bf16.gmra.mrb[0].mxu0 %v7024
      %v7108 = vpop.f32.mrb[0].mxu0
      %v7109 = vadd.f32 0.0, %v7108
      %v7110 = vpop.f32.mrb[0].mxu0
      %v7111 = vpop.f32.mrb[0].mxu0
      %v7112 = vadd.f32 0.0, %v7111
      %v7113 = vpop.f32.mrb[0].mxu0
      %7114 = vmatprep.mubr.bf16.mxu0 0
      %7115 = vmatmul.mubr.bf16.gmra.mrb[0].mxu0 %v7027
      %v7116 = vpop.f32.mrb[0].mxu0
      %v7117 = vadd.f32 0.0, %v7116
      %v7118 = vpop.f32.mrb[0].mxu0
      %v7119 = vpop.f32.mrb[0].mxu0
      %v7120 = vadd.f32 0.0, %v7119
      %v7121 = vpop.f32.mrb[0].mxu0
      %7122 = vmatprep.mubr.bf16.mxu0 0
      %7123 = vmatmul.mubr.bf16.gmra.mrb[0].mxu0 %v7030
      %v7124 = vpop.f32.mrb[0].mxu0
      %v7125 = vadd.f32 0.0, %v7124
      %v7126 = vpop.f32.mrb[0].mxu0
      %v7127 = vpop.f32.mrb[0].mxu0
      %v7128 = vadd.f32 0.0, %v7127
      %v7129 = vpop.f32.mrb[0].mxu0
      %7130 = vmatprep.mubr.bf16.mxu0 0
      %7131 = vmatmul.mubr.bf16.gmra.mrb[0].mxu0 %v7033
      %v7132 = vpop.f32.mrb[0].mxu0
      %v7133 = vadd.f32 0.0, %v7132
      %v7134 = vpop.f32.mrb[0].mxu0
      %v7135 = vpop.f32.mrb[0].mxu0
      %v7136 = vadd.f32 0.0, %v7135
      %v7137 = vpop.f32.mrb[0].mxu0
      %7138 = vmatprep.mubr.bf16.mxu0 0
      %7139 = vmatmul.mubr.bf16.gmra.mrb[0].mxu0 %v7036
      %v7140 = vpop.f32.mrb[0].mxu0
      %v7141 = vadd.f32 0.0, %v7140
      %v7142 = vpop.f32.mrb[0].mxu0
      %v7143 = vpop.f32.mrb[0].mxu0
      %v7144 = vadd.f32 0.0, %v7143
      %v7145 = vpop.f32.mrb[0].mxu0
      %7146 = vmatprep.mubr.bf16.mxu0 0
      %7147 = vmatmul.mubr.bf16.gmra.mrb[0].mxu0 %v7039
      %v7148 = vpop.f32.mrb[0].mxu0
      %v7149 = vadd.f32 0.0, %v7148
      %v7150 = vpop.f32.mrb[0].mxu0
      %v7151 = vpop.f32.mrb[0].mxu0
      %v7152 = vadd.f32 0.0, %v7151
      %v7153 = vpop.f32.mrb[0].mxu0
      %7154 = vmatprep.mubr.bf16.mxu0 0
      %7155 = vmatmul.mubr.bf16.gmra.mrb[0].mxu0 %v7042
      %v7156 = vpop.f32.mrb[0].mxu0
      %v7157 = vadd.f32 0.0, %v7156
      %v7158 = vpop.f32.mrb[0].mxu0
      %v7159 = vpop.f32.mrb[0].mxu0
      %v7160 = vadd.f32 0.0, %v7159
      %v7161 = vpop.f32.mrb[0].mxu0
      %7162 = vmatprep.mubr.bf16.mxu0 0
      %7163 = vmatmul.mubr.bf16.gmra.mrb[0].mxu0 %v7045
      %v7164 = vpop.f32.mrb[0].mxu0
      %v7165 = vadd.f32 0.0, %v7164
      %v7166 = vpop.f32.mrb[0].mxu0
      %v7167 = vpop.f32.mrb[0].mxu0
      %v7168 = vadd.f32 0.0, %v7167
      %v7169 = vpop.f32.mrb[0].mxu0
      %7170 = vmatprep.mubr.bf16.mxu0 0
      %7171 = vmatmul.mubr.bf16.gmra.mrb[0].mxu0 %v7048
      %v7172 = vpop.f32.mrb[0].mxu0
      %v7173 = vadd.f32 0.0, %v7172
      %v7174 = vpop.f32.mrb[0].mxu0
      %v7175 = vpop.f32.mrb[0].mxu0
      %v7176 = vadd.f32 0.0, %v7175
      %v7177 = vpop.f32.mrb[0].mxu0
      %7178 = vmatprep.mubr.bf16.mxu0 0
      %7179 = vmatmul.mubr.bf16.gmra.mrb[0].mxu0 %v7051
      %v7180 = vpop.f32.mrb[0].mxu0
      %v7181 = vadd.f32 0.0, %v7180
      %v7182 = vpop.f32.mrb[0].mxu0
      %v7183 = vpop.f32.mrb[0].mxu0
      %v7184 = vadd.f32 0.0, %v7183
      %v7185 = vpop.f32.mrb[0].mxu0
      %7186 = vmatprep.mubr.bf16.mxu0 0
      %7187 = vmatmul.mubr.bf16.gmra.mrb[0].mxu0 %v7054
      %v7188 = vpop.f32.mrb[0].mxu0
      %v7189 = vadd.f32 0.0, %v7188
      %v7190 = vpop.f32.mrb[0].mxu0
      %v7191 = vpop.f32.mrb[0].mxu0
      %v7192 = vadd.f32 0.0, %v7191
      %v7193 = vpop.f32.mrb[0].mxu0
      %7194 = vmatprep.mubr.bf16.mxu0 0
      %7195 = vmatmul.mubr.bf16.gmra.mrb[0].mxu0 %v7057
      %v7196 = vpop.f32.mrb[0].mxu0
      %v7197 = vadd.f32 0.0, %v7196
      %v7198 = vpop.f32.mrb[0].mxu0
      %v7199 = vpop.f32.mrb[0].mxu0
      %v7200 = vadd.f32 0.0, %v7199
      %v7201 = vpop.f32.mrb[0].mxu0
      %7202 = vmatprep.mubr.bf16.mxu0 0
      %7203 = vmatmul.mubr.bf16.gmra.mrb[0].mxu0 %v7060
      %v7204 = vpop.f32.mrb[0].mxu0
      %v7205 = vadd.f32 0.0, %v7204
      %v7206 = vpop.f32.mrb[0].mxu0
      %v7207 = vpop.f32.mrb[0].mxu0
      %v7208 = vadd.f32 0.0, %v7207
      %v7209 = vpop.f32.mrb[0].mxu0
      %7210 = vmatprep.mubr.bf16.mxu0 0
      %7211 = vmatmul.mubr.bf16.gmra.mrb[0].mxu0 %v7063
      %v7212 = vpop.f32.mrb[0].mxu0
      %v7213 = vadd.f32 0.0, %v7212
      %v7214 = vpop.f32.mrb[0].mxu0
      %v7215 = vpop.f32.mrb[0].mxu0
      %v7216 = vadd.f32 0.0, %v7215
      %v7217 = vpop.f32.mrb[0].mxu0
      %7218 = vmatprep.mubr.bf16.mxu0 0
      %7219 = vmatmul.mubr.bf16.gmra.mrb[0].mxu0 %v7066
      %v7220 = vpop.f32.mrb[0].mxu0
      %v7221 = vadd.f32 0.0, %v7220
      %v7222 = vpop.f32.mrb[0].mxu0
      %v7223 = vpop.f32.mrb[0].mxu0
      %v7224 = vadd.f32 0.0, %v7223
      %v7225 = vpop.f32.mrb[0].mxu0
      %7226 = vmatprep.mubr.bf16.mxu0 0
      %7227 = vmatmul.mubr.bf16.gmra.mrb[0].mxu0 %v7069
      %v7228 = vpop.f32.mrb[0].mxu0
      %v7229 = vadd.f32 0.0, %v7228
      %v7230 = vpop.f32.mrb[0].mxu0
      %v7231 = vpop.f32.mrb[0].mxu0
      %v7232 = vadd.f32 0.0, %v7231
      %v7233 = vpop.f32.mrb[0].mxu0
      %7234 = vdwg.mxu0
      %v7267 = vunpack.c.l.b16 %v6540
      %v7268 = vunpack.c.l.b16 %v6541
      %v7269 = vunpack.c.l.b16 %v6542
      %v7270 = vunpack.c.l.b16 %v6543
      %v7271 = vunpack.c.l.b16 %v6544
      %v7272 = vunpack.c.l.b16 %v6545
      %v7273 = vunpack.c.l.b16 %v6546
      %v7274 = vunpack.c.l.b16 %v6547
      %v7275 = vunpack.c.l.b16 %v6548
      %v7276 = vunpack.c.l.b16 %v6549
      %v7277 = vunpack.c.l.b16 %v6550
      %v7278 = vunpack.c.l.b16 %v6551
      %v7279 = vunpack.c.l.b16 %v6552
      %v7280 = vunpack.c.l.b16 %v6553
      %v7281 = vunpack.c.l.b16 %v6554
      %v7282 = vunpack.c.l.b16 %v6555
      %v7283 = vunpack.c.l.b16 %v6556
      %v7284 = vunpack.c.l.b16 %v6557
      %v7285 = vunpack.c.l.b16 %v6558
      %v7286 = vunpack.c.l.b16 %v6559
      %v7287 = vunpack.c.l.b16 %v6560
      %v7288 = vunpack.c.l.b16 %v6561
      %v7289 = vunpack.c.l.b16 %v6562
      %v7290 = vunpack.c.l.b16 %v6563
      %v7291 = vunpack.c.l.b16 %v6564
      %v7292 = vunpack.c.l.b16 %v6565
      %v7293 = vunpack.c.l.b16 %v6566
      %v7294 = vunpack.c.l.b16 %v6567
      %v7295 = vunpack.c.l.b16 %v6568
      %v7296 = vunpack.c.l.b16 %v6569
      %v7297 = vunpack.c.l.b16 %v6570
      %v7298 = vunpack.c.l.b16 %v6571
      %v7299 = vpack.c.b16 %v7268, %v7267
      %v7300 = vpack.c.b16 %v7270, %v7269
      %v7301 = vpack.c.b16 %v7272, %v7271
      %v7302 = vpack.c.b16 %v7274, %v7273
      %v7303 = vpack.c.b16 %v7276, %v7275
      %v7304 = vpack.c.b16 %v7278, %v7277
      %v7305 = vpack.c.b16 %v7280, %v7279
      %v7306 = vpack.c.b16 %v7282, %v7281
      %v7307 = vpack.c.b16 %v7284, %v7283
      %v7308 = vpack.c.b16 %v7286, %v7285
      %v7309 = vpack.c.b16 %v7288, %v7287
      %v7310 = vpack.c.b16 %v7290, %v7289
      %v7311 = vpack.c.b16 %v7292, %v7291
      %v7312 = vpack.c.b16 %v7294, %v7293
      %v7313 = vpack.c.b16 %v7296, %v7295
      %v7314 = vpack.c.b16 %v7298, %v7297
      %v7316 = vsel %vm1448, %v7299, 0
      %v7319 = vsel %vm1448, %v7300, 0
      %v7322 = vsel %vm1448, %v7301, 0
      %v7325 = vsel %vm1448, %v7302, 0
      %v7328 = vsel %vm1448, %v7303, 0
      %v7331 = vsel %vm1448, %v7304, 0
      %v7334 = vsel %vm1448, %v7305, 0
      %v7337 = vsel %vm1448, %v7306, 0
      %v7340 = vsel %vm1448, %v7307, 0
      %v7343 = vsel %vm1448, %v7308, 0
      %v7346 = vsel %vm1448, %v7309, 0
      %v7349 = vsel %vm1448, %v7310, 0
      %v7352 = vsel %vm1448, %v7311, 0
      %v7355 = vsel %vm1448, %v7312, 0
      %v7358 = vsel %vm1448, %v7313, 0
      %v7361 = vsel %vm1448, %v7314, 0
      %v7364 = vsel %vm1497, %v6572, 0
      %7366 = vmatprep.subr.bf16.mxu0 0
      %7367 = vmatpush1.bf16.msra.mxu0 %v7364
      %7368 = vmatprep.subr.bf16.mxu0 0
      %7369 = vmatpush1.bf16.msra.mxu0 0
      %7370 = vmatprep.subr.bf16.mxu0 0
      %7371 = vmatpush1.bf16.msra.mxu0 0
      %7372 = vmatprep.subr.bf16.mxu0 0
      %7373 = vmatpush1.bf16.msra.mxu0 0
      %7374 = vmatprep.subr.bf16.mxu0 0
      %7375 = vmatpush1.bf16.msra.mxu0 0
      %7376 = vmatprep.subr.bf16.mxu0 0
      %7377 = vmatpush1.bf16.msra.mxu0 0
      %7378 = vmatprep.subr.bf16.mxu0 0
      %7379 = vmatpush1.bf16.msra.mxu0 0
      %7380 = vmatprep.subr.bf16.mxu0 0
      %7381 = vmatpush1.bf16.msra.mxu0 0
      %7382 = vmatprep.subr.bf16.mxu0 0
      %7383 = vmatpush1.bf16.msra.mxu0 0
      %7384 = vmatprep.subr.bf16.mxu0 0
      %7385 = vmatpush1.bf16.msra.mxu0 0
      %7386 = vmatprep.subr.bf16.mxu0 0
      %7387 = vmatpush1.bf16.msra.mxu0 0
      %7388 = vmatprep.subr.bf16.mxu0 0
      %7389 = vmatpush1.bf16.msra.mxu0 0
      %7390 = vmatprep.subr.bf16.mxu0 0
      %7391 = vmatpush1.bf16.msra.mxu0 0
      %7392 = vmatprep.subr.bf16.mxu0 0
      %7393 = vmatpush1.bf16.msra.mxu0 0
      %7394 = vmatprep.subr.bf16.mxu0 0
      %7395 = vmatpush1.bf16.msra.mxu0 0
      %7396 = vmatprep.subr.bf16.mxu0 0
      %7397 = vmatpush1.bf16.msra.mxu0 0
      %7398 = vmatprep.mubr.bf16.mxu0 0
      %7399 = vmatmul.mubr.bf16.gmra.mrb[0].mxu0 %v7316
      %v7400 = vpop.f32.mrb[0].mxu0
      %v7401 = vadd.f32 %v7109, %v7400
      %v7402 = vpop.f32.mrb[0].mxu0
      %v7403 = vpop.f32.mrb[0].mxu0
      %v7404 = vadd.f32 %v7112, %v7403
      %v7405 = vpop.f32.mrb[0].mxu0
      %7406 = vmatprep.mubr.bf16.mxu0 0
      %7407 = vmatmul.mubr.bf16.gmra.mrb[0].mxu0 %v7319
      %v7408 = vpop.f32.mrb[0].mxu0
      %v7409 = vadd.f32 %v7117, %v7408
      %v7410 = vpop.f32.mrb[0].mxu0
      %v7411 = vpop.f32.mrb[0].mxu0
      %v7412 = vadd.f32 %v7120, %v7411
      %v7413 = vpop.f32.mrb[0].mxu0
      %7414 = vmatprep.mubr.bf16.mxu0 0
      %7415 = vmatmul.mubr.bf16.gmra.mrb[0].mxu0 %v7322
      %v7416 = vpop.f32.mrb[0].mxu0
      %v7417 = vadd.f32 %v7125, %v7416
      %v7418 = vpop.f32.mrb[0].mxu0
      %v7419 = vpop.f32.mrb[0].mxu0
      %v7420 = vadd.f32 %v7128, %v7419
      %v7421 = vpop.f32.mrb[0].mxu0
      %7422 = vmatprep.mubr.bf16.mxu0 0
      %7423 = vmatmul.mubr.bf16.gmra.mrb[0].mxu0 %v7325
      %v7424 = vpop.f32.mrb[0].mxu0
      %v7425 = vadd.f32 %v7133, %v7424
      %v7426 = vpop.f32.mrb[0].mxu0
      %v7427 = vpop.f32.mrb[0].mxu0
      %v7428 = vadd.f32 %v7136, %v7427
      %v7429 = vpop.f32.mrb[0].mxu0
      %7430 = vmatprep.mubr.bf16.mxu0 0
      %7431 = vmatmul.mubr.bf16.gmra.mrb[0].mxu0 %v7328
      %v7432 = vpop.f32.mrb[0].mxu0
      %v7433 = vadd.f32 %v7141, %v7432
      %v7434 = vpop.f32.mrb[0].mxu0
      %v7435 = vpop.f32.mrb[0].mxu0
      %v7436 = vadd.f32 %v7144, %v7435
      %v7437 = vpop.f32.mrb[0].mxu0
      %7438 = vmatprep.mubr.bf16.mxu0 0
      %7439 = vmatmul.mubr.bf16.gmra.mrb[0].mxu0 %v7331
      %v7440 = vpop.f32.mrb[0].mxu0
      %v7441 = vadd.f32 %v7149, %v7440
      %v7442 = vpop.f32.mrb[0].mxu0
      %v7443 = vpop.f32.mrb[0].mxu0
      %v7444 = vadd.f32 %v7152, %v7443
      %v7445 = vpop.f32.mrb[0].mxu0
      %7446 = vmatprep.mubr.bf16.mxu0 0
      %7447 = vmatmul.mubr.bf16.gmra.mrb[0].mxu0 %v7334
      %v7448 = vpop.f32.mrb[0].mxu0
      %v7449 = vadd.f32 %v7157, %v7448
      %v7450 = vpop.f32.mrb[0].mxu0
      %v7451 = vpop.f32.mrb[0].mxu0
      %v7452 = vadd.f32 %v7160, %v7451
      %v7453 = vpop.f32.mrb[0].mxu0
      %7454 = vmatprep.mubr.bf16.mxu0 0
      %7455 = vmatmul.mubr.bf16.gmra.mrb[0].mxu0 %v7337
      %v7456 = vpop.f32.mrb[0].mxu0
      %v7457 = vadd.f32 %v7165, %v7456
      %v7458 = vpop.f32.mrb[0].mxu0
      %v7459 = vpop.f32.mrb[0].mxu0
      %v7460 = vadd.f32 %v7168, %v7459
      %v7461 = vpop.f32.mrb[0].mxu0
      %7462 = vmatprep.mubr.bf16.mxu0 0
      %7463 = vmatmul.mubr.bf16.gmra.mrb[0].mxu0 %v7340
      %v7464 = vpop.f32.mrb[0].mxu0
      %v7465 = vadd.f32 %v7173, %v7464
      %v7466 = vpop.f32.mrb[0].mxu0
      %v7467 = vpop.f32.mrb[0].mxu0
      %v7468 = vadd.f32 %v7176, %v7467
      %v7469 = vpop.f32.mrb[0].mxu0
      %7470 = vmatprep.mubr.bf16.mxu0 0
      %7471 = vmatmul.mubr.bf16.gmra.mrb[0].mxu0 %v7343
      %v7472 = vpop.f32.mrb[0].mxu0
      %v7473 = vadd.f32 %v7181, %v7472
      %v7474 = vpop.f32.mrb[0].mxu0
      %v7475 = vpop.f32.mrb[0].mxu0
      %v7476 = vadd.f32 %v7184, %v7475
      %v7477 = vpop.f32.mrb[0].mxu0
      %7478 = vmatprep.mubr.bf16.mxu0 0
      %7479 = vmatmul.mubr.bf16.gmra.mrb[0].mxu0 %v7346
      %v7480 = vpop.f32.mrb[0].mxu0
      %v7481 = vadd.f32 %v7189, %v7480
      %v7482 = vpop.f32.mrb[0].mxu0
      %v7483 = vpop.f32.mrb[0].mxu0
      %v7484 = vadd.f32 %v7192, %v7483
      %v7485 = vpop.f32.mrb[0].mxu0
      %7486 = vmatprep.mubr.bf16.mxu0 0
      %7487 = vmatmul.mubr.bf16.gmra.mrb[0].mxu0 %v7349
      %v7488 = vpop.f32.mrb[0].mxu0
      %v7489 = vadd.f32 %v7197, %v7488
      %v7490 = vpop.f32.mrb[0].mxu0
      %v7491 = vpop.f32.mrb[0].mxu0
      %v7492 = vadd.f32 %v7200, %v7491
      %v7493 = vpop.f32.mrb[0].mxu0
      %7494 = vmatprep.mubr.bf16.mxu0 0
      %7495 = vmatmul.mubr.bf16.gmra.mrb[0].mxu0 %v7352
      %v7496 = vpop.f32.mrb[0].mxu0
      %v7497 = vadd.f32 %v7205, %v7496
      %v7498 = vpop.f32.mrb[0].mxu0
      %v7499 = vpop.f32.mrb[0].mxu0
      %v7500 = vadd.f32 %v7208, %v7499
      %v7501 = vpop.f32.mrb[0].mxu0
      %7502 = vmatprep.mubr.bf16.mxu0 0
      %7503 = vmatmul.mubr.bf16.gmra.mrb[0].mxu0 %v7355
      %v7504 = vpop.f32.mrb[0].mxu0
      %v7505 = vadd.f32 %v7213, %v7504
      %v7506 = vpop.f32.mrb[0].mxu0
      %v7507 = vpop.f32.mrb[0].mxu0
      %v7508 = vadd.f32 %v7216, %v7507
      %v7509 = vpop.f32.mrb[0].mxu0
      %7510 = vmatprep.mubr.bf16.mxu0 0
      %7511 = vmatmul.mubr.bf16.gmra.mrb[0].mxu0 %v7358
      %v7512 = vpop.f32.mrb[0].mxu0
      %v7513 = vadd.f32 %v7221, %v7512
      %v7514 = vpop.f32.mrb[0].mxu0
      %v7515 = vpop.f32.mrb[0].mxu0
      %v7516 = vadd.f32 %v7224, %v7515
      %v7517 = vpop.f32.mrb[0].mxu0
      %7518 = vmatprep.mubr.bf16.mxu0 0
      %7519 = vmatmul.mubr.bf16.gmra.mrb[0].mxu0 %v7361
      %v7520 = vpop.f32.mrb[0].mxu0
      %v7521 = vadd.f32 %v7229, %v7520
      %v7522 = vpop.f32.mrb[0].mxu0
      %v7523 = vpop.f32.mrb[0].mxu0
      %v7524 = vadd.f32 %v7232, %v7523
      %v7525 = vpop.f32.mrb[0].mxu0
      %7526 = vdwg.mxu0
      %v7527 = vld [vmem:[#allocation3] sm:$0xe]
      %v7528 = vld [vmem:[#allocation3 + $0xc] sm:$0xe]
      %v7529 = vld [vmem:[#allocation3 + $0x18] sm:$0xe]
      %v7530 = vld [vmem:[#allocation3 + $0x24] sm:$0xe]
      %v7531 = vld [vmem:[#allocation3 + $0x30] sm:$0xe]
      %v7532 = vld [vmem:[#allocation3 + $0x3c] sm:$0xe]
      %v7533 = vld [vmem:[#allocation3 + $0x48] sm:$0xe]
      %v7534 = vld [vmem:[#allocation3 + $0x54] sm:$0xe]
      %v7535 = vld [vmem:[#allocation3 + $0x60] sm:$0xe]
      %v7536 = vld [vmem:[#allocation3 + $0x6c] sm:$0xe]
      %v7537 = vld [vmem:[#allocation3 + $0x78] sm:$0xe]
      %v7538 = vld [vmem:[#allocation3 + $0x84] sm:$0xe]
      %v7539 = vld [vmem:[#allocation3 + $0x90] sm:$0xe]
      %v7540 = vld [vmem:[#allocation3 + $0x9c] sm:$0xe]
      %v7541 = vld [vmem:[#allocation3 + $0xa8] sm:$0xe]
      %v7542 = vld [vmem:[#allocation3 + $0xb4] sm:$0xe]
      %v7575 = vrot.slane %v7527, 5
      %v7576 = vrot.slane %v7575, 4
      %v7577 = vrot.slane %v6541, 5
      %v7578 = vsel %vm2004, %v7576, %v7577
      %v7579 = vrot.slane %v7577, 4
      %v7580 = vrot.slane %v6573, 5
      %v7581 = vsel %vm2004, %v7579, %v7580
      %v7582 = vrot.slane %v7528, 5
      %v7583 = vrot.slane %v7582, 4
      %v7584 = vrot.slane %v6543, 5
      %v7585 = vsel %vm2004, %v7583, %v7584
      %v7586 = vrot.slane %v7584, 4
      %v7587 = vrot.slane %v6574, 5
      %v7588 = vsel %vm2004, %v7586, %v7587
      %v7589 = vrot.slane %v7529, 5
      %v7590 = vrot.slane %v7589, 4
      %v7591 = vrot.slane %v6545, 5
      %v7592 = vsel %vm2004, %v7590, %v7591
      %v7593 = vrot.slane %v7591, 4
      %v7594 = vrot.slane %v6575, 5
      %v7595 = vsel %vm2004, %v7593, %v7594
      %v7596 = vrot.slane %v7530, 5
      %v7597 = vrot.slane %v7596, 4
      %v7598 = vrot.slane %v6547, 5
      %v7599 = vsel %vm2004, %v7597, %v7598
      %v7600 = vrot.slane %v7598, 4
      %v7601 = vrot.slane %v6576, 5
      %v7602 = vsel %vm2004, %v7600, %v7601
      %v7603 = vrot.slane %v7531, 5
      %v7604 = vrot.slane %v7603, 4
      %v7605 = vrot.slane %v6549, 5
      %v7606 = vsel %vm2004, %v7604, %v7605
      %v7607 = vrot.slane %v7605, 4
      %v7608 = vrot.slane %v6577, 5
      %v7609 = vsel %vm2004, %v7607, %v7608
      %v7610 = vrot.slane %v7532, 5
      %v7611 = vrot.slane %v7610, 4
      %v7612 = vrot.slane %v6551, 5
      %v7613 = vsel %vm2004, %v7611, %v7612
      %v7614 = vrot.slane %v7612, 4
      %v7615 = vrot.slane %v6578, 5
      %v7616 = vsel %vm2004, %v7614, %v7615
      %v7617 = vrot.slane %v7533, 5
      %v7618 = vrot.slane %v7617, 4
      %v7619 = vrot.slane %v6553, 5
      %v7620 = vsel %vm2004, %v7618, %v7619
      %v7621 = vrot.slane %v7619, 4
      %v7622 = vrot.slane %v6579, 5
      %v7623 = vsel %vm2004, %v7621, %v7622
      %v7624 = vrot.slane %v7534, 5
      %v7625 = vrot.slane %v7624, 4
      %v7626 = vrot.slane %v6555, 5
      %v7627 = vsel %vm2004, %v7625, %v7626
      %v7628 = vrot.slane %v7626, 4
      %v7629 = vrot.slane %v6580, 5
      %v7630 = vsel %vm2004, %v7628, %v7629
      %v7631 = vrot.slane %v7535, 5
      %v7632 = vrot.slane %v7631, 4
      %v7633 = vrot.slane %v6557, 5
      %v7634 = vsel %vm2004, %v7632, %v7633
      %v7635 = vrot.slane %v7633, 4
      %v7636 = vrot.slane %v6581, 5
      %v7637 = vsel %vm2004, %v7635, %v7636
      %v7638 = vrot.slane %v7536, 5
      %v7639 = vrot.slane %v7638, 4
      %v7640 = vrot.slane %v6559, 5
      %v7641 = vsel %vm2004, %v7639, %v7640
      %v7642 = vrot.slane %v7640, 4
      %v7643 = vrot.slane %v6582, 5
      %v7644 = vsel %vm2004, %v7642, %v7643
      %v7645 = vrot.slane %v7537, 5
      %v7646 = vrot.slane %v7645, 4
      %v7647 = vrot.slane %v6561, 5
      %v7648 = vsel %vm2004, %v7646, %v7647
      %v7649 = vrot.slane %v7647, 4
      %v7650 = vrot.slane %v6583, 5
      %v7651 = vsel %vm2004, %v7649, %v7650
      %v7652 = vrot.slane %v7538, 5
      %v7653 = vrot.slane %v7652, 4
      %v7654 = vrot.slane %v6563, 5
      %v7655 = vsel %vm2004, %v7653, %v7654
      %v7656 = vrot.slane %v7654, 4
      %v7657 = vrot.slane %v6584, 5
      %v7658 = vsel %vm2004, %v7656, %v7657
      %v7659 = vrot.slane %v7539, 5
      %v7660 = vrot.slane %v7659, 4
      %v7661 = vrot.slane %v6565, 5
      %v7662 = vsel %vm2004, %v7660, %v7661
      %v7663 = vrot.slane %v7661, 4
      %v7664 = vrot.slane %v6585, 5
      %v7665 = vsel %vm2004, %v7663, %v7664
      %v7666 = vrot.slane %v7540, 5
      %v7667 = vrot.slane %v7666, 4
      %v7668 = vrot.slane %v6567, 5
      %v7669 = vsel %vm2004, %v7667, %v7668
      %v7670 = vrot.slane %v7668, 4
      %v7671 = vrot.slane %v6586, 5
      %v7672 = vsel %vm2004, %v7670, %v7671
      %v7673 = vrot.slane %v7541, 5
      %v7674 = vrot.slane %v7673, 4
      %v7675 = vrot.slane %v6569, 5
      %v7676 = vsel %vm2004, %v7674, %v7675
      %v7677 = vrot.slane %v7675, 4
      %v7678 = vrot.slane %v6587, 5
      %v7679 = vsel %vm2004, %v7677, %v7678
      %v7680 = vrot.slane %v7542, 5
      %v7681 = vrot.slane %v7680, 4
      %v7682 = vrot.slane %v6571, 5
      %v7683 = vsel %vm2004, %v7681, %v7682
      %v7684 = vrot.slane %v7682, 4
      %v7685 = vrot.slane %v6588, 5
      %v7686 = vsel %vm2004, %v7684, %v7685
      %s7687 = scalar_lea.vmem %s2, 8
      %v7688 = vld [vmem:[%s7687] sm:$0xf]
      %v7689 = vunpack.c.l.b16 %v7578
      %v7690 = vunpack.c.l.b16 %v7581
      %v7691 = vunpack.c.l.b16 %v7585
      %v7692 = vunpack.c.l.b16 %v7588
      %v7693 = vunpack.c.l.b16 %v7592
      %v7694 = vunpack.c.l.b16 %v7595
      %v7695 = vunpack.c.l.b16 %v7599
      %v7696 = vunpack.c.l.b16 %v7602
      %v7697 = vunpack.c.l.b16 %v7606
      %v7698 = vunpack.c.l.b16 %v7609
      %v7699 = vunpack.c.l.b16 %v7613
      %v7700 = vunpack.c.l.b16 %v7616
      %v7701 = vunpack.c.l.b16 %v7620
      %v7702 = vunpack.c.l.b16 %v7623
      %v7703 = vunpack.c.l.b16 %v7627
      %v7704 = vunpack.c.l.b16 %v7630
      %v7705 = vunpack.c.l.b16 %v7634
      %v7706 = vunpack.c.l.b16 %v7637
      %v7707 = vunpack.c.l.b16 %v7641
      %v7708 = vunpack.c.l.b16 %v7644
      %v7709 = vunpack.c.l.b16 %v7648
      %v7710 = vunpack.c.l.b16 %v7651
      %v7711 = vunpack.c.l.b16 %v7655
      %v7712 = vunpack.c.l.b16 %v7658
      %v7713 = vunpack.c.l.b16 %v7662
      %v7714 = vunpack.c.l.b16 %v7665
      %v7715 = vunpack.c.l.b16 %v7669
      %v7716 = vunpack.c.l.b16 %v7672
      %v7717 = vunpack.c.l.b16 %v7676
      %v7718 = vunpack.c.l.b16 %v7679
      %v7719 = vunpack.c.l.b16 %v7683
      %v7720 = vunpack.c.l.b16 %v7686
      %v7721 = vpack.c.b16 %v7690, %v7689
      %v7722 = vpack.c.b16 %v7692, %v7691
      %v7723 = vpack.c.b16 %v7694, %v7693
      %v7724 = vpack.c.b16 %v7696, %v7695
      %v7725 = vpack.c.b16 %v7698, %v7697
      %v7726 = vpack.c.b16 %v7700, %v7699
      %v7727 = vpack.c.b16 %v7702, %v7701
      %v7728 = vpack.c.b16 %v7704, %v7703
      %v7729 = vpack.c.b16 %v7706, %v7705
      %v7730 = vpack.c.b16 %v7708, %v7707
      %v7731 = vpack.c.b16 %v7710, %v7709
      %v7732 = vpack.c.b16 %v7712, %v7711
      %v7733 = vpack.c.b16 %v7714, %v7713
      %v7734 = vpack.c.b16 %v7716, %v7715
      %v7735 = vpack.c.b16 %v7718, %v7717
      %v7736 = vpack.c.b16 %v7720, %v7719
      %v7738 = vsel %vm1448, %v7721, 0
      %v7741 = vsel %vm1448, %v7722, 0
      %v7744 = vsel %vm1448, %v7723, 0
      %v7747 = vsel %vm1448, %v7724, 0
      %v7750 = vsel %vm1448, %v7725, 0
      %v7753 = vsel %vm1448, %v7726, 0
      %v7756 = vsel %vm1448, %v7727, 0
      %v7759 = vsel %vm1448, %v7728, 0
      %v7762 = vsel %vm1448, %v7729, 0
      %v7765 = vsel %vm1448, %v7730, 0
      %v7768 = vsel %vm1448, %v7731, 0
      %v7771 = vsel %vm1448, %v7732, 0
      %v7774 = vsel %vm1448, %v7733, 0
      %v7777 = vsel %vm1448, %v7734, 0
      %v7780 = vsel %vm1448, %v7735, 0
      %v7783 = vsel %vm1448, %v7736, 0
      %v7786 = vsel %vm1497, %v7688, 0
      %7788 = vmatprep.subr.bf16.mxu0 0
      %7789 = vmatpush1.bf16.msra.mxu0 %v7786
      %7790 = vmatprep.subr.bf16.mxu0 0
      %7791 = vmatpush1.bf16.msra.mxu0 0
      %7792 = vmatprep.subr.bf16.mxu0 0
      %7793 = vmatpush1.bf16.msra.mxu0 0
      %7794 = vmatprep.subr.bf16.mxu0 0
      %7795 = vmatpush1.bf16.msra.mxu0 0
      %7796 = vmatprep.subr.bf16.mxu0 0
      %7797 = vmatpush1.bf16.msra.mxu0 0
      %7798 = vmatprep.subr.bf16.mxu0 0
      %7799 = vmatpush1.bf16.msra.mxu0 0
      %7800 = vmatprep.subr.bf16.mxu0 0
      %7801 = vmatpush1.bf16.msra.mxu0 0
      %7802 = vmatprep.subr.bf16.mxu0 0
      %7803 = vmatpush1.bf16.msra.mxu0 0
      %7804 = vmatprep.subr.bf16.mxu0 0
      %7805 = vmatpush1.bf16.msra.mxu0 0
      %7806 = vmatprep.subr.bf16.mxu0 0
      %7807 = vmatpush1.bf16.msra.mxu0 0
      %7808 = vmatprep.subr.bf16.mxu0 0
      %7809 = vmatpush1.bf16.msra.mxu0 0
      %7810 = vmatprep.subr.bf16.mxu0 0
      %7811 = vmatpush1.bf16.msra.mxu0 0
      %7812 = vmatprep.subr.bf16.mxu0 0
      %7813 = vmatpush1.bf16.msra.mxu0 0
      %7814 = vmatprep.subr.bf16.mxu0 0
      %7815 = vmatpush1.bf16.msra.mxu0 0
      %7816 = vmatprep.subr.bf16.mxu0 0
      %7817 = vmatpush1.bf16.msra.mxu0 0
      %7818 = vmatprep.subr.bf16.mxu0 0
      %7819 = vmatpush1.bf16.msra.mxu0 0
      %7820 = vmatprep.mubr.bf16.mxu0 0
      %7821 = vmatmul.mubr.bf16.gmra.mrb[0].mxu0 %v7738
      %v7822 = vpop.f32.mrb[0].mxu0
      %v7823 = vadd.f32 0.0, %v7822
      %v7824 = vpop.f32.mrb[0].mxu0
      %v7825 = vpop.f32.mrb[0].mxu0
      %v7826 = vadd.f32 0.0, %v7825
      %v7827 = vpop.f32.mrb[0].mxu0
      %7828 = vmatprep.mubr.bf16.mxu0 0
      %7829 = vmatmul.mubr.bf16.gmra.mrb[0].mxu0 %v7741
      %v7830 = vpop.f32.mrb[0].mxu0
      %v7831 = vadd.f32 0.0, %v7830
      %v7832 = vpop.f32.mrb[0].mxu0
      %v7833 = vpop.f32.mrb[0].mxu0
      %v7834 = vadd.f32 0.0, %v7833
      %v7835 = vpop.f32.mrb[0].mxu0
      %7836 = vmatprep.mubr.bf16.mxu0 0
      %7837 = vmatmul.mubr.bf16.gmra.mrb[0].mxu0 %v7744
      %v7838 = vpop.f32.mrb[0].mxu0
      %v7839 = vadd.f32 0.0, %v7838
      %v7840 = vpop.f32.mrb[0].mxu0
      %v7841 = vpop.f32.mrb[0].mxu0
      %v7842 = vadd.f32 0.0, %v7841
      %v7843 = vpop.f32.mrb[0].mxu0
      %7844 = vmatprep.mubr.bf16.mxu0 0
      %7845 = vmatmul.mubr.bf16.gmra.mrb[0].mxu0 %v7747
      %v7846 = vpop.f32.mrb[0].mxu0
      %v7847 = vadd.f32 0.0, %v7846
      %v7848 = vpop.f32.mrb[0].mxu0
      %v7849 = vpop.f32.mrb[0].mxu0
      %v7850 = vadd.f32 0.0, %v7849
      %v7851 = vpop.f32.mrb[0].mxu0
      %7852 = vmatprep.mubr.bf16.mxu0 0
      %7853 = vmatmul.mubr.bf16.gmra.mrb[0].mxu0 %v7750
      %v7854 = vpop.f32.mrb[0].mxu0
      %v7855 = vadd.f32 0.0, %v7854
      %v7856 = vpop.f32.mrb[0].mxu0
      %v7857 = vpop.f32.mrb[0].mxu0
      %v7858 = vadd.f32 0.0, %v7857
      %v7859 = vpop.f32.mrb[0].mxu0
      %7860 = vmatprep.mubr.bf16.mxu0 0
      %7861 = vmatmul.mubr.bf16.gmra.mrb[0].mxu0 %v7753
      %v7862 = vpop.f32.mrb[0].mxu0
      %v7863 = vadd.f32 0.0, %v7862
      %v7864 = vpop.f32.mrb[0].mxu0
      %v7865 = vpop.f32.mrb[0].mxu0
      %v7866 = vadd.f32 0.0, %v7865
      %v7867 = vpop.f32.mrb[0].mxu0
      %7868 = vmatprep.mubr.bf16.mxu0 0
      %7869 = vmatmul.mubr.bf16.gmra.mrb[0].mxu0 %v7756
      %v7870 = vpop.f32.mrb[0].mxu0
      %v7871 = vadd.f32 0.0, %v7870
      %v7872 = vpop.f32.mrb[0].mxu0
      %v7873 = vpop.f32.mrb[0].mxu0
      %v7874 = vadd.f32 0.0, %v7873
      %v7875 = vpop.f32.mrb[0].mxu0
      %7876 = vmatprep.mubr.bf16.mxu0 0
      %7877 = vmatmul.mubr.bf16.gmra.mrb[0].mxu0 %v7759
      %v7878 = vpop.f32.mrb[0].mxu0
      %v7879 = vadd.f32 0.0, %v7878
      %v7880 = vpop.f32.mrb[0].mxu0
      %v7881 = vpop.f32.mrb[0].mxu0
      %v7882 = vadd.f32 0.0, %v7881
      %v7883 = vpop.f32.mrb[0].mxu0
      %7884 = vmatprep.mubr.bf16.mxu0 0
      %7885 = vmatmul.mubr.bf16.gmra.mrb[0].mxu0 %v7762
      %v7886 = vpop.f32.mrb[0].mxu0
      %v7887 = vadd.f32 0.0, %v7886
      %v7888 = vpop.f32.mrb[0].mxu0
      %v7889 = vpop.f32.mrb[0].mxu0
      %v7890 = vadd.f32 0.0, %v7889
      %v7891 = vpop.f32.mrb[0].mxu0
      %7892 = vmatprep.mubr.bf16.mxu0 0
      %7893 = vmatmul.mubr.bf16.gmra.mrb[0].mxu0 %v7765
      %v7894 = vpop.f32.mrb[0].mxu0
      %v7895 = vadd.f32 0.0, %v7894
      %v7896 = vpop.f32.mrb[0].mxu0
      %v7897 = vpop.f32.mrb[0].mxu0
      %v7898 = vadd.f32 0.0, %v7897
      %v7899 = vpop.f32.mrb[0].mxu0
      %7900 = vmatprep.mubr.bf16.mxu0 0
      %7901 = vmatmul.mubr.bf16.gmra.mrb[0].mxu0 %v7768
      %v7902 = vpop.f32.mrb[0].mxu0
      %v7903 = vadd.f32 0.0, %v7902
      %v7904 = vpop.f32.mrb[0].mxu0
      %v7905 = vpop.f32.mrb[0].mxu0
      %v7906 = vadd.f32 0.0, %v7905
      %v7907 = vpop.f32.mrb[0].mxu0
      %7908 = vmatprep.mubr.bf16.mxu0 0
      %7909 = vmatmul.mubr.bf16.gmra.mrb[0].mxu0 %v7771
      %v7910 = vpop.f32.mrb[0].mxu0
      %v7911 = vadd.f32 0.0, %v7910
      %v7912 = vpop.f32.mrb[0].mxu0
      %v7913 = vpop.f32.mrb[0].mxu0
      %v7914 = vadd.f32 0.0, %v7913
      %v7915 = vpop.f32.mrb[0].mxu0
      %7916 = vmatprep.mubr.bf16.mxu0 0
      %7917 = vmatmul.mubr.bf16.gmra.mrb[0].mxu0 %v7774
      %v7918 = vpop.f32.mrb[0].mxu0
      %v7919 = vadd.f32 0.0, %v7918
      %v7920 = vpop.f32.mrb[0].mxu0
      %v7921 = vpop.f32.mrb[0].mxu0
      %v7922 = vadd.f32 0.0, %v7921
      %v7923 = vpop.f32.mrb[0].mxu0
      %7924 = vmatprep.mubr.bf16.mxu0 0
      %7925 = vmatmul.mubr.bf16.gmra.mrb[0].mxu0 %v7777
      %v7926 = vpop.f32.mrb[0].mxu0
      %v7927 = vadd.f32 0.0, %v7926
      %v7928 = vpop.f32.mrb[0].mxu0
      %v7929 = vpop.f32.mrb[0].mxu0
      %v7930 = vadd.f32 0.0, %v7929
      %v7931 = vpop.f32.mrb[0].mxu0
      %7932 = vmatprep.mubr.bf16.mxu0 0
      %7933 = vmatmul.mubr.bf16.gmra.mrb[0].mxu0 %v7780
      %v7934 = vpop.f32.mrb[0].mxu0
      %v7935 = vadd.f32 0.0, %v7934
      %v7936 = vpop.f32.mrb[0].mxu0
      %v7937 = vpop.f32.mrb[0].mxu0
      %v7938 = vadd.f32 0.0, %v7937
      %v7939 = vpop.f32.mrb[0].mxu0
      %7940 = vmatprep.mubr.bf16.mxu0 0
      %7941 = vmatmul.mubr.bf16.gmra.mrb[0].mxu0 %v7783
      %v7942 = vpop.f32.mrb[0].mxu0
      %v7943 = vadd.f32 0.0, %v7942
      %v7944 = vpop.f32.mrb[0].mxu0
      %v7945 = vpop.f32.mrb[0].mxu0
      %v7946 = vadd.f32 0.0, %v7945
      %v7947 = vpop.f32.mrb[0].mxu0
      %7948 = vdwg.mxu0
      %v7949 = vadd.f32 %v7401, %v7823
      %v7950 = vadd.f32 %v7404, %v7826
      %v7951 = vadd.f32 %v7409, %v7831
      %v7952 = vadd.f32 %v7412, %v7834
      %v7953 = vadd.f32 %v7417, %v7839
      %v7954 = vadd.f32 %v7420, %v7842
      %v7955 = vadd.f32 %v7425, %v7847
      %v7956 = vadd.f32 %v7428, %v7850
      %v7957 = vadd.f32 %v7433, %v7855
      %v7958 = vadd.f32 %v7436, %v7858
      %v7959 = vadd.f32 %v7441, %v7863
      %v7960 = vadd.f32 %v7444, %v7866
      %v7961 = vadd.f32 %v7449, %v7871
      %v7962 = vadd.f32 %v7452, %v7874
      %v7963 = vadd.f32 %v7457, %v7879
      %v7964 = vadd.f32 %v7460, %v7882
      %v7965 = vadd.f32 %v7465, %v7887
      %v7966 = vadd.f32 %v7468, %v7890
      %v7967 = vadd.f32 %v7473, %v7895
      %v7968 = vadd.f32 %v7476, %v7898
      %v7969 = vadd.f32 %v7481, %v7903
      %v7970 = vadd.f32 %v7484, %v7906
      %v7971 = vadd.f32 %v7489, %v7911
      %v7972 = vadd.f32 %v7492, %v7914
      %v7973 = vadd.f32 %v7497, %v7919
      %v7974 = vadd.f32 %v7500, %v7922
      %v7975 = vadd.f32 %v7505, %v7927
      %v7976 = vadd.f32 %v7508, %v7930
      %v7977 = vadd.f32 %v7513, %v7935
      %v7978 = vadd.f32 %v7516, %v7938
      %v7979 = vadd.f32 %v7521, %v7943
      %v7980 = vadd.f32 %v7524, %v7946
      %v7981 = vld [vmem:[%s6208] sm:$0xf]
      %v7982 = vld [vmem:[%s6208 + $0x4] sm:$0xf]
      %v7983 = vld [vmem:[%s6208 + $0xc] sm:$0xf]
      %v7984 = vld [vmem:[%s6208 + $0x10] sm:$0xf]
      %v7985 = vld [vmem:[%s6208 + $0x18] sm:$0xf]
      %v7986 = vld [vmem:[%s6208 + $0x1c] sm:$0xf]
      %v7987 = vld [vmem:[%s6208 + $0x24] sm:$0xf]
      %v7988 = vld [vmem:[%s6208 + $0x28] sm:$0xf]
      %v7989 = vld [vmem:[%s6208 + $0x30] sm:$0xf]
      %v7990 = vld [vmem:[%s6208 + $0x34] sm:$0xf]
      %v7991 = vld [vmem:[%s6208 + $0x3c] sm:$0xf]
      %v7992 = vld [vmem:[%s6208 + $0x40] sm:$0xf]
      %v7993 = vld [vmem:[%s6208 + $0x48] sm:$0xf]
      %v7994 = vld [vmem:[%s6208 + $0x4c] sm:$0xf]
      %v7995 = vld [vmem:[%s6208 + $0x54] sm:$0xf]
      %v7996 = vld [vmem:[%s6208 + $0x58] sm:$0xf]
      %v7997 = vld [vmem:[%s6208 + $0x60] sm:$0xf]
      %v7998 = vld [vmem:[%s6208 + $0x64] sm:$0xf]
      %v7999 = vld [vmem:[%s6208 + $0x6c] sm:$0xf]
      %v8000 = vld [vmem:[%s6208 + $0x70] sm:$0xf]
      %v8001 = vld [vmem:[%s6208 + $0x78] sm:$0xf]
      %v8002 = vld [vmem:[%s6208 + $0x7c] sm:$0xf]
      %v8003 = vld [vmem:[%s6208 + $0x84] sm:$0xf]
      %v8004 = vld [vmem:[%s6208 + $0x88] sm:$0xf]
      %v8005 = vld [vmem:[%s6208 + $0x90] sm:$0xf]
      %v8006 = vld [vmem:[%s6208 + $0x94] sm:$0xf]
      %v8007 = vld [vmem:[%s6208 + $0x9c] sm:$0xf]
      %v8008 = vld [vmem:[%s6208 + $0xa0] sm:$0xf]
      %v8009 = vld [vmem:[%s6208 + $0xa8] sm:$0xf]
      %v8010 = vld [vmem:[%s6208 + $0xac] sm:$0xf]
      %v8011 = vld [vmem:[%s6208 + $0xb4] sm:$0xf]
      %v8012 = vld [vmem:[%s6208 + $0xb8] sm:$0xf]
      %s8013 = scalar_lea.vmem %s2, 12
      %v8014 = vld [vmem:[%s8013] sm:$0xf]
      %v8047 = vunpack.c.l.b16 %v7981
      %v8048 = vunpack.c.l.b16 %v7982
      %v8049 = vunpack.c.l.b16 %v7983
      %v8050 = vunpack.c.l.b16 %v7984
      %v8051 = vunpack.c.l.b16 %v7985
      %v8052 = vunpack.c.l.b16 %v7986
      %v8053 = vunpack.c.l.b16 %v7987
      %v8054 = vunpack.c.l.b16 %v7988
      %v8055 = vunpack.c.l.b16 %v7989
      %v8056 = vunpack.c.l.b16 %v7990
      %v8057 = vunpack.c.l.b16 %v7991
      %v8058 = vunpack.c.l.b16 %v7992
      %v8059 = vunpack.c.l.b16 %v7993
      %v8060 = vunpack.c.l.b16 %v7994
      %v8061 = vunpack.c.l.b16 %v7995
      %v8062 = vunpack.c.l.b16 %v7996
      %v8063 = vunpack.c.l.b16 %v7997
      %v8064 = vunpack.c.l.b16 %v7998
      %v8065 = vunpack.c.l.b16 %v7999
      %v8066 = vunpack.c.l.b16 %v8000
      %v8067 = vunpack.c.l.b16 %v8001
      %v8068 = vunpack.c.l.b16 %v8002
      %v8069 = vunpack.c.l.b16 %v8003
      %v8070 = vunpack.c.l.b16 %v8004
      %v8071 = vunpack.c.l.b16 %v8005
      %v8072 = vunpack.c.l.b16 %v8006
      %v8073 = vunpack.c.l.b16 %v8007
      %v8074 = vunpack.c.l.b16 %v8008
      %v8075 = vunpack.c.l.b16 %v8009
      %v8076 = vunpack.c.l.b16 %v8010
      %v8077 = vunpack.c.l.b16 %v8011
      %v8078 = vunpack.c.l.b16 %v8012
      %v8079 = vpack.c.b16 %v8048, %v8047
      %v8080 = vpack.c.b16 %v8050, %v8049
      %v8081 = vpack.c.b16 %v8052, %v8051
      %v8082 = vpack.c.b16 %v8054, %v8053
      %v8083 = vpack.c.b16 %v8056, %v8055
      %v8084 = vpack.c.b16 %v8058, %v8057
      %v8085 = vpack.c.b16 %v8060, %v8059
      %v8086 = vpack.c.b16 %v8062, %v8061
      %v8087 = vpack.c.b16 %v8064, %v8063
      %v8088 = vpack.c.b16 %v8066, %v8065
      %v8089 = vpack.c.b16 %v8068, %v8067
      %v8090 = vpack.c.b16 %v8070, %v8069
      %v8091 = vpack.c.b16 %v8072, %v8071
      %v8092 = vpack.c.b16 %v8074, %v8073
      %v8093 = vpack.c.b16 %v8076, %v8075
      %v8094 = vpack.c.b16 %v8078, %v8077
      %v8096 = vsel %vm1448, %v8079, 0
      %v8099 = vsel %vm1448, %v8080, 0
      %v8102 = vsel %vm1448, %v8081, 0
      %v8105 = vsel %vm1448, %v8082, 0
      %v8108 = vsel %vm1448, %v8083, 0
      %v8111 = vsel %vm1448, %v8084, 0
      %v8114 = vsel %vm1448, %v8085, 0
      %v8117 = vsel %vm1448, %v8086, 0
      %v8120 = vsel %vm1448, %v8087, 0
      %v8123 = vsel %vm1448, %v8088, 0
      %v8126 = vsel %vm1448, %v8089, 0
      %v8129 = vsel %vm1448, %v8090, 0
      %v8132 = vsel %vm1448, %v8091, 0
      %v8135 = vsel %vm1448, %v8092, 0
      %v8138 = vsel %vm1448, %v8093, 0
      %v8141 = vsel %vm1448, %v8094, 0
      %v8144 = vsel %vm1497, %v8014, 0
      %8146 = vmatprep.subr.bf16.mxu0 0
      %8147 = vmatpush1.bf16.msra.mxu0 %v8144
      %8148 = vmatprep.subr.bf16.mxu0 0
      %8149 = vmatpush1.bf16.msra.mxu0 0
      %8150 = vmatprep.subr.bf16.mxu0 0
      %8151 = vmatpush1.bf16.msra.mxu0 0
      %8152 = vmatprep.subr.bf16.mxu0 0
      %8153 = vmatpush1.bf16.msra.mxu0 0
      %8154 = vmatprep.subr.bf16.mxu0 0
      %8155 = vmatpush1.bf16.msra.mxu0 0
      %8156 = vmatprep.subr.bf16.mxu0 0
      %8157 = vmatpush1.bf16.msra.mxu0 0
      %8158 = vmatprep.subr.bf16.mxu0 0
      %8159 = vmatpush1.bf16.msra.mxu0 0
      %8160 = vmatprep.subr.bf16.mxu0 0
      %8161 = vmatpush1.bf16.msra.mxu0 0
      %8162 = vmatprep.subr.bf16.mxu0 0
      %8163 = vmatpush1.bf16.msra.mxu0 0
      %8164 = vmatprep.subr.bf16.mxu0 0
      %8165 = vmatpush1.bf16.msra.mxu0 0
      %8166 = vmatprep.subr.bf16.mxu0 0
      %8167 = vmatpush1.bf16.msra.mxu0 0
      %8168 = vmatprep.subr.bf16.mxu0 0
      %8169 = vmatpush1.bf16.msra.mxu0 0
      %8170 = vmatprep.subr.bf16.mxu0 0
      %8171 = vmatpush1.bf16.msra.mxu0 0
      %8172 = vmatprep.subr.bf16.mxu0 0
      %8173 = vmatpush1.bf16.msra.mxu0 0
      %8174 = vmatprep.subr.bf16.mxu0 0
      %8175 = vmatpush1.bf16.msra.mxu0 0
      %8176 = vmatprep.subr.bf16.mxu0 0
      %8177 = vmatpush1.bf16.msra.mxu0 0
      %8178 = vmatprep.mubr.bf16.mxu0 0
      %8179 = vmatmul.mubr.bf16.gmra.mrb[0].mxu0 %v8096
      %v8180 = vpop.f32.mrb[0].mxu0
      %v8181 = vadd.f32 0.0, %v8180
      %v8182 = vpop.f32.mrb[0].mxu0
      %v8183 = vpop.f32.mrb[0].mxu0
      %v8184 = vadd.f32 0.0, %v8183
      %v8185 = vpop.f32.mrb[0].mxu0
      %8186 = vmatprep.mubr.bf16.mxu0 0
      %8187 = vmatmul.mubr.bf16.gmra.mrb[0].mxu0 %v8099
      %v8188 = vpop.f32.mrb[0].mxu0
      %v8189 = vadd.f32 0.0, %v8188
      %v8190 = vpop.f32.mrb[0].mxu0
      %v8191 = vpop.f32.mrb[0].mxu0
      %v8192 = vadd.f32 0.0, %v8191
      %v8193 = vpop.f32.mrb[0].mxu0
      %8194 = vmatprep.mubr.bf16.mxu0 0
      %8195 = vmatmul.mubr.bf16.gmra.mrb[0].mxu0 %v8102
      %v8196 = vpop.f32.mrb[0].mxu0
      %v8197 = vadd.f32 0.0, %v8196
      %v8198 = vpop.f32.mrb[0].mxu0
      %v8199 = vpop.f32.mrb[0].mxu0
      %v8200 = vadd.f32 0.0, %v8199
      %v8201 = vpop.f32.mrb[0].mxu0
      %8202 = vmatprep.mubr.bf16.mxu0 0
      %8203 = vmatmul.mubr.bf16.gmra.mrb[0].mxu0 %v8105
      %v8204 = vpop.f32.mrb[0].mxu0
      %v8205 = vadd.f32 0.0, %v8204
      %v8206 = vpop.f32.mrb[0].mxu0
      %v8207 = vpop.f32.mrb[0].mxu0
      %v8208 = vadd.f32 0.0, %v8207
      %v8209 = vpop.f32.mrb[0].mxu0
      %8210 = vmatprep.mubr.bf16.mxu0 0
      %8211 = vmatmul.mubr.bf16.gmra.mrb[0].mxu0 %v8108
      %v8212 = vpop.f32.mrb[0].mxu0
      %v8213 = vadd.f32 0.0, %v8212
      %v8214 = vpop.f32.mrb[0].mxu0
      %v8215 = vpop.f32.mrb[0].mxu0
      %v8216 = vadd.f32 0.0, %v8215
      %v8217 = vpop.f32.mrb[0].mxu0
      %8218 = vmatprep.mubr.bf16.mxu0 0
      %8219 = vmatmul.mubr.bf16.gmra.mrb[0].mxu0 %v8111
      %v8220 = vpop.f32.mrb[0].mxu0
      %v8221 = vadd.f32 0.0, %v8220
      %v8222 = vpop.f32.mrb[0].mxu0
      %v8223 = vpop.f32.mrb[0].mxu0
      %v8224 = vadd.f32 0.0, %v8223
      %v8225 = vpop.f32.mrb[0].mxu0
      %8226 = vmatprep.mubr.bf16.mxu0 0
      %8227 = vmatmul.mubr.bf16.gmra.mrb[0].mxu0 %v8114
      %v8228 = vpop.f32.mrb[0].mxu0
      %v8229 = vadd.f32 0.0, %v8228
      %v8230 = vpop.f32.mrb[0].mxu0
      %v8231 = vpop.f32.mrb[0].mxu0
      %v8232 = vadd.f32 0.0, %v8231
      %v8233 = vpop.f32.mrb[0].mxu0
      %8234 = vmatprep.mubr.bf16.mxu0 0
      %8235 = vmatmul.mubr.bf16.gmra.mrb[0].mxu0 %v8117
      %v8236 = vpop.f32.mrb[0].mxu0
      %v8237 = vadd.f32 0.0, %v8236
      %v8238 = vpop.f32.mrb[0].mxu0
      %v8239 = vpop.f32.mrb[0].mxu0
      %v8240 = vadd.f32 0.0, %v8239
      %v8241 = vpop.f32.mrb[0].mxu0
      %8242 = vmatprep.mubr.bf16.mxu0 0
      %8243 = vmatmul.mubr.bf16.gmra.mrb[0].mxu0 %v8120
      %v8244 = vpop.f32.mrb[0].mxu0
      %v8245 = vadd.f32 0.0, %v8244
      %v8246 = vpop.f32.mrb[0].mxu0
      %v8247 = vpop.f32.mrb[0].mxu0
      %v8248 = vadd.f32 0.0, %v8247
      %v8249 = vpop.f32.mrb[0].mxu0
      %8250 = vmatprep.mubr.bf16.mxu0 0
      %8251 = vmatmul.mubr.bf16.gmra.mrb[0].mxu0 %v8123
      %v8252 = vpop.f32.mrb[0].mxu0
      %v8253 = vadd.f32 0.0, %v8252
      %v8254 = vpop.f32.mrb[0].mxu0
      %v8255 = vpop.f32.mrb[0].mxu0
      %v8256 = vadd.f32 0.0, %v8255
      %v8257 = vpop.f32.mrb[0].mxu0
      %8258 = vmatprep.mubr.bf16.mxu0 0
      %8259 = vmatmul.mubr.bf16.gmra.mrb[0].mxu0 %v8126
      %v8260 = vpop.f32.mrb[0].mxu0
      %v8261 = vadd.f32 0.0, %v8260
      %v8262 = vpop.f32.mrb[0].mxu0
      %v8263 = vpop.f32.mrb[0].mxu0
      %v8264 = vadd.f32 0.0, %v8263
      %v8265 = vpop.f32.mrb[0].mxu0
      %8266 = vmatprep.mubr.bf16.mxu0 0
      %8267 = vmatmul.mubr.bf16.gmra.mrb[0].mxu0 %v8129
      %v8268 = vpop.f32.mrb[0].mxu0
      %v8269 = vadd.f32 0.0, %v8268
      %v8270 = vpop.f32.mrb[0].mxu0
      %v8271 = vpop.f32.mrb[0].mxu0
      %v8272 = vadd.f32 0.0, %v8271
      %v8273 = vpop.f32.mrb[0].mxu0
      %8274 = vmatprep.mubr.bf16.mxu0 0
      %8275 = vmatmul.mubr.bf16.gmra.mrb[0].mxu0 %v8132
      %v8276 = vpop.f32.mrb[0].mxu0
      %v8277 = vadd.f32 0.0, %v8276
      %v8278 = vpop.f32.mrb[0].mxu0
      %v8279 = vpop.f32.mrb[0].mxu0
      %v8280 = vadd.f32 0.0, %v8279
      %v8281 = vpop.f32.mrb[0].mxu0
      %8282 = vmatprep.mubr.bf16.mxu0 0
      %8283 = vmatmul.mubr.bf16.gmra.mrb[0].mxu0 %v8135
      %v8284 = vpop.f32.mrb[0].mxu0
      %v8285 = vadd.f32 0.0, %v8284
      %v8286 = vpop.f32.mrb[0].mxu0
      %v8287 = vpop.f32.mrb[0].mxu0
      %v8288 = vadd.f32 0.0, %v8287
      %v8289 = vpop.f32.mrb[0].mxu0
      %8290 = vmatprep.mubr.bf16.mxu0 0
      %8291 = vmatmul.mubr.bf16.gmra.mrb[0].mxu0 %v8138
      %v8292 = vpop.f32.mrb[0].mxu0
      %v8293 = vadd.f32 0.0, %v8292
      %v8294 = vpop.f32.mrb[0].mxu0
      %v8295 = vpop.f32.mrb[0].mxu0
      %v8296 = vadd.f32 0.0, %v8295
      %v8297 = vpop.f32.mrb[0].mxu0
      %8298 = vmatprep.mubr.bf16.mxu0 0
      %8299 = vmatmul.mubr.bf16.gmra.mrb[0].mxu0 %v8141
      %v8300 = vpop.f32.mrb[0].mxu0
      %v8301 = vadd.f32 0.0, %v8300
      %v8302 = vpop.f32.mrb[0].mxu0
      %v8303 = vpop.f32.mrb[0].mxu0
      %v8304 = vadd.f32 0.0, %v8303
      %v8305 = vpop.f32.mrb[0].mxu0
      %8306 = vdwg.mxu0
      %v8307 = vadd.f32 %v7949, %v8181
      %v8308 = vadd.f32 %v7950, %v8184
      %v8309 = vadd.f32 %v7951, %v8189
      %v8310 = vadd.f32 %v7952, %v8192
      %v8311 = vadd.f32 %v7953, %v8197
      %v8312 = vadd.f32 %v7954, %v8200
      %v8313 = vadd.f32 %v7955, %v8205
      %v8314 = vadd.f32 %v7956, %v8208
      %v8315 = vadd.f32 %v7957, %v8213
      %v8316 = vadd.f32 %v7958, %v8216
      %v8317 = vadd.f32 %v7959, %v8221
      %v8318 = vadd.f32 %v7960, %v8224
      %v8319 = vadd.f32 %v7961, %v8229
      %v8320 = vadd.f32 %v7962, %v8232
      %v8321 = vadd.f32 %v7963, %v8237
      %v8322 = vadd.f32 %v7964, %v8240
      %v8323 = vadd.f32 %v7965, %v8245
      %v8324 = vadd.f32 %v7966, %v8248
      %v8325 = vadd.f32 %v7967, %v8253
      %v8326 = vadd.f32 %v7968, %v8256
      %v8327 = vadd.f32 %v7969, %v8261
      %v8328 = vadd.f32 %v7970, %v8264
      %v8329 = vadd.f32 %v7971, %v8269
      %v8330 = vadd.f32 %v7972, %v8272
      %v8331 = vadd.f32 %v7973, %v8277
      %v8332 = vadd.f32 %v7974, %v8280
      %v8333 = vadd.f32 %v7975, %v8285
      %v8334 = vadd.f32 %v7976, %v8288
      %v8335 = vadd.f32 %v7977, %v8293
      %v8336 = vadd.f32 %v7978, %v8296
      %v8337 = vadd.f32 %v7979, %v8301
      %v8338 = vadd.f32 %v7980, %v8304
      %v8339 = vld [vmem:[%s6208] sm:$0xf]
      %v8340 = vld [vmem:[%s6208 + $0x4] sm:$0xf]
      %v8341 = vld [vmem:[%s6208 + $0x8] sm:$0x1]
      %v8342 = vld [vmem:[%s6208 + $0xc] sm:$0xf]
      %v8343 = vld [vmem:[%s6208 + $0x10] sm:$0xf]
      %v8344 = vld [vmem:[%s6208 + $0x14] sm:$0x1]
      %v8345 = vld [vmem:[%s6208 + $0x18] sm:$0xf]
      %v8346 = vld [vmem:[%s6208 + $0x1c] sm:$0xf]
      %v8347 = vld [vmem:[%s6208 + $0x20] sm:$0x1]
      %v8348 = vld [vmem:[%s6208 + $0x24] sm:$0xf]
      %v8349 = vld [vmem:[%s6208 + $0x28] sm:$0xf]
      %v8350 = vld [vmem:[%s6208 + $0x2c] sm:$0x1]
      %v8351 = vld [vmem:[%s6208 + $0x30] sm:$0xf]
      %v8352 = vld [vmem:[%s6208 + $0x34] sm:$0xf]
      %v8353 = vld [vmem:[%s6208 + $0x38] sm:$0x1]
      %v8354 = vld [vmem:[%s6208 + $0x3c] sm:$0xf]
      %v8355 = vld [vmem:[%s6208 + $0x40] sm:$0xf]
      %v8356 = vld [vmem:[%s6208 + $0x44] sm:$0x1]
      %v8357 = vld [vmem:[%s6208 + $0x48] sm:$0xf]
      %v8358 = vld [vmem:[%s6208 + $0x4c] sm:$0xf]
      %v8359 = vld [vmem:[%s6208 + $0x50] sm:$0x1]
      %v8360 = vld [vmem:[%s6208 + $0x54] sm:$0xf]
      %v8361 = vld [vmem:[%s6208 + $0x58] sm:$0xf]
      %v8362 = vld [vmem:[%s6208 + $0x5c] sm:$0x1]
      %v8363 = vld [vmem:[%s6208 + $0x60] sm:$0xf]
      %v8364 = vld [vmem:[%s6208 + $0x64] sm:$0xf]
      %v8365 = vld [vmem:[%s6208 + $0x68] sm:$0x1]
      %v8366 = vld [vmem:[%s6208 + $0x6c] sm:$0xf]
      %v8367 = vld [vmem:[%s6208 + $0x70] sm:$0xf]
      %v8368 = vld [vmem:[%s6208 + $0x74] sm:$0x1]
      %v8369 = vld [vmem:[%s6208 + $0x78] sm:$0xf]
      %v8370 = vld [vmem:[%s6208 + $0x7c] sm:$0xf]
      %v8371 = vld [vmem:[%s6208 + $0x80] sm:$0x1]
      %v8372 = vld [vmem:[%s6208 + $0x84] sm:$0xf]
      %v8373 = vld [vmem:[%s6208 + $0x88] sm:$0xf]
      %v8374 = vld [vmem:[%s6208 + $0x8c] sm:$0x1]
      %v8375 = vld [vmem:[%s6208 + $0x90] sm:$0xf]
      %v8376 = vld [vmem:[%s6208 + $0x94] sm:$0xf]
      %v8377 = vld [vmem:[%s6208 + $0x98] sm:$0x1]
      %v8378 = vld [vmem:[%s6208 + $0x9c] sm:$0xf]
      %v8379 = vld [vmem:[%s6208 + $0xa0] sm:$0xf]
      %v8380 = vld [vmem:[%s6208 + $0xa4] sm:$0x1]
      %v8381 = vld [vmem:[%s6208 + $0xa8] sm:$0xf]
      %v8382 = vld [vmem:[%s6208 + $0xac] sm:$0xf]
      %v8383 = vld [vmem:[%s6208 + $0xb0] sm:$0x1]
      %v8384 = vld [vmem:[%s6208 + $0xb4] sm:$0xf]
      %v8385 = vld [vmem:[%s6208 + $0xb8] sm:$0xf]
      %v8386 = vld [vmem:[%s6208 + $0xbc] sm:$0x1]
      %v8388 = vshrl.u32 %v8339, 16
      %v8390 = vrot.slane %v8388, 4
      %v8391 = vshll.u32 %v8339, 16
      %v8393 = vrot.slane %v8391, 5
      %v8394 = vor.u32 %v8390, %v8393
      %v8395 = vrot.slane %v8394, 4
      %v8397 = vshll.u32 %v8340, 16
      %v8399 = vrot.slane %v8397, 5
      %v8400 = vsel %vm1013, %v8395, %v8399
      %v8401 = vshrl.u32 %v8340, 16
      %v8403 = vrot.slane %v8401, 4
      %v8404 = vor.u32 %v8403, %v8399
      %v8405 = vrot.slane %v8404, 4
      %v8407 = vshll.u32 %v8341, 16
      %v8409 = vrot.slane %v8407, 5
      %v8410 = vsel %vm1013, %v8405, %v8409
      %v8412 = vshrl.u32 %v8342, 16
      %v8414 = vrot.slane %v8412, 4
      %v8415 = vshll.u32 %v8342, 16
      %v8417 = vrot.slane %v8415, 5
      %v8418 = vor.u32 %v8414, %v8417
      %v8419 = vrot.slane %v8418, 4
      %v8421 = vshll.u32 %v8343, 16
      %v8423 = vrot.slane %v8421, 5
      %v8424 = vsel %vm1013, %v8419, %v8423
      %v8425 = vshrl.u32 %v8343, 16
      %v8427 = vrot.slane %v8425, 4
      %v8428 = vor.u32 %v8427, %v8423
      %v8429 = vrot.slane %v8428, 4
      %v8431 = vshll.u32 %v8344, 16
      %v8433 = vrot.slane %v8431, 5
      %v8434 = vsel %vm1013, %v8429, %v8433
      %v8436 = vshrl.u32 %v8345, 16
      %v8438 = vrot.slane %v8436, 4
      %v8439 = vshll.u32 %v8345, 16
      %v8441 = vrot.slane %v8439, 5
      %v8442 = vor.u32 %v8438, %v8441
      %v8443 = vrot.slane %v8442, 4
      %v8445 = vshll.u32 %v8346, 16
      %v8447 = vrot.slane %v8445, 5
      %v8448 = vsel %vm1013, %v8443, %v8447
      %v8449 = vshrl.u32 %v8346, 16
      %v8451 = vrot.slane %v8449, 4
      %v8452 = vor.u32 %v8451, %v8447
      %v8453 = vrot.slane %v8452, 4
      %v8455 = vshll.u32 %v8347, 16
      %v8457 = vrot.slane %v8455, 5
      %v8458 = vsel %vm1013, %v8453, %v8457
      %v8460 = vshrl.u32 %v8348, 16
      %v8462 = vrot.slane %v8460, 4
      %v8463 = vshll.u32 %v8348, 16
      %v8465 = vrot.slane %v8463, 5
      %v8466 = vor.u32 %v8462, %v8465
      %v8467 = vrot.slane %v8466, 4
      %v8469 = vshll.u32 %v8349, 16
      %v8471 = vrot.slane %v8469, 5
      %v8472 = vsel %vm1013, %v8467, %v8471
      %v8473 = vshrl.u32 %v8349, 16
      %v8475 = vrot.slane %v8473, 4
      %v8476 = vor.u32 %v8475, %v8471
      %v8477 = vrot.slane %v8476, 4
      %v8479 = vshll.u32 %v8350, 16
      %v8481 = vrot.slane %v8479, 5
      %v8482 = vsel %vm1013, %v8477, %v8481
      %v8484 = vshrl.u32 %v8351, 16
      %v8486 = vrot.slane %v8484, 4
      %v8487 = vshll.u32 %v8351, 16
      %v8489 = vrot.slane %v8487, 5
      %v8490 = vor.u32 %v8486, %v8489
      %v8491 = vrot.slane %v8490, 4
      %v8493 = vshll.u32 %v8352, 16
      %v8495 = vrot.slane %v8493, 5
      %v8496 = vsel %vm1013, %v8491, %v8495
      %v8497 = vshrl.u32 %v8352, 16
      %v8499 = vrot.slane %v8497, 4
      %v8500 = vor.u32 %v8499, %v8495
      %v8501 = vrot.slane %v8500, 4
      %v8503 = vshll.u32 %v8353, 16
      %v8505 = vrot.slane %v8503, 5
      %v8506 = vsel %vm1013, %v8501, %v8505
      %v8508 = vshrl.u32 %v8354, 16
      %v8510 = vrot.slane %v8508, 4
      %v8511 = vshll.u32 %v8354, 16
      %v8513 = vrot.slane %v8511, 5
      %v8514 = vor.u32 %v8510, %v8513
      %v8515 = vrot.slane %v8514, 4
      %v8517 = vshll.u32 %v8355, 16
      %v8519 = vrot.slane %v8517, 5
      %v8520 = vsel %vm1013, %v8515, %v8519
      %v8521 = vshrl.u32 %v8355, 16
      %v8523 = vrot.slane %v8521, 4
      %v8524 = vor.u32 %v8523, %v8519
      %v8525 = vrot.slane %v8524, 4
      %v8527 = vshll.u32 %v8356, 16
      %v8529 = vrot.slane %v8527, 5
      %v8530 = vsel %vm1013, %v8525, %v8529
      %v8532 = vshrl.u32 %v8357, 16
      %v8534 = vrot.slane %v8532, 4
      %v8535 = vshll.u32 %v8357, 16
      %v8537 = vrot.slane %v8535, 5
      %v8538 = vor.u32 %v8534, %v8537
      %v8539 = vrot.slane %v8538, 4
      %v8541 = vshll.u32 %v8358, 16
      %v8543 = vrot.slane %v8541, 5
      %v8544 = vsel %vm1013, %v8539, %v8543
      %v8545 = vshrl.u32 %v8358, 16
      %v8547 = vrot.slane %v8545, 4
      %v8548 = vor.u32 %v8547, %v8543
      %v8549 = vrot.slane %v8548, 4
      %v8551 = vshll.u32 %v8359, 16
      %v8553 = vrot.slane %v8551, 5
      %v8554 = vsel %vm1013, %v8549, %v8553
      %v8556 = vshrl.u32 %v8360, 16
      %v8558 = vrot.slane %v8556, 4
      %v8559 = vshll.u32 %v8360, 16
      %v8561 = vrot.slane %v8559, 5
      %v8562 = vor.u32 %v8558, %v8561
      %v8563 = vrot.slane %v8562, 4
      %v8565 = vshll.u32 %v8361, 16
      %v8567 = vrot.slane %v8565, 5
      %v8568 = vsel %vm1013, %v8563, %v8567
      %v8569 = vshrl.u32 %v8361, 16
      %v8571 = vrot.slane %v8569, 4
      %v8572 = vor.u32 %v8571, %v8567
      %v8573 = vrot.slane %v8572, 4
      %v8575 = vshll.u32 %v8362, 16
      %v8577 = vrot.slane %v8575, 5
      %v8578 = vsel %vm1013, %v8573, %v8577
      %v8580 = vshrl.u32 %v8363, 16
      %v8582 = vrot.slane %v8580, 4
      %v8583 = vshll.u32 %v8363, 16
      %v8585 = vrot.slane %v8583, 5
      %v8586 = vor.u32 %v8582, %v8585
      %v8587 = vrot.slane %v8586, 4
      %v8589 = vshll.u32 %v8364, 16
      %v8591 = vrot.slane %v8589, 5
      %v8592 = vsel %vm1013, %v8587, %v8591
      %v8593 = vshrl.u32 %v8364, 16
      %v8595 = vrot.slane %v8593, 4
      %v8596 = vor.u32 %v8595, %v8591
      %v8597 = vrot.slane %v8596, 4
      %v8599 = vshll.u32 %v8365, 16
      %v8601 = vrot.slane %v8599, 5
      %v8602 = vsel %vm1013, %v8597, %v8601
      %v8604 = vshrl.u32 %v8366, 16
      %v8606 = vrot.slane %v8604, 4
      %v8607 = vshll.u32 %v8366, 16
      %v8609 = vrot.slane %v8607, 5
      %v8610 = vor.u32 %v8606, %v8609
      %v8611 = vrot.slane %v8610, 4
      %v8613 = vshll.u32 %v8367, 16
      %v8615 = vrot.slane %v8613, 5
      %v8616 = vsel %vm1013, %v8611, %v8615
      %v8617 = vshrl.u32 %v8367, 16
      %v8619 = vrot.slane %v8617, 4
      %v8620 = vor.u32 %v8619, %v8615
      %v8621 = vrot.slane %v8620, 4
      %v8623 = vshll.u32 %v8368, 16
      %v8625 = vrot.slane %v8623, 5
      %v8626 = vsel %vm1013, %v8621, %v8625
      %v8628 = vshrl.u32 %v8369, 16
      %v8630 = vrot.slane %v8628, 4
      %v8631 = vshll.u32 %v8369, 16
      %v8633 = vrot.slane %v8631, 5
      %v8634 = vor.u32 %v8630, %v8633
      %v8635 = vrot.slane %v8634, 4
      %v8637 = vshll.u32 %v8370, 16
      %v8639 = vrot.slane %v8637, 5
      %v8640 = vsel %vm1013, %v8635, %v8639
      %v8641 = vshrl.u32 %v8370, 16
      %v8643 = vrot.slane %v8641, 4
      %v8644 = vor.u32 %v8643, %v8639
      %v8645 = vrot.slane %v8644, 4
      %v8647 = vshll.u32 %v8371, 16
      %v8649 = vrot.slane %v8647, 5
      %v8650 = vsel %vm1013, %v8645, %v8649
      %v8652 = vshrl.u32 %v8372, 16
      %v8654 = vrot.slane %v8652, 4
      %v8655 = vshll.u32 %v8372, 16
      %v8657 = vrot.slane %v8655, 5
      %v8658 = vor.u32 %v8654, %v8657
      %v8659 = vrot.slane %v8658, 4
      %v8661 = vshll.u32 %v8373, 16
      %v8663 = vrot.slane %v8661, 5
      %v8664 = vsel %vm1013, %v8659, %v8663
      %v8665 = vshrl.u32 %v8373, 16
      %v8667 = vrot.slane %v8665, 4
      %v8668 = vor.u32 %v8667, %v8663
      %v8669 = vrot.slane %v8668, 4
      %v8671 = vshll.u32 %v8374, 16
      %v8673 = vrot.slane %v8671, 5
      %v8674 = vsel %vm1013, %v8669, %v8673
      %v8676 = vshrl.u32 %v8375, 16
      %v8678 = vrot.slane %v8676, 4
      %v8679 = vshll.u32 %v8375, 16
      %v8681 = vrot.slane %v8679, 5
      %v8682 = vor.u32 %v8678, %v8681
      %v8683 = vrot.slane %v8682, 4
      %v8685 = vshll.u32 %v8376, 16
      %v8687 = vrot.slane %v8685, 5
      %v8688 = vsel %vm1013, %v8683, %v8687
      %v8689 = vshrl.u32 %v8376, 16
      %v8691 = vrot.slane %v8689, 4
      %v8692 = vor.u32 %v8691, %v8687
      %v8693 = vrot.slane %v8692, 4
      %v8695 = vshll.u32 %v8377, 16
      %v8697 = vrot.slane %v8695, 5
      %v8698 = vsel %vm1013, %v8693, %v8697
      %v8700 = vshrl.u32 %v8378, 16
      %v8702 = vrot.slane %v8700, 4
      %v8703 = vshll.u32 %v8378, 16
      %v8705 = vrot.slane %v8703, 5
      %v8706 = vor.u32 %v8702, %v8705
      %v8707 = vrot.slane %v8706, 4
      %v8709 = vshll.u32 %v8379, 16
      %v8711 = vrot.slane %v8709, 5
      %v8712 = vsel %vm1013, %v8707, %v8711
      %v8713 = vshrl.u32 %v8379, 16
      %v8715 = vrot.slane %v8713, 4
      %v8716 = vor.u32 %v8715, %v8711
      %v8717 = vrot.slane %v8716, 4
      %v8719 = vshll.u32 %v8380, 16
      %v8721 = vrot.slane %v8719, 5
      %v8722 = vsel %vm1013, %v8717, %v8721
      %v8724 = vshrl.u32 %v8381, 16
      %v8726 = vrot.slane %v8724, 4
      %v8727 = vshll.u32 %v8381, 16
      %v8729 = vrot.slane %v8727, 5
      %v8730 = vor.u32 %v8726, %v8729
      %v8731 = vrot.slane %v8730, 4
      %v8733 = vshll.u32 %v8382, 16
      %v8735 = vrot.slane %v8733, 5
      %v8736 = vsel %vm1013, %v8731, %v8735
      %v8737 = vshrl.u32 %v8382, 16
      %v8739 = vrot.slane %v8737, 4
      %v8740 = vor.u32 %v8739, %v8735
      %v8741 = vrot.slane %v8740, 4
      %v8743 = vshll.u32 %v8383, 16
      %v8745 = vrot.slane %v8743, 5
      %v8746 = vsel %vm1013, %v8741, %v8745
      %v8748 = vshrl.u32 %v8384, 16
      %v8750 = vrot.slane %v8748, 4
      %v8751 = vshll.u32 %v8384, 16
      %v8753 = vrot.slane %v8751, 5
      %v8754 = vor.u32 %v8750, %v8753
      %v8755 = vrot.slane %v8754, 4
      %v8757 = vshll.u32 %v8385, 16
      %v8759 = vrot.slane %v8757, 5
      %v8760 = vsel %vm1013, %v8755, %v8759
      %v8761 = vshrl.u32 %v8385, 16
      %v8763 = vrot.slane %v8761, 4
      %v8764 = vor.u32 %v8763, %v8759
      %v8765 = vrot.slane %v8764, 4
      %v8767 = vshll.u32 %v8386, 16
      %v8769 = vrot.slane %v8767, 5
      %v8770 = vsel %vm1013, %v8765, %v8769
      %s8771 = scalar_lea.vmem %s2, 16
      %v8772 = vld [vmem:[%s8771] sm:$0xf]
      %v8773 = vunpack.c.l.b16 %v8400
      %v8774 = vunpack.c.l.b16 %v8410
      %v8775 = vunpack.c.l.b16 %v8424
      %v8776 = vunpack.c.l.b16 %v8434
      %v8777 = vunpack.c.l.b16 %v8448
      %v8778 = vunpack.c.l.b16 %v8458
      %v8779 = vunpack.c.l.b16 %v8472
      %v8780 = vunpack.c.l.b16 %v8482
      %v8781 = vunpack.c.l.b16 %v8496
      %v8782 = vunpack.c.l.b16 %v8506
      %v8783 = vunpack.c.l.b16 %v8520
      %v8784 = vunpack.c.l.b16 %v8530
      %v8785 = vunpack.c.l.b16 %v8544
      %v8786 = vunpack.c.l.b16 %v8554
      %v8787 = vunpack.c.l.b16 %v8568
      %v8788 = vunpack.c.l.b16 %v8578
      %v8789 = vunpack.c.l.b16 %v8592
      %v8790 = vunpack.c.l.b16 %v8602
      %v8791 = vunpack.c.l.b16 %v8616
      %v8792 = vunpack.c.l.b16 %v8626
      %v8793 = vunpack.c.l.b16 %v8640
      %v8794 = vunpack.c.l.b16 %v8650
      %v8795 = vunpack.c.l.b16 %v8664
      %v8796 = vunpack.c.l.b16 %v8674
      %v8797 = vunpack.c.l.b16 %v8688
      %v8798 = vunpack.c.l.b16 %v8698
      %v8799 = vunpack.c.l.b16 %v8712
      %v8800 = vunpack.c.l.b16 %v8722
      %v8801 = vunpack.c.l.b16 %v8736
      %v8802 = vunpack.c.l.b16 %v8746
      %v8803 = vunpack.c.l.b16 %v8760
      %v8804 = vunpack.c.l.b16 %v8770
      %v8805 = vpack.c.b16 %v8774, %v8773
      %v8806 = vpack.c.b16 %v8776, %v8775
      %v8807 = vpack.c.b16 %v8778, %v8777
      %v8808 = vpack.c.b16 %v8780, %v8779
      %v8809 = vpack.c.b16 %v8782, %v8781
      %v8810 = vpack.c.b16 %v8784, %v8783
      %v8811 = vpack.c.b16 %v8786, %v8785
      %v8812 = vpack.c.b16 %v8788, %v8787
      %v8813 = vpack.c.b16 %v8790, %v8789
      %v8814 = vpack.c.b16 %v8792, %v8791
      %v8815 = vpack.c.b16 %v8794, %v8793
      %v8816 = vpack.c.b16 %v8796, %v8795
      %v8817 = vpack.c.b16 %v8798, %v8797
      %v8818 = vpack.c.b16 %v8800, %v8799
      %v8819 = vpack.c.b16 %v8802, %v8801
      %v8820 = vpack.c.b16 %v8804, %v8803
      %v8822 = vsel %vm1448, %v8805, 0
      %v8825 = vsel %vm1448, %v8806, 0
      %v8828 = vsel %vm1448, %v8807, 0
      %v8831 = vsel %vm1448, %v8808, 0
      %v8834 = vsel %vm1448, %v8809, 0
      %v8837 = vsel %vm1448, %v8810, 0
      %v8840 = vsel %vm1448, %v8811, 0
      %v8843 = vsel %vm1448, %v8812, 0
      %v8846 = vsel %vm1448, %v8813, 0
      %v8849 = vsel %vm1448, %v8814, 0
      %v8852 = vsel %vm1448, %v8815, 0
      %v8855 = vsel %vm1448, %v8816, 0
      %v8858 = vsel %vm1448, %v8817, 0
      %v8861 = vsel %vm1448, %v8818, 0
      %v8864 = vsel %vm1448, %v8819, 0
      %v8867 = vsel %vm1448, %v8820, 0
      %v8870 = vsel %vm1497, %v8772, 0
      %8872 = vmatprep.subr.bf16.mxu0 0
      %8873 = vmatpush1.bf16.msra.mxu0 %v8870
      %8874 = vmatprep.subr.bf16.mxu0 0
      %8875 = vmatpush1.bf16.msra.mxu0 0
      %8876 = vmatprep.subr.bf16.mxu0 0
      %8877 = vmatpush1.bf16.msra.mxu0 0
      %8878 = vmatprep.subr.bf16.mxu0 0
      %8879 = vmatpush1.bf16.msra.mxu0 0
      %8880 = vmatprep.subr.bf16.mxu0 0
      %8881 = vmatpush1.bf16.msra.mxu0 0
      %8882 = vmatprep.subr.bf16.mxu0 0
      %8883 = vmatpush1.bf16.msra.mxu0 0
      %8884 = vmatprep.subr.bf16.mxu0 0
      %8885 = vmatpush1.bf16.msra.mxu0 0
      %8886 = vmatprep.subr.bf16.mxu0 0
      %8887 = vmatpush1.bf16.msra.mxu0 0
      %8888 = vmatprep.subr.bf16.mxu0 0
      %8889 = vmatpush1.bf16.msra.mxu0 0
      %8890 = vmatprep.subr.bf16.mxu0 0
      %8891 = vmatpush1.bf16.msra.mxu0 0
      %8892 = vmatprep.subr.bf16.mxu0 0
      %8893 = vmatpush1.bf16.msra.mxu0 0
      %8894 = vmatprep.subr.bf16.mxu0 0
      %8895 = vmatpush1.bf16.msra.mxu0 0
      %8896 = vmatprep.subr.bf16.mxu0 0
      %8897 = vmatpush1.bf16.msra.mxu0 0
      %8898 = vmatprep.subr.bf16.mxu0 0
      %8899 = vmatpush1.bf16.msra.mxu0 0
      %8900 = vmatprep.subr.bf16.mxu0 0
      %8901 = vmatpush1.bf16.msra.mxu0 0
      %8902 = vmatprep.subr.bf16.mxu0 0
      %8903 = vmatpush1.bf16.msra.mxu0 0
      %8904 = vmatprep.mubr.bf16.mxu0 0
      %8905 = vmatmul.mubr.bf16.gmra.mrb[0].mxu0 %v8822
      %v8906 = vpop.f32.mrb[0].mxu0
      %v8907 = vadd.f32 0.0, %v8906
      %v8908 = vpop.f32.mrb[0].mxu0
      %v8909 = vpop.f32.mrb[0].mxu0
      %v8910 = vadd.f32 0.0, %v8909
      %v8911 = vpop.f32.mrb[0].mxu0
      %8912 = vmatprep.mubr.bf16.mxu0 0
      %8913 = vmatmul.mubr.bf16.gmra.mrb[0].mxu0 %v8825
      %v8914 = vpop.f32.mrb[0].mxu0
      %v8915 = vadd.f32 0.0, %v8914
      %v8916 = vpop.f32.mrb[0].mxu0
      %v8917 = vpop.f32.mrb[0].mxu0
      %v8918 = vadd.f32 0.0, %v8917
      %v8919 = vpop.f32.mrb[0].mxu0
      %8920 = vmatprep.mubr.bf16.mxu0 0
      %8921 = vmatmul.mubr.bf16.gmra.mrb[0].mxu0 %v8828
      %v8922 = vpop.f32.mrb[0].mxu0
      %v8923 = vadd.f32 0.0, %v8922
      %v8924 = vpop.f32.mrb[0].mxu0
      %v8925 = vpop.f32.mrb[0].mxu0
      %v8926 = vadd.f32 0.0, %v8925
      %v8927 = vpop.f32.mrb[0].mxu0
      %8928 = vmatprep.mubr.bf16.mxu0 0
      %8929 = vmatmul.mubr.bf16.gmra.mrb[0].mxu0 %v8831
      %v8930 = vpop.f32.mrb[0].mxu0
      %v8931 = vadd.f32 0.0, %v8930
      %v8932 = vpop.f32.mrb[0].mxu0
      %v8933 = vpop.f32.mrb[0].mxu0
      %v8934 = vadd.f32 0.0, %v8933
      %v8935 = vpop.f32.mrb[0].mxu0
      %8936 = vmatprep.mubr.bf16.mxu0 0
      %8937 = vmatmul.mubr.bf16.gmra.mrb[0].mxu0 %v8834
      %v8938 = vpop.f32.mrb[0].mxu0
      %v8939 = vadd.f32 0.0, %v8938
      %v8940 = vpop.f32.mrb[0].mxu0
      %v8941 = vpop.f32.mrb[0].mxu0
      %v8942 = vadd.f32 0.0, %v8941
      %v8943 = vpop.f32.mrb[0].mxu0
      %8944 = vmatprep.mubr.bf16.mxu0 0
      %8945 = vmatmul.mubr.bf16.gmra.mrb[0].mxu0 %v8837
      %v8946 = vpop.f32.mrb[0].mxu0
      %v8947 = vadd.f32 0.0, %v8946
      %v8948 = vpop.f32.mrb[0].mxu0
      %v8949 = vpop.f32.mrb[0].mxu0
      %v8950 = vadd.f32 0.0, %v8949
      %v8951 = vpop.f32.mrb[0].mxu0
      %8952 = vmatprep.mubr.bf16.mxu0 0
      %8953 = vmatmul.mubr.bf16.gmra.mrb[0].mxu0 %v8840
      %v8954 = vpop.f32.mrb[0].mxu0
      %v8955 = vadd.f32 0.0, %v8954
      %v8956 = vpop.f32.mrb[0].mxu0
      %v8957 = vpop.f32.mrb[0].mxu0
      %v8958 = vadd.f32 0.0, %v8957
      %v8959 = vpop.f32.mrb[0].mxu0
      %8960 = vmatprep.mubr.bf16.mxu0 0
      %8961 = vmatmul.mubr.bf16.gmra.mrb[0].mxu0 %v8843
      %v8962 = vpop.f32.mrb[0].mxu0
      %v8963 = vadd.f32 0.0, %v8962
      %v8964 = vpop.f32.mrb[0].mxu0
      %v8965 = vpop.f32.mrb[0].mxu0
      %v8966 = vadd.f32 0.0, %v8965
      %v8967 = vpop.f32.mrb[0].mxu0
      %8968 = vmatprep.mubr.bf16.mxu0 0
      %8969 = vmatmul.mubr.bf16.gmra.mrb[0].mxu0 %v8846
      %v8970 = vpop.f32.mrb[0].mxu0
      %v8971 = vadd.f32 0.0, %v8970
      %v8972 = vpop.f32.mrb[0].mxu0
      %v8973 = vpop.f32.mrb[0].mxu0
      %v8974 = vadd.f32 0.0, %v8973
      %v8975 = vpop.f32.mrb[0].mxu0
      %8976 = vmatprep.mubr.bf16.mxu0 0
      %8977 = vmatmul.mubr.bf16.gmra.mrb[0].mxu0 %v8849
      %v8978 = vpop.f32.mrb[0].mxu0
      %v8979 = vadd.f32 0.0, %v8978
      %v8980 = vpop.f32.mrb[0].mxu0
      %v8981 = vpop.f32.mrb[0].mxu0
      %v8982 = vadd.f32 0.0, %v8981
      %v8983 = vpop.f32.mrb[0].mxu0
      %8984 = vmatprep.mubr.bf16.mxu0 0
      %8985 = vmatmul.mubr.bf16.gmra.mrb[0].mxu0 %v8852
      %v8986 = vpop.f32.mrb[0].mxu0
      %v8987 = vadd.f32 0.0, %v8986
      %v8988 = vpop.f32.mrb[0].mxu0
      %v8989 = vpop.f32.mrb[0].mxu0
      %v8990 = vadd.f32 0.0, %v8989
      %v8991 = vpop.f32.mrb[0].mxu0
      %8992 = vmatprep.mubr.bf16.mxu0 0
      %8993 = vmatmul.mubr.bf16.gmra.mrb[0].mxu0 %v8855
      %v8994 = vpop.f32.mrb[0].mxu0
      %v8995 = vadd.f32 0.0, %v8994
      %v8996 = vpop.f32.mrb[0].mxu0
      %v8997 = vpop.f32.mrb[0].mxu0
      %v8998 = vadd.f32 0.0, %v8997
      %v8999 = vpop.f32.mrb[0].mxu0
      %9000 = vmatprep.mubr.bf16.mxu0 0
      %9001 = vmatmul.mubr.bf16.gmra.mrb[0].mxu0 %v8858
      %v9002 = vpop.f32.mrb[0].mxu0
      %v9003 = vadd.f32 0.0, %v9002
      %v9004 = vpop.f32.mrb[0].mxu0
      %v9005 = vpop.f32.mrb[0].mxu0
      %v9006 = vadd.f32 0.0, %v9005
      %v9007 = vpop.f32.mrb[0].mxu0
      %9008 = vmatprep.mubr.bf16.mxu0 0
      %9009 = vmatmul.mubr.bf16.gmra.mrb[0].mxu0 %v8861
      %v9010 = vpop.f32.mrb[0].mxu0
      %v9011 = vadd.f32 0.0, %v9010
      %v9012 = vpop.f32.mrb[0].mxu0
      %v9013 = vpop.f32.mrb[0].mxu0
      %v9014 = vadd.f32 0.0, %v9013
      %v9015 = vpop.f32.mrb[0].mxu0
      %9016 = vmatprep.mubr.bf16.mxu0 0
      %9017 = vmatmul.mubr.bf16.gmra.mrb[0].mxu0 %v8864
      %v9018 = vpop.f32.mrb[0].mxu0
      %v9019 = vadd.f32 0.0, %v9018
      %v9020 = vpop.f32.mrb[0].mxu0
      %v9021 = vpop.f32.mrb[0].mxu0
      %v9022 = vadd.f32 0.0, %v9021
      %v9023 = vpop.f32.mrb[0].mxu0
      %9024 = vmatprep.mubr.bf16.mxu0 0
      %9025 = vmatmul.mubr.bf16.gmra.mrb[0].mxu0 %v8867
      %v9026 = vpop.f32.mrb[0].mxu0
      %v9027 = vadd.f32 0.0, %v9026
      %v9028 = vpop.f32.mrb[0].mxu0
      %v9029 = vpop.f32.mrb[0].mxu0
      %v9030 = vadd.f32 0.0, %v9029
      %v9031 = vpop.f32.mrb[0].mxu0
      %9032 = vdwg.mxu0
      %v9033 = vadd.f32 %v8307, %v8907
      %v9034 = vadd.f32 %v8308, %v8910
      %v9035 = vadd.f32 %v8309, %v8915
      %v9036 = vadd.f32 %v8310, %v8918
      %v9037 = vadd.f32 %v8311, %v8923
      %v9038 = vadd.f32 %v8312, %v8926
      %v9039 = vadd.f32 %v8313, %v8931
      %v9040 = vadd.f32 %v8314, %v8934
      %v9041 = vadd.f32 %v8315, %v8939
      %v9042 = vadd.f32 %v8316, %v8942
      %v9043 = vadd.f32 %v8317, %v8947
      %v9044 = vadd.f32 %v8318, %v8950
      %v9045 = vadd.f32 %v8319, %v8955
      %v9046 = vadd.f32 %v8320, %v8958
      %v9047 = vadd.f32 %v8321, %v8963
      %v9048 = vadd.f32 %v8322, %v8966
      %v9049 = vadd.f32 %v8323, %v8971
      %v9050 = vadd.f32 %v8324, %v8974
      %v9051 = vadd.f32 %v8325, %v8979
      %v9052 = vadd.f32 %v8326, %v8982
      %v9053 = vadd.f32 %v8327, %v8987
      %v9054 = vadd.f32 %v8328, %v8990
      %v9055 = vadd.f32 %v8329, %v8995
      %v9056 = vadd.f32 %v8330, %v8998
      %v9057 = vadd.f32 %v8331, %v9003
      %v9058 = vadd.f32 %v8332, %v9006
      %v9059 = vadd.f32 %v8333, %v9011
      %v9060 = vadd.f32 %v8334, %v9014
      %v9061 = vadd.f32 %v8335, %v9019
      %v9062 = vadd.f32 %v8336, %v9022
      %v9063 = vadd.f32 %v8337, %v9027
      %v9064 = vadd.f32 %v8338, %v9030
      %v9065 = vld [vmem:[%s6208] sm:$0xe]
      %v9066 = vld [vmem:[%s6208 + $0xc] sm:$0xe]
      %v9067 = vld [vmem:[%s6208 + $0x18] sm:$0xe]
      %v9068 = vld [vmem:[%s6208 + $0x24] sm:$0xe]
      %v9069 = vld [vmem:[%s6208 + $0x30] sm:$0xe]
      %v9070 = vld [vmem:[%s6208 + $0x3c] sm:$0xe]
      %v9071 = vld [vmem:[%s6208 + $0x48] sm:$0xe]
      %v9072 = vld [vmem:[%s6208 + $0x54] sm:$0xe]
      %v9073 = vld [vmem:[%s6208 + $0x60] sm:$0xe]
      %v9074 = vld [vmem:[%s6208 + $0x6c] sm:$0xe]
      %v9075 = vld [vmem:[%s6208 + $0x78] sm:$0xe]
      %v9076 = vld [vmem:[%s6208 + $0x84] sm:$0xe]
      %v9077 = vld [vmem:[%s6208 + $0x90] sm:$0xe]
      %v9078 = vld [vmem:[%s6208 + $0x9c] sm:$0xe]
      %v9079 = vld [vmem:[%s6208 + $0xa8] sm:$0xe]
      %v9080 = vld [vmem:[%s6208 + $0xb4] sm:$0xe]
      %v9129 = vrot.slane %v9065, 5
      %v9130 = vrot.slane %v9129, 4
      %v9131 = vrot.slane %v8340, 5
      %v9132 = vsel %vm2004, %v9130, %v9131
      %v9133 = vrot.slane %v9131, 4
      %v9134 = vrot.slane %v8341, 5
      %v9135 = vsel %vm2004, %v9133, %v9134
      %v9136 = vrot.slane %v9066, 5
      %v9137 = vrot.slane %v9136, 4
      %v9138 = vrot.slane %v8343, 5
      %v9139 = vsel %vm2004, %v9137, %v9138
      %v9140 = vrot.slane %v9138, 4
      %v9141 = vrot.slane %v8344, 5
      %v9142 = vsel %vm2004, %v9140, %v9141
      %v9143 = vrot.slane %v9067, 5
      %v9144 = vrot.slane %v9143, 4
      %v9145 = vrot.slane %v8346, 5
      %v9146 = vsel %vm2004, %v9144, %v9145
      %v9147 = vrot.slane %v9145, 4
      %v9148 = vrot.slane %v8347, 5
      %v9149 = vsel %vm2004, %v9147, %v9148
      %v9150 = vrot.slane %v9068, 5
      %v9151 = vrot.slane %v9150, 4
      %v9152 = vrot.slane %v8349, 5
      %v9153 = vsel %vm2004, %v9151, %v9152
      %v9154 = vrot.slane %v9152, 4
      %v9155 = vrot.slane %v8350, 5
      %v9156 = vsel %vm2004, %v9154, %v9155
      %v9157 = vrot.slane %v9069, 5
      %v9158 = vrot.slane %v9157, 4
      %v9159 = vrot.slane %v8352, 5
      %v9160 = vsel %vm2004, %v9158, %v9159
      %v9161 = vrot.slane %v9159, 4
      %v9162 = vrot.slane %v8353, 5
      %v9163 = vsel %vm2004, %v9161, %v9162
      %v9164 = vrot.slane %v9070, 5
      %v9165 = vrot.slane %v9164, 4
      %v9166 = vrot.slane %v8355, 5
      %v9167 = vsel %vm2004, %v9165, %v9166
      %v9168 = vrot.slane %v9166, 4
      %v9169 = vrot.slane %v8356, 5
      %v9170 = vsel %vm2004, %v9168, %v9169
      %v9171 = vrot.slane %v9071, 5
      %v9172 = vrot.slane %v9171, 4
      %v9173 = vrot.slane %v8358, 5
      %v9174 = vsel %vm2004, %v9172, %v9173
      %v9175 = vrot.slane %v9173, 4
      %v9176 = vrot.slane %v8359, 5
      %v9177 = vsel %vm2004, %v9175, %v9176
      %v9178 = vrot.slane %v9072, 5
      %v9179 = vrot.slane %v9178, 4
      %v9180 = vrot.slane %v8361, 5
      %v9181 = vsel %vm2004, %v9179, %v9180
      %v9182 = vrot.slane %v9180, 4
      %v9183 = vrot.slane %v8362, 5
      %v9184 = vsel %vm2004, %v9182, %v9183
      %v9185 = vrot.slane %v9073, 5
      %v9186 = vrot.slane %v9185, 4
      %v9187 = vrot.slane %v8364, 5
      %v9188 = vsel %vm2004, %v9186, %v9187
      %v9189 = vrot.slane %v9187, 4
      %v9190 = vrot.slane %v8365, 5
      %v9191 = vsel %vm2004, %v9189, %v9190
      %v9192 = vrot.slane %v9074, 5
      %v9193 = vrot.slane %v9192, 4
      %v9194 = vrot.slane %v8367, 5
      %v9195 = vsel %vm2004, %v9193, %v9194
      %v9196 = vrot.slane %v9194, 4
      %v9197 = vrot.slane %v8368, 5
      %v9198 = vsel %vm2004, %v9196, %v9197
      %v9199 = vrot.slane %v9075, 5
      %v9200 = vrot.slane %v9199, 4
      %v9201 = vrot.slane %v8370, 5
      %v9202 = vsel %vm2004, %v9200, %v9201
      %v9203 = vrot.slane %v9201, 4
      %v9204 = vrot.slane %v8371, 5
      %v9205 = vsel %vm2004, %v9203, %v9204
      %v9206 = vrot.slane %v9076, 5
      %v9207 = vrot.slane %v9206, 4
      %v9208 = vrot.slane %v8373, 5
      %v9209 = vsel %vm2004, %v9207, %v9208
      %v9210 = vrot.slane %v9208, 4
      %v9211 = vrot.slane %v8374, 5
      %v9212 = vsel %vm2004, %v9210, %v9211
      %v9213 = vrot.slane %v9077, 5
      %v9214 = vrot.slane %v9213, 4
      %v9215 = vrot.slane %v8376, 5
      %v9216 = vsel %vm2004, %v9214, %v9215
      %v9217 = vrot.slane %v9215, 4
      %v9218 = vrot.slane %v8377, 5
      %v9219 = vsel %vm2004, %v9217, %v9218
      %v9220 = vrot.slane %v9078, 5
      %v9221 = vrot.slane %v9220, 4
      %v9222 = vrot.slane %v8379, 5
      %v9223 = vsel %vm2004, %v9221, %v9222
      %v9224 = vrot.slane %v9222, 4
      %v9225 = vrot.slane %v8380, 5
      %v9226 = vsel %vm2004, %v9224, %v9225
      %v9227 = vrot.slane %v9079, 5
      %v9228 = vrot.slane %v9227, 4
      %v9229 = vrot.slane %v8382, 5
      %v9230 = vsel %vm2004, %v9228, %v9229
      %v9231 = vrot.slane %v9229, 4
      %v9232 = vrot.slane %v8383, 5
      %v9233 = vsel %vm2004, %v9231, %v9232
      %v9234 = vrot.slane %v9080, 5
      %v9235 = vrot.slane %v9234, 4
      %v9236 = vrot.slane %v8385, 5
      %v9237 = vsel %vm2004, %v9235, %v9236
      %v9238 = vrot.slane %v9236, 4
      %v9239 = vrot.slane %v8386, 5
      %v9240 = vsel %vm2004, %v9238, %v9239
      %s9241 = scalar_lea.vmem %s2, 20
      %v9242 = vld [vmem:[%s9241] sm:$0xf]
      %v9243 = vunpack.c.l.b16 %v9132
      %v9244 = vunpack.c.l.b16 %v9135
      %v9245 = vunpack.c.l.b16 %v9139
      %v9246 = vunpack.c.l.b16 %v9142
      %v9247 = vunpack.c.l.b16 %v9146
      %v9248 = vunpack.c.l.b16 %v9149
      %v9249 = vunpack.c.l.b16 %v9153
      %v9250 = vunpack.c.l.b16 %v9156
      %v9251 = vunpack.c.l.b16 %v9160
      %v9252 = vunpack.c.l.b16 %v9163
      %v9253 = vunpack.c.l.b16 %v9167
      %v9254 = vunpack.c.l.b16 %v9170
      %v9255 = vunpack.c.l.b16 %v9174
      %v9256 = vunpack.c.l.b16 %v9177
      %v9257 = vunpack.c.l.b16 %v9181
      %v9258 = vunpack.c.l.b16 %v9184
      %v9259 = vunpack.c.l.b16 %v9188
      %v9260 = vunpack.c.l.b16 %v9191
      %v9261 = vunpack.c.l.b16 %v9195
      %v9262 = vunpack.c.l.b16 %v9198
      %v9263 = vunpack.c.l.b16 %v9202
      %v9264 = vunpack.c.l.b16 %v9205
      %v9265 = vunpack.c.l.b16 %v9209
      %v9266 = vunpack.c.l.b16 %v9212
      %v9267 = vunpack.c.l.b16 %v9216
      %v9268 = vunpack.c.l.b16 %v9219
      %v9269 = vunpack.c.l.b16 %v9223
      %v9270 = vunpack.c.l.b16 %v9226
      %v9271 = vunpack.c.l.b16 %v9230
      %v9272 = vunpack.c.l.b16 %v9233
      %v9273 = vunpack.c.l.b16 %v9237
      %v9274 = vunpack.c.l.b16 %v9240
      %v9275 = vpack.c.b16 %v9244, %v9243
      %v9276 = vpack.c.b16 %v9246, %v9245
      %v9277 = vpack.c.b16 %v9248, %v9247
      %v9278 = vpack.c.b16 %v9250, %v9249
      %v9279 = vpack.c.b16 %v9252, %v9251
      %v9280 = vpack.c.b16 %v9254, %v9253
      %v9281 = vpack.c.b16 %v9256, %v9255
      %v9282 = vpack.c.b16 %v9258, %v9257
      %v9283 = vpack.c.b16 %v9260, %v9259
      %v9284 = vpack.c.b16 %v9262, %v9261
      %v9285 = vpack.c.b16 %v9264, %v9263
      %v9286 = vpack.c.b16 %v9266, %v9265
      %v9287 = vpack.c.b16 %v9268, %v9267
      %v9288 = vpack.c.b16 %v9270, %v9269
      %v9289 = vpack.c.b16 %v9272, %v9271
      %v9290 = vpack.c.b16 %v9274, %v9273
      %v9292 = vsel %vm1448, %v9275, 0
      %v9295 = vsel %vm1448, %v9276, 0
      %v9298 = vsel %vm1448, %v9277, 0
      %v9301 = vsel %vm1448, %v9278, 0
      %v9304 = vsel %vm1448, %v9279, 0
      %v9307 = vsel %vm1448, %v9280, 0
      %v9310 = vsel %vm1448, %v9281, 0
      %v9313 = vsel %vm1448, %v9282, 0
      %v9316 = vsel %vm1448, %v9283, 0
      %v9319 = vsel %vm1448, %v9284, 0
      %v9322 = vsel %vm1448, %v9285, 0
      %v9325 = vsel %vm1448, %v9286, 0
      %v9328 = vsel %vm1448, %v9287, 0
      %v9331 = vsel %vm1448, %v9288, 0
      %v9334 = vsel %vm1448, %v9289, 0
      %v9337 = vsel %vm1448, %v9290, 0
      %v9340 = vsel %vm1497, %v9242, 0
      %9342 = vmatprep.subr.bf16.mxu0 0
      %9343 = vmatpush1.bf16.msra.mxu0 %v9340
      %9344 = vmatprep.subr.bf16.mxu0 0
      %9345 = vmatpush1.bf16.msra.mxu0 0
      %9346 = vmatprep.subr.bf16.mxu0 0
      %9347 = vmatpush1.bf16.msra.mxu0 0
      %9348 = vmatprep.subr.bf16.mxu0 0
      %9349 = vmatpush1.bf16.msra.mxu0 0
      %9350 = vmatprep.subr.bf16.mxu0 0
      %9351 = vmatpush1.bf16.msra.mxu0 0
      %9352 = vmatprep.subr.bf16.mxu0 0
      %9353 = vmatpush1.bf16.msra.mxu0 0
      %9354 = vmatprep.subr.bf16.mxu0 0
      %9355 = vmatpush1.bf16.msra.mxu0 0
      %9356 = vmatprep.subr.bf16.mxu0 0
      %9357 = vmatpush1.bf16.msra.mxu0 0
      %9358 = vmatprep.subr.bf16.mxu0 0
      %9359 = vmatpush1.bf16.msra.mxu0 0
      %9360 = vmatprep.subr.bf16.mxu0 0
      %9361 = vmatpush1.bf16.msra.mxu0 0
      %9362 = vmatprep.subr.bf16.mxu0 0
      %9363 = vmatpush1.bf16.msra.mxu0 0
      %9364 = vmatprep.subr.bf16.mxu0 0
      %9365 = vmatpush1.bf16.msra.mxu0 0
      %9366 = vmatprep.subr.bf16.mxu0 0
      %9367 = vmatpush1.bf16.msra.mxu0 0
      %9368 = vmatprep.subr.bf16.mxu0 0
      %9369 = vmatpush1.bf16.msra.mxu0 0
      %9370 = vmatprep.subr.bf16.mxu0 0
      %9371 = vmatpush1.bf16.msra.mxu0 0
      %9372 = vmatprep.subr.bf16.mxu0 0
      %9373 = vmatpush1.bf16.msra.mxu0 0
      %9374 = vmatprep.mubr.bf16.mxu0 0
      %9375 = vmatmul.mubr.bf16.gmra.mrb[0].mxu0 %v9292
      %v9376 = vpop.f32.mrb[0].mxu0
      %v9377 = vadd.f32 0.0, %v9376
      %v9378 = vpop.f32.mrb[0].mxu0
      %v9379 = vpop.f32.mrb[0].mxu0
      %v9380 = vadd.f32 0.0, %v9379
      %v9381 = vpop.f32.mrb[0].mxu0
      %9382 = vmatprep.mubr.bf16.mxu0 0
      %9383 = vmatmul.mubr.bf16.gmra.mrb[0].mxu0 %v9295
      %v9384 = vpop.f32.mrb[0].mxu0
      %v9385 = vadd.f32 0.0, %v9384
      %v9386 = vpop.f32.mrb[0].mxu0
      %v9387 = vpop.f32.mrb[0].mxu0
      %v9388 = vadd.f32 0.0, %v9387
      %v9389 = vpop.f32.mrb[0].mxu0
      %9390 = vmatprep.mubr.bf16.mxu0 0
      %9391 = vmatmul.mubr.bf16.gmra.mrb[0].mxu0 %v9298
      %v9392 = vpop.f32.mrb[0].mxu0
      %v9393 = vadd.f32 0.0, %v9392
      %v9394 = vpop.f32.mrb[0].mxu0
      %v9395 = vpop.f32.mrb[0].mxu0
      %v9396 = vadd.f32 0.0, %v9395
      %v9397 = vpop.f32.mrb[0].mxu0
      %9398 = vmatprep.mubr.bf16.mxu0 0
      %9399 = vmatmul.mubr.bf16.gmra.mrb[0].mxu0 %v9301
      %v9400 = vpop.f32.mrb[0].mxu0
      %v9401 = vadd.f32 0.0, %v9400
      %v9402 = vpop.f32.mrb[0].mxu0
      %v9403 = vpop.f32.mrb[0].mxu0
      %v9404 = vadd.f32 0.0, %v9403
      %v9405 = vpop.f32.mrb[0].mxu0
      %9406 = vmatprep.mubr.bf16.mxu0 0
      %9407 = vmatmul.mubr.bf16.gmra.mrb[0].mxu0 %v9304
      %v9408 = vpop.f32.mrb[0].mxu0
      %v9409 = vadd.f32 0.0, %v9408
      %v9410 = vpop.f32.mrb[0].mxu0
      %v9411 = vpop.f32.mrb[0].mxu0
      %v9412 = vadd.f32 0.0, %v9411
      %v9413 = vpop.f32.mrb[0].mxu0
      %9414 = vmatprep.mubr.bf16.mxu0 0
      %9415 = vmatmul.mubr.bf16.gmra.mrb[0].mxu0 %v9307
      %v9416 = vpop.f32.mrb[0].mxu0
      %v9417 = vadd.f32 0.0, %v9416
      %v9418 = vpop.f32.mrb[0].mxu0
      %v9419 = vpop.f32.mrb[0].mxu0
      %v9420 = vadd.f32 0.0, %v9419
      %v9421 = vpop.f32.mrb[0].mxu0
      %9422 = vmatprep.mubr.bf16.mxu0 0
      %9423 = vmatmul.mubr.bf16.gmra.mrb[0].mxu0 %v9310
      %v9424 = vpop.f32.mrb[0].mxu0
      %v9425 = vadd.f32 0.0, %v9424
      %v9426 = vpop.f32.mrb[0].mxu0
      %v9427 = vpop.f32.mrb[0].mxu0
      %v9428 = vadd.f32 0.0, %v9427
      %v9429 = vpop.f32.mrb[0].mxu0
      %9430 = vmatprep.mubr.bf16.mxu0 0
      %9431 = vmatmul.mubr.bf16.gmra.mrb[0].mxu0 %v9313
      %v9432 = vpop.f32.mrb[0].mxu0
      %v9433 = vadd.f32 0.0, %v9432
      %v9434 = vpop.f32.mrb[0].mxu0
      %v9435 = vpop.f32.mrb[0].mxu0
      %v9436 = vadd.f32 0.0, %v9435
      %v9437 = vpop.f32.mrb[0].mxu0
      %9438 = vmatprep.mubr.bf16.mxu0 0
      %9439 = vmatmul.mubr.bf16.gmra.mrb[0].mxu0 %v9316
      %v9440 = vpop.f32.mrb[0].mxu0
      %v9441 = vadd.f32 0.0, %v9440
      %v9442 = vpop.f32.mrb[0].mxu0
      %v9443 = vpop.f32.mrb[0].mxu0
      %v9444 = vadd.f32 0.0, %v9443
      %v9445 = vpop.f32.mrb[0].mxu0
      %9446 = vmatprep.mubr.bf16.mxu0 0
      %9447 = vmatmul.mubr.bf16.gmra.mrb[0].mxu0 %v9319
      %v9448 = vpop.f32.mrb[0].mxu0
      %v9449 = vadd.f32 0.0, %v9448
      %v9450 = vpop.f32.mrb[0].mxu0
      %v9451 = vpop.f32.mrb[0].mxu0
      %v9452 = vadd.f32 0.0, %v9451
      %v9453 = vpop.f32.mrb[0].mxu0
      %9454 = vmatprep.mubr.bf16.mxu0 0
      %9455 = vmatmul.mubr.bf16.gmra.mrb[0].mxu0 %v9322
      %v9456 = vpop.f32.mrb[0].mxu0
      %v9457 = vadd.f32 0.0, %v9456
      %v9458 = vpop.f32.mrb[0].mxu0
      %v9459 = vpop.f32.mrb[0].mxu0
      %v9460 = vadd.f32 0.0, %v9459
      %v9461 = vpop.f32.mrb[0].mxu0
      %9462 = vmatprep.mubr.bf16.mxu0 0
      %9463 = vmatmul.mubr.bf16.gmra.mrb[0].mxu0 %v9325
      %v9464 = vpop.f32.mrb[0].mxu0
      %v9465 = vadd.f32 0.0, %v9464
      %v9466 = vpop.f32.mrb[0].mxu0
      %v9467 = vpop.f32.mrb[0].mxu0
      %v9468 = vadd.f32 0.0, %v9467
      %v9469 = vpop.f32.mrb[0].mxu0
      %9470 = vmatprep.mubr.bf16.mxu0 0
      %9471 = vmatmul.mubr.bf16.gmra.mrb[0].mxu0 %v9328
      %v9472 = vpop.f32.mrb[0].mxu0
      %v9473 = vadd.f32 0.0, %v9472
      %v9474 = vpop.f32.mrb[0].mxu0
      %v9475 = vpop.f32.mrb[0].mxu0
      %v9476 = vadd.f32 0.0, %v9475
      %v9477 = vpop.f32.mrb[0].mxu0
      %9478 = vmatprep.mubr.bf16.mxu0 0
      %9479 = vmatmul.mubr.bf16.gmra.mrb[0].mxu0 %v9331
      %v9480 = vpop.f32.mrb[0].mxu0
      %v9481 = vadd.f32 0.0, %v9480
      %v9482 = vpop.f32.mrb[0].mxu0
      %v9483 = vpop.f32.mrb[0].mxu0
      %v9484 = vadd.f32 0.0, %v9483
      %v9485 = vpop.f32.mrb[0].mxu0
      %9486 = vmatprep.mubr.bf16.mxu0 0
      %9487 = vmatmul.mubr.bf16.gmra.mrb[0].mxu0 %v9334
      %v9488 = vpop.f32.mrb[0].mxu0
      %v9489 = vadd.f32 0.0, %v9488
      %v9490 = vpop.f32.mrb[0].mxu0
      %v9491 = vpop.f32.mrb[0].mxu0
      %v9492 = vadd.f32 0.0, %v9491
      %v9493 = vpop.f32.mrb[0].mxu0
      %9494 = vmatprep.mubr.bf16.mxu0 0
      %9495 = vmatmul.mubr.bf16.gmra.mrb[0].mxu0 %v9337
      %v9496 = vpop.f32.mrb[0].mxu0
      %v9497 = vadd.f32 0.0, %v9496
      %v9498 = vpop.f32.mrb[0].mxu0
      %v9499 = vpop.f32.mrb[0].mxu0
      %v9500 = vadd.f32 0.0, %v9499
      %v9501 = vpop.f32.mrb[0].mxu0
      %9502 = vdwg.mxu0
      %v9503 = vadd.f32 %v9033, %v9377
      %v9504 = vadd.f32 %v9034, %v9380
      %v9505 = vadd.f32 %v9035, %v9385
      %v9506 = vadd.f32 %v9036, %v9388
      %v9507 = vadd.f32 %v9037, %v9393
      %v9508 = vadd.f32 %v9038, %v9396
      %v9509 = vadd.f32 %v9039, %v9401
      %v9510 = vadd.f32 %v9040, %v9404
      %v9511 = vadd.f32 %v9041, %v9409
      %v9512 = vadd.f32 %v9042, %v9412
      %v9513 = vadd.f32 %v9043, %v9417
      %v9514 = vadd.f32 %v9044, %v9420
      %v9515 = vadd.f32 %v9045, %v9425
      %v9516 = vadd.f32 %v9046, %v9428
      %v9517 = vadd.f32 %v9047, %v9433
      %v9518 = vadd.f32 %v9048, %v9436
      %v9519 = vadd.f32 %v9049, %v9441
      %v9520 = vadd.f32 %v9050, %v9444
      %v9521 = vadd.f32 %v9051, %v9449
      %v9522 = vadd.f32 %v9052, %v9452
      %v9523 = vadd.f32 %v9053, %v9457
      %v9524 = vadd.f32 %v9054, %v9460
      %v9525 = vadd.f32 %v9055, %v9465
      %v9526 = vadd.f32 %v9056, %v9468
      %v9527 = vadd.f32 %v9057, %v9473
      %v9528 = vadd.f32 %v9058, %v9476
      %v9529 = vadd.f32 %v9059, %v9481
      %v9530 = vadd.f32 %v9060, %v9484
      %v9531 = vadd.f32 %v9061, %v9489
      %v9532 = vadd.f32 %v9062, %v9492
      %v9533 = vadd.f32 %v9063, %v9497
      %v9534 = vadd.f32 %v9064, %v9500
      %s9535 = scalar_lea.vmem [#allocation3], 24
      %v9536 = vld [vmem:[%s9535] sm:$0xf]
      %v9537 = vld [vmem:[%s9535 + $0x4] sm:$0xf]
      %v9538 = vld [vmem:[%s9535 + $0xc] sm:$0xf]
      %v9539 = vld [vmem:[%s9535 + $0x10] sm:$0xf]
      %v9540 = vld [vmem:[%s9535 + $0x18] sm:$0xf]
      %v9541 = vld [vmem:[%s9535 + $0x1c] sm:$0xf]
      %v9542 = vld [vmem:[%s9535 + $0x24] sm:$0xf]
      %v9543 = vld [vmem:[%s9535 + $0x28] sm:$0xf]
      %v9544 = vld [vmem:[%s9535 + $0x30] sm:$0xf]
      %v9545 = vld [vmem:[%s9535 + $0x34] sm:$0xf]
      %v9546 = vld [vmem:[%s9535 + $0x3c] sm:$0xf]
      %v9547 = vld [vmem:[%s9535 + $0x40] sm:$0xf]
      %v9548 = vld [vmem:[%s9535 + $0x48] sm:$0xf]
      %v9549 = vld [vmem:[%s9535 + $0x4c] sm:$0xf]
      %v9550 = vld [vmem:[%s9535 + $0x54] sm:$0xf]
      %v9551 = vld [vmem:[%s9535 + $0x58] sm:$0xf]
      %v9552 = vld [vmem:[%s9535 + $0x60] sm:$0xf]
      %v9553 = vld [vmem:[%s9535 + $0x64] sm:$0xf]
      %v9554 = vld [vmem:[%s9535 + $0x6c] sm:$0xf]
      %v9555 = vld [vmem:[%s9535 + $0x70] sm:$0xf]
      %v9556 = vld [vmem:[%s9535 + $0x78] sm:$0xf]
      %v9557 = vld [vmem:[%s9535 + $0x7c] sm:$0xf]
      %v9558 = vld [vmem:[%s9535 + $0x84] sm:$0xf]
      %v9559 = vld [vmem:[%s9535 + $0x88] sm:$0xf]
      %v9560 = vld [vmem:[%s9535 + $0x90] sm:$0xf]
      %v9561 = vld [vmem:[%s9535 + $0x94] sm:$0xf]
      %v9562 = vld [vmem:[%s9535 + $0x9c] sm:$0xf]
      %v9563 = vld [vmem:[%s9535 + $0xa0] sm:$0xf]
      %v9564 = vld [vmem:[%s9535 + $0xa8] sm:$0xf]
      %v9565 = vld [vmem:[%s9535 + $0xac] sm:$0xf]
      %v9566 = vld [vmem:[%s9535 + $0xb4] sm:$0xf]
      %v9567 = vld [vmem:[%s9535 + $0xb8] sm:$0xf]
      %s9568 = scalar_lea.vmem %s2, 24
      %v9569 = vld [vmem:[%s9568] sm:$0xf]
      %v9602 = vunpack.c.l.b16 %v9536
      %v9603 = vunpack.c.l.b16 %v9537
      %v9604 = vunpack.c.l.b16 %v9538
      %v9605 = vunpack.c.l.b16 %v9539
      %v9606 = vunpack.c.l.b16 %v9540
      %v9607 = vunpack.c.l.b16 %v9541
      %v9608 = vunpack.c.l.b16 %v9542
      %v9609 = vunpack.c.l.b16 %v9543
      %v9610 = vunpack.c.l.b16 %v9544
      %v9611 = vunpack.c.l.b16 %v9545
      %v9612 = vunpack.c.l.b16 %v9546
      %v9613 = vunpack.c.l.b16 %v9547
      %v9614 = vunpack.c.l.b16 %v9548
      %v9615 = vunpack.c.l.b16 %v9549
      %v9616 = vunpack.c.l.b16 %v9550
      %v9617 = vunpack.c.l.b16 %v9551
      %v9618 = vunpack.c.l.b16 %v9552
      %v9619 = vunpack.c.l.b16 %v9553
      %v9620 = vunpack.c.l.b16 %v9554
      %v9621 = vunpack.c.l.b16 %v9555
      %v9622 = vunpack.c.l.b16 %v9556
      %v9623 = vunpack.c.l.b16 %v9557
      %v9624 = vunpack.c.l.b16 %v9558
      %v9625 = vunpack.c.l.b16 %v9559
      %v9626 = vunpack.c.l.b16 %v9560
      %v9627 = vunpack.c.l.b16 %v9561
      %v9628 = vunpack.c.l.b16 %v9562
      %v9629 = vunpack.c.l.b16 %v9563
      %v9630 = vunpack.c.l.b16 %v9564
      %v9631 = vunpack.c.l.b16 %v9565
      %v9632 = vunpack.c.l.b16 %v9566
      %v9633 = vunpack.c.l.b16 %v9567
      %v9634 = vpack.c.b16 %v9603, %v9602
      %v9635 = vpack.c.b16 %v9605, %v9604
      %v9636 = vpack.c.b16 %v9607, %v9606
      %v9637 = vpack.c.b16 %v9609, %v9608
      %v9638 = vpack.c.b16 %v9611, %v9610
      %v9639 = vpack.c.b16 %v9613, %v9612
      %v9640 = vpack.c.b16 %v9615, %v9614
      %v9641 = vpack.c.b16 %v9617, %v9616
      %v9642 = vpack.c.b16 %v9619, %v9618
      %v9643 = vpack.c.b16 %v9621, %v9620
      %v9644 = vpack.c.b16 %v9623, %v9622
      %v9645 = vpack.c.b16 %v9625, %v9624
      %v9646 = vpack.c.b16 %v9627, %v9626
      %v9647 = vpack.c.b16 %v9629, %v9628
      %v9648 = vpack.c.b16 %v9631, %v9630
      %v9649 = vpack.c.b16 %v9633, %v9632
      %v9651 = vsel %vm1448, %v9634, 0
      %v9654 = vsel %vm1448, %v9635, 0
      %v9657 = vsel %vm1448, %v9636, 0
      %v9660 = vsel %vm1448, %v9637, 0
      %v9663 = vsel %vm1448, %v9638, 0
      %v9666 = vsel %vm1448, %v9639, 0
      %v9669 = vsel %vm1448, %v9640, 0
      %v9672 = vsel %vm1448, %v9641, 0
      %v9675 = vsel %vm1448, %v9642, 0
      %v9678 = vsel %vm1448, %v9643, 0
      %v9681 = vsel %vm1448, %v9644, 0
      %v9684 = vsel %vm1448, %v9645, 0
      %v9687 = vsel %vm1448, %v9646, 0
      %v9690 = vsel %vm1448, %v9647, 0
      %v9693 = vsel %vm1448, %v9648, 0
      %v9696 = vsel %vm1448, %v9649, 0
      %v9699 = vsel %vm1497, %v9569, 0
      %9701 = vmatprep.subr.bf16.mxu0 0
      %9702 = vmatpush1.bf16.msra.mxu0 %v9699
      %9703 = vmatprep.subr.bf16.mxu0 0
      %9704 = vmatpush1.bf16.msra.mxu0 0
      %9705 = vmatprep.subr.bf16.mxu0 0
      %9706 = vmatpush1.bf16.msra.mxu0 0
      %9707 = vmatprep.subr.bf16.mxu0 0
      %9708 = vmatpush1.bf16.msra.mxu0 0
      %9709 = vmatprep.subr.bf16.mxu0 0
      %9710 = vmatpush1.bf16.msra.mxu0 0
      %9711 = vmatprep.subr.bf16.mxu0 0
      %9712 = vmatpush1.bf16.msra.mxu0 0
      %9713 = vmatprep.subr.bf16.mxu0 0
      %9714 = vmatpush1.bf16.msra.mxu0 0
      %9715 = vmatprep.subr.bf16.mxu0 0
      %9716 = vmatpush1.bf16.msra.mxu0 0
      %9717 = vmatprep.subr.bf16.mxu0 0
      %9718 = vmatpush1.bf16.msra.mxu0 0
      %9719 = vmatprep.subr.bf16.mxu0 0
      %9720 = vmatpush1.bf16.msra.mxu0 0
      %9721 = vmatprep.subr.bf16.mxu0 0
      %9722 = vmatpush1.bf16.msra.mxu0 0
      %9723 = vmatprep.subr.bf16.mxu0 0
      %9724 = vmatpush1.bf16.msra.mxu0 0
      %9725 = vmatprep.subr.bf16.mxu0 0
      %9726 = vmatpush1.bf16.msra.mxu0 0
      %9727 = vmatprep.subr.bf16.mxu0 0
      %9728 = vmatpush1.bf16.msra.mxu0 0
      %9729 = vmatprep.subr.bf16.mxu0 0
      %9730 = vmatpush1.bf16.msra.mxu0 0
      %9731 = vmatprep.subr.bf16.mxu0 0
      %9732 = vmatpush1.bf16.msra.mxu0 0
      %9733 = vmatprep.mubr.bf16.mxu0 0
      %9734 = vmatmul.mubr.bf16.gmra.mrb[0].mxu0 %v9651
      %v9735 = vpop.f32.mrb[0].mxu0
      %v9736 = vadd.f32 0.0, %v9735
      %v9737 = vpop.f32.mrb[0].mxu0
      %v9738 = vpop.f32.mrb[0].mxu0
      %v9739 = vadd.f32 0.0, %v9738
      %v9740 = vpop.f32.mrb[0].mxu0
      %9741 = vmatprep.mubr.bf16.mxu0 0
      %9742 = vmatmul.mubr.bf16.gmra.mrb[0].mxu0 %v9654
      %v9743 = vpop.f32.mrb[0].mxu0
      %v9744 = vadd.f32 0.0, %v9743
      %v9745 = vpop.f32.mrb[0].mxu0
      %v9746 = vpop.f32.mrb[0].mxu0
      %v9747 = vadd.f32 0.0, %v9746
      %v9748 = vpop.f32.mrb[0].mxu0
      %9749 = vmatprep.mubr.bf16.mxu0 0
      %9750 = vmatmul.mubr.bf16.gmra.mrb[0].mxu0 %v9657
      %v9751 = vpop.f32.mrb[0].mxu0
      %v9752 = vadd.f32 0.0, %v9751
      %v9753 = vpop.f32.mrb[0].mxu0
      %v9754 = vpop.f32.mrb[0].mxu0
      %v9755 = vadd.f32 0.0, %v9754
      %v9756 = vpop.f32.mrb[0].mxu0
      %9757 = vmatprep.mubr.bf16.mxu0 0
      %9758 = vmatmul.mubr.bf16.gmra.mrb[0].mxu0 %v9660
      %v9759 = vpop.f32.mrb[0].mxu0
      %v9760 = vadd.f32 0.0, %v9759
      %v9761 = vpop.f32.mrb[0].mxu0
      %v9762 = vpop.f32.mrb[0].mxu0
      %v9763 = vadd.f32 0.0, %v9762
      %v9764 = vpop.f32.mrb[0].mxu0
      %9765 = vmatprep.mubr.bf16.mxu0 0
      %9766 = vmatmul.mubr.bf16.gmra.mrb[0].mxu0 %v9663
      %v9767 = vpop.f32.mrb[0].mxu0
      %v9768 = vadd.f32 0.0, %v9767
      %v9769 = vpop.f32.mrb[0].mxu0
      %v9770 = vpop.f32.mrb[0].mxu0
      %v9771 = vadd.f32 0.0, %v9770
      %v9772 = vpop.f32.mrb[0].mxu0
      %9773 = vmatprep.mubr.bf16.mxu0 0
      %9774 = vmatmul.mubr.bf16.gmra.mrb[0].mxu0 %v9666
      %v9775 = vpop.f32.mrb[0].mxu0
      %v9776 = vadd.f32 0.0, %v9775
      %v9777 = vpop.f32.mrb[0].mxu0
      %v9778 = vpop.f32.mrb[0].mxu0
      %v9779 = vadd.f32 0.0, %v9778
      %v9780 = vpop.f32.mrb[0].mxu0
      %9781 = vmatprep.mubr.bf16.mxu0 0
      %9782 = vmatmul.mubr.bf16.gmra.mrb[0].mxu0 %v9669
      %v9783 = vpop.f32.mrb[0].mxu0
      %v9784 = vadd.f32 0.0, %v9783
      %v9785 = vpop.f32.mrb[0].mxu0
      %v9786 = vpop.f32.mrb[0].mxu0
      %v9787 = vadd.f32 0.0, %v9786
      %v9788 = vpop.f32.mrb[0].mxu0
      %9789 = vmatprep.mubr.bf16.mxu0 0
      %9790 = vmatmul.mubr.bf16.gmra.mrb[0].mxu0 %v9672
      %v9791 = vpop.f32.mrb[0].mxu0
      %v9792 = vadd.f32 0.0, %v9791
      %v9793 = vpop.f32.mrb[0].mxu0
      %v9794 = vpop.f32.mrb[0].mxu0
      %v9795 = vadd.f32 0.0, %v9794
      %v9796 = vpop.f32.mrb[0].mxu0
      %9797 = vmatprep.mubr.bf16.mxu0 0
      %9798 = vmatmul.mubr.bf16.gmra.mrb[0].mxu0 %v9675
      %v9799 = vpop.f32.mrb[0].mxu0
      %v9800 = vadd.f32 0.0, %v9799
      %v9801 = vpop.f32.mrb[0].mxu0
      %v9802 = vpop.f32.mrb[0].mxu0
      %v9803 = vadd.f32 0.0, %v9802
      %v9804 = vpop.f32.mrb[0].mxu0
      %9805 = vmatprep.mubr.bf16.mxu0 0
      %9806 = vmatmul.mubr.bf16.gmra.mrb[0].mxu0 %v9678
      %v9807 = vpop.f32.mrb[0].mxu0
      %v9808 = vadd.f32 0.0, %v9807
      %v9809 = vpop.f32.mrb[0].mxu0
      %v9810 = vpop.f32.mrb[0].mxu0
      %v9811 = vadd.f32 0.0, %v9810
      %v9812 = vpop.f32.mrb[0].mxu0
      %9813 = vmatprep.mubr.bf16.mxu0 0
      %9814 = vmatmul.mubr.bf16.gmra.mrb[0].mxu0 %v9681
      %v9815 = vpop.f32.mrb[0].mxu0
      %v9816 = vadd.f32 0.0, %v9815
      %v9817 = vpop.f32.mrb[0].mxu0
      %v9818 = vpop.f32.mrb[0].mxu0
      %v9819 = vadd.f32 0.0, %v9818
      %v9820 = vpop.f32.mrb[0].mxu0
      %9821 = vmatprep.mubr.bf16.mxu0 0
      %9822 = vmatmul.mubr.bf16.gmra.mrb[0].mxu0 %v9684
      %v9823 = vpop.f32.mrb[0].mxu0
      %v9824 = vadd.f32 0.0, %v9823
      %v9825 = vpop.f32.mrb[0].mxu0
      %v9826 = vpop.f32.mrb[0].mxu0
      %v9827 = vadd.f32 0.0, %v9826
      %v9828 = vpop.f32.mrb[0].mxu0
      %9829 = vmatprep.mubr.bf16.mxu0 0
      %9830 = vmatmul.mubr.bf16.gmra.mrb[0].mxu0 %v9687
      %v9831 = vpop.f32.mrb[0].mxu0
      %v9832 = vadd.f32 0.0, %v9831
      %v9833 = vpop.f32.mrb[0].mxu0
      %v9834 = vpop.f32.mrb[0].mxu0
      %v9835 = vadd.f32 0.0, %v9834
      %v9836 = vpop.f32.mrb[0].mxu0
      %9837 = vmatprep.mubr.bf16.mxu0 0
      %9838 = vmatmul.mubr.bf16.gmra.mrb[0].mxu0 %v9690
      %v9839 = vpop.f32.mrb[0].mxu0
      %v9840 = vadd.f32 0.0, %v9839
      %v9841 = vpop.f32.mrb[0].mxu0
      %v9842 = vpop.f32.mrb[0].mxu0
      %v9843 = vadd.f32 0.0, %v9842
      %v9844 = vpop.f32.mrb[0].mxu0
      %9845 = vmatprep.mubr.bf16.mxu0 0
      %9846 = vmatmul.mubr.bf16.gmra.mrb[0].mxu0 %v9693
      %v9847 = vpop.f32.mrb[0].mxu0
      %v9848 = vadd.f32 0.0, %v9847
      %v9849 = vpop.f32.mrb[0].mxu0
      %v9850 = vpop.f32.mrb[0].mxu0
      %v9851 = vadd.f32 0.0, %v9850
      %v9852 = vpop.f32.mrb[0].mxu0
      %9853 = vmatprep.mubr.bf16.mxu0 0
      %9854 = vmatmul.mubr.bf16.gmra.mrb[0].mxu0 %v9696
      %v9855 = vpop.f32.mrb[0].mxu0
      %v9856 = vadd.f32 0.0, %v9855
      %v9857 = vpop.f32.mrb[0].mxu0
      %v9858 = vpop.f32.mrb[0].mxu0
      %v9859 = vadd.f32 0.0, %v9858
      %v9860 = vpop.f32.mrb[0].mxu0
      %9861 = vdwg.mxu0
      %v9862 = vadd.f32 %v9503, %v9736
      %v9863 = vadd.f32 %v9504, %v9739
      %v9864 = vadd.f32 %v9505, %v9744
      %v9865 = vadd.f32 %v9506, %v9747
      %v9866 = vadd.f32 %v9507, %v9752
      %v9867 = vadd.f32 %v9508, %v9755
      %v9868 = vadd.f32 %v9509, %v9760
      %v9869 = vadd.f32 %v9510, %v9763
      %v9870 = vadd.f32 %v9511, %v9768
      %v9871 = vadd.f32 %v9512, %v9771
      %v9872 = vadd.f32 %v9513, %v9776
      %v9873 = vadd.f32 %v9514, %v9779
      %v9874 = vadd.f32 %v9515, %v9784
      %v9875 = vadd.f32 %v9516, %v9787
      %v9876 = vadd.f32 %v9517, %v9792
      %v9877 = vadd.f32 %v9518, %v9795
      %v9878 = vadd.f32 %v9519, %v9800
      %v9879 = vadd.f32 %v9520, %v9803
      %v9880 = vadd.f32 %v9521, %v9808
      %v9881 = vadd.f32 %v9522, %v9811
      %v9882 = vadd.f32 %v9523, %v9816
      %v9883 = vadd.f32 %v9524, %v9819
      %v9884 = vadd.f32 %v9525, %v9824
      %v9885 = vadd.f32 %v9526, %v9827
      %v9886 = vadd.f32 %v9527, %v9832
      %v9887 = vadd.f32 %v9528, %v9835
      %v9888 = vadd.f32 %v9529, %v9840
      %v9889 = vadd.f32 %v9530, %v9843
      %v9890 = vadd.f32 %v9531, %v9848
      %v9891 = vadd.f32 %v9532, %v9851
      %v9892 = vadd.f32 %v9533, %v9856
      %v9893 = vadd.f32 %v9534, %v9859
      %v9894 = vld [vmem:[%s9535] sm:$0xf]
      %v9895 = vld [vmem:[%s9535 + $0x4] sm:$0xf]
      %v9896 = vld [vmem:[%s9535 + $0x8] sm:$0x1]
      %v9897 = vld [vmem:[%s9535 + $0xc] sm:$0xf]
      %v9898 = vld [vmem:[%s9535 + $0x10] sm:$0xf]
      %v9899 = vld [vmem:[%s9535 + $0x14] sm:$0x1]
      %v9900 = vld [vmem:[%s9535 + $0x18] sm:$0xf]
      %v9901 = vld [vmem:[%s9535 + $0x1c] sm:$0xf]
      %v9902 = vld [vmem:[%s9535 + $0x20] sm:$0x1]
      %v9903 = vld [vmem:[%s9535 + $0x24] sm:$0xf]
      %v9904 = vld [vmem:[%s9535 + $0x28] sm:$0xf]
      %v9905 = vld [vmem:[%s9535 + $0x2c] sm:$0x1]
      %v9906 = vld [vmem:[%s9535 + $0x30] sm:$0xf]
      %v9907 = vld [vmem:[%s9535 + $0x34] sm:$0xf]
      %v9908 = vld [vmem:[%s9535 + $0x38] sm:$0x1]
      %v9909 = vld [vmem:[%s9535 + $0x3c] sm:$0xf]
      %v9910 = vld [vmem:[%s9535 + $0x40] sm:$0xf]
      %v9911 = vld [vmem:[%s9535 + $0x44] sm:$0x1]
      %v9912 = vld [vmem:[%s9535 + $0x48] sm:$0xf]
      %v9913 = vld [vmem:[%s9535 + $0x4c] sm:$0xf]
      %v9914 = vld [vmem:[%s9535 + $0x50] sm:$0x1]
      %v9915 = vld [vmem:[%s9535 + $0x54] sm:$0xf]
      %v9916 = vld [vmem:[%s9535 + $0x58] sm:$0xf]
      %v9917 = vld [vmem:[%s9535 + $0x5c] sm:$0x1]
      %v9918 = vld [vmem:[%s9535 + $0x60] sm:$0xf]
      %v9919 = vld [vmem:[%s9535 + $0x64] sm:$0xf]
      %v9920 = vld [vmem:[%s9535 + $0x68] sm:$0x1]
      %v9921 = vld [vmem:[%s9535 + $0x6c] sm:$0xf]
      %v9922 = vld [vmem:[%s9535 + $0x70] sm:$0xf]
      %v9923 = vld [vmem:[%s9535 + $0x74] sm:$0x1]
      %v9924 = vld [vmem:[%s9535 + $0x78] sm:$0xf]
      %v9925 = vld [vmem:[%s9535 + $0x7c] sm:$0xf]
      %v9926 = vld [vmem:[%s9535 + $0x80] sm:$0x1]
      %v9927 = vld [vmem:[%s9535 + $0x84] sm:$0xf]
      %v9928 = vld [vmem:[%s9535 + $0x88] sm:$0xf]
      %v9929 = vld [vmem:[%s9535 + $0x8c] sm:$0x1]
      %v9930 = vld [vmem:[%s9535 + $0x90] sm:$0xf]
      %v9931 = vld [vmem:[%s9535 + $0x94] sm:$0xf]
      %v9932 = vld [vmem:[%s9535 + $0x98] sm:$0x1]
      %v9933 = vld [vmem:[%s9535 + $0x9c] sm:$0xf]
      %v9934 = vld [vmem:[%s9535 + $0xa0] sm:$0xf]
      %v9935 = vld [vmem:[%s9535 + $0xa4] sm:$0x1]
      %v9936 = vld [vmem:[%s9535 + $0xa8] sm:$0xf]
      %v9937 = vld [vmem:[%s9535 + $0xac] sm:$0xf]
      %v9938 = vld [vmem:[%s9535 + $0xb0] sm:$0x1]
      %v9939 = vld [vmem:[%s9535 + $0xb4] sm:$0xf]
      %v9940 = vld [vmem:[%s9535 + $0xb8] sm:$0xf]
      %v9941 = vld [vmem:[%s9535 + $0xbc] sm:$0x1]
      %v9943 = vshrl.u32 %v9894, 16
      %v9945 = vrot.slane %v9943, 4
      %v9946 = vshll.u32 %v9894, 16
      %v9948 = vrot.slane %v9946, 5
      %v9949 = vor.u32 %v9945, %v9948
      %v9950 = vrot.slane %v9949, 4
      %v9952 = vshll.u32 %v9895, 16
      %v9954 = vrot.slane %v9952, 5
      %v9955 = vsel %vm1013, %v9950, %v9954
      %v9956 = vshrl.u32 %v9895, 16
      %v9958 = vrot.slane %v9956, 4
      %v9959 = vor.u32 %v9958, %v9954
      %v9960 = vrot.slane %v9959, 4
      %v9962 = vshll.u32 %v9896, 16
      %v9964 = vrot.slane %v9962, 5
      %v9965 = vsel %vm1013, %v9960, %v9964
      %v9967 = vshrl.u32 %v9897, 16
      %v9969 = vrot.slane %v9967, 4
      %v9970 = vshll.u32 %v9897, 16
      %v9972 = vrot.slane %v9970, 5
      %v9973 = vor.u32 %v9969, %v9972
      %v9974 = vrot.slane %v9973, 4
      %v9976 = vshll.u32 %v9898, 16
      %v9978 = vrot.slane %v9976, 5
      %v9979 = vsel %vm1013, %v9974, %v9978
      %v9980 = vshrl.u32 %v9898, 16
      %v9982 = vrot.slane %v9980, 4
      %v9983 = vor.u32 %v9982, %v9978
      %v9984 = vrot.slane %v9983, 4
      %v9986 = vshll.u32 %v9899, 16
      %v9988 = vrot.slane %v9986, 5
      %v9989 = vsel %vm1013, %v9984, %v9988
      %v9991 = vshrl.u32 %v9900, 16
      %v9993 = vrot.slane %v9991, 4
      %v9994 = vshll.u32 %v9900, 16
      %v9996 = vrot.slane %v9994, 5
      %v9997 = vor.u32 %v9993, %v9996
      %v9998 = vrot.slane %v9997, 4
      %v10000 = vshll.u32 %v9901, 16
      %v10002 = vrot.slane %v10000, 5
      %v10003 = vsel %vm1013, %v9998, %v10002
      %v10004 = vshrl.u32 %v9901, 16
      %v10006 = vrot.slane %v10004, 4
      %v10007 = vor.u32 %v10006, %v10002
      %v10008 = vrot.slane %v10007, 4
      %v10010 = vshll.u32 %v9902, 16
      %v10012 = vrot.slane %v10010, 5
      %v10013 = vsel %vm1013, %v10008, %v10012
      %v10015 = vshrl.u32 %v9903, 16
      %v10017 = vrot.slane %v10015, 4
      %v10018 = vshll.u32 %v9903, 16
      %v10020 = vrot.slane %v10018, 5
      %v10021 = vor.u32 %v10017, %v10020
      %v10022 = vrot.slane %v10021, 4
      %v10024 = vshll.u32 %v9904, 16
      %v10026 = vrot.slane %v10024, 5
      %v10027 = vsel %vm1013, %v10022, %v10026
      %v10028 = vshrl.u32 %v9904, 16
      %v10030 = vrot.slane %v10028, 4
      %v10031 = vor.u32 %v10030, %v10026
      %v10032 = vrot.slane %v10031, 4
      %v10034 = vshll.u32 %v9905, 16
      %v10036 = vrot.slane %v10034, 5
      %v10037 = vsel %vm1013, %v10032, %v10036
      %v10039 = vshrl.u32 %v9906, 16
      %v10041 = vrot.slane %v10039, 4
      %v10042 = vshll.u32 %v9906, 16
      %v10044 = vrot.slane %v10042, 5
      %v10045 = vor.u32 %v10041, %v10044
      %v10046 = vrot.slane %v10045, 4
      %v10048 = vshll.u32 %v9907, 16
      %v10050 = vrot.slane %v10048, 5
      %v10051 = vsel %vm1013, %v10046, %v10050
      %v10052 = vshrl.u32 %v9907, 16
      %v10054 = vrot.slane %v10052, 4
      %v10055 = vor.u32 %v10054, %v10050
      %v10056 = vrot.slane %v10055, 4
      %v10058 = vshll.u32 %v9908, 16
      %v10060 = vrot.slane %v10058, 5
      %v10061 = vsel %vm1013, %v10056, %v10060
      %v10063 = vshrl.u32 %v9909, 16
      %v10065 = vrot.slane %v10063, 4
      %v10066 = vshll.u32 %v9909, 16
      %v10068 = vrot.slane %v10066, 5
      %v10069 = vor.u32 %v10065, %v10068
      %v10070 = vrot.slane %v10069, 4
      %v10072 = vshll.u32 %v9910, 16
      %v10074 = vrot.slane %v10072, 5
      %v10075 = vsel %vm1013, %v10070, %v10074
      %v10076 = vshrl.u32 %v9910, 16
      %v10078 = vrot.slane %v10076, 4
      %v10079 = vor.u32 %v10078, %v10074
      %v10080 = vrot.slane %v10079, 4
      %v10082 = vshll.u32 %v9911, 16
      %v10084 = vrot.slane %v10082, 5
      %v10085 = vsel %vm1013, %v10080, %v10084
      %v10087 = vshrl.u32 %v9912, 16
      %v10089 = vrot.slane %v10087, 4
      %v10090 = vshll.u32 %v9912, 16
      %v10092 = vrot.slane %v10090, 5
      %v10093 = vor.u32 %v10089, %v10092
      %v10094 = vrot.slane %v10093, 4
      %v10096 = vshll.u32 %v9913, 16
      %v10098 = vrot.slane %v10096, 5
      %v10099 = vsel %vm1013, %v10094, %v10098
      %v10100 = vshrl.u32 %v9913, 16
      %v10102 = vrot.slane %v10100, 4
      %v10103 = vor.u32 %v10102, %v10098
      %v10104 = vrot.slane %v10103, 4
      %v10106 = vshll.u32 %v9914, 16
      %v10108 = vrot.slane %v10106, 5
      %v10109 = vsel %vm1013, %v10104, %v10108
      %v10111 = vshrl.u32 %v9915, 16
      %v10113 = vrot.slane %v10111, 4
      %v10114 = vshll.u32 %v9915, 16
      %v10116 = vrot.slane %v10114, 5
      %v10117 = vor.u32 %v10113, %v10116
      %v10118 = vrot.slane %v10117, 4
      %v10120 = vshll.u32 %v9916, 16
      %v10122 = vrot.slane %v10120, 5
      %v10123 = vsel %vm1013, %v10118, %v10122
      %v10124 = vshrl.u32 %v9916, 16
      %v10126 = vrot.slane %v10124, 4
      %v10127 = vor.u32 %v10126, %v10122
      %v10128 = vrot.slane %v10127, 4
      %v10130 = vshll.u32 %v9917, 16
      %v10132 = vrot.slane %v10130, 5
      %v10133 = vsel %vm1013, %v10128, %v10132
      %v10135 = vshrl.u32 %v9918, 16
      %v10137 = vrot.slane %v10135, 4
      %v10138 = vshll.u32 %v9918, 16
      %v10140 = vrot.slane %v10138, 5
      %v10141 = vor.u32 %v10137, %v10140
      %v10142 = vrot.slane %v10141, 4
      %v10144 = vshll.u32 %v9919, 16
      %v10146 = vrot.slane %v10144, 5
      %v10147 = vsel %vm1013, %v10142, %v10146
      %v10148 = vshrl.u32 %v9919, 16
      %v10150 = vrot.slane %v10148, 4
      %v10151 = vor.u32 %v10150, %v10146
      %v10152 = vrot.slane %v10151, 4
      %v10154 = vshll.u32 %v9920, 16
      %v10156 = vrot.slane %v10154, 5
      %v10157 = vsel %vm1013, %v10152, %v10156
      %v10159 = vshrl.u32 %v9921, 16
      %v10161 = vrot.slane %v10159, 4
      %v10162 = vshll.u32 %v9921, 16
      %v10164 = vrot.slane %v10162, 5
      %v10165 = vor.u32 %v10161, %v10164
      %v10166 = vrot.slane %v10165, 4
      %v10168 = vshll.u32 %v9922, 16
      %v10170 = vrot.slane %v10168, 5
      %v10171 = vsel %vm1013, %v10166, %v10170
      %v10172 = vshrl.u32 %v9922, 16
      %v10174 = vrot.slane %v10172, 4
      %v10175 = vor.u32 %v10174, %v10170
      %v10176 = vrot.slane %v10175, 4
      %v10178 = vshll.u32 %v9923, 16
      %v10180 = vrot.slane %v10178, 5
      %v10181 = vsel %vm1013, %v10176, %v10180
      %v10183 = vshrl.u32 %v9924, 16
      %v10185 = vrot.slane %v10183, 4
      %v10186 = vshll.u32 %v9924, 16
      %v10188 = vrot.slane %v10186, 5
      %v10189 = vor.u32 %v10185, %v10188
      %v10190 = vrot.slane %v10189, 4
      %v10192 = vshll.u32 %v9925, 16
      %v10194 = vrot.slane %v10192, 5
      %v10195 = vsel %vm1013, %v10190, %v10194
      %v10196 = vshrl.u32 %v9925, 16
      %v10198 = vrot.slane %v10196, 4
      %v10199 = vor.u32 %v10198, %v10194
      %v10200 = vrot.slane %v10199, 4
      %v10202 = vshll.u32 %v9926, 16
      %v10204 = vrot.slane %v10202, 5
      %v10205 = vsel %vm1013, %v10200, %v10204
      %v10207 = vshrl.u32 %v9927, 16
      %v10209 = vrot.slane %v10207, 4
      %v10210 = vshll.u32 %v9927, 16
      %v10212 = vrot.slane %v10210, 5
      %v10213 = vor.u32 %v10209, %v10212
      %v10214 = vrot.slane %v10213, 4
      %v10216 = vshll.u32 %v9928, 16
      %v10218 = vrot.slane %v10216, 5
      %v10219 = vsel %vm1013, %v10214, %v10218
      %v10220 = vshrl.u32 %v9928, 16
      %v10222 = vrot.slane %v10220, 4
      %v10223 = vor.u32 %v10222, %v10218
      %v10224 = vrot.slane %v10223, 4
      %v10226 = vshll.u32 %v9929, 16
      %v10228 = vrot.slane %v10226, 5
      %v10229 = vsel %vm1013, %v10224, %v10228
      %v10231 = vshrl.u32 %v9930, 16
      %v10233 = vrot.slane %v10231, 4
      %v10234 = vshll.u32 %v9930, 16
      %v10236 = vrot.slane %v10234, 5
      %v10237 = vor.u32 %v10233, %v10236
      %v10238 = vrot.slane %v10237, 4
      %v10240 = vshll.u32 %v9931, 16
      %v10242 = vrot.slane %v10240, 5
      %v10243 = vsel %vm1013, %v10238, %v10242
      %v10244 = vshrl.u32 %v9931, 16
      %v10246 = vrot.slane %v10244, 4
      %v10247 = vor.u32 %v10246, %v10242
      %v10248 = vrot.slane %v10247, 4
      %v10250 = vshll.u32 %v9932, 16
      %v10252 = vrot.slane %v10250, 5
      %v10253 = vsel %vm1013, %v10248, %v10252
      %v10255 = vshrl.u32 %v9933, 16
      %v10257 = vrot.slane %v10255, 4
      %v10258 = vshll.u32 %v9933, 16
      %v10260 = vrot.slane %v10258, 5
      %v10261 = vor.u32 %v10257, %v10260
      %v10262 = vrot.slane %v10261, 4
      %v10264 = vshll.u32 %v9934, 16
      %v10266 = vrot.slane %v10264, 5
      %v10267 = vsel %vm1013, %v10262, %v10266
      %v10268 = vshrl.u32 %v9934, 16
      %v10270 = vrot.slane %v10268, 4
      %v10271 = vor.u32 %v10270, %v10266
      %v10272 = vrot.slane %v10271, 4
      %v10274 = vshll.u32 %v9935, 16
      %v10276 = vrot.slane %v10274, 5
      %v10277 = vsel %vm1013, %v10272, %v10276
      %v10279 = vshrl.u32 %v9936, 16
      %v10281 = vrot.slane %v10279, 4
      %v10282 = vshll.u32 %v9936, 16
      %v10284 = vrot.slane %v10282, 5
      %v10285 = vor.u32 %v10281, %v10284
      %v10286 = vrot.slane %v10285, 4
      %v10288 = vshll.u32 %v9937, 16
      %v10290 = vrot.slane %v10288, 5
      %v10291 = vsel %vm1013, %v10286, %v10290
      %v10292 = vshrl.u32 %v9937, 16
      %v10294 = vrot.slane %v10292, 4
      %v10295 = vor.u32 %v10294, %v10290
      %v10296 = vrot.slane %v10295, 4
      %v10298 = vshll.u32 %v9938, 16
      %v10300 = vrot.slane %v10298, 5
      %v10301 = vsel %vm1013, %v10296, %v10300
      %v10303 = vshrl.u32 %v9939, 16
      %v10305 = vrot.slane %v10303, 4
      %v10306 = vshll.u32 %v9939, 16
      %v10308 = vrot.slane %v10306, 5
      %v10309 = vor.u32 %v10305, %v10308
      %v10310 = vrot.slane %v10309, 4
      %v10312 = vshll.u32 %v9940, 16
      %v10314 = vrot.slane %v10312, 5
      %v10315 = vsel %vm1013, %v10310, %v10314
      %v10316 = vshrl.u32 %v9940, 16
      %v10318 = vrot.slane %v10316, 4
      %v10319 = vor.u32 %v10318, %v10314
      %v10320 = vrot.slane %v10319, 4
      %v10322 = vshll.u32 %v9941, 16
      %v10324 = vrot.slane %v10322, 5
      %v10325 = vsel %vm1013, %v10320, %v10324
      %s10326 = scalar_lea.vmem %s2, 28
      %v10327 = vld [vmem:[%s10326] sm:$0xf]
      %v10328 = vunpack.c.l.b16 %v9955
      %v10329 = vunpack.c.l.b16 %v9965
      %v10330 = vunpack.c.l.b16 %v9979
      %v10331 = vunpack.c.l.b16 %v9989
      %v10332 = vunpack.c.l.b16 %v10003
      %v10333 = vunpack.c.l.b16 %v10013
      %v10334 = vunpack.c.l.b16 %v10027
      %v10335 = vunpack.c.l.b16 %v10037
      %v10336 = vunpack.c.l.b16 %v10051
      %v10337 = vunpack.c.l.b16 %v10061
      %v10338 = vunpack.c.l.b16 %v10075
      %v10339 = vunpack.c.l.b16 %v10085
      %v10340 = vunpack.c.l.b16 %v10099
      %v10341 = vunpack.c.l.b16 %v10109
      %v10342 = vunpack.c.l.b16 %v10123
      %v10343 = vunpack.c.l.b16 %v10133
      %v10344 = vunpack.c.l.b16 %v10147
      %v10345 = vunpack.c.l.b16 %v10157
      %v10346 = vunpack.c.l.b16 %v10171
      %v10347 = vunpack.c.l.b16 %v10181
      %v10348 = vunpack.c.l.b16 %v10195
      %v10349 = vunpack.c.l.b16 %v10205
      %v10350 = vunpack.c.l.b16 %v10219
      %v10351 = vunpack.c.l.b16 %v10229
      %v10352 = vunpack.c.l.b16 %v10243
      %v10353 = vunpack.c.l.b16 %v10253
      %v10354 = vunpack.c.l.b16 %v10267
      %v10355 = vunpack.c.l.b16 %v10277
      %v10356 = vunpack.c.l.b16 %v10291
      %v10357 = vunpack.c.l.b16 %v10301
      %v10358 = vunpack.c.l.b16 %v10315
      %v10359 = vunpack.c.l.b16 %v10325
      %v10360 = vpack.c.b16 %v10329, %v10328
      %v10361 = vpack.c.b16 %v10331, %v10330
      %v10362 = vpack.c.b16 %v10333, %v10332
      %v10363 = vpack.c.b16 %v10335, %v10334
      %v10364 = vpack.c.b16 %v10337, %v10336
      %v10365 = vpack.c.b16 %v10339, %v10338
      %v10366 = vpack.c.b16 %v10341, %v10340
      %v10367 = vpack.c.b16 %v10343, %v10342
      %v10368 = vpack.c.b16 %v10345, %v10344
      %v10369 = vpack.c.b16 %v10347, %v10346
      %v10370 = vpack.c.b16 %v10349, %v10348
      %v10371 = vpack.c.b16 %v10351, %v10350
      %v10372 = vpack.c.b16 %v10353, %v10352
      %v10373 = vpack.c.b16 %v10355, %v10354
      %v10374 = vpack.c.b16 %v10357, %v10356
      %v10375 = vpack.c.b16 %v10359, %v10358
      %v10377 = vsel %vm1448, %v10360, 0
      %v10380 = vsel %vm1448, %v10361, 0
      %v10383 = vsel %vm1448, %v10362, 0
      %v10386 = vsel %vm1448, %v10363, 0
      %v10389 = vsel %vm1448, %v10364, 0
      %v10392 = vsel %vm1448, %v10365, 0
      %v10395 = vsel %vm1448, %v10366, 0
      %v10398 = vsel %vm1448, %v10367, 0
      %v10401 = vsel %vm1448, %v10368, 0
      %v10404 = vsel %vm1448, %v10369, 0
      %v10407 = vsel %vm1448, %v10370, 0
      %v10410 = vsel %vm1448, %v10371, 0
      %v10413 = vsel %vm1448, %v10372, 0
      %v10416 = vsel %vm1448, %v10373, 0
      %v10419 = vsel %vm1448, %v10374, 0
      %v10422 = vsel %vm1448, %v10375, 0
      %v10425 = vsel %vm1497, %v10327, 0
      %10427 = vmatprep.subr.bf16.mxu0 0
      %10428 = vmatpush1.bf16.msra.mxu0 %v10425
      %10429 = vmatprep.subr.bf16.mxu0 0
      %10430 = vmatpush1.bf16.msra.mxu0 0
      %10431 = vmatprep.subr.bf16.mxu0 0
      %10432 = vmatpush1.bf16.msra.mxu0 0
      %10433 = vmatprep.subr.bf16.mxu0 0
      %10434 = vmatpush1.bf16.msra.mxu0 0
      %10435 = vmatprep.subr.bf16.mxu0 0
      %10436 = vmatpush1.bf16.msra.mxu0 0
      %10437 = vmatprep.subr.bf16.mxu0 0
      %10438 = vmatpush1.bf16.msra.mxu0 0
      %10439 = vmatprep.subr.bf16.mxu0 0
      %10440 = vmatpush1.bf16.msra.mxu0 0
      %10441 = vmatprep.subr.bf16.mxu0 0
      %10442 = vmatpush1.bf16.msra.mxu0 0
      %10443 = vmatprep.subr.bf16.mxu0 0
      %10444 = vmatpush1.bf16.msra.mxu0 0
      %10445 = vmatprep.subr.bf16.mxu0 0
      %10446 = vmatpush1.bf16.msra.mxu0 0
      %10447 = vmatprep.subr.bf16.mxu0 0
      %10448 = vmatpush1.bf16.msra.mxu0 0
      %10449 = vmatprep.subr.bf16.mxu0 0
      %10450 = vmatpush1.bf16.msra.mxu0 0
      %10451 = vmatprep.subr.bf16.mxu0 0
      %10452 = vmatpush1.bf16.msra.mxu0 0
      %10453 = vmatprep.subr.bf16.mxu0 0
      %10454 = vmatpush1.bf16.msra.mxu0 0
      %10455 = vmatprep.subr.bf16.mxu0 0
      %10456 = vmatpush1.bf16.msra.mxu0 0
      %10457 = vmatprep.subr.bf16.mxu0 0
      %10458 = vmatpush1.bf16.msra.mxu0 0
      %10459 = vmatprep.mubr.bf16.mxu0 0
      %10460 = vmatmul.mubr.bf16.gmra.mrb[0].mxu0 %v10377
      %v10461 = vpop.f32.mrb[0].mxu0
      %v10462 = vadd.f32 0.0, %v10461
      %v10463 = vpop.f32.mrb[0].mxu0
      %v10464 = vpop.f32.mrb[0].mxu0
      %v10465 = vadd.f32 0.0, %v10464
      %v10466 = vpop.f32.mrb[0].mxu0
      %10467 = vmatprep.mubr.bf16.mxu0 0
      %10468 = vmatmul.mubr.bf16.gmra.mrb[0].mxu0 %v10380
      %v10469 = vpop.f32.mrb[0].mxu0
      %v10470 = vadd.f32 0.0, %v10469
      %v10471 = vpop.f32.mrb[0].mxu0
      %v10472 = vpop.f32.mrb[0].mxu0
      %v10473 = vadd.f32 0.0, %v10472
      %v10474 = vpop.f32.mrb[0].mxu0
      %10475 = vmatprep.mubr.bf16.mxu0 0
      %10476 = vmatmul.mubr.bf16.gmra.mrb[0].mxu0 %v10383
      %v10477 = vpop.f32.mrb[0].mxu0
      %v10478 = vadd.f32 0.0, %v10477
      %v10479 = vpop.f32.mrb[0].mxu0
      %v10480 = vpop.f32.mrb[0].mxu0
      %v10481 = vadd.f32 0.0, %v10480
      %v10482 = vpop.f32.mrb[0].mxu0
      %10483 = vmatprep.mubr.bf16.mxu0 0
      %10484 = vmatmul.mubr.bf16.gmra.mrb[0].mxu0 %v10386
      %v10485 = vpop.f32.mrb[0].mxu0
      %v10486 = vadd.f32 0.0, %v10485
      %v10487 = vpop.f32.mrb[0].mxu0
      %v10488 = vpop.f32.mrb[0].mxu0
      %v10489 = vadd.f32 0.0, %v10488
      %v10490 = vpop.f32.mrb[0].mxu0
      %10491 = vmatprep.mubr.bf16.mxu0 0
      %10492 = vmatmul.mubr.bf16.gmra.mrb[0].mxu0 %v10389
      %v10493 = vpop.f32.mrb[0].mxu0
      %v10494 = vadd.f32 0.0, %v10493
      %v10495 = vpop.f32.mrb[0].mxu0
      %v10496 = vpop.f32.mrb[0].mxu0
      %v10497 = vadd.f32 0.0, %v10496
      %v10498 = vpop.f32.mrb[0].mxu0
      %10499 = vmatprep.mubr.bf16.mxu0 0
      %10500 = vmatmul.mubr.bf16.gmra.mrb[0].mxu0 %v10392
      %v10501 = vpop.f32.mrb[0].mxu0
      %v10502 = vadd.f32 0.0, %v10501
      %v10503 = vpop.f32.mrb[0].mxu0
      %v10504 = vpop.f32.mrb[0].mxu0
      %v10505 = vadd.f32 0.0, %v10504
      %v10506 = vpop.f32.mrb[0].mxu0
      %10507 = vmatprep.mubr.bf16.mxu0 0
      %10508 = vmatmul.mubr.bf16.gmra.mrb[0].mxu0 %v10395
      %v10509 = vpop.f32.mrb[0].mxu0
      %v10510 = vadd.f32 0.0, %v10509
      %v10511 = vpop.f32.mrb[0].mxu0
      %v10512 = vpop.f32.mrb[0].mxu0
      %v10513 = vadd.f32 0.0, %v10512
      %v10514 = vpop.f32.mrb[0].mxu0
      %10515 = vmatprep.mubr.bf16.mxu0 0
      %10516 = vmatmul.mubr.bf16.gmra.mrb[0].mxu0 %v10398
      %v10517 = vpop.f32.mrb[0].mxu0
      %v10518 = vadd.f32 0.0, %v10517
      %v10519 = vpop.f32.mrb[0].mxu0
      %v10520 = vpop.f32.mrb[0].mxu0
      %v10521 = vadd.f32 0.0, %v10520
      %v10522 = vpop.f32.mrb[0].mxu0
      %10523 = vmatprep.mubr.bf16.mxu0 0
      %10524 = vmatmul.mubr.bf16.gmra.mrb[0].mxu0 %v10401
      %v10525 = vpop.f32.mrb[0].mxu0
      %v10526 = vadd.f32 0.0, %v10525
      %v10527 = vpop.f32.mrb[0].mxu0
      %v10528 = vpop.f32.mrb[0].mxu0
      %v10529 = vadd.f32 0.0, %v10528
      %v10530 = vpop.f32.mrb[0].mxu0
      %10531 = vmatprep.mubr.bf16.mxu0 0
      %10532 = vmatmul.mubr.bf16.gmra.mrb[0].mxu0 %v10404
      %v10533 = vpop.f32.mrb[0].mxu0
      %v10534 = vadd.f32 0.0, %v10533
      %v10535 = vpop.f32.mrb[0].mxu0
      %v10536 = vpop.f32.mrb[0].mxu0
      %v10537 = vadd.f32 0.0, %v10536
      %v10538 = vpop.f32.mrb[0].mxu0
      %10539 = vmatprep.mubr.bf16.mxu0 0
      %10540 = vmatmul.mubr.bf16.gmra.mrb[0].mxu0 %v10407
      %v10541 = vpop.f32.mrb[0].mxu0
      %v10542 = vadd.f32 0.0, %v10541
      %v10543 = vpop.f32.mrb[0].mxu0
      %v10544 = vpop.f32.mrb[0].mxu0
      %v10545 = vadd.f32 0.0, %v10544
      %v10546 = vpop.f32.mrb[0].mxu0
      %10547 = vmatprep.mubr.bf16.mxu0 0
      %10548 = vmatmul.mubr.bf16.gmra.mrb[0].mxu0 %v10410
      %v10549 = vpop.f32.mrb[0].mxu0
      %v10550 = vadd.f32 0.0, %v10549
      %v10551 = vpop.f32.mrb[0].mxu0
      %v10552 = vpop.f32.mrb[0].mxu0
      %v10553 = vadd.f32 0.0, %v10552
      %v10554 = vpop.f32.mrb[0].mxu0
      %10555 = vmatprep.mubr.bf16.mxu0 0
      %10556 = vmatmul.mubr.bf16.gmra.mrb[0].mxu0 %v10413
      %v10557 = vpop.f32.mrb[0].mxu0
      %v10558 = vadd.f32 0.0, %v10557
      %v10559 = vpop.f32.mrb[0].mxu0
      %v10560 = vpop.f32.mrb[0].mxu0
      %v10561 = vadd.f32 0.0, %v10560
      %v10562 = vpop.f32.mrb[0].mxu0
      %10563 = vmatprep.mubr.bf16.mxu0 0
      %10564 = vmatmul.mubr.bf16.gmra.mrb[0].mxu0 %v10416
      %v10565 = vpop.f32.mrb[0].mxu0
      %v10566 = vadd.f32 0.0, %v10565
      %v10567 = vpop.f32.mrb[0].mxu0
      %v10568 = vpop.f32.mrb[0].mxu0
      %v10569 = vadd.f32 0.0, %v10568
      %v10570 = vpop.f32.mrb[0].mxu0
      %10571 = vmatprep.mubr.bf16.mxu0 0
      %10572 = vmatmul.mubr.bf16.gmra.mrb[0].mxu0 %v10419
      %v10573 = vpop.f32.mrb[0].mxu0
      %v10574 = vadd.f32 0.0, %v10573
      %v10575 = vpop.f32.mrb[0].mxu0
      %v10576 = vpop.f32.mrb[0].mxu0
      %v10577 = vadd.f32 0.0, %v10576
      %v10578 = vpop.f32.mrb[0].mxu0
      %10579 = vmatprep.mubr.bf16.mxu0 0
      %10580 = vmatmul.mubr.bf16.gmra.mrb[0].mxu0 %v10422
      %v10581 = vpop.f32.mrb[0].mxu0
      %v10582 = vadd.f32 0.0, %v10581
      %v10583 = vpop.f32.mrb[0].mxu0
      %v10584 = vpop.f32.mrb[0].mxu0
      %v10585 = vadd.f32 0.0, %v10584
      %v10586 = vpop.f32.mrb[0].mxu0
      %10587 = vdwg.mxu0
      %v10588 = vadd.f32 %v9862, %v10462
      %v10589 = vadd.f32 %v9863, %v10465
      %v10590 = vadd.f32 %v9864, %v10470
      %v10591 = vadd.f32 %v9865, %v10473
      %v10592 = vadd.f32 %v9866, %v10478
      %v10593 = vadd.f32 %v9867, %v10481
      %v10594 = vadd.f32 %v9868, %v10486
      %v10595 = vadd.f32 %v9869, %v10489
      %v10596 = vadd.f32 %v9870, %v10494
      %v10597 = vadd.f32 %v9871, %v10497
      %v10598 = vadd.f32 %v9872, %v10502
      %v10599 = vadd.f32 %v9873, %v10505
      %v10600 = vadd.f32 %v9874, %v10510
      %v10601 = vadd.f32 %v9875, %v10513
      %v10602 = vadd.f32 %v9876, %v10518
      %v10603 = vadd.f32 %v9877, %v10521
      %v10604 = vadd.f32 %v9878, %v10526
      %v10605 = vadd.f32 %v9879, %v10529
      %v10606 = vadd.f32 %v9880, %v10534
      %v10607 = vadd.f32 %v9881, %v10537
      %v10608 = vadd.f32 %v9882, %v10542
      %v10609 = vadd.f32 %v9883, %v10545
      %v10610 = vadd.f32 %v9884, %v10550
      %v10611 = vadd.f32 %v9885, %v10553
      %v10612 = vadd.f32 %v9886, %v10558
      %v10613 = vadd.f32 %v9887, %v10561
      %v10614 = vadd.f32 %v9888, %v10566
      %v10615 = vadd.f32 %v9889, %v10569
      %v10616 = vadd.f32 %v9890, %v10574
      %v10617 = vadd.f32 %v9891, %v10577
      %v10618 = vadd.f32 %v9892, %v10582
      %v10619 = vadd.f32 %v9893, %v10585
      %v10620 = vld [vmem:[%s9535] sm:$0xe]
      %v10621 = vld [vmem:[%s9535 + $0xc] sm:$0xe]
      %v10622 = vld [vmem:[%s9535 + $0x18] sm:$0xe]
      %v10623 = vld [vmem:[%s9535 + $0x24] sm:$0xe]
      %v10624 = vld [vmem:[%s9535 + $0x30] sm:$0xe]
      %v10625 = vld [vmem:[%s9535 + $0x3c] sm:$0xe]
      %v10626 = vld [vmem:[%s9535 + $0x48] sm:$0xe]
      %v10627 = vld [vmem:[%s9535 + $0x54] sm:$0xe]
      %v10628 = vld [vmem:[%s9535 + $0x60] sm:$0xe]
      %v10629 = vld [vmem:[%s9535 + $0x6c] sm:$0xe]
      %v10630 = vld [vmem:[%s9535 + $0x78] sm:$0xe]
      %v10631 = vld [vmem:[%s9535 + $0x84] sm:$0xe]
      %v10632 = vld [vmem:[%s9535 + $0x90] sm:$0xe]
      %v10633 = vld [vmem:[%s9535 + $0x9c] sm:$0xe]
      %v10634 = vld [vmem:[%s9535 + $0xa8] sm:$0xe]
      %v10635 = vld [vmem:[%s9535 + $0xb4] sm:$0xe]
      %v10684 = vrot.slane %v10620, 5
      %v10685 = vrot.slane %v10684, 4
      %v10686 = vrot.slane %v9895, 5
      %v10687 = vsel %vm2004, %v10685, %v10686
      %v10688 = vrot.slane %v10686, 4
      %v10689 = vrot.slane %v9896, 5
      %v10690 = vsel %vm2004, %v10688, %v10689
      %v10691 = vrot.slane %v10621, 5
      %v10692 = vrot.slane %v10691, 4
      %v10693 = vrot.slane %v9898, 5
      %v10694 = vsel %vm2004, %v10692, %v10693
      %v10695 = vrot.slane %v10693, 4
      %v10696 = vrot.slane %v9899, 5
      %v10697 = vsel %vm2004, %v10695, %v10696
      %v10698 = vrot.slane %v10622, 5
      %v10699 = vrot.slane %v10698, 4
      %v10700 = vrot.slane %v9901, 5
      %v10701 = vsel %vm2004, %v10699, %v10700
      %v10702 = vrot.slane %v10700, 4
      %v10703 = vrot.slane %v9902, 5
      %v10704 = vsel %vm2004, %v10702, %v10703
      %v10705 = vrot.slane %v10623, 5
      %v10706 = vrot.slane %v10705, 4
      %v10707 = vrot.slane %v9904, 5
      %v10708 = vsel %vm2004, %v10706, %v10707
      %v10709 = vrot.slane %v10707, 4
      %v10710 = vrot.slane %v9905, 5
      %v10711 = vsel %vm2004, %v10709, %v10710
      %v10712 = vrot.slane %v10624, 5
      %v10713 = vrot.slane %v10712, 4
      %v10714 = vrot.slane %v9907, 5
      %v10715 = vsel %vm2004, %v10713, %v10714
      %v10716 = vrot.slane %v10714, 4
      %v10717 = vrot.slane %v9908, 5
      %v10718 = vsel %vm2004, %v10716, %v10717
      %v10719 = vrot.slane %v10625, 5
      %v10720 = vrot.slane %v10719, 4
      %v10721 = vrot.slane %v9910, 5
      %v10722 = vsel %vm2004, %v10720, %v10721
      %v10723 = vrot.slane %v10721, 4
      %v10724 = vrot.slane %v9911, 5
      %v10725 = vsel %vm2004, %v10723, %v10724
      %v10726 = vrot.slane %v10626, 5
      %v10727 = vrot.slane %v10726, 4
      %v10728 = vrot.slane %v9913, 5
      %v10729 = vsel %vm2004, %v10727, %v10728
      %v10730 = vrot.slane %v10728, 4
      %v10731 = vrot.slane %v9914, 5
      %v10732 = vsel %vm2004, %v10730, %v10731
      %v10733 = vrot.slane %v10627, 5
      %v10734 = vrot.slane %v10733, 4
      %v10735 = vrot.slane %v9916, 5
      %v10736 = vsel %vm2004, %v10734, %v10735
      %v10737 = vrot.slane %v10735, 4
      %v10738 = vrot.slane %v9917, 5
      %v10739 = vsel %vm2004, %v10737, %v10738
      %v10740 = vrot.slane %v10628, 5
      %v10741 = vrot.slane %v10740, 4
      %v10742 = vrot.slane %v9919, 5
      %v10743 = vsel %vm2004, %v10741, %v10742
      %v10744 = vrot.slane %v10742, 4
      %v10745 = vrot.slane %v9920, 5
      %v10746 = vsel %vm2004, %v10744, %v10745
      %v10747 = vrot.slane %v10629, 5
      %v10748 = vrot.slane %v10747, 4
      %v10749 = vrot.slane %v9922, 5
      %v10750 = vsel %vm2004, %v10748, %v10749
      %v10751 = vrot.slane %v10749, 4
      %v10752 = vrot.slane %v9923, 5
      %v10753 = vsel %vm2004, %v10751, %v10752
      %v10754 = vrot.slane %v10630, 5
      %v10755 = vrot.slane %v10754, 4
      %v10756 = vrot.slane %v9925, 5
      %v10757 = vsel %vm2004, %v10755, %v10756
      %v10758 = vrot.slane %v10756, 4
      %v10759 = vrot.slane %v9926, 5
      %v10760 = vsel %vm2004, %v10758, %v10759
      %v10761 = vrot.slane %v10631, 5
      %v10762 = vrot.slane %v10761, 4
      %v10763 = vrot.slane %v9928, 5
      %v10764 = vsel %vm2004, %v10762, %v10763
      %v10765 = vrot.slane %v10763, 4
      %v10766 = vrot.slane %v9929, 5
      %v10767 = vsel %vm2004, %v10765, %v10766
      %v10768 = vrot.slane %v10632, 5
      %v10769 = vrot.slane %v10768, 4
      %v10770 = vrot.slane %v9931, 5
      %v10771 = vsel %vm2004, %v10769, %v10770
      %v10772 = vrot.slane %v10770, 4
      %v10773 = vrot.slane %v9932, 5
      %v10774 = vsel %vm2004, %v10772, %v10773
      %v10775 = vrot.slane %v10633, 5
      %v10776 = vrot.slane %v10775, 4
      %v10777 = vrot.slane %v9934, 5
      %v10778 = vsel %vm2004, %v10776, %v10777
      %v10779 = vrot.slane %v10777, 4
      %v10780 = vrot.slane %v9935, 5
      %v10781 = vsel %vm2004, %v10779, %v10780
      %v10782 = vrot.slane %v10634, 5
      %v10783 = vrot.slane %v10782, 4
      %v10784 = vrot.slane %v9937, 5
      %v10785 = vsel %vm2004, %v10783, %v10784
      %v10786 = vrot.slane %v10784, 4
      %v10787 = vrot.slane %v9938, 5
      %v10788 = vsel %vm2004, %v10786, %v10787
      %v10789 = vrot.slane %v10635, 5
      %v10790 = vrot.slane %v10789, 4
      %v10791 = vrot.slane %v9940, 5
      %v10792 = vsel %vm2004, %v10790, %v10791
      %v10793 = vrot.slane %v10791, 4
      %v10794 = vrot.slane %v9941, 5
      %v10795 = vsel %vm2004, %v10793, %v10794
      %s10796 = scalar_lea.vmem %s2, 32
      %v10797 = vld [vmem:[%s10796] sm:$0xf]
      %v10798 = vunpack.c.l.b16 %v10687
      %v10799 = vunpack.c.l.b16 %v10690
      %v10800 = vunpack.c.l.b16 %v10694
      %v10801 = vunpack.c.l.b16 %v10697
      %v10802 = vunpack.c.l.b16 %v10701
      %v10803 = vunpack.c.l.b16 %v10704
      %v10804 = vunpack.c.l.b16 %v10708
      %v10805 = vunpack.c.l.b16 %v10711
      %v10806 = vunpack.c.l.b16 %v10715
      %v10807 = vunpack.c.l.b16 %v10718
      %v10808 = vunpack.c.l.b16 %v10722
      %v10809 = vunpack.c.l.b16 %v10725
      %v10810 = vunpack.c.l.b16 %v10729
      %v10811 = vunpack.c.l.b16 %v10732
      %v10812 = vunpack.c.l.b16 %v10736
      %v10813 = vunpack.c.l.b16 %v10739
      %v10814 = vunpack.c.l.b16 %v10743
      %v10815 = vunpack.c.l.b16 %v10746
      %v10816 = vunpack.c.l.b16 %v10750
      %v10817 = vunpack.c.l.b16 %v10753
      %v10818 = vunpack.c.l.b16 %v10757
      %v10819 = vunpack.c.l.b16 %v10760
      %v10820 = vunpack.c.l.b16 %v10764
      %v10821 = vunpack.c.l.b16 %v10767
      %v10822 = vunpack.c.l.b16 %v10771
      %v10823 = vunpack.c.l.b16 %v10774
      %v10824 = vunpack.c.l.b16 %v10778
      %v10825 = vunpack.c.l.b16 %v10781
      %v10826 = vunpack.c.l.b16 %v10785
      %v10827 = vunpack.c.l.b16 %v10788
      %v10828 = vunpack.c.l.b16 %v10792
      %v10829 = vunpack.c.l.b16 %v10795
      %v10830 = vpack.c.b16 %v10799, %v10798
      %v10831 = vpack.c.b16 %v10801, %v10800
      %v10832 = vpack.c.b16 %v10803, %v10802
      %v10833 = vpack.c.b16 %v10805, %v10804
      %v10834 = vpack.c.b16 %v10807, %v10806
      %v10835 = vpack.c.b16 %v10809, %v10808
      %v10836 = vpack.c.b16 %v10811, %v10810
      %v10837 = vpack.c.b16 %v10813, %v10812
      %v10838 = vpack.c.b16 %v10815, %v10814
      %v10839 = vpack.c.b16 %v10817, %v10816
      %v10840 = vpack.c.b16 %v10819, %v10818
      %v10841 = vpack.c.b16 %v10821, %v10820
      %v10842 = vpack.c.b16 %v10823, %v10822
      %v10843 = vpack.c.b16 %v10825, %v10824
      %v10844 = vpack.c.b16 %v10827, %v10826
      %v10845 = vpack.c.b16 %v10829, %v10828
      %v10847 = vsel %vm1448, %v10830, 0
      %v10850 = vsel %vm1448, %v10831, 0
      %v10853 = vsel %vm1448, %v10832, 0
      %v10856 = vsel %vm1448, %v10833, 0
      %v10859 = vsel %vm1448, %v10834, 0
      %v10862 = vsel %vm1448, %v10835, 0
      %v10865 = vsel %vm1448, %v10836, 0
      %v10868 = vsel %vm1448, %v10837, 0
      %v10871 = vsel %vm1448, %v10838, 0
      %v10874 = vsel %vm1448, %v10839, 0
      %v10877 = vsel %vm1448, %v10840, 0
      %v10880 = vsel %vm1448, %v10841, 0
      %v10883 = vsel %vm1448, %v10842, 0
      %v10886 = vsel %vm1448, %v10843, 0
      %v10889 = vsel %vm1448, %v10844, 0
      %v10892 = vsel %vm1448, %v10845, 0
      %v10895 = vsel %vm1497, %v10797, 0
      %10897 = vmatprep.subr.bf16.mxu0 0
      %10898 = vmatpush1.bf16.msra.mxu0 %v10895
      %10899 = vmatprep.subr.bf16.mxu0 0
      %10900 = vmatpush1.bf16.msra.mxu0 0
      %10901 = vmatprep.subr.bf16.mxu0 0
      %10902 = vmatpush1.bf16.msra.mxu0 0
      %10903 = vmatprep.subr.bf16.mxu0 0
      %10904 = vmatpush1.bf16.msra.mxu0 0
      %10905 = vmatprep.subr.bf16.mxu0 0
      %10906 = vmatpush1.bf16.msra.mxu0 0
      %10907 = vmatprep.subr.bf16.mxu0 0
      %10908 = vmatpush1.bf16.msra.mxu0 0
      %10909 = vmatprep.subr.bf16.mxu0 0
      %10910 = vmatpush1.bf16.msra.mxu0 0
      %10911 = vmatprep.subr.bf16.mxu0 0
      %10912 = vmatpush1.bf16.msra.mxu0 0
      %10913 = vmatprep.subr.bf16.mxu0 0
      %10914 = vmatpush1.bf16.msra.mxu0 0
      %10915 = vmatprep.subr.bf16.mxu0 0
      %10916 = vmatpush1.bf16.msra.mxu0 0
      %10917 = vmatprep.subr.bf16.mxu0 0
      %10918 = vmatpush1.bf16.msra.mxu0 0
      %10919 = vmatprep.subr.bf16.mxu0 0
      %10920 = vmatpush1.bf16.msra.mxu0 0
      %10921 = vmatprep.subr.bf16.mxu0 0
      %10922 = vmatpush1.bf16.msra.mxu0 0
      %10923 = vmatprep.subr.bf16.mxu0 0
      %10924 = vmatpush1.bf16.msra.mxu0 0
      %10925 = vmatprep.subr.bf16.mxu0 0
      %10926 = vmatpush1.bf16.msra.mxu0 0
      %10927 = vmatprep.subr.bf16.mxu0 0
      %10928 = vmatpush1.bf16.msra.mxu0 0
      %10929 = vmatprep.mubr.bf16.mxu0 0
      %10930 = vmatmul.mubr.bf16.gmra.mrb[0].mxu0 %v10847
      %v10931 = vpop.f32.mrb[0].mxu0
      %v10932 = vadd.f32 0.0, %v10931
      %v10933 = vpop.f32.mrb[0].mxu0
      %v10934 = vpop.f32.mrb[0].mxu0
      %v10935 = vadd.f32 0.0, %v10934
      %v10936 = vpop.f32.mrb[0].mxu0
      %10937 = vmatprep.mubr.bf16.mxu0 0
      %10938 = vmatmul.mubr.bf16.gmra.mrb[0].mxu0 %v10850
      %v10939 = vpop.f32.mrb[0].mxu0
      %v10940 = vadd.f32 0.0, %v10939
      %v10941 = vpop.f32.mrb[0].mxu0
      %v10942 = vpop.f32.mrb[0].mxu0
      %v10943 = vadd.f32 0.0, %v10942
      %v10944 = vpop.f32.mrb[0].mxu0
      %10945 = vmatprep.mubr.bf16.mxu0 0
      %10946 = vmatmul.mubr.bf16.gmra.mrb[0].mxu0 %v10853
      %v10947 = vpop.f32.mrb[0].mxu0
      %v10948 = vadd.f32 0.0, %v10947
      %v10949 = vpop.f32.mrb[0].mxu0
      %v10950 = vpop.f32.mrb[0].mxu0
      %v10951 = vadd.f32 0.0, %v10950
      %v10952 = vpop.f32.mrb[0].mxu0
      %10953 = vmatprep.mubr.bf16.mxu0 0
      %10954 = vmatmul.mubr.bf16.gmra.mrb[0].mxu0 %v10856
      %v10955 = vpop.f32.mrb[0].mxu0
      %v10956 = vadd.f32 0.0, %v10955
      %v10957 = vpop.f32.mrb[0].mxu0
      %v10958 = vpop.f32.mrb[0].mxu0
      %v10959 = vadd.f32 0.0, %v10958
      %v10960 = vpop.f32.mrb[0].mxu0
      %10961 = vmatprep.mubr.bf16.mxu0 0
      %10962 = vmatmul.mubr.bf16.gmra.mrb[0].mxu0 %v10859
      %v10963 = vpop.f32.mrb[0].mxu0
      %v10964 = vadd.f32 0.0, %v10963
      %v10965 = vpop.f32.mrb[0].mxu0
      %v10966 = vpop.f32.mrb[0].mxu0
      %v10967 = vadd.f32 0.0, %v10966
      %v10968 = vpop.f32.mrb[0].mxu0
      %10969 = vmatprep.mubr.bf16.mxu0 0
      %10970 = vmatmul.mubr.bf16.gmra.mrb[0].mxu0 %v10862
      %v10971 = vpop.f32.mrb[0].mxu0
      %v10972 = vadd.f32 0.0, %v10971
      %v10973 = vpop.f32.mrb[0].mxu0
      %v10974 = vpop.f32.mrb[0].mxu0
      %v10975 = vadd.f32 0.0, %v10974
      %v10976 = vpop.f32.mrb[0].mxu0
      %10977 = vmatprep.mubr.bf16.mxu0 0
      %10978 = vmatmul.mubr.bf16.gmra.mrb[0].mxu0 %v10865
      %v10979 = vpop.f32.mrb[0].mxu0
      %v10980 = vadd.f32 0.0, %v10979
      %v10981 = vpop.f32.mrb[0].mxu0
      %v10982 = vpop.f32.mrb[0].mxu0
      %v10983 = vadd.f32 0.0, %v10982
      %v10984 = vpop.f32.mrb[0].mxu0
      %10985 = vmatprep.mubr.bf16.mxu0 0
      %10986 = vmatmul.mubr.bf16.gmra.mrb[0].mxu0 %v10868
      %v10987 = vpop.f32.mrb[0].mxu0
      %v10988 = vadd.f32 0.0, %v10987
      %v10989 = vpop.f32.mrb[0].mxu0
      %v10990 = vpop.f32.mrb[0].mxu0
      %v10991 = vadd.f32 0.0, %v10990
      %v10992 = vpop.f32.mrb[0].mxu0
      %10993 = vmatprep.mubr.bf16.mxu0 0
      %10994 = vmatmul.mubr.bf16.gmra.mrb[0].mxu0 %v10871
      %v10995 = vpop.f32.mrb[0].mxu0
      %v10996 = vadd.f32 0.0, %v10995
      %v10997 = vpop.f32.mrb[0].mxu0
      %v10998 = vpop.f32.mrb[0].mxu0
      %v10999 = vadd.f32 0.0, %v10998
      %v11000 = vpop.f32.mrb[0].mxu0
      %11001 = vmatprep.mubr.bf16.mxu0 0
      %11002 = vmatmul.mubr.bf16.gmra.mrb[0].mxu0 %v10874
      %v11003 = vpop.f32.mrb[0].mxu0
      %v11004 = vadd.f32 0.0, %v11003
      %v11005 = vpop.f32.mrb[0].mxu0
      %v11006 = vpop.f32.mrb[0].mxu0
      %v11007 = vadd.f32 0.0, %v11006
      %v11008 = vpop.f32.mrb[0].mxu0
      %11009 = vmatprep.mubr.bf16.mxu0 0
      %11010 = vmatmul.mubr.bf16.gmra.mrb[0].mxu0 %v10877
      %v11011 = vpop.f32.mrb[0].mxu0
      %v11012 = vadd.f32 0.0, %v11011
      %v11013 = vpop.f32.mrb[0].mxu0
      %v11014 = vpop.f32.mrb[0].mxu0
      %v11015 = vadd.f32 0.0, %v11014
      %v11016 = vpop.f32.mrb[0].mxu0
      %11017 = vmatprep.mubr.bf16.mxu0 0
      %11018 = vmatmul.mubr.bf16.gmra.mrb[0].mxu0 %v10880
      %v11019 = vpop.f32.mrb[0].mxu0
      %v11020 = vadd.f32 0.0, %v11019
      %v11021 = vpop.f32.mrb[0].mxu0
      %v11022 = vpop.f32.mrb[0].mxu0
      %v11023 = vadd.f32 0.0, %v11022
      %v11024 = vpop.f32.mrb[0].mxu0
      %11025 = vmatprep.mubr.bf16.mxu0 0
      %11026 = vmatmul.mubr.bf16.gmra.mrb[0].mxu0 %v10883
      %v11027 = vpop.f32.mrb[0].mxu0
      %v11028 = vadd.f32 0.0, %v11027
      %v11029 = vpop.f32.mrb[0].mxu0
      %v11030 = vpop.f32.mrb[0].mxu0
      %v11031 = vadd.f32 0.0, %v11030
      %v11032 = vpop.f32.mrb[0].mxu0
      %11033 = vmatprep.mubr.bf16.mxu0 0
      %11034 = vmatmul.mubr.bf16.gmra.mrb[0].mxu0 %v10886
      %v11035 = vpop.f32.mrb[0].mxu0
      %v11036 = vadd.f32 0.0, %v11035
      %v11037 = vpop.f32.mrb[0].mxu0
      %v11038 = vpop.f32.mrb[0].mxu0
      %v11039 = vadd.f32 0.0, %v11038
      %v11040 = vpop.f32.mrb[0].mxu0
      %11041 = vmatprep.mubr.bf16.mxu0 0
      %11042 = vmatmul.mubr.bf16.gmra.mrb[0].mxu0 %v10889
      %v11043 = vpop.f32.mrb[0].mxu0
      %v11044 = vadd.f32 0.0, %v11043
      %v11045 = vpop.f32.mrb[0].mxu0
      %v11046 = vpop.f32.mrb[0].mxu0
      %v11047 = vadd.f32 0.0, %v11046
      %v11048 = vpop.f32.mrb[0].mxu0
      %11049 = vmatprep.mubr.bf16.mxu0 0
      %11050 = vmatmul.mubr.bf16.gmra.mrb[0].mxu0 %v10892
      %v11051 = vpop.f32.mrb[0].mxu0
      %v11052 = vadd.f32 0.0, %v11051
      %v11053 = vpop.f32.mrb[0].mxu0
      %v11054 = vpop.f32.mrb[0].mxu0
      %v11055 = vadd.f32 0.0, %v11054
      %v11056 = vpop.f32.mrb[0].mxu0
      %11057 = vdwg.mxu0
      %v11058 = vadd.f32 %v10588, %v10932
      %v11059 = vadd.f32 %v10589, %v10935
      %v11060 = vadd.f32 %v10590, %v10940
      %v11061 = vadd.f32 %v10591, %v10943
      %v11062 = vadd.f32 %v10592, %v10948
      %v11063 = vadd.f32 %v10593, %v10951
      %v11064 = vadd.f32 %v10594, %v10956
      %v11065 = vadd.f32 %v10595, %v10959
      %v11066 = vadd.f32 %v10596, %v10964
      %v11067 = vadd.f32 %v10597, %v10967
      %v11068 = vadd.f32 %v10598, %v10972
      %v11069 = vadd.f32 %v10599, %v10975
      %v11070 = vadd.f32 %v10600, %v10980
      %v11071 = vadd.f32 %v10601, %v10983
      %v11072 = vadd.f32 %v10602, %v10988
      %v11073 = vadd.f32 %v10603, %v10991
      %v11074 = vadd.f32 %v10604, %v10996
      %v11075 = vadd.f32 %v10605, %v10999
      %v11076 = vadd.f32 %v10606, %v11004
      %v11077 = vadd.f32 %v10607, %v11007
      %v11078 = vadd.f32 %v10608, %v11012
      %v11079 = vadd.f32 %v10609, %v11015
      %v11080 = vadd.f32 %v10610, %v11020
      %v11081 = vadd.f32 %v10611, %v11023
      %v11082 = vadd.f32 %v10612, %v11028
      %v11083 = vadd.f32 %v10613, %v11031
      %v11084 = vadd.f32 %v10614, %v11036
      %v11085 = vadd.f32 %v10615, %v11039
      %v11086 = vadd.f32 %v10616, %v11044
      %v11087 = vadd.f32 %v10617, %v11047
      %v11088 = vadd.f32 %v10618, %v11052
      %v11089 = vadd.f32 %v10619, %v11055
      %v11090 = vsel %vm1448, %v11058, 0.0
      %v11091 = vsel %vm1448, %v11059, 0.0
      %v11092 = vadd.f32 %v11090, %v11091
      %v11093 = vsel %vm1448, %v11060, 0.0
      %v11094 = vadd.f32 %v11092, %v11093
      %v11095 = vsel %vm1448, %v11061, 0.0
      %v11096 = vadd.f32 %v11094, %v11095
      %v11097 = vsel %vm1448, %v11062, 0.0
      %v11098 = vadd.f32 %v11096, %v11097
      %v11099 = vsel %vm1448, %v11063, 0.0
      %v11100 = vadd.f32 %v11098, %v11099
      %v11101 = vsel %vm1448, %v11064, 0.0
      %v11102 = vadd.f32 %v11100, %v11101
      %v11103 = vsel %vm1448, %v11065, 0.0
      %v11104 = vadd.f32 %v11102, %v11103
      %v11105 = vsel %vm1448, %v11066, 0.0
      %v11106 = vadd.f32 %v11104, %v11105
      %v11107 = vsel %vm1448, %v11067, 0.0
      %v11108 = vadd.f32 %v11106, %v11107
      %v11109 = vsel %vm1448, %v11068, 0.0
      %v11110 = vadd.f32 %v11108, %v11109
      %v11111 = vsel %vm1448, %v11069, 0.0
      %v11112 = vadd.f32 %v11110, %v11111
      %v11113 = vsel %vm1448, %v11070, 0.0
      %v11114 = vadd.f32 %v11112, %v11113
      %v11115 = vsel %vm1448, %v11071, 0.0
      %v11116 = vadd.f32 %v11114, %v11115
      %v11117 = vsel %vm1448, %v11072, 0.0
      %v11118 = vadd.f32 %v11116, %v11117
      %v11119 = vsel %vm1448, %v11073, 0.0
      %v11120 = vadd.f32 %v11118, %v11119
      %v11121 = vsel %vm1448, %v11074, 0.0
      %v11122 = vadd.f32 %v11120, %v11121
      %v11123 = vsel %vm1448, %v11075, 0.0
      %v11124 = vadd.f32 %v11122, %v11123
      %v11125 = vsel %vm1448, %v11076, 0.0
      %v11126 = vadd.f32 %v11124, %v11125
      %v11127 = vsel %vm1448, %v11077, 0.0
      %v11128 = vadd.f32 %v11126, %v11127
      %v11129 = vsel %vm1448, %v11078, 0.0
      %v11130 = vadd.f32 %v11128, %v11129
      %v11131 = vsel %vm1448, %v11079, 0.0
      %v11132 = vadd.f32 %v11130, %v11131
      %v11133 = vsel %vm1448, %v11080, 0.0
      %v11134 = vadd.f32 %v11132, %v11133
      %v11135 = vsel %vm1448, %v11081, 0.0
      %v11136 = vadd.f32 %v11134, %v11135
      %v11137 = vsel %vm1448, %v11082, 0.0
      %v11138 = vadd.f32 %v11136, %v11137
      %v11139 = vsel %vm1448, %v11083, 0.0
      %v11140 = vadd.f32 %v11138, %v11139
      %v11141 = vsel %vm1448, %v11084, 0.0
      %v11142 = vadd.f32 %v11140, %v11141
      %v11143 = vsel %vm1448, %v11085, 0.0
      %v11144 = vadd.f32 %v11142, %v11143
      %v11145 = vsel %vm1448, %v11086, 0.0
      %v11146 = vadd.f32 %v11144, %v11145
      %v11147 = vsel %vm1448, %v11087, 0.0
      %v11148 = vadd.f32 %v11146, %v11147
      %v11149 = vsel %vm1448, %v11088, 0.0
      %v11150 = vadd.f32 %v11148, %v11149
      %v11151 = vsel %vm1448, %v11089, 0.0
      %v11152 = vadd.f32 %v11150, %v11151
      %v11153 = vrot.slane %v11152, 4
      %v11154 = vadd.f32 %v11152, %v11153
      %v11155 = vrot.slane %v11154, 2
      %v11156 = vadd.f32 %v11154, %v11155
      %v11157 = vrot.slane %v11156, 1
      %v11158 = vadd.f32 %v11156, %v11157
      %v11159 = vmul.f32 %v11058, %v11058
      %v11160 = vmul.f32 %v11059, %v11059
      %v11161 = vmul.f32 %v11060, %v11060
      %v11162 = vmul.f32 %v11061, %v11061
      %v11163 = vmul.f32 %v11062, %v11062
      %v11164 = vmul.f32 %v11063, %v11063
      %v11165 = vmul.f32 %v11064, %v11064
      %v11166 = vmul.f32 %v11065, %v11065
      %v11167 = vmul.f32 %v11066, %v11066
      %v11168 = vmul.f32 %v11067, %v11067
      %v11169 = vmul.f32 %v11068, %v11068
      %v11170 = vmul.f32 %v11069, %v11069
      %v11171 = vmul.f32 %v11070, %v11070
      %v11172 = vmul.f32 %v11071, %v11071
      %v11173 = vmul.f32 %v11072, %v11072
      %v11174 = vmul.f32 %v11073, %v11073
      %v11175 = vmul.f32 %v11074, %v11074
      %v11176 = vmul.f32 %v11075, %v11075
      %v11177 = vmul.f32 %v11076, %v11076
      %v11178 = vmul.f32 %v11077, %v11077
      %v11179 = vmul.f32 %v11078, %v11078
      %v11180 = vmul.f32 %v11079, %v11079
      %v11181 = vmul.f32 %v11080, %v11080
      %v11182 = vmul.f32 %v11081, %v11081
      %v11183 = vmul.f32 %v11082, %v11082
      %v11184 = vmul.f32 %v11083, %v11083
      %v11185 = vmul.f32 %v11084, %v11084
      %v11186 = vmul.f32 %v11085, %v11085
      %v11187 = vmul.f32 %v11086, %v11086
      %v11188 = vmul.f32 %v11087, %v11087
      %v11189 = vmul.f32 %v11088, %v11088
      %v11190 = vmul.f32 %v11089, %v11089
      %v11191 = vsel %vm1448, %v11159, 0.0
      %v11192 = vsel %vm1448, %v11160, 0.0
      %v11193 = vadd.f32 %v11191, %v11192
      %v11194 = vsel %vm1448, %v11161, 0.0
      %v11195 = vadd.f32 %v11193, %v11194
      %v11196 = vsel %vm1448, %v11162, 0.0
      %v11197 = vadd.f32 %v11195, %v11196
      %v11198 = vsel %vm1448, %v11163, 0.0
      %v11199 = vadd.f32 %v11197, %v11198
      %v11200 = vsel %vm1448, %v11164, 0.0
      %v11201 = vadd.f32 %v11199, %v11200
      %v11202 = vsel %vm1448, %v11165, 0.0
      %v11203 = vadd.f32 %v11201, %v11202
      %v11204 = vsel %vm1448, %v11166, 0.0
      %v11205 = vadd.f32 %v11203, %v11204
      %v11206 = vsel %vm1448, %v11167, 0.0
      %v11207 = vadd.f32 %v11205, %v11206
      %v11208 = vsel %vm1448, %v11168, 0.0
      %v11209 = vadd.f32 %v11207, %v11208
      %v11210 = vsel %vm1448, %v11169, 0.0
      %v11211 = vadd.f32 %v11209, %v11210
      %v11212 = vsel %vm1448, %v11170, 0.0
      %v11213 = vadd.f32 %v11211, %v11212
      %v11214 = vsel %vm1448, %v11171, 0.0
      %v11215 = vadd.f32 %v11213, %v11214
      %v11216 = vsel %vm1448, %v11172, 0.0
      %v11217 = vadd.f32 %v11215, %v11216
      %v11218 = vsel %vm1448, %v11173, 0.0
      %v11219 = vadd.f32 %v11217, %v11218
      %v11220 = vsel %vm1448, %v11174, 0.0
      %v11221 = vadd.f32 %v11219, %v11220
      %v11222 = vsel %vm1448, %v11175, 0.0
      %v11223 = vadd.f32 %v11221, %v11222
      %v11224 = vsel %vm1448, %v11176, 0.0
      %v11225 = vadd.f32 %v11223, %v11224
      %v11226 = vsel %vm1448, %v11177, 0.0
      %v11227 = vadd.f32 %v11225, %v11226
      %v11228 = vsel %vm1448, %v11178, 0.0
      %v11229 = vadd.f32 %v11227, %v11228
      %v11230 = vsel %vm1448, %v11179, 0.0
      %v11231 = vadd.f32 %v11229, %v11230
      %v11232 = vsel %vm1448, %v11180, 0.0
      %v11233 = vadd.f32 %v11231, %v11232
      %v11234 = vsel %vm1448, %v11181, 0.0
      %v11235 = vadd.f32 %v11233, %v11234
      %v11236 = vsel %vm1448, %v11182, 0.0
      %v11237 = vadd.f32 %v11235, %v11236
      %v11238 = vsel %vm1448, %v11183, 0.0
      %v11239 = vadd.f32 %v11237, %v11238
      %v11240 = vsel %vm1448, %v11184, 0.0
      %v11241 = vadd.f32 %v11239, %v11240
      %v11242 = vsel %vm1448, %v11185, 0.0
      %v11243 = vadd.f32 %v11241, %v11242
      %v11244 = vsel %vm1448, %v11186, 0.0
      %v11245 = vadd.f32 %v11243, %v11244
      %v11246 = vsel %vm1448, %v11187, 0.0
      %v11247 = vadd.f32 %v11245, %v11246
      %v11248 = vsel %vm1448, %v11188, 0.0
      %v11249 = vadd.f32 %v11247, %v11248
      %v11250 = vsel %vm1448, %v11189, 0.0
      %v11251 = vadd.f32 %v11249, %v11250
      %v11252 = vsel %vm1448, %v11190, 0.0
      %v11253 = vadd.f32 %v11251, %v11252
      %v11254 = vrot.slane %v11253, 4
      %v11255 = vadd.f32 %v11253, %v11254
      %v11256 = vrot.slane %v11255, 2
      %v11257 = vadd.f32 %v11255, %v11256
      %v11258 = vrot.slane %v11257, 1
      %v11259 = vadd.f32 %v11257, %v11258
      %v11260 = vmul.f32 %v11158, 0.00390625
      %v11261 = vmul.f32 %v11259, 0.00390625
      %v11262 = vmul.f32 %v11260, %v11260
      %v11263 = vsub.f32 %v11261, %v11262
      %v11264 = vsub.f32 %v11058, %v11260
      %v11265 = vsub.f32 %v11059, %v11260
      %v11266 = vsub.f32 %v11060, %v11260
      %v11267 = vsub.f32 %v11061, %v11260
      %v11268 = vsub.f32 %v11062, %v11260
      %v11269 = vsub.f32 %v11063, %v11260
      %v11270 = vsub.f32 %v11064, %v11260
      %v11271 = vsub.f32 %v11065, %v11260
      %v11272 = vsub.f32 %v11066, %v11260
      %v11273 = vsub.f32 %v11067, %v11260
      %v11274 = vsub.f32 %v11068, %v11260
      %v11275 = vsub.f32 %v11069, %v11260
      %v11276 = vsub.f32 %v11070, %v11260
      %v11277 = vsub.f32 %v11071, %v11260
      %v11278 = vsub.f32 %v11072, %v11260
      %v11279 = vsub.f32 %v11073, %v11260
      %v11280 = vsub.f32 %v11074, %v11260
      %v11281 = vsub.f32 %v11075, %v11260
      %v11282 = vsub.f32 %v11076, %v11260
      %v11283 = vsub.f32 %v11077, %v11260
      %v11284 = vsub.f32 %v11078, %v11260
      %v11285 = vsub.f32 %v11079, %v11260
      %v11286 = vsub.f32 %v11080, %v11260
      %v11287 = vsub.f32 %v11081, %v11260
      %v11288 = vsub.f32 %v11082, %v11260
      %v11289 = vsub.f32 %v11083, %v11260
      %v11290 = vsub.f32 %v11084, %v11260
      %v11291 = vsub.f32 %v11085, %v11260
      %v11292 = vsub.f32 %v11086, %v11260
      %v11293 = vsub.f32 %v11087, %v11260
      %v11294 = vsub.f32 %v11088, %v11260
      %v11295 = vsub.f32 %v11089, %v11260
      %v11296 = vadd.f32 %v11263, 1e-05
      %v11297 = vrsqrt.pop %v11296
      %v11298 = vmul.f32 %v11264, %v11297
      %v11299 = vmul.f32 %v11265, %v11297
      %v11300 = vmul.f32 %v11266, %v11297
      %v11301 = vmul.f32 %v11267, %v11297
      %v11302 = vmul.f32 %v11268, %v11297
      %v11303 = vmul.f32 %v11269, %v11297
      %v11304 = vmul.f32 %v11270, %v11297
      %v11305 = vmul.f32 %v11271, %v11297
      %v11306 = vmul.f32 %v11272, %v11297
      %v11307 = vmul.f32 %v11273, %v11297
      %v11308 = vmul.f32 %v11274, %v11297
      %v11309 = vmul.f32 %v11275, %v11297
      %v11310 = vmul.f32 %v11276, %v11297
      %v11311 = vmul.f32 %v11277, %v11297
      %v11312 = vmul.f32 %v11278, %v11297
      %v11313 = vmul.f32 %v11279, %v11297
      %v11314 = vmul.f32 %v11280, %v11297
      %v11315 = vmul.f32 %v11281, %v11297
      %v11316 = vmul.f32 %v11282, %v11297
      %v11317 = vmul.f32 %v11283, %v11297
      %v11318 = vmul.f32 %v11284, %v11297
      %v11319 = vmul.f32 %v11285, %v11297
      %v11320 = vmul.f32 %v11286, %v11297
      %v11321 = vmul.f32 %v11287, %v11297
      %v11322 = vmul.f32 %v11288, %v11297
      %v11323 = vmul.f32 %v11289, %v11297
      %v11324 = vmul.f32 %v11290, %v11297
      %v11325 = vmul.f32 %v11291, %v11297
      %v11326 = vmul.f32 %v11292, %v11297
      %v11327 = vmul.f32 %v11293, %v11297
      %v11328 = vmul.f32 %v11294, %v11297
      %v11329 = vmul.f32 %v11295, %v11297
      %v11330 = vld [vmem:[%s165] sm:$0xff]
      %v11331 = vld [vmem:[%s165 + $0x8] sm:$0xff]
      %v11332 = vld [vmem:[%s165 + $0x10] sm:$0xff]
      %v11333 = vld [vmem:[%s165 + $0x18] sm:$0xff]
      %v11334 = vld [vmem:[%s165 + $0x20] sm:$0xff]
      %v11335 = vld [vmem:[%s165 + $0x28] sm:$0xff]
      %v11336 = vld [vmem:[%s165 + $0x30] sm:$0xff]
      %v11337 = vld [vmem:[%s165 + $0x38] sm:$0xff]
      %v11338 = vld [vmem:[%s165 + $0x40] sm:$0xff]
      %v11339 = vld [vmem:[%s165 + $0x48] sm:$0xff]
      %v11340 = vld [vmem:[%s165 + $0x50] sm:$0xff]
      %v11341 = vld [vmem:[%s165 + $0x58] sm:$0xff]
      %v11342 = vld [vmem:[%s165 + $0x60] sm:$0xff]
      %v11343 = vld [vmem:[%s165 + $0x68] sm:$0xff]
      %v11344 = vld [vmem:[%s165 + $0x70] sm:$0xff]
      %v11345 = vld [vmem:[%s165 + $0x78] sm:$0xff]
      %v11346 = vld [vmem:[%s165 + $0x80] sm:$0xff]
      %v11347 = vld [vmem:[%s165 + $0x88] sm:$0xff]
      %v11348 = vld [vmem:[%s165 + $0x90] sm:$0xff]
      %v11349 = vld [vmem:[%s165 + $0x98] sm:$0xff]
      %v11350 = vld [vmem:[%s165 + $0xa0] sm:$0xff]
      %v11351 = vld [vmem:[%s165 + $0xa8] sm:$0xff]
      %v11352 = vld [vmem:[%s165 + $0xb0] sm:$0xff]
      %v11353 = vld [vmem:[%s165 + $0xb8] sm:$0xff]
      %v11354 = vld [vmem:[%s165 + $0xc0] sm:$0xff]
      %v11355 = vld [vmem:[%s165 + $0xc8] sm:$0xff]
      %v11356 = vld [vmem:[%s165 + $0xd0] sm:$0xff]
      %v11357 = vld [vmem:[%s165 + $0xd8] sm:$0xff]
      %v11358 = vld [vmem:[%s165 + $0xe0] sm:$0xff]
      %v11359 = vld [vmem:[%s165 + $0xe8] sm:$0xff]
      %v11360 = vld [vmem:[%s165 + $0xf0] sm:$0xff]
      %v11361 = vld [vmem:[%s165 + $0xf8] sm:$0xff]
      %v11362 = vadd.f32 %v11330, %v11298
      %v11363 = vadd.f32 %v11331, %v11299
      %v11364 = vadd.f32 %v11332, %v11300
      %v11365 = vadd.f32 %v11333, %v11301
      %v11366 = vadd.f32 %v11334, %v11302
      %v11367 = vadd.f32 %v11335, %v11303
      %v11368 = vadd.f32 %v11336, %v11304
      %v11369 = vadd.f32 %v11337, %v11305
      %v11370 = vadd.f32 %v11338, %v11306
      %v11371 = vadd.f32 %v11339, %v11307
      %v11372 = vadd.f32 %v11340, %v11308
      %v11373 = vadd.f32 %v11341, %v11309
      %v11374 = vadd.f32 %v11342, %v11310
      %v11375 = vadd.f32 %v11343, %v11311
      %v11376 = vadd.f32 %v11344, %v11312
      %v11377 = vadd.f32 %v11345, %v11313
      %v11378 = vadd.f32 %v11346, %v11314
      %v11379 = vadd.f32 %v11347, %v11315
      %v11380 = vadd.f32 %v11348, %v11316
      %v11381 = vadd.f32 %v11349, %v11317
      %v11382 = vadd.f32 %v11350, %v11318
      %v11383 = vadd.f32 %v11351, %v11319
      %v11384 = vadd.f32 %v11352, %v11320
      %v11385 = vadd.f32 %v11353, %v11321
      %v11386 = vadd.f32 %v11354, %v11322
      %v11387 = vadd.f32 %v11355, %v11323
      %v11388 = vadd.f32 %v11356, %v11324
      %v11389 = vadd.f32 %v11357, %v11325
      %v11390 = vadd.f32 %v11358, %v11326
      %v11391 = vadd.f32 %v11359, %v11327
      %v11392 = vadd.f32 %v11360, %v11328
      %v11393 = vadd.f32 %v11361, %v11329
      %11394 = vst.msk [vmem:[%s170] sm:$0xff] %vm1448, %v11362
      %11395 = vst.msk [vmem:[%s170 + $0x8] sm:$0xff] %vm1448, %v11363
      %11396 = vst.msk [vmem:[%s170 + $0x10] sm:$0xff] %vm1448, %v11364
      %11397 = vst.msk [vmem:[%s170 + $0x18] sm:$0xff] %vm1448, %v11365
      %11398 = vst.msk [vmem:[%s170 + $0x20] sm:$0xff] %vm1448, %v11366
      %11399 = vst.msk [vmem:[%s170 + $0x28] sm:$0xff] %vm1448, %v11367
      %11400 = vst.msk [vmem:[%s170 + $0x30] sm:$0xff] %vm1448, %v11368
      %11401 = vst.msk [vmem:[%s170 + $0x38] sm:$0xff] %vm1448, %v11369
      %11402 = vst.msk [vmem:[%s170 + $0x40] sm:$0xff] %vm1448, %v11370
      %11403 = vst.msk [vmem:[%s170 + $0x48] sm:$0xff] %vm1448, %v11371
      %11404 = vst.msk [vmem:[%s170 + $0x50] sm:$0xff] %vm1448, %v11372
      %11405 = vst.msk [vmem:[%s170 + $0x58] sm:$0xff] %vm1448, %v11373
      %11406 = vst.msk [vmem:[%s170 + $0x60] sm:$0xff] %vm1448, %v11374
      %11407 = vst.msk [vmem:[%s170 + $0x68] sm:$0xff] %vm1448, %v11375
      %11408 = vst.msk [vmem:[%s170 + $0x70] sm:$0xff] %vm1448, %v11376
      %11409 = vst.msk [vmem:[%s170 + $0x78] sm:$0xff] %vm1448, %v11377
      %11410 = vst.msk [vmem:[%s170 + $0x80] sm:$0xff] %vm1448, %v11378
      %11411 = vst.msk [vmem:[%s170 + $0x88] sm:$0xff] %vm1448, %v11379
      %11412 = vst.msk [vmem:[%s170 + $0x90] sm:$0xff] %vm1448, %v11380
      %11413 = vst.msk [vmem:[%s170 + $0x98] sm:$0xff] %vm1448, %v11381
      %11414 = vst.msk [vmem:[%s170 + $0xa0] sm:$0xff] %vm1448, %v11382
      %11415 = vst.msk [vmem:[%s170 + $0xa8] sm:$0xff] %vm1448, %v11383
      %11416 = vst.msk [vmem:[%s170 + $0xb0] sm:$0xff] %vm1448, %v11384
      %11417 = vst.msk [vmem:[%s170 + $0xb8] sm:$0xff] %vm1448, %v11385
      %11418 = vst.msk [vmem:[%s170 + $0xc0] sm:$0xff] %vm1448, %v11386
      %11419 = vst.msk [vmem:[%s170 + $0xc8] sm:$0xff] %vm1448, %v11387
      %11420 = vst.msk [vmem:[%s170 + $0xd0] sm:$0xff] %vm1448, %v11388
      %11421 = vst.msk [vmem:[%s170 + $0xd8] sm:$0xff] %vm1448, %v11389
      %11422 = vst.msk [vmem:[%s170 + $0xe0] sm:$0xff] %vm1448, %v11390
      %11423 = vst.msk [vmem:[%s170 + $0xe8] sm:$0xff] %vm1448, %v11391
      %11424 = vst.msk [vmem:[%s170 + $0xf0] sm:$0xff] %vm1448, %v11392
      %11425 = vst.msk [vmem:[%s170 + $0xf8] sm:$0xff] %vm1448, %v11393
      %p11426 = scmp.lt.s32.totalorder %s14, 1
      %s11427 = scalar_select %p11426, %s14, 1
      %s11428 = smul.addr %s11427, 32
      %s11429 = smul.addr %s11428, 8
      %s11430 = scalar_lea.vmem %s3, %s11429
      // Predicated region
      $region33: #{tpu_custom_call.1} parent=31 // pred_check
        %p11431 = pneg %p100
      $region34: #{tpu_custom_call.1} parent=31 // pred_check_branch
        %11433 = sbr.rel (%p11431) target = $region36
      $region35: #{tpu_custom_call.1} parent=31 // pred_region
        _
      $region36: #{tpu_custom_call.1} parent=31 // pred_fallthru
        _
    $region32: #{tpu_custom_call.1} parent=5 // pred_fallthru
      _
    %p11434 = scmp.le.s32.totalorder 2, %s9
    // Predicated region
    $region37: #{tpu_custom_call.1} parent=5 // pred_check
      %p11435 = pneg %p11434
    $region38: #{tpu_custom_call.1} parent=5 // pred_check_branch
      %11437 = sbr.rel (%p11435) target = $region40
    $region39: #{tpu_custom_call.1} parent=5 // pred_region
      %s11438 = ssub.s32 %s9, 2
      // Predicated region
      $region41: #{tpu_custom_call.1} parent=39 // pred_check
        %p11439 = pneg %p106
      $region42: #{tpu_custom_call.1} parent=39 // pred_check_branch
        %11441 = sbr.rel (%p11439) target = $region44
      $region43: #{tpu_custom_call.1} parent=39 // pred_region
        %p11442 = scmp.lt.s32.totalorder %s15, 1
        %s11443 = scalar_select %p11442, %s15, 1
        %s11444 = smul.addr %s11443, 32
        %s11445 = smul.addr %s11444, 8
        %s11446 = scalar_lea.vmem %s3, %s11445
      $region44: #{tpu_custom_call.1} parent=39 // pred_fallthru
        _
    $region40: #{tpu_custom_call.1} parent=5 // pred_fallthru
      _
  $region6: #{tpu_custom_call.1} parent=0 // loop_footer
    %s13 = sadd.s32 1, %s9
  $region7: #{tpu_custom_call.1} parent=0 // loop_footer_branch
    %8 = sbr.rel target = $region3
  $region8: #{tpu_custom_call.1} parent=0 // loop_exit
    _

</llo_original>
